<compile_context>
chip_gen: v6e
topology: v6e:2x2x1
jax: 0.10.0
libtpu: 0.0.40
codegen_flags: <defaults>
</compile_context>

<pallas_src>
import functools

import jax
import jax.numpy as jnp
from jax.experimental import pallas as pl
from jax.experimental.pallas import tpu as pltpu

_VMEM_LIMIT = 32 * 1024 * 1024  # explicit scoped-VMEM cap (safe on v5e/v6e/v7x)


# ----------------------------------------------------------------------------
# fused kernel: one batch element per grid step
# ----------------------------------------------------------------------------
def _fused_cnn_kernel(
        xp_ref, w1_ref, b1_ref, w2_ref, b2_ref, w3_ref, b3_ref,
        fc1w_ref, fc1b_ref, fc2w_ref, fc2b_ref, mask_ref,
        out_ref, p2_ref, p3_ref, *,
        kh1, kw1, kh2, kw2, kh3, kw3,
        Wp1, OH1, OW1, M1,
        Wp2, OH2, OW2, M2,
        Wp3, OH3, OW3, M3):
    f32 = jnp.float32
    bf16 = jnp.bfloat16

    def conv_taps(load_rows, w_ref, b_ref, kh, kw, Wp, M):
        """Shift-and-accumulate conv on a flat padded (Hp*Wp, Cin) slab.

        Output row r = oh*Wp + ow accumulates input row r + i*Wp + j for every
        tap (i, j); rows with ow >= OW are junk and are ignored downstream.
        """
        cout = b_ref.shape[1]
        acc = jnp.zeros((M, cout), f32)
        for i in range(kh):
            for j in range(kw):
                r0 = i * Wp + j
                lhs = load_rows(r0, M)                       # (M, Cin) bf16
                acc = acc + jnp.dot(lhs, w_ref[i * kw + j],
                                    preferred_element_type=f32)
        return jnp.maximum(acc + b_ref[...], 0.0)            # (M, Cout) f32

    # ---- conv1 (3x4, pad (1,1)) on the pre-padded input slab ---------------
    x0 = xp_ref[0]                                           # (Hp1*Wp1, Cin) f32
    act1 = conv_taps(lambda r0, m: x0[r0:r0 + m, :].astype(bf16),
                     w1_ref, b1_ref, kh1, kw1, Wp1, M1)      # (M1, 32)

    # ---- hand valid rows to conv2's zero-padded VMEM scratch ---------------
    p2_ref[...] = jnp.zeros(p2_ref.shape, f32)               # zero H margins
    for oh in range(OH1):
        p2_ref[(oh + 1) * Wp2:(oh + 1) * Wp2 + OW1, :] = \
            act1[oh * Wp1:oh * Wp1 + OW1, :]

    # ---- conv2 (2x2, pad (1,0)) --------------------------------------------
    act2 = conv_taps(lambda r0, m: p2_ref[r0:r0 + m, :].astype(bf16),
                     w2_ref, b2_ref, kh2, kw2, Wp2, M2)      # (M2, 64)

    p3_ref[...] = jnp.zeros(p3_ref.shape, f32)
    for oh in range(OH2):
        p3_ref[(oh + 1) * Wp3:(oh + 1) * Wp3 + OW2, :] = \
            act2[oh * Wp2:oh * Wp2 + OW2, :]

    # ---- conv3 (2x2, pad (1,0)) --------------------------------------------
    act3 = conv_taps(lambda r0, m: p3_ref[r0:r0 + m, :].astype(bf16),
                     w3_ref, b3_ref, kh3, kw3, Wp3, M3)      # (M3, 128)

    # ---- global average pool over the valid OH3*OW3 rows (junk masked) -----
    pooled = jnp.sum(act3 * mask_ref[...], axis=0, keepdims=True) \
        * (1.0 / float(OH3 * OW3))                           # (1, 128) f32

    # ---- fc1 + ReLU + (Dropout = identity at inference) + fc2 + sigmoid ----
    h = jnp.maximum(
        jnp.dot(pooled, fc1w_ref[...], preferred_element_type=f32)
        + fc1b_ref[...], 0.0)                                # (1, 64)
    z = jnp.dot(h, fc2w_ref[...], preferred_element_type=f32) + fc2b_ref[...]
    out_ref[...] = (1.0 / (1.0 + jnp.exp(-z))).reshape(out_ref.shape)


# ----------------------------------------------------------------------------
# wrapper
# ----------------------------------------------------------------------------
def cnn_forward_pallas(params, x):
    """x: (B, H, W, C) — same layout the PyTorch module receives (it permutes
    internally); stride-1 convs with the module's kernel sizes / paddings."""
    B, H, W, Cin = x.shape
    kh1, kw1, ph1, pw1 = 3, 4, 1, 1
    kh2, kw2, ph2, pw2 = 2, 2, 1, 0
    kh3, kw3, ph3, pw3 = 2, 2, 1, 0

    Hp1, Wp1 = H + 2 * ph1, W + 2 * pw1
    OH1, OW1 = Hp1 - kh1 + 1, Wp1 - kw1 + 1
    M1 = (OH1 - 1) * Wp1 + OW1

    Hp2, Wp2 = OH1 + 2 * ph2, OW1 + 2 * pw2
    OH2, OW2 = Hp2 - kh2 + 1, Wp2 - kw2 + 1
    M2 = (OH2 - 1) * Wp2 + OW2

    Hp3, Wp3 = OH2 + 2 * ph3, OW2 + 2 * pw3
    OH3, OW3 = Hp3 - kh3 + 1, Wp3 - kw3 + 1
    M3 = (OH3 - 1) * Wp3 + OW3

    C1 = params["conv1_b"].shape[0]      # 32
    C2 = params["conv2_b"].shape[0]      # 64
    C3 = params["conv3_b"].shape[0]      # 128
    hidden = params["fc1_b"].shape[0]    # 64
    nc = params["fc2_b"].shape[0]        # num_classes

    # Pre-pad the network input (it comes from HBM anyway) and flatten to the
    # (Hp*Wp, C) row layout the kernel uses. Intermediates never leave VMEM.
    xp = jnp.pad(x.astype(jnp.float32),
                 ((0, 0), (ph1, ph1), (pw1, pw1), (0, 0)))
    xp = xp.reshape(B, Hp1 * Wp1, Cin)

    # Per-tap weight matrices (kh*kw, Cin, Cout), real channel counts, bf16.
    w1 = params["conv1_w"].reshape(kh1 * kw1, Cin, C1).astype(jnp.bfloat16)
    w2 = params["conv2_w"].reshape(kh2 * kw2, C1, C2).astype(jnp.bfloat16)
    w3 = params["conv3_w"].reshape(kh3 * kw3, C2, C3).astype(jnp.bfloat16)
    b1 = params["conv1_b"].reshape(1, C1).astype(jnp.float32)
    b2 = params["conv2_b"].reshape(1, C2).astype(jnp.float32)
    b3 = params["conv3_b"].reshape(1, C3).astype(jnp.float32)
    fc1w = params["fc1_w"].astype(jnp.float32)
    fc1b = params["fc1_b"].reshape(1, hidden).astype(jnp.float32)
    fc2w = params["fc2_w"].astype(jnp.float32)
    fc2b = params["fc2_b"].reshape(1, nc).astype(jnp.float32)

    # Rows of the conv3 accumulator whose window straddles the W wrap are junk;
    # mask them out of the global average pool.
    mask = (jnp.arange(M3) % Wp3 < OW3).astype(jnp.float32).reshape(M3, 1)

    kernel = functools.partial(
        _fused_cnn_kernel,
        kh1=kh1, kw1=kw1, kh2=kh2, kw2=kw2, kh3=kh3, kw3=kw3,
        Wp1=Wp1, OH1=OH1, OW1=OW1, M1=M1,
        Wp2=Wp2, OH2=OH2, OW2=OW2, M2=M2,
        Wp3=Wp3, OH3=OH3, OW3=OW3, M3=M3)

    def full(rank):                      # whole-array block, shared by all steps
        return lambda b: (0,) * rank

    out = pl.pallas_call(
        kernel,
        out_shape=jax.ShapeDtypeStruct((B, 1, nc), jnp.float32),
        grid_spec=pltpu.PrefetchScalarGridSpec(
            num_scalar_prefetch=0,
            grid=(B,),
            in_specs=[
                pl.BlockSpec((1, Hp1 * Wp1, Cin), lambda b: (b, 0, 0)),
                pl.BlockSpec(w1.shape, full(3)),
                pl.BlockSpec(b1.shape, full(2)),
                pl.BlockSpec(w2.shape, full(3)),
                pl.BlockSpec(b2.shape, full(2)),
                pl.BlockSpec(w3.shape, full(3)),
                pl.BlockSpec(b3.shape, full(2)),
                pl.BlockSpec(fc1w.shape, full(2)),
                pl.BlockSpec(fc1b.shape, full(2)),
                pl.BlockSpec(fc2w.shape, full(2)),
                pl.BlockSpec(fc2b.shape, full(2)),
                pl.BlockSpec(mask.shape, full(2)),
            ],
            out_specs=pl.BlockSpec((1, 1, nc), lambda b: (b, 0, 0)),
            scratch_shapes=[
                pltpu.VMEM((Hp2 * Wp2, C1), jnp.float32),   # conv2 padded input
                pltpu.VMEM((Hp3 * Wp3, C2), jnp.float32),   # conv3 padded input
            ],
        ),
        compiler_params=pltpu.CompilerParams(
            dimension_semantics=("parallel",),              # batch across TCs
            vmem_limit_bytes=_VMEM_LIMIT),
    )(xp, w1, b1, w2, b2, w3, b3, fc1w, fc1b, fc2w, fc2b, mask)
    return out.reshape(B, nc)


# ----------------------------------------------------------------------------
# parameters + pure-JAX reference (for the self-check)
# ----------------------------------------------------------------------------
def init_params(key, n_channels, num_classes=1):
    ks = jax.random.split(key, 10)

    def winit(k, shape, fan_in):
        return (jax.random.normal(k, shape, jnp.float32)
                / jnp.sqrt(jnp.float32(fan_in)))

    return {
        # conv1: Conv2d(n_channels, 32, kernel=(3,4), padding=(1,1))  [HWIO]
        "conv1_w": winit(ks[0], (3, 4, n_channels, 32), n_channels * 3 * 4),
        "conv1_b": winit(ks[1], (32,), n_channels * 3 * 4),
        # conv2: Conv2d(32, 64, kernel=2, padding=(1,0))
        "conv2_w": winit(ks[2], (2, 2, 32, 64), 32 * 2 * 2),
        "conv2_b": winit(ks[3], (64,), 32 * 2 * 2),
        # conv3: Conv2d(64, 128, kernel=2, padding=(1,0))
        "conv3_w": winit(ks[4], (2, 2, 64, 128), 64 * 2 * 2),
        "conv3_b": winit(ks[5], (128,), 64 * 2 * 2),
        # fc1: Linear(128, 64), fc2: Linear(64, num_classes)
        "fc1_w": winit(ks[6], (128, 64), 128),
        "fc1_b": winit(ks[7], (64,), 128),
        "fc2_w": winit(ks[8], (64, num_classes), 64),
        "fc2_b": winit(ks[9], (num_classes,), 64),
    }


def cnn_forward_reference(params, x):
    def conv(y, w, b, pad):
        out = jax.lax.conv_general_dilated(
            y, w, window_strides=(1, 1),
            padding=((pad[0], pad[0]), (pad[1], pad[1])),
            dimension_numbers=("NHWC", "HWIO", "NHWC"))
        return jax.nn.relu(out + b)

    y = conv(x, params["conv1_w"], params["conv1_b"], (1, 1))
    y = conv(y, params["conv2_w"], params["conv2_b"], (1, 0))
    y = conv(y, params["conv3_w"], params["conv3_b"], (1, 0))
    pooled = y.mean(axis=(1, 2))
    h = jax.nn.relu(pooled @ params["fc1_w"] + params["fc1_b"])
    # Dropout(p=0.5) is identity in eval mode.
    return jax.nn.sigmoid(h @ params["fc2_w"] + params["fc2_b"])


if __name__ == "__main__":
    key = jax.random.PRNGKey(0)
    k_param, k_x = jax.random.split(key)
    n_channels = 4
    params = init_params(k_param, n_channels, num_classes=1)
    x = jax.random.normal(k_x, (2, 16, 16, n_channels), jnp.float32)

    out = jax.block_until_ready(jax.jit(cnn_forward_pallas)(params, x))

    assert out.shape == (2, 1), out.shape
    assert bool(jnp.all(jnp.isfinite(out)))
    assert bool(jnp.all((out >= 0.0) & (out <= 1.0)))  # sigmoid range

    ref = jax.jit(cnn_forward_reference)(params, x)
    # bf16 conv operands (f32 accumulation) vs the f32 reference.
    assert bool(jnp.allclose(out, ref, atol=3e-2)), (out, ref)

    print("KERNEL_OK")
</pallas_src>

<mosaic_0001>
module attributes {stable_mosaic.version = 11 : i64} {
  func.func @_fused_cnn_kernel(%arg0: i32, %arg1: memref<1x324x4xf32, #tpu.memory_space<vmem>>, %arg2: memref<12x4x32xbf16, #tpu.memory_space<vmem>>, %arg3: memref<1x32xf32, #tpu.memory_space<vmem>>, %arg4: memref<4x32x64xbf16, #tpu.memory_space<vmem>>, %arg5: memref<1x64xf32, #tpu.memory_space<vmem>>, %arg6: memref<4x64x128xbf16, #tpu.memory_space<vmem>>, %arg7: memref<1x128xf32, #tpu.memory_space<vmem>>, %arg8: memref<128x64xf32, #tpu.memory_space<vmem>>, %arg9: memref<1x64xf32, #tpu.memory_space<vmem>>, %arg10: memref<64x1xf32, #tpu.memory_space<vmem>>, %arg11: memref<1x1xf32, #tpu.memory_space<vmem>>, %arg12: memref<251x1xf32, #tpu.memory_space<vmem>>, %arg13: memref<1x1x1xf32, #tpu.memory_space<vmem>>, %arg14: memref<270x32xf32, #tpu.memory_space<vmem>>, %arg15: memref<266x64xf32, #tpu.memory_space<vmem>>) attributes {dimension_semantics = [#tpu.dimension_semantics<parallel>], iteration_bounds = array<i64: 2>, scalar_prefetch = 0 : i64, scratch_operands = 2 : i64, tpu.core_type = #tpu.core_type<tc>, window_params = [{transform_indices = @transform_0, window_bounds = array<i64: 1, 324, 4>}, {pipeline_mode = #tpu.pipeline_mode<synchronous>, transform_indices = @transform_1, window_bounds = array<i64: 12, 4, 32>}, {pipeline_mode = #tpu.pipeline_mode<synchronous>, transform_indices = @transform_2, window_bounds = array<i64: 1, 32>}, {pipeline_mode = #tpu.pipeline_mode<synchronous>, transform_indices = @transform_3, window_bounds = array<i64: 4, 32, 64>}, {pipeline_mode = #tpu.pipeline_mode<synchronous>, transform_indices = @transform_4, window_bounds = array<i64: 1, 64>}, {pipeline_mode = #tpu.pipeline_mode<synchronous>, transform_indices = @transform_5, window_bounds = array<i64: 4, 64, 128>}, {pipeline_mode = #tpu.pipeline_mode<synchronous>, transform_indices = @transform_6, window_bounds = array<i64: 1, 128>}, {pipeline_mode = #tpu.pipeline_mode<synchronous>, transform_indices = @transform_7, window_bounds = array<i64: 128, 64>}, {pipeline_mode = #tpu.pipeline_mode<synchronous>, transform_indices = @transform_8, window_bounds = array<i64: 1, 64>}, {pipeline_mode = #tpu.pipeline_mode<synchronous>, transform_indices = @transform_9, window_bounds = array<i64: 64, 1>}, {pipeline_mode = #tpu.pipeline_mode<synchronous>, transform_indices = @transform_10, window_bounds = array<i64: 1, 1>}, {pipeline_mode = #tpu.pipeline_mode<synchronous>, transform_indices = @transform_11, window_bounds = array<i64: 251, 1>}, {transform_indices = @transform_12, window_bounds = array<i64: 1, 1, 1>}]} {
    %c0 = arith.constant 0 : index
    %c0_0 = arith.constant 0 : index
    %c0_1 = arith.constant 0 : index
    %0 = vector.load %arg1[%c0, %c0_0, %c0_1] : memref<1x324x4xf32, #tpu.memory_space<vmem>>, vector<1x324x4xf32>
    %1 = vector.shape_cast %0 : vector<1x324x4xf32> to vector<324x4xf32>
    %cst = arith.constant 0.000000e+00 : f32
    %2 = vector.broadcast %cst : f32 to vector<285x32xf32>
    %3 = vector.extract_strided_slice %1 {offsets = [0, 0], sizes = [285, 4], strides = [1, 1]} : vector<324x4xf32> to vector<285x4xf32>
    %4 = arith.truncf %3 : vector<285x4xf32> to vector<285x4xbf16>
    %c0_2 = arith.constant 0 : index
    %c0_3 = arith.constant 0 : index
    %c0_4 = arith.constant 0 : index
    %5 = vector.load %arg2[%c0_2, %c0_3, %c0_4] : memref<12x4x32xbf16, #tpu.memory_space<vmem>>, vector<1x4x32xbf16>
    %6 = vector.shape_cast %5 : vector<1x4x32xbf16> to vector<4x32xbf16>
    %cst_5 = arith.constant dense<0.000000e+00> : vector<285x32xf32>
    %7 = tpu.matmul %4, %6, %cst_5 {dimension_numbers = #tpu.dot_dimension_numbers<[1], [0], [0], [1], [0, 0, 1, 1], [], []>} : vector<285x4xbf16>, vector<4x32xbf16>, vector<285x32xf32> -> vector<285x32xf32>
    %8 = arith.addf %2, %7 : vector<285x32xf32>
    %9 = vector.extract_strided_slice %1 {offsets = [1, 0], sizes = [285, 4], strides = [1, 1]} : vector<324x4xf32> to vector<285x4xf32>
    %10 = arith.truncf %9 : vector<285x4xf32> to vector<285x4xbf16>
    %c1 = arith.constant 1 : index
    %c0_6 = arith.constant 0 : index
    %c0_7 = arith.constant 0 : index
    %11 = vector.load %arg2[%c1, %c0_6, %c0_7] : memref<12x4x32xbf16, #tpu.memory_space<vmem>>, vector<1x4x32xbf16>
    %12 = vector.shape_cast %11 : vector<1x4x32xbf16> to vector<4x32xbf16>
    %cst_8 = arith.constant dense<0.000000e+00> : vector<285x32xf32>
    %13 = tpu.matmul %10, %12, %cst_8 {dimension_numbers = #tpu.dot_dimension_numbers<[1], [0], [0], [1], [0, 0, 1, 1], [], []>} : vector<285x4xbf16>, vector<4x32xbf16>, vector<285x32xf32> -> vector<285x32xf32>
    %14 = arith.addf %8, %13 : vector<285x32xf32>
    %15 = vector.extract_strided_slice %1 {offsets = [2, 0], sizes = [285, 4], strides = [1, 1]} : vector<324x4xf32> to vector<285x4xf32>
    %16 = arith.truncf %15 : vector<285x4xf32> to vector<285x4xbf16>
    %c2 = arith.constant 2 : index
    %c0_9 = arith.constant 0 : index
    %c0_10 = arith.constant 0 : index
    %17 = vector.load %arg2[%c2, %c0_9, %c0_10] : memref<12x4x32xbf16, #tpu.memory_space<vmem>>, vector<1x4x32xbf16>
    %18 = vector.shape_cast %17 : vector<1x4x32xbf16> to vector<4x32xbf16>
    %cst_11 = arith.constant dense<0.000000e+00> : vector<285x32xf32>
    %19 = tpu.matmul %16, %18, %cst_11 {dimension_numbers = #tpu.dot_dimension_numbers<[1], [0], [0], [1], [0, 0, 1, 1], [], []>} : vector<285x4xbf16>, vector<4x32xbf16>, vector<285x32xf32> -> vector<285x32xf32>
    %20 = arith.addf %14, %19 : vector<285x32xf32>
    %21 = vector.extract_strided_slice %1 {offsets = [3, 0], sizes = [285, 4], strides = [1, 1]} : vector<324x4xf32> to vector<285x4xf32>
    %22 = arith.truncf %21 : vector<285x4xf32> to vector<285x4xbf16>
    %c3 = arith.constant 3 : index
    %c0_12 = arith.constant 0 : index
    %c0_13 = arith.constant 0 : index
    %23 = vector.load %arg2[%c3, %c0_12, %c0_13] : memref<12x4x32xbf16, #tpu.memory_space<vmem>>, vector<1x4x32xbf16>
    %24 = vector.shape_cast %23 : vector<1x4x32xbf16> to vector<4x32xbf16>
    %cst_14 = arith.constant dense<0.000000e+00> : vector<285x32xf32>
    %25 = tpu.matmul %22, %24, %cst_14 {dimension_numbers = #tpu.dot_dimension_numbers<[1], [0], [0], [1], [0, 0, 1, 1], [], []>} : vector<285x4xbf16>, vector<4x32xbf16>, vector<285x32xf32> -> vector<285x32xf32>
    %26 = arith.addf %20, %25 : vector<285x32xf32>
    %27 = vector.extract_strided_slice %1 {offsets = [18, 0], sizes = [285, 4], strides = [1, 1]} : vector<324x4xf32> to vector<285x4xf32>
    %28 = arith.truncf %27 : vector<285x4xf32> to vector<285x4xbf16>
    %c4 = arith.constant 4 : index
    %c0_15 = arith.constant 0 : index
    %c0_16 = arith.constant 0 : index
    %29 = vector.load %arg2[%c4, %c0_15, %c0_16] : memref<12x4x32xbf16, #tpu.memory_space<vmem>>, vector<1x4x32xbf16>
    %30 = vector.shape_cast %29 : vector<1x4x32xbf16> to vector<4x32xbf16>
    %cst_17 = arith.constant dense<0.000000e+00> : vector<285x32xf32>
    %31 = tpu.matmul %28, %30, %cst_17 {dimension_numbers = #tpu.dot_dimension_numbers<[1], [0], [0], [1], [0, 0, 1, 1], [], []>} : vector<285x4xbf16>, vector<4x32xbf16>, vector<285x32xf32> -> vector<285x32xf32>
    %32 = arith.addf %26, %31 : vector<285x32xf32>
    %33 = vector.extract_strided_slice %1 {offsets = [19, 0], sizes = [285, 4], strides = [1, 1]} : vector<324x4xf32> to vector<285x4xf32>
    %34 = arith.truncf %33 : vector<285x4xf32> to vector<285x4xbf16>
    %c5 = arith.constant 5 : index
    %c0_18 = arith.constant 0 : index
    %c0_19 = arith.constant 0 : index
    %35 = vector.load %arg2[%c5, %c0_18, %c0_19] : memref<12x4x32xbf16, #tpu.memory_space<vmem>>, vector<1x4x32xbf16>
    %36 = vector.shape_cast %35 : vector<1x4x32xbf16> to vector<4x32xbf16>
    %cst_20 = arith.constant dense<0.000000e+00> : vector<285x32xf32>
    %37 = tpu.matmul %34, %36, %cst_20 {dimension_numbers = #tpu.dot_dimension_numbers<[1], [0], [0], [1], [0, 0, 1, 1], [], []>} : vector<285x4xbf16>, vector<4x32xbf16>, vector<285x32xf32> -> vector<285x32xf32>
    %38 = arith.addf %32, %37 : vector<285x32xf32>
    %39 = vector.extract_strided_slice %1 {offsets = [20, 0], sizes = [285, 4], strides = [1, 1]} : vector<324x4xf32> to vector<285x4xf32>
    %40 = arith.truncf %39 : vector<285x4xf32> to vector<285x4xbf16>
    %c6 = arith.constant 6 : index
    %c0_21 = arith.constant 0 : index
    %c0_22 = arith.constant 0 : index
    %41 = vector.load %arg2[%c6, %c0_21, %c0_22] : memref<12x4x32xbf16, #tpu.memory_space<vmem>>, vector<1x4x32xbf16>
    %42 = vector.shape_cast %41 : vector<1x4x32xbf16> to vector<4x32xbf16>
    %cst_23 = arith.constant dense<0.000000e+00> : vector<285x32xf32>
    %43 = tpu.matmul %40, %42, %cst_23 {dimension_numbers = #tpu.dot_dimension_numbers<[1], [0], [0], [1], [0, 0, 1, 1], [], []>} : vector<285x4xbf16>, vector<4x32xbf16>, vector<285x32xf32> -> vector<285x32xf32>
    %44 = arith.addf %38, %43 : vector<285x32xf32>
    %45 = vector.extract_strided_slice %1 {offsets = [21, 0], sizes = [285, 4], strides = [1, 1]} : vector<324x4xf32> to vector<285x4xf32>
    %46 = arith.truncf %45 : vector<285x4xf32> to vector<285x4xbf16>
    %c7 = arith.constant 7 : index
    %c0_24 = arith.constant 0 : index
    %c0_25 = arith.constant 0 : index
    %47 = vector.load %arg2[%c7, %c0_24, %c0_25] : memref<12x4x32xbf16, #tpu.memory_space<vmem>>, vector<1x4x32xbf16>
    %48 = vector.shape_cast %47 : vector<1x4x32xbf16> to vector<4x32xbf16>
    %cst_26 = arith.constant dense<0.000000e+00> : vector<285x32xf32>
    %49 = tpu.matmul %46, %48, %cst_26 {dimension_numbers = #tpu.dot_dimension_numbers<[1], [0], [0], [1], [0, 0, 1, 1], [], []>} : vector<285x4xbf16>, vector<4x32xbf16>, vector<285x32xf32> -> vector<285x32xf32>
    %50 = arith.addf %44, %49 : vector<285x32xf32>
    %51 = vector.extract_strided_slice %1 {offsets = [36, 0], sizes = [285, 4], strides = [1, 1]} : vector<324x4xf32> to vector<285x4xf32>
    %52 = arith.truncf %51 : vector<285x4xf32> to vector<285x4xbf16>
    %c8 = arith.constant 8 : index
    %c0_27 = arith.constant 0 : index
    %c0_28 = arith.constant 0 : index
    %53 = vector.load %arg2[%c8, %c0_27, %c0_28] : memref<12x4x32xbf16, #tpu.memory_space<vmem>>, vector<1x4x32xbf16>
    %54 = vector.shape_cast %53 : vector<1x4x32xbf16> to vector<4x32xbf16>
    %cst_29 = arith.constant dense<0.000000e+00> : vector<285x32xf32>
    %55 = tpu.matmul %52, %54, %cst_29 {dimension_numbers = #tpu.dot_dimension_numbers<[1], [0], [0], [1], [0, 0, 1, 1], [], []>} : vector<285x4xbf16>, vector<4x32xbf16>, vector<285x32xf32> -> vector<285x32xf32>
    %56 = arith.addf %50, %55 : vector<285x32xf32>
    %57 = vector.extract_strided_slice %1 {offsets = [37, 0], sizes = [285, 4], strides = [1, 1]} : vector<324x4xf32> to vector<285x4xf32>
    %58 = arith.truncf %57 : vector<285x4xf32> to vector<285x4xbf16>
    %c9 = arith.constant 9 : index
    %c0_30 = arith.constant 0 : index
    %c0_31 = arith.constant 0 : index
    %59 = vector.load %arg2[%c9, %c0_30, %c0_31] : memref<12x4x32xbf16, #tpu.memory_space<vmem>>, vector<1x4x32xbf16>
    %60 = vector.shape_cast %59 : vector<1x4x32xbf16> to vector<4x32xbf16>
    %cst_32 = arith.constant dense<0.000000e+00> : vector<285x32xf32>
    %61 = tpu.matmul %58, %60, %cst_32 {dimension_numbers = #tpu.dot_dimension_numbers<[1], [0], [0], [1], [0, 0, 1, 1], [], []>} : vector<285x4xbf16>, vector<4x32xbf16>, vector<285x32xf32> -> vector<285x32xf32>
    %62 = arith.addf %56, %61 : vector<285x32xf32>
    %63 = vector.extract_strided_slice %1 {offsets = [38, 0], sizes = [285, 4], strides = [1, 1]} : vector<324x4xf32> to vector<285x4xf32>
    %64 = arith.truncf %63 : vector<285x4xf32> to vector<285x4xbf16>
    %c10 = arith.constant 10 : index
    %c0_33 = arith.constant 0 : index
    %c0_34 = arith.constant 0 : index
    %65 = vector.load %arg2[%c10, %c0_33, %c0_34] : memref<12x4x32xbf16, #tpu.memory_space<vmem>>, vector<1x4x32xbf16>
    %66 = vector.shape_cast %65 : vector<1x4x32xbf16> to vector<4x32xbf16>
    %cst_35 = arith.constant dense<0.000000e+00> : vector<285x32xf32>
    %67 = tpu.matmul %64, %66, %cst_35 {dimension_numbers = #tpu.dot_dimension_numbers<[1], [0], [0], [1], [0, 0, 1, 1], [], []>} : vector<285x4xbf16>, vector<4x32xbf16>, vector<285x32xf32> -> vector<285x32xf32>
    %68 = arith.addf %62, %67 : vector<285x32xf32>
    %69 = vector.extract_strided_slice %1 {offsets = [39, 0], sizes = [285, 4], strides = [1, 1]} : vector<324x4xf32> to vector<285x4xf32>
    %70 = arith.truncf %69 : vector<285x4xf32> to vector<285x4xbf16>
    %c11 = arith.constant 11 : index
    %c0_36 = arith.constant 0 : index
    %c0_37 = arith.constant 0 : index
    %71 = vector.load %arg2[%c11, %c0_36, %c0_37] : memref<12x4x32xbf16, #tpu.memory_space<vmem>>, vector<1x4x32xbf16>
    %72 = vector.shape_cast %71 : vector<1x4x32xbf16> to vector<4x32xbf16>
    %cst_38 = arith.constant dense<0.000000e+00> : vector<285x32xf32>
    %73 = tpu.matmul %70, %72, %cst_38 {dimension_numbers = #tpu.dot_dimension_numbers<[1], [0], [0], [1], [0, 0, 1, 1], [], []>} : vector<285x4xbf16>, vector<4x32xbf16>, vector<285x32xf32> -> vector<285x32xf32>
    %74 = arith.addf %68, %73 : vector<285x32xf32>
    %c0_39 = arith.constant 0 : index
    %c0_40 = arith.constant 0 : index
    %75 = vector.load %arg3[%c0_39, %c0_40] : memref<1x32xf32, #tpu.memory_space<vmem>>, vector<1x32xf32>
    %76 = vector.broadcast %75 : vector<1x32xf32> to vector<285x32xf32>
    %77 = arith.addf %74, %76 : vector<285x32xf32>
    %cst_41 = arith.constant 0.000000e+00 : f32
    %78 = vector.broadcast %cst_41 : f32 to vector<285x32xf32>
    %79 = arith.maximumf %77, %78 : vector<285x32xf32>
    %cst_42 = arith.constant 0.000000e+00 : f32
    %80 = vector.broadcast %cst_42 : f32 to vector<270x32xf32>
    %c0_43 = arith.constant 0 : index
    %c0_44 = arith.constant 0 : index
    %81 = vector.load %arg14[%c0_43, %c0_44] : memref<270x32xf32, #tpu.memory_space<vmem>>, vector<270x32xf32>
    tpu.vector_store %arg14[%c0_43, %c0_44], %80 {strides = array<i32>} : memref<270x32xf32, #tpu.memory_space<vmem>>, vector<270x32xf32>,
    %82 = vector.extract_strided_slice %79 {offsets = [0, 0], sizes = [15, 32], strides = [1, 1]} : vector<285x32xf32> to vector<15x32xf32>
    %c15 = arith.constant 15 : index
    %c0_45 = arith.constant 0 : index
    %83 = vector.load %arg14[%c15, %c0_45] : memref<270x32xf32, #tpu.memory_space<vmem>>, vector<15x32xf32>
    tpu.vector_store %arg14[%c15, %c0_45], %82 {strides = array<i32>} : memref<270x32xf32, #tpu.memory_space<vmem>>, vector<15x32xf32>,
    %84 = vector.extract_strided_slice %79 {offsets = [18, 0], sizes = [15, 32], strides = [1, 1]} : vector<285x32xf32> to vector<15x32xf32>
    %c30 = arith.constant 30 : index
    %c0_46 = arith.constant 0 : index
    %85 = vector.load %arg14[%c30, %c0_46] : memref<270x32xf32, #tpu.memory_space<vmem>>, vector<15x32xf32>
    tpu.vector_store %arg14[%c30, %c0_46], %84 {strides = array<i32>} : memref<270x32xf32, #tpu.memory_space<vmem>>, vector<15x32xf32>,
    %86 = vector.extract_strided_slice %79 {offsets = [36, 0], sizes = [15, 32], strides = [1, 1]} : vector<285x32xf32> to vector<15x32xf32>
    %c45 = arith.constant 45 : index
    %c0_47 = arith.constant 0 : index
    %87 = vector.load %arg14[%c45, %c0_47] : memref<270x32xf32, #tpu.memory_space<vmem>>, vector<15x32xf32>
    tpu.vector_store %arg14[%c45, %c0_47], %86 {strides = array<i32>} : memref<270x32xf32, #tpu.memory_space<vmem>>, vector<15x32xf32>,
    %88 = vector.extract_strided_slice %79 {offsets = [54, 0], sizes = [15, 32], strides = [1, 1]} : vector<285x32xf32> to vector<15x32xf32>
    %c60 = arith.constant 60 : index
    %c0_48 = arith.constant 0 : index
    %89 = vector.load %arg14[%c60, %c0_48] : memref<270x32xf32, #tpu.memory_space<vmem>>, vector<15x32xf32>
    tpu.vector_store %arg14[%c60, %c0_48], %88 {strides = array<i32>} : memref<270x32xf32, #tpu.memory_space<vmem>>, vector<15x32xf32>,
    %90 = vector.extract_strided_slice %79 {offsets = [72, 0], sizes = [15, 32], strides = [1, 1]} : vector<285x32xf32> to vector<15x32xf32>
    %c75 = arith.constant 75 : index
    %c0_49 = arith.constant 0 : index
    %91 = vector.load %arg14[%c75, %c0_49] : memref<270x32xf32, #tpu.memory_space<vmem>>, vector<15x32xf32>
    tpu.vector_store %arg14[%c75, %c0_49], %90 {strides = array<i32>} : memref<270x32xf32, #tpu.memory_space<vmem>>, vector<15x32xf32>,
    %92 = vector.extract_strided_slice %79 {offsets = [90, 0], sizes = [15, 32], strides = [1, 1]} : vector<285x32xf32> to vector<15x32xf32>
    %c90 = arith.constant 90 : index
    %c0_50 = arith.constant 0 : index
    %93 = vector.load %arg14[%c90, %c0_50] : memref<270x32xf32, #tpu.memory_space<vmem>>, vector<15x32xf32>
    tpu.vector_store %arg14[%c90, %c0_50], %92 {strides = array<i32>} : memref<270x32xf32, #tpu.memory_space<vmem>>, vector<15x32xf32>,
    %94 = vector.extract_strided_slice %79 {offsets = [108, 0], sizes = [15, 32], strides = [1, 1]} : vector<285x32xf32> to vector<15x32xf32>
    %c105 = arith.constant 105 : index
    %c0_51 = arith.constant 0 : index
    %95 = vector.load %arg14[%c105, %c0_51] : memref<270x32xf32, #tpu.memory_space<vmem>>, vector<15x32xf32>
    tpu.vector_store %arg14[%c105, %c0_51], %94 {strides = array<i32>} : memref<270x32xf32, #tpu.memory_space<vmem>>, vector<15x32xf32>,
    %96 = vector.extract_strided_slice %79 {offsets = [126, 0], sizes = [15, 32], strides = [1, 1]} : vector<285x32xf32> to vector<15x32xf32>
    %c120 = arith.constant 120 : index
    %c0_52 = arith.constant 0 : index
    %97 = vector.load %arg14[%c120, %c0_52] : memref<270x32xf32, #tpu.memory_space<vmem>>, vector<15x32xf32>
    tpu.vector_store %arg14[%c120, %c0_52], %96 {strides = array<i32>} : memref<270x32xf32, #tpu.memory_space<vmem>>, vector<15x32xf32>,
    %98 = vector.extract_strided_slice %79 {offsets = [144, 0], sizes = [15, 32], strides = [1, 1]} : vector<285x32xf32> to vector<15x32xf32>
    %c135 = arith.constant 135 : index
    %c0_53 = arith.constant 0 : index
    %99 = vector.load %arg14[%c135, %c0_53] : memref<270x32xf32, #tpu.memory_space<vmem>>, vector<15x32xf32>
    tpu.vector_store %arg14[%c135, %c0_53], %98 {strides = array<i32>} : memref<270x32xf32, #tpu.memory_space<vmem>>, vector<15x32xf32>,
    %100 = vector.extract_strided_slice %79 {offsets = [162, 0], sizes = [15, 32], strides = [1, 1]} : vector<285x32xf32> to vector<15x32xf32>
    %c150 = arith.constant 150 : index
    %c0_54 = arith.constant 0 : index
    %101 = vector.load %arg14[%c150, %c0_54] : memref<270x32xf32, #tpu.memory_space<vmem>>, vector<15x32xf32>
    tpu.vector_store %arg14[%c150, %c0_54], %100 {strides = array<i32>} : memref<270x32xf32, #tpu.memory_space<vmem>>, vector<15x32xf32>,
    %102 = vector.extract_strided_slice %79 {offsets = [180, 0], sizes = [15, 32], strides = [1, 1]} : vector<285x32xf32> to vector<15x32xf32>
    %c165 = arith.constant 165 : index
    %c0_55 = arith.constant 0 : index
    %103 = vector.load %arg14[%c165, %c0_55] : memref<270x32xf32, #tpu.memory_space<vmem>>, vector<15x32xf32>
    tpu.vector_store %arg14[%c165, %c0_55], %102 {strides = array<i32>} : memref<270x32xf32, #tpu.memory_space<vmem>>, vector<15x32xf32>,
    %104 = vector.extract_strided_slice %79 {offsets = [198, 0], sizes = [15, 32], strides = [1, 1]} : vector<285x32xf32> to vector<15x32xf32>
    %c180 = arith.constant 180 : index
    %c0_56 = arith.constant 0 : index
    %105 = vector.load %arg14[%c180, %c0_56] : memref<270x32xf32, #tpu.memory_space<vmem>>, vector<15x32xf32>
    tpu.vector_store %arg14[%c180, %c0_56], %104 {strides = array<i32>} : memref<270x32xf32, #tpu.memory_space<vmem>>, vector<15x32xf32>,
    %106 = vector.extract_strided_slice %79 {offsets = [216, 0], sizes = [15, 32], strides = [1, 1]} : vector<285x32xf32> to vector<15x32xf32>
    %c195 = arith.constant 195 : index
    %c0_57 = arith.constant 0 : index
    %107 = vector.load %arg14[%c195, %c0_57] : memref<270x32xf32, #tpu.memory_space<vmem>>, vector<15x32xf32>
    tpu.vector_store %arg14[%c195, %c0_57], %106 {strides = array<i32>} : memref<270x32xf32, #tpu.memory_space<vmem>>, vector<15x32xf32>,
    %108 = vector.extract_strided_slice %79 {offsets = [234, 0], sizes = [15, 32], strides = [1, 1]} : vector<285x32xf32> to vector<15x32xf32>
    %c210 = arith.constant 210 : index
    %c0_58 = arith.constant 0 : index
    %109 = vector.load %arg14[%c210, %c0_58] : memref<270x32xf32, #tpu.memory_space<vmem>>, vector<15x32xf32>
    tpu.vector_store %arg14[%c210, %c0_58], %108 {strides = array<i32>} : memref<270x32xf32, #tpu.memory_space<vmem>>, vector<15x32xf32>,
    %110 = vector.extract_strided_slice %79 {offsets = [252, 0], sizes = [15, 32], strides = [1, 1]} : vector<285x32xf32> to vector<15x32xf32>
    %c225 = arith.constant 225 : index
    %c0_59 = arith.constant 0 : index
    %111 = vector.load %arg14[%c225, %c0_59] : memref<270x32xf32, #tpu.memory_space<vmem>>, vector<15x32xf32>
    tpu.vector_store %arg14[%c225, %c0_59], %110 {strides = array<i32>} : memref<270x32xf32, #tpu.memory_space<vmem>>, vector<15x32xf32>,
    %112 = vector.extract_strided_slice %79 {offsets = [270, 0], sizes = [15, 32], strides = [1, 1]} : vector<285x32xf32> to vector<15x32xf32>
    %c240 = arith.constant 240 : index
    %c0_60 = arith.constant 0 : index
    %113 = vector.load %arg14[%c240, %c0_60] : memref<270x32xf32, #tpu.memory_space<vmem>>, vector<15x32xf32>
    tpu.vector_store %arg14[%c240, %c0_60], %112 {strides = array<i32>} : memref<270x32xf32, #tpu.memory_space<vmem>>, vector<15x32xf32>,
    %cst_61 = arith.constant 0.000000e+00 : f32
    %114 = vector.broadcast %cst_61 : f32 to vector<254x64xf32>
    %c0_62 = arith.constant 0 : index
    %c0_63 = arith.constant 0 : index
    %115 = vector.load %arg14[%c0_62, %c0_63] : memref<270x32xf32, #tpu.memory_space<vmem>>, vector<254x32xf32>
    %116 = arith.truncf %115 : vector<254x32xf32> to vector<254x32xbf16>
    %c0_64 = arith.constant 0 : index
    %c0_65 = arith.constant 0 : index
    %c0_66 = arith.constant 0 : index
    %117 = vector.load %arg4[%c0_64, %c0_65, %c0_66] : memref<4x32x64xbf16, #tpu.memory_space<vmem>>, vector<1x32x64xbf16>
    %118 = vector.shape_cast %117 : vector<1x32x64xbf16> to vector<32x64xbf16>
    %cst_67 = arith.constant dense<0.000000e+00> : vector<254x64xf32>
    %119 = tpu.matmul %116, %118, %cst_67 {dimension_numbers = #tpu.dot_dimension_numbers<[1], [0], [0], [1], [0, 0, 1, 1], [], []>} : vector<254x32xbf16>, vector<32x64xbf16>, vector<254x64xf32> -> vector<254x64xf32>
    %120 = arith.addf %114, %119 : vector<254x64xf32>
    %c1_68 = arith.constant 1 : index
    %c0_69 = arith.constant 0 : index
    %121 = vector.load %arg14[%c1_68, %c0_69] : memref<270x32xf32, #tpu.memory_space<vmem>>, vector<254x32xf32>
    %122 = arith.truncf %121 : vector<254x32xf32> to vector<254x32xbf16>
    %c1_70 = arith.constant 1 : index
    %c0_71 = arith.constant 0 : index
    %c0_72 = arith.constant 0 : index
    %123 = vector.load %arg4[%c1_70, %c0_71, %c0_72] : memref<4x32x64xbf16, #tpu.memory_space<vmem>>, vector<1x32x64xbf16>
    %124 = vector.shape_cast %123 : vector<1x32x64xbf16> to vector<32x64xbf16>
    %cst_73 = arith.constant dense<0.000000e+00> : vector<254x64xf32>
    %125 = tpu.matmul %122, %124, %cst_73 {dimension_numbers = #tpu.dot_dimension_numbers<[1], [0], [0], [1], [0, 0, 1, 1], [], []>} : vector<254x32xbf16>, vector<32x64xbf16>, vector<254x64xf32> -> vector<254x64xf32>
    %126 = arith.addf %120, %125 : vector<254x64xf32>
    %c15_74 = arith.constant 15 : index
    %c0_75 = arith.constant 0 : index
    %127 = vector.load %arg14[%c15_74, %c0_75] : memref<270x32xf32, #tpu.memory_space<vmem>>, vector<254x32xf32>
    %128 = arith.truncf %127 : vector<254x32xf32> to vector<254x32xbf16>
    %c2_76 = arith.constant 2 : index
    %c0_77 = arith.constant 0 : index
    %c0_78 = arith.constant 0 : index
    %129 = vector.load %arg4[%c2_76, %c0_77, %c0_78] : memref<4x32x64xbf16, #tpu.memory_space<vmem>>, vector<1x32x64xbf16>
    %130 = vector.shape_cast %129 : vector<1x32x64xbf16> to vector<32x64xbf16>
    %cst_79 = arith.constant dense<0.000000e+00> : vector<254x64xf32>
    %131 = tpu.matmul %128, %130, %cst_79 {dimension_numbers = #tpu.dot_dimension_numbers<[1], [0], [0], [1], [0, 0, 1, 1], [], []>} : vector<254x32xbf16>, vector<32x64xbf16>, vector<254x64xf32> -> vector<254x64xf32>
    %132 = arith.addf %126, %131 : vector<254x64xf32>
    %c16 = arith.constant 16 : index
    %c0_80 = arith.constant 0 : index
    %133 = vector.load %arg14[%c16, %c0_80] : memref<270x32xf32, #tpu.memory_space<vmem>>, vector<254x32xf32>
    %134 = arith.truncf %133 : vector<254x32xf32> to vector<254x32xbf16>
    %c3_81 = arith.constant 3 : index
    %c0_82 = arith.constant 0 : index
    %c0_83 = arith.constant 0 : index
    %135 = vector.load %arg4[%c3_81, %c0_82, %c0_83] : memref<4x32x64xbf16, #tpu.memory_space<vmem>>, vector<1x32x64xbf16>
    %136 = vector.shape_cast %135 : vector<1x32x64xbf16> to vector<32x64xbf16>
    %cst_84 = arith.constant dense<0.000000e+00> : vector<254x64xf32>
    %137 = tpu.matmul %134, %136, %cst_84 {dimension_numbers = #tpu.dot_dimension_numbers<[1], [0], [0], [1], [0, 0, 1, 1], [], []>} : vector<254x32xbf16>, vector<32x64xbf16>, vector<254x64xf32> -> vector<254x64xf32>
    %138 = arith.addf %132, %137 : vector<254x64xf32>
    %c0_85 = arith.constant 0 : index
    %c0_86 = arith.constant 0 : index
    %139 = vector.load %arg5[%c0_85, %c0_86] : memref<1x64xf32, #tpu.memory_space<vmem>>, vector<1x64xf32>
    %140 = vector.broadcast %139 : vector<1x64xf32> to vector<254x64xf32>
    %141 = arith.addf %138, %140 : vector<254x64xf32>
    %cst_87 = arith.constant 0.000000e+00 : f32
    %142 = vector.broadcast %cst_87 : f32 to vector<254x64xf32>
    %143 = arith.maximumf %141, %142 : vector<254x64xf32>
    %cst_88 = arith.constant 0.000000e+00 : f32
    %144 = vector.broadcast %cst_88 : f32 to vector<266x64xf32>
    %c0_89 = arith.constant 0 : index
    %c0_90 = arith.constant 0 : index
    %145 = vector.load %arg15[%c0_89, %c0_90] : memref<266x64xf32, #tpu.memory_space<vmem>>, vector<266x64xf32>
    tpu.vector_store %arg15[%c0_89, %c0_90], %144 {strides = array<i32>} : memref<266x64xf32, #tpu.memory_space<vmem>>, vector<266x64xf32>,
    %146 = vector.extract_strided_slice %143 {offsets = [0, 0], sizes = [14, 64], strides = [1, 1]} : vector<254x64xf32> to vector<14x64xf32>
    %c14 = arith.constant 14 : index
    %c0_91 = arith.constant 0 : index
    %147 = vector.load %arg15[%c14, %c0_91] : memref<266x64xf32, #tpu.memory_space<vmem>>, vector<14x64xf32>
    tpu.vector_store %arg15[%c14, %c0_91], %146 {strides = array<i32>} : memref<266x64xf32, #tpu.memory_space<vmem>>, vector<14x64xf32>,
    %148 = vector.extract_strided_slice %143 {offsets = [15, 0], sizes = [14, 64], strides = [1, 1]} : vector<254x64xf32> to vector<14x64xf32>
    %c28 = arith.constant 28 : index
    %c0_92 = arith.constant 0 : index
    %149 = vector.load %arg15[%c28, %c0_92] : memref<266x64xf32, #tpu.memory_space<vmem>>, vector<14x64xf32>
    tpu.vector_store %arg15[%c28, %c0_92], %148 {strides = array<i32>} : memref<266x64xf32, #tpu.memory_space<vmem>>, vector<14x64xf32>,
    %150 = vector.extract_strided_slice %143 {offsets = [30, 0], sizes = [14, 64], strides = [1, 1]} : vector<254x64xf32> to vector<14x64xf32>
    %c42 = arith.constant 42 : index
    %c0_93 = arith.constant 0 : index
    %151 = vector.load %arg15[%c42, %c0_93] : memref<266x64xf32, #tpu.memory_space<vmem>>, vector<14x64xf32>
    tpu.vector_store %arg15[%c42, %c0_93], %150 {strides = array<i32>} : memref<266x64xf32, #tpu.memory_space<vmem>>, vector<14x64xf32>,
    %152 = vector.extract_strided_slice %143 {offsets = [45, 0], sizes = [14, 64], strides = [1, 1]} : vector<254x64xf32> to vector<14x64xf32>
    %c56 = arith.constant 56 : index
    %c0_94 = arith.constant 0 : index
    %153 = vector.load %arg15[%c56, %c0_94] : memref<266x64xf32, #tpu.memory_space<vmem>>, vector<14x64xf32>
    tpu.vector_store %arg15[%c56, %c0_94], %152 {strides = array<i32>} : memref<266x64xf32, #tpu.memory_space<vmem>>, vector<14x64xf32>,
    %154 = vector.extract_strided_slice %143 {offsets = [60, 0], sizes = [14, 64], strides = [1, 1]} : vector<254x64xf32> to vector<14x64xf32>
    %c70 = arith.constant 70 : index
    %c0_95 = arith.constant 0 : index
    %155 = vector.load %arg15[%c70, %c0_95] : memref<266x64xf32, #tpu.memory_space<vmem>>, vector<14x64xf32>
    tpu.vector_store %arg15[%c70, %c0_95], %154 {strides = array<i32>} : memref<266x64xf32, #tpu.memory_space<vmem>>, vector<14x64xf32>,
    %156 = vector.extract_strided_slice %143 {offsets = [75, 0], sizes = [14, 64], strides = [1, 1]} : vector<254x64xf32> to vector<14x64xf32>
    %c84 = arith.constant 84 : index
    %c0_96 = arith.constant 0 : index
    %157 = vector.load %arg15[%c84, %c0_96] : memref<266x64xf32, #tpu.memory_space<vmem>>, vector<14x64xf32>
    tpu.vector_store %arg15[%c84, %c0_96], %156 {strides = array<i32>} : memref<266x64xf32, #tpu.memory_space<vmem>>, vector<14x64xf32>,
    %158 = vector.extract_strided_slice %143 {offsets = [90, 0], sizes = [14, 64], strides = [1, 1]} : vector<254x64xf32> to vector<14x64xf32>
    %c98 = arith.constant 98 : index
    %c0_97 = arith.constant 0 : index
    %159 = vector.load %arg15[%c98, %c0_97] : memref<266x64xf32, #tpu.memory_space<vmem>>, vector<14x64xf32>
    tpu.vector_store %arg15[%c98, %c0_97], %158 {strides = array<i32>} : memref<266x64xf32, #tpu.memory_space<vmem>>, vector<14x64xf32>,
    %160 = vector.extract_strided_slice %143 {offsets = [105, 0], sizes = [14, 64], strides = [1, 1]} : vector<254x64xf32> to vector<14x64xf32>
    %c112 = arith.constant 112 : index
    %c0_98 = arith.constant 0 : index
    %161 = vector.load %arg15[%c112, %c0_98] : memref<266x64xf32, #tpu.memory_space<vmem>>, vector<14x64xf32>
    tpu.vector_store %arg15[%c112, %c0_98], %160 {strides = array<i32>} : memref<266x64xf32, #tpu.memory_space<vmem>>, vector<14x64xf32>,
    %162 = vector.extract_strided_slice %143 {offsets = [120, 0], sizes = [14, 64], strides = [1, 1]} : vector<254x64xf32> to vector<14x64xf32>
    %c126 = arith.constant 126 : index
    %c0_99 = arith.constant 0 : index
    %163 = vector.load %arg15[%c126, %c0_99] : memref<266x64xf32, #tpu.memory_space<vmem>>, vector<14x64xf32>
    tpu.vector_store %arg15[%c126, %c0_99], %162 {strides = array<i32>} : memref<266x64xf32, #tpu.memory_space<vmem>>, vector<14x64xf32>,
    %164 = vector.extract_strided_slice %143 {offsets = [135, 0], sizes = [14, 64], strides = [1, 1]} : vector<254x64xf32> to vector<14x64xf32>
    %c140 = arith.constant 140 : index
    %c0_100 = arith.constant 0 : index
    %165 = vector.load %arg15[%c140, %c0_100] : memref<266x64xf32, #tpu.memory_space<vmem>>, vector<14x64xf32>
    tpu.vector_store %arg15[%c140, %c0_100], %164 {strides = array<i32>} : memref<266x64xf32, #tpu.memory_space<vmem>>, vector<14x64xf32>,
    %166 = vector.extract_strided_slice %143 {offsets = [150, 0], sizes = [14, 64], strides = [1, 1]} : vector<254x64xf32> to vector<14x64xf32>
    %c154 = arith.constant 154 : index
    %c0_101 = arith.constant 0 : index
    %167 = vector.load %arg15[%c154, %c0_101] : memref<266x64xf32, #tpu.memory_space<vmem>>, vector<14x64xf32>
    tpu.vector_store %arg15[%c154, %c0_101], %166 {strides = array<i32>} : memref<266x64xf32, #tpu.memory_space<vmem>>, vector<14x64xf32>,
    %168 = vector.extract_strided_slice %143 {offsets = [165, 0], sizes = [14, 64], strides = [1, 1]} : vector<254x64xf32> to vector<14x64xf32>
    %c168 = arith.constant 168 : index
    %c0_102 = arith.constant 0 : index
    %169 = vector.load %arg15[%c168, %c0_102] : memref<266x64xf32, #tpu.memory_space<vmem>>, vector<14x64xf32>
    tpu.vector_store %arg15[%c168, %c0_102], %168 {strides = array<i32>} : memref<266x64xf32, #tpu.memory_space<vmem>>, vector<14x64xf32>,
    %170 = vector.extract_strided_slice %143 {offsets = [180, 0], sizes = [14, 64], strides = [1, 1]} : vector<254x64xf32> to vector<14x64xf32>
    %c182 = arith.constant 182 : index
    %c0_103 = arith.constant 0 : index
    %171 = vector.load %arg15[%c182, %c0_103] : memref<266x64xf32, #tpu.memory_space<vmem>>, vector<14x64xf32>
    tpu.vector_store %arg15[%c182, %c0_103], %170 {strides = array<i32>} : memref<266x64xf32, #tpu.memory_space<vmem>>, vector<14x64xf32>,
    %172 = vector.extract_strided_slice %143 {offsets = [195, 0], sizes = [14, 64], strides = [1, 1]} : vector<254x64xf32> to vector<14x64xf32>
    %c196 = arith.constant 196 : index
    %c0_104 = arith.constant 0 : index
    %173 = vector.load %arg15[%c196, %c0_104] : memref<266x64xf32, #tpu.memory_space<vmem>>, vector<14x64xf32>
    tpu.vector_store %arg15[%c196, %c0_104], %172 {strides = array<i32>} : memref<266x64xf32, #tpu.memory_space<vmem>>, vector<14x64xf32>,
    %174 = vector.extract_strided_slice %143 {offsets = [210, 0], sizes = [14, 64], strides = [1, 1]} : vector<254x64xf32> to vector<14x64xf32>
    %c210_105 = arith.constant 210 : index
    %c0_106 = arith.constant 0 : index
    %175 = vector.load %arg15[%c210_105, %c0_106] : memref<266x64xf32, #tpu.memory_space<vmem>>, vector<14x64xf32>
    tpu.vector_store %arg15[%c210_105, %c0_106], %174 {strides = array<i32>} : memref<266x64xf32, #tpu.memory_space<vmem>>, vector<14x64xf32>,
    %176 = vector.extract_strided_slice %143 {offsets = [225, 0], sizes = [14, 64], strides = [1, 1]} : vector<254x64xf32> to vector<14x64xf32>
    %c224 = arith.constant 224 : index
    %c0_107 = arith.constant 0 : index
    %177 = vector.load %arg15[%c224, %c0_107] : memref<266x64xf32, #tpu.memory_space<vmem>>, vector<14x64xf32>
    tpu.vector_store %arg15[%c224, %c0_107], %176 {strides = array<i32>} : memref<266x64xf32, #tpu.memory_space<vmem>>, vector<14x64xf32>,
    %178 = vector.extract_strided_slice %143 {offsets = [240, 0], sizes = [14, 64], strides = [1, 1]} : vector<254x64xf32> to vector<14x64xf32>
    %c238 = arith.constant 238 : index
    %c0_108 = arith.constant 0 : index
    %179 = vector.load %arg15[%c238, %c0_108] : memref<266x64xf32, #tpu.memory_space<vmem>>, vector<14x64xf32>
    tpu.vector_store %arg15[%c238, %c0_108], %178 {strides = array<i32>} : memref<266x64xf32, #tpu.memory_space<vmem>>, vector<14x64xf32>,
    %cst_109 = arith.constant 0.000000e+00 : f32
    %180 = vector.broadcast %cst_109 : f32 to vector<251x128xf32>
    %c0_110 = arith.constant 0 : index
    %c0_111 = arith.constant 0 : index
    %181 = vector.load %arg15[%c0_110, %c0_111] : memref<266x64xf32, #tpu.memory_space<vmem>>, vector<251x64xf32>
    %182 = arith.truncf %181 : vector<251x64xf32> to vector<251x64xbf16>
    %c0_112 = arith.constant 0 : index
    %c0_113 = arith.constant 0 : index
    %c0_114 = arith.constant 0 : index
    %183 = vector.load %arg6[%c0_112, %c0_113, %c0_114] : memref<4x64x128xbf16, #tpu.memory_space<vmem>>, vector<1x64x128xbf16>
    %184 = vector.shape_cast %183 : vector<1x64x128xbf16> to vector<64x128xbf16>
    %cst_115 = arith.constant dense<0.000000e+00> : vector<251x128xf32>
    %185 = tpu.matmul %182, %184, %cst_115 {dimension_numbers = #tpu.dot_dimension_numbers<[1], [0], [0], [1], [0, 0, 1, 1], [], []>} : vector<251x64xbf16>, vector<64x128xbf16>, vector<251x128xf32> -> vector<251x128xf32>
    %186 = arith.addf %180, %185 : vector<251x128xf32>
    %c1_116 = arith.constant 1 : index
    %c0_117 = arith.constant 0 : index
    %187 = vector.load %arg15[%c1_116, %c0_117] : memref<266x64xf32, #tpu.memory_space<vmem>>, vector<251x64xf32>
    %188 = arith.truncf %187 : vector<251x64xf32> to vector<251x64xbf16>
    %c1_118 = arith.constant 1 : index
    %c0_119 = arith.constant 0 : index
    %c0_120 = arith.constant 0 : index
    %189 = vector.load %arg6[%c1_118, %c0_119, %c0_120] : memref<4x64x128xbf16, #tpu.memory_space<vmem>>, vector<1x64x128xbf16>
    %190 = vector.shape_cast %189 : vector<1x64x128xbf16> to vector<64x128xbf16>
    %cst_121 = arith.constant dense<0.000000e+00> : vector<251x128xf32>
    %191 = tpu.matmul %188, %190, %cst_121 {dimension_numbers = #tpu.dot_dimension_numbers<[1], [0], [0], [1], [0, 0, 1, 1], [], []>} : vector<251x64xbf16>, vector<64x128xbf16>, vector<251x128xf32> -> vector<251x128xf32>
    %192 = arith.addf %186, %191 : vector<251x128xf32>
    %c14_122 = arith.constant 14 : index
    %c0_123 = arith.constant 0 : index
    %193 = vector.load %arg15[%c14_122, %c0_123] : memref<266x64xf32, #tpu.memory_space<vmem>>, vector<251x64xf32>
    %194 = arith.truncf %193 : vector<251x64xf32> to vector<251x64xbf16>
    %c2_124 = arith.constant 2 : index
    %c0_125 = arith.constant 0 : index
    %c0_126 = arith.constant 0 : index
    %195 = vector.load %arg6[%c2_124, %c0_125, %c0_126] : memref<4x64x128xbf16, #tpu.memory_space<vmem>>, vector<1x64x128xbf16>
    %196 = vector.shape_cast %195 : vector<1x64x128xbf16> to vector<64x128xbf16>
    %cst_127 = arith.constant dense<0.000000e+00> : vector<251x128xf32>
    %197 = tpu.matmul %194, %196, %cst_127 {dimension_numbers = #tpu.dot_dimension_numbers<[1], [0], [0], [1], [0, 0, 1, 1], [], []>} : vector<251x64xbf16>, vector<64x128xbf16>, vector<251x128xf32> -> vector<251x128xf32>
    %198 = arith.addf %192, %197 : vector<251x128xf32>
    %c15_128 = arith.constant 15 : index
    %c0_129 = arith.constant 0 : index
    %199 = vector.load %arg15[%c15_128, %c0_129] : memref<266x64xf32, #tpu.memory_space<vmem>>, vector<251x64xf32>
    %200 = arith.truncf %199 : vector<251x64xf32> to vector<251x64xbf16>
    %c3_130 = arith.constant 3 : index
    %c0_131 = arith.constant 0 : index
    %c0_132 = arith.constant 0 : index
    %201 = vector.load %arg6[%c3_130, %c0_131, %c0_132] : memref<4x64x128xbf16, #tpu.memory_space<vmem>>, vector<1x64x128xbf16>
    %202 = vector.shape_cast %201 : vector<1x64x128xbf16> to vector<64x128xbf16>
    %cst_133 = arith.constant dense<0.000000e+00> : vector<251x128xf32>
    %203 = tpu.matmul %200, %202, %cst_133 {dimension_numbers = #tpu.dot_dimension_numbers<[1], [0], [0], [1], [0, 0, 1, 1], [], []>} : vector<251x64xbf16>, vector<64x128xbf16>, vector<251x128xf32> -> vector<251x128xf32>
    %204 = arith.addf %198, %203 : vector<251x128xf32>
    %c0_134 = arith.constant 0 : index
    %c0_135 = arith.constant 0 : index
    %205 = vector.load %arg7[%c0_134, %c0_135] : memref<1x128xf32, #tpu.memory_space<vmem>>, vector<1x128xf32>
    %206 = vector.broadcast %205 : vector<1x128xf32> to vector<251x128xf32>
    %207 = arith.addf %204, %206 : vector<251x128xf32>
    %cst_136 = arith.constant 0.000000e+00 : f32
    %208 = vector.broadcast %cst_136 : f32 to vector<251x128xf32>
    %209 = arith.maximumf %207, %208 : vector<251x128xf32>
    %c0_137 = arith.constant 0 : index
    %c0_138 = arith.constant 0 : index
    %210 = vector.load %arg12[%c0_137, %c0_138] : memref<251x1xf32, #tpu.memory_space<vmem>>, vector<251x1xf32>
    %211 = vector.broadcast %210 : vector<251x1xf32> to vector<251x128xf32>
    %212 = arith.mulf %209, %211 : vector<251x128xf32>
    %cst_139 = arith.constant dense<0.000000e+00> : vector<128xf32>
    %213 = vector.multi_reduction <add>, %212, %cst_139 [0] : vector<251x128xf32> to vector<128xf32>
    %214 = vector.shape_cast %213 : vector<128xf32> to vector<1x128xf32>
    %cst_140 = arith.constant 0.00427350448 : f32
    %215 = vector.broadcast %cst_140 : f32 to vector<1x128xf32>
    %216 = arith.mulf %214, %215 : vector<1x128xf32>
    %c0_141 = arith.constant 0 : index
    %c0_142 = arith.constant 0 : index
    %217 = vector.load %arg8[%c0_141, %c0_142] : memref<128x64xf32, #tpu.memory_space<vmem>>, vector<128x64xf32>
    %cst_143 = arith.constant dense<0.000000e+00> : vector<1x64xf32>
    %218 = tpu.matmul %216, %217, %cst_143 {dimension_numbers = #tpu.dot_dimension_numbers<[1], [0], [0], [1], [0, 0, 1, 1], [], []>} : vector<1x128xf32>, vector<128x64xf32>, vector<1x64xf32> -> vector<1x64xf32>
    %c0_144 = arith.constant 0 : index
    %c0_145 = arith.constant 0 : index
    %219 = vector.load %arg9[%c0_144, %c0_145] : memref<1x64xf32, #tpu.memory_space<vmem>>, vector<1x64xf32>
    %220 = arith.addf %218, %219 : vector<1x64xf32>
    %cst_146 = arith.constant 0.000000e+00 : f32
    %221 = vector.broadcast %cst_146 : f32 to vector<1x64xf32>
    %222 = arith.maximumf %220, %221 : vector<1x64xf32>
    %c0_147 = arith.constant 0 : index
    %c0_148 = arith.constant 0 : index
    %223 = vector.load %arg10[%c0_147, %c0_148] : memref<64x1xf32, #tpu.memory_space<vmem>>, vector<64x1xf32>
    %cst_149 = arith.constant dense<0.000000e+00> : vector<1x1xf32>
    %224 = tpu.matmul %222, %223, %cst_149 {dimension_numbers = #tpu.dot_dimension_numbers<[1], [0], [0], [1], [0, 0, 1, 1], [], []>} : vector<1x64xf32>, vector<64x1xf32>, vector<1x1xf32> -> vector<1x1xf32>
    %c0_150 = arith.constant 0 : index
    %c0_151 = arith.constant 0 : index
    %225 = vector.load %arg11[%c0_150, %c0_151] : memref<1x1xf32, #tpu.memory_space<vmem>>, vector<1x1xf32>
    %226 = arith.addf %224, %225 : vector<1x1xf32>
    %cst_152 = arith.constant 0.000000e+00 : f32
    %227 = vector.broadcast %cst_152 : f32 to vector<1x1xf32>
    %228 = arith.subf %227, %226 : vector<1x1xf32>
    %229 = math.exp %228 : vector<1x1xf32>
    %cst_153 = arith.constant 1.000000e+00 : f32
    %230 = vector.broadcast %cst_153 : f32 to vector<1x1xf32>
    %231 = arith.addf %230, %229 : vector<1x1xf32>
    %cst_154 = arith.constant 1.000000e+00 : f32
    %232 = vector.broadcast %cst_154 : f32 to vector<1x1xf32>
    %233 = arith.divf %232, %231 : vector<1x1xf32>
    %234 = vector.shape_cast %233 : vector<1x1xf32> to vector<1x1x1xf32>
    %c0_155 = arith.constant 0 : index
    %c0_156 = arith.constant 0 : index
    %c0_157 = arith.constant 0 : index
    %235 = vector.load %arg13[%c0_155, %c0_156, %c0_157] : memref<1x1x1xf32, #tpu.memory_space<vmem>>, vector<1x1x1xf32>
    tpu.vector_store %arg13[%c0_155, %c0_156, %c0_157], %234 {strides = array<i32>} : memref<1x1x1xf32, #tpu.memory_space<vmem>>, vector<1x1x1xf32>,
    return
  }
  func.func @transform_0(%arg0: i32) -> (i32, i32, i32) {
    %c0_i32 = arith.constant 0 : i32
    %c0_i32_0 = arith.constant 0 : i32
    %c0_i32_1 = arith.constant 0 : i32
    return %arg0, %c0_i32, %c0_i32_0 : i32, i32, i32
  }
  func.func @transform_1(%arg0: i32) -> (i32, i32, i32) {
    %c0_i32 = arith.constant 0 : i32
    %c0_i32_0 = arith.constant 0 : i32
    %c0_i32_1 = arith.constant 0 : i32
    %c0_i32_2 = arith.constant 0 : i32
    return %c0_i32, %c0_i32_0, %c0_i32_1 : i32, i32, i32
  }
  func.func @transform_2(%arg0: i32) -> (i32, i32) {
    %c0_i32 = arith.constant 0 : i32
    %c0_i32_0 = arith.constant 0 : i32
    %c0_i32_1 = arith.constant 0 : i32
    return %c0_i32, %c0_i32_0 : i32, i32
  }
  func.func @transform_3(%arg0: i32) -> (i32, i32, i32) {
    %c0_i32 = arith.constant 0 : i32
    %c0_i32_0 = arith.constant 0 : i32
    %c0_i32_1 = arith.constant 0 : i32
    %c0_i32_2 = arith.constant 0 : i32
    return %c0_i32, %c0_i32_0, %c0_i32_1 : i32, i32, i32
  }
  func.func @transform_4(%arg0: i32) -> (i32, i32) {
    %c0_i32 = arith.constant 0 : i32
    %c0_i32_0 = arith.constant 0 : i32
    %c0_i32_1 = arith.constant 0 : i32
    return %c0_i32, %c0_i32_0 : i32, i32
  }
  func.func @transform_5(%arg0: i32) -> (i32, i32, i32) {
    %c0_i32 = arith.constant 0 : i32
    %c0_i32_0 = arith.constant 0 : i32
    %c0_i32_1 = arith.constant 0 : i32
    %c0_i32_2 = arith.constant 0 : i32
    return %c0_i32, %c0_i32_0, %c0_i32_1 : i32, i32, i32
  }
  func.func @transform_6(%arg0: i32) -> (i32, i32) {
    %c0_i32 = arith.constant 0 : i32
    %c0_i32_0 = arith.constant 0 : i32
    %c0_i32_1 = arith.constant 0 : i32
    return %c0_i32, %c0_i32_0 : i32, i32
  }
  func.func @transform_7(%arg0: i32) -> (i32, i32) {
    %c0_i32 = arith.constant 0 : i32
    %c0_i32_0 = arith.constant 0 : i32
    %c0_i32_1 = arith.constant 0 : i32
    return %c0_i32, %c0_i32_0 : i32, i32
  }
  func.func @transform_8(%arg0: i32) -> (i32, i32) {
    %c0_i32 = arith.constant 0 : i32
    %c0_i32_0 = arith.constant 0 : i32
    %c0_i32_1 = arith.constant 0 : i32
    return %c0_i32, %c0_i32_0 : i32, i32
  }
  func.func @transform_9(%arg0: i32) -> (i32, i32) {
    %c0_i32 = arith.constant 0 : i32
    %c0_i32_0 = arith.constant 0 : i32
    %c0_i32_1 = arith.constant 0 : i32
    return %c0_i32, %c0_i32_0 : i32, i32
  }
  func.func @transform_10(%arg0: i32) -> (i32, i32) {
    %c0_i32 = arith.constant 0 : i32
    %c0_i32_0 = arith.constant 0 : i32
    %c0_i32_1 = arith.constant 0 : i32
    return %c0_i32, %c0_i32_0 : i32, i32
  }
  func.func @transform_11(%arg0: i32) -> (i32, i32) {
    %c0_i32 = arith.constant 0 : i32
    %c0_i32_0 = arith.constant 0 : i32
    %c0_i32_1 = arith.constant 0 : i32
    return %c0_i32, %c0_i32_0 : i32, i32
  }
  func.func @transform_12(%arg0: i32) -> (i32, i32, i32) {
    %c0_i32 = arith.constant 0 : i32
    %c0_i32_0 = arith.constant 0 : i32
    %c0_i32_1 = arith.constant 0 : i32
    return %arg0, %c0_i32, %c0_i32_0 : i32, i32, i32
  }
}

</mosaic_0001>

<llo_original>
// kernel: cnn_forward_pallas.1
$region0: #{cnn_forward_pallas.1}
  #allocation0 [shape = 'u32[]', space=smem, size = 0x4, offset = 0x4, fixed_abs, tag = 'smem constant byte address 0x4 - core index']
  #allocation1 [shape = 'u32[144,128]{1,0:T(1,128)}', space=vmem, size = 0x12000, scoped, tag = 'internal scratch']
  #allocation2 [shape = 'f32[270,32]{1,0:T(8,128)}', space=vmem, size = 0x22000, scoped, tag = 'scratch operand']
  #allocation3 [shape = 'f32[266,64]{1,0:T(8,128)}', space=vmem, size = 0x22000, scoped, tag = 'scratch operand']
  #allocation4 [shape = 'f32[1,1]{1,0:T(1,128)S(1)}', space=vmem, size = 0x200, scoped, tag = 'scoped memory for cnn_forward_pallas.1']
  %s0 = inlined_call_operand.vmem [shape: f32[2,324,4], index: 0, kind: input, shape index: {}]
  %s1 = inlined_call_operand.vmem [shape: bf16[12,4,32], index: 1, kind: input, shape index: {}]
  %s2 = inlined_call_operand.vmem [shape: f32[1,32], index: 2, kind: input, shape index: {}]
  %s3 = inlined_call_operand.vmem [shape: bf16[4,32,64], index: 3, kind: input, shape index: {}]
  %s4 = inlined_call_operand.vmem [shape: f32[1,64], index: 4, kind: input, shape index: {}]
  %s5 = inlined_call_operand.vmem [shape: bf16[4,64,128], index: 5, kind: input, shape index: {}]
  %s6 = inlined_call_operand.vmem [shape: f32[1,128], index: 6, kind: input, shape index: {}]
  %s7 = inlined_call_operand.vmem [shape: f32[128,64], index: 7, kind: input, shape index: {}]
  %s8 = inlined_call_operand.vmem [shape: f32[1,64], index: 8, kind: input, shape index: {}]
  %s9 = inlined_call_operand.vmem [shape: f32[64,1], index: 9, kind: input, shape index: {}]
  %s10 = inlined_call_operand.<no memory space> [shape: f32[1,1], index: 10, kind: input, shape index: {}]
  %s11 = inlined_call_operand.vmem [shape: f32[251,1], index: 11, kind: input, shape index: {}]
  %s12 = inlined_call_operand.vmem [shape: f32[2,1,1], index: 12, kind: output, shape index: {}]
  %s13 = sld [smem:[#allocation0]]
  $region81: #{cnn_forward_pallas.1} parent=0
    _
  %s15 = ssub.s32 1, %s13
  %s16 = scalar_select 0, %s15, %s13
  %v17 = vstv %s10
  %18 = vst [vmem:[#allocation4] sm:$0x1] %v17
  loop: start=0, step=1, limit=4
  $region2: #{cnn_forward_pallas.1} parent=0 // loop_pre_header
    _
  $region3: #{cnn_forward_pallas.1} parent=0 // loop_header
    %s20 = sphi 0, %s24
    %p21 = scmp.ge.s32.totalorder %s20, 4
    %s30 = sphi 0, %s32
    %s33 = sphi 0, %s30
    %s34 = sphi 0, %s33
    %s50 = sphi 0, %s34
    %s54 = sphi 0, %s54
    %s56 = sphi 0, %s54
    %s57 = sphi 0, %s56
    %s71 = sphi 0, %s57
    %s75 = sphi 0, %s75
    %s77 = sphi 0, %s75
    %s78 = sphi 0, %s77
    %s92 = sphi 0, %s78
    %s96 = sphi 0, %s96
    %s98 = sphi 0, %s96
    %s99 = sphi 0, %s98
    %s113 = sphi 0, %s99
    %s117 = sphi 0, %s117
    %s119 = sphi 0, %s117
    %s120 = sphi 0, %s119
    %s134 = sphi 0, %s120
    %s138 = sphi 0, %s138
    %s140 = sphi 0, %s138
    %s141 = sphi 0, %s140
    %s155 = sphi 0, %s141
    %s159 = sphi 0, %s159
    %s161 = sphi 0, %s159
    %s162 = sphi 0, %s161
    %s176 = sphi 0, %s162
    %s180 = sphi 0, %s180
    %s182 = sphi 0, %s180
    %s183 = sphi 0, %s182
    %s197 = sphi 0, %s183
    %s201 = sphi 0, %s201
    %s203 = sphi 0, %s201
    %s204 = sphi 0, %s203
    %s218 = sphi 0, %s204
    %s222 = sphi 0, %s222
    %s224 = sphi 0, %s222
    %s225 = sphi 0, %s224
    %s239 = sphi 0, %s225
    %s243 = sphi 0, %s243
    %s245 = sphi 0, %s243
    %s246 = sphi 0, %s245
    %s260 = sphi 0, %s246
    %s264 = sphi 0, %s264
    %s266 = sphi 0, %s264
    %s267 = sphi 0, %s266
    %s281 = sphi 0, %s267
    %s287 = sphi 0, %s289
    %s290 = sphi 0, %s287
    %s291 = sphi 0, %s290
    %s307 = sphi 0, %s291
  $region4: #{cnn_forward_pallas.1} parent=0 // loop_header_branch
    %23 = sbr.rel (%p21) target = $region8
  $region5: #{cnn_forward_pallas.1} parent=0 // loop_body
    %s25 = ssub.s32 %s20, 1
    %s26 = ssub.s32 %s20, 2
    %s27 = sadd.s32 %s20, 1
    %s28 = ssub.s32 %s20, %s27
    %p29 = scmp.eq.s32.totalorder %s28, 0
    %s31 = sadd.s32 %s30, 1
    %s32 = scalar_select %p29, %s30, %s31
    %p35 = pneg %p29
    %p36 = scmp.eq.s32.totalorder %s20, 1
    %p37 = por %p35, %p36
    %p38 = scmp.ne.s32.totalorder %s30, %s33
    %p39 = scmp.eq.s32.totalorder %s20, 0
    %p40 = por %p38, %p39
    %p41 = scmp.ne.s32.totalorder %s30, %s33
    %p42 = scmp.eq.s32.totalorder %s25, 1
    %p43 = por %p41, %p42
    %p44 = scmp.ne.s32.totalorder %s33, %s34
    %p45 = scmp.eq.s32.totalorder %s25, 0
    %p46 = por %p44, %p45
    %p47 = scmp.ne.s32.totalorder %s33, %s34
    %p48 = scmp.eq.s32.totalorder %s26, 1
    %p49 = por %p47, %p48
    %p51 = scmp.ne.s32.totalorder %s34, %s50
    %p52 = scmp.eq.s32.totalorder %s26, 0
    %p53 = por %p51, %p52
    %s55 = sadd.s32 %s54, 1
    %p58 = scmp.eq.s32.totalorder %s20, 1
    %p59 = scmp.ne.s32.totalorder %s54, %s56
    %p60 = scmp.eq.s32.totalorder %s20, 0
    %p61 = por %p59, %p60
    %p62 = scmp.ne.s32.totalorder %s54, %s56
    %p63 = scmp.eq.s32.totalorder %s25, 1
    %p64 = por %p62, %p63
    %p65 = scmp.ne.s32.totalorder %s56, %s57
    %p66 = scmp.eq.s32.totalorder %s25, 0
    %p67 = por %p65, %p66
    %p68 = scmp.ne.s32.totalorder %s56, %s57
    %p69 = scmp.eq.s32.totalorder %s26, 1
    %p70 = por %p68, %p69
    %p72 = scmp.ne.s32.totalorder %s57, %s71
    %p73 = scmp.eq.s32.totalorder %s26, 0
    %p74 = por %p72, %p73
    %s76 = sadd.s32 %s75, 1
    %p79 = scmp.eq.s32.totalorder %s20, 1
    %p80 = scmp.ne.s32.totalorder %s75, %s77
    %p81 = scmp.eq.s32.totalorder %s20, 0
    %p82 = por %p80, %p81
    %p83 = scmp.ne.s32.totalorder %s75, %s77
    %p84 = scmp.eq.s32.totalorder %s25, 1
    %p85 = por %p83, %p84
    %p86 = scmp.ne.s32.totalorder %s77, %s78
    %p87 = scmp.eq.s32.totalorder %s25, 0
    %p88 = por %p86, %p87
    %p89 = scmp.ne.s32.totalorder %s77, %s78
    %p90 = scmp.eq.s32.totalorder %s26, 1
    %p91 = por %p89, %p90
    %p93 = scmp.ne.s32.totalorder %s78, %s92
    %p94 = scmp.eq.s32.totalorder %s26, 0
    %p95 = por %p93, %p94
    %s97 = sadd.s32 %s96, 1
    %p100 = scmp.eq.s32.totalorder %s20, 1
    %p101 = scmp.ne.s32.totalorder %s96, %s98
    %p102 = scmp.eq.s32.totalorder %s20, 0
    %p103 = por %p101, %p102
    %p104 = scmp.ne.s32.totalorder %s96, %s98
    %p105 = scmp.eq.s32.totalorder %s25, 1
    %p106 = por %p104, %p105
    %p107 = scmp.ne.s32.totalorder %s98, %s99
    %p108 = scmp.eq.s32.totalorder %s25, 0
    %p109 = por %p107, %p108
    %p110 = scmp.ne.s32.totalorder %s98, %s99
    %p111 = scmp.eq.s32.totalorder %s26, 1
    %p112 = por %p110, %p111
    %p114 = scmp.ne.s32.totalorder %s99, %s113
    %p115 = scmp.eq.s32.totalorder %s26, 0
    %p116 = por %p114, %p115
    %s118 = sadd.s32 %s117, 1
    %p121 = scmp.eq.s32.totalorder %s20, 1
    %p122 = scmp.ne.s32.totalorder %s117, %s119
    %p123 = scmp.eq.s32.totalorder %s20, 0
    %p124 = por %p122, %p123
    %p125 = scmp.ne.s32.totalorder %s117, %s119
    %p126 = scmp.eq.s32.totalorder %s25, 1
    %p127 = por %p125, %p126
    %p128 = scmp.ne.s32.totalorder %s119, %s120
    %p129 = scmp.eq.s32.totalorder %s25, 0
    %p130 = por %p128, %p129
    %p131 = scmp.ne.s32.totalorder %s119, %s120
    %p132 = scmp.eq.s32.totalorder %s26, 1
    %p133 = por %p131, %p132
    %p135 = scmp.ne.s32.totalorder %s120, %s134
    %p136 = scmp.eq.s32.totalorder %s26, 0
    %p137 = por %p135, %p136
    %s139 = sadd.s32 %s138, 1
    %p142 = scmp.eq.s32.totalorder %s20, 1
    %p143 = scmp.ne.s32.totalorder %s138, %s140
    %p144 = scmp.eq.s32.totalorder %s20, 0
    %p145 = por %p143, %p144
    %p146 = scmp.ne.s32.totalorder %s138, %s140
    %p147 = scmp.eq.s32.totalorder %s25, 1
    %p148 = por %p146, %p147
    %p149 = scmp.ne.s32.totalorder %s140, %s141
    %p150 = scmp.eq.s32.totalorder %s25, 0
    %p151 = por %p149, %p150
    %p152 = scmp.ne.s32.totalorder %s140, %s141
    %p153 = scmp.eq.s32.totalorder %s26, 1
    %p154 = por %p152, %p153
    %p156 = scmp.ne.s32.totalorder %s141, %s155
    %p157 = scmp.eq.s32.totalorder %s26, 0
    %p158 = por %p156, %p157
    %s160 = sadd.s32 %s159, 1
    %p163 = scmp.eq.s32.totalorder %s20, 1
    %p164 = scmp.ne.s32.totalorder %s159, %s161
    %p165 = scmp.eq.s32.totalorder %s20, 0
    %p166 = por %p164, %p165
    %p167 = scmp.ne.s32.totalorder %s159, %s161
    %p168 = scmp.eq.s32.totalorder %s25, 1
    %p169 = por %p167, %p168
    %p170 = scmp.ne.s32.totalorder %s161, %s162
    %p171 = scmp.eq.s32.totalorder %s25, 0
    %p172 = por %p170, %p171
    %p173 = scmp.ne.s32.totalorder %s161, %s162
    %p174 = scmp.eq.s32.totalorder %s26, 1
    %p175 = por %p173, %p174
    %p177 = scmp.ne.s32.totalorder %s162, %s176
    %p178 = scmp.eq.s32.totalorder %s26, 0
    %p179 = por %p177, %p178
    %s181 = sadd.s32 %s180, 1
    %p184 = scmp.eq.s32.totalorder %s20, 1
    %p185 = scmp.ne.s32.totalorder %s180, %s182
    %p186 = scmp.eq.s32.totalorder %s20, 0
    %p187 = por %p185, %p186
    %p188 = scmp.ne.s32.totalorder %s180, %s182
    %p189 = scmp.eq.s32.totalorder %s25, 1
    %p190 = por %p188, %p189
    %p191 = scmp.ne.s32.totalorder %s182, %s183
    %p192 = scmp.eq.s32.totalorder %s25, 0
    %p193 = por %p191, %p192
    %p194 = scmp.ne.s32.totalorder %s182, %s183
    %p195 = scmp.eq.s32.totalorder %s26, 1
    %p196 = por %p194, %p195
    %p198 = scmp.ne.s32.totalorder %s183, %s197
    %p199 = scmp.eq.s32.totalorder %s26, 0
    %p200 = por %p198, %p199
    %s202 = sadd.s32 %s201, 1
    %p205 = scmp.eq.s32.totalorder %s20, 1
    %p206 = scmp.ne.s32.totalorder %s201, %s203
    %p207 = scmp.eq.s32.totalorder %s20, 0
    %p208 = por %p206, %p207
    %p209 = scmp.ne.s32.totalorder %s201, %s203
    %p210 = scmp.eq.s32.totalorder %s25, 1
    %p211 = por %p209, %p210
    %p212 = scmp.ne.s32.totalorder %s203, %s204
    %p213 = scmp.eq.s32.totalorder %s25, 0
    %p214 = por %p212, %p213
    %p215 = scmp.ne.s32.totalorder %s203, %s204
    %p216 = scmp.eq.s32.totalorder %s26, 1
    %p217 = por %p215, %p216
    %p219 = scmp.ne.s32.totalorder %s204, %s218
    %p220 = scmp.eq.s32.totalorder %s26, 0
    %p221 = por %p219, %p220
    %s223 = sadd.s32 %s222, 1
    %p226 = scmp.eq.s32.totalorder %s20, 1
    %p227 = scmp.ne.s32.totalorder %s222, %s224
    %p228 = scmp.eq.s32.totalorder %s20, 0
    %p229 = por %p227, %p228
    %p230 = scmp.ne.s32.totalorder %s222, %s224
    %p231 = scmp.eq.s32.totalorder %s25, 1
    %p232 = por %p230, %p231
    %p233 = scmp.ne.s32.totalorder %s224, %s225
    %p234 = scmp.eq.s32.totalorder %s25, 0
    %p235 = por %p233, %p234
    %p236 = scmp.ne.s32.totalorder %s224, %s225
    %p237 = scmp.eq.s32.totalorder %s26, 1
    %p238 = por %p236, %p237
    %p240 = scmp.ne.s32.totalorder %s225, %s239
    %p241 = scmp.eq.s32.totalorder %s26, 0
    %p242 = por %p240, %p241
    %s244 = sadd.s32 %s243, 1
    %p247 = scmp.eq.s32.totalorder %s20, 1
    %p248 = scmp.ne.s32.totalorder %s243, %s245
    %p249 = scmp.eq.s32.totalorder %s20, 0
    %p250 = por %p248, %p249
    %p251 = scmp.ne.s32.totalorder %s243, %s245
    %p252 = scmp.eq.s32.totalorder %s25, 1
    %p253 = por %p251, %p252
    %p254 = scmp.ne.s32.totalorder %s245, %s246
    %p255 = scmp.eq.s32.totalorder %s25, 0
    %p256 = por %p254, %p255
    %p257 = scmp.ne.s32.totalorder %s245, %s246
    %p258 = scmp.eq.s32.totalorder %s26, 1
    %p259 = por %p257, %p258
    %p261 = scmp.ne.s32.totalorder %s246, %s260
    %p262 = scmp.eq.s32.totalorder %s26, 0
    %p263 = por %p261, %p262
    %s265 = sadd.s32 %s264, 1
    %p268 = scmp.eq.s32.totalorder %s20, 1
    %p269 = scmp.ne.s32.totalorder %s264, %s266
    %p270 = scmp.eq.s32.totalorder %s20, 0
    %p271 = por %p269, %p270
    %p272 = scmp.ne.s32.totalorder %s264, %s266
    %p273 = scmp.eq.s32.totalorder %s25, 1
    %p274 = por %p272, %p273
    %p275 = scmp.ne.s32.totalorder %s266, %s267
    %p276 = scmp.eq.s32.totalorder %s25, 0
    %p277 = por %p275, %p276
    %p278 = scmp.ne.s32.totalorder %s266, %s267
    %p279 = scmp.eq.s32.totalorder %s26, 1
    %p280 = por %p278, %p279
    %p282 = scmp.ne.s32.totalorder %s267, %s281
    %p283 = scmp.eq.s32.totalorder %s26, 0
    %p284 = por %p282, %p283
    %s285 = ssub.s32 %s20, %s27
    %p286 = scmp.eq.s32.totalorder %s285, 0
    %s288 = sadd.s32 %s287, 1
    %s289 = scalar_select %p286, %s287, %s288
    %p292 = pneg %p286
    %p293 = scmp.eq.s32.totalorder %s20, 1
    %p294 = por %p292, %p293
    %p295 = scmp.ne.s32.totalorder %s287, %s290
    %p296 = scmp.eq.s32.totalorder %s20, 0
    %p297 = por %p295, %p296
    %p298 = scmp.ne.s32.totalorder %s287, %s290
    %p299 = scmp.eq.s32.totalorder %s25, 1
    %p300 = por %p298, %p299
    %p301 = scmp.ne.s32.totalorder %s290, %s291
    %p302 = scmp.eq.s32.totalorder %s25, 0
    %p303 = por %p301, %p302
    %p304 = scmp.ne.s32.totalorder %s290, %s291
    %p305 = scmp.eq.s32.totalorder %s26, 1
    %p306 = por %p304, %p305
    %p308 = scmp.ne.s32.totalorder %s291, %s307
    %p309 = scmp.eq.s32.totalorder %s26, 0
    %p310 = por %p308, %p309
    %p311 = scmp.le.s32.totalorder 1, %s20
    %p312 = scmp.lt.s32.totalorder %s20, 3
    %p313 = pnand %p311, %p312
    %p314 = pneg %p313
    // Predicated region
    $region9: #{cnn_forward_pallas.1} parent=5 // pred_check
      _
    $region10: #{cnn_forward_pallas.1} parent=5 // pred_check_branch
      %316 = sbr.rel (%p313) target = $region12
    $region11: #{cnn_forward_pallas.1} parent=5 // pred_region
      %s317 = ssub.s32 %s20, 1
      // Predicated region
      $region13: #{cnn_forward_pallas.1} parent=11 // pred_check
        %p318 = pneg %p67
      $region14: #{cnn_forward_pallas.1} parent=11 // pred_check_branch
        %320 = sbr.rel (%p318) target = $region16
      $region15: #{cnn_forward_pallas.1} parent=11 // pred_region
        _
      $region16: #{cnn_forward_pallas.1} parent=11 // pred_fallthru
        _
      // Predicated region
      $region17: #{cnn_forward_pallas.1} parent=11 // pred_check
        %p321 = pneg %p88
      $region18: #{cnn_forward_pallas.1} parent=11 // pred_check_branch
        %323 = sbr.rel (%p321) target = $region20
      $region19: #{cnn_forward_pallas.1} parent=11 // pred_region
        _
      $region20: #{cnn_forward_pallas.1} parent=11 // pred_fallthru
        _
      // Predicated region
      $region21: #{cnn_forward_pallas.1} parent=11 // pred_check
        %p324 = pneg %p109
      $region22: #{cnn_forward_pallas.1} parent=11 // pred_check_branch
        %326 = sbr.rel (%p324) target = $region24
      $region23: #{cnn_forward_pallas.1} parent=11 // pred_region
        _
      $region24: #{cnn_forward_pallas.1} parent=11 // pred_fallthru
        _
      // Predicated region
      $region25: #{cnn_forward_pallas.1} parent=11 // pred_check
        %p327 = pneg %p130
      $region26: #{cnn_forward_pallas.1} parent=11 // pred_check_branch
        %329 = sbr.rel (%p327) target = $region28
      $region27: #{cnn_forward_pallas.1} parent=11 // pred_region
        _
      $region28: #{cnn_forward_pallas.1} parent=11 // pred_fallthru
        _
      // Predicated region
      $region29: #{cnn_forward_pallas.1} parent=11 // pred_check
        %p330 = pneg %p151
      $region30: #{cnn_forward_pallas.1} parent=11 // pred_check_branch
        %332 = sbr.rel (%p330) target = $region32
      $region31: #{cnn_forward_pallas.1} parent=11 // pred_region
        _
      $region32: #{cnn_forward_pallas.1} parent=11 // pred_fallthru
        _
      // Predicated region
      $region33: #{cnn_forward_pallas.1} parent=11 // pred_check
        %p333 = pneg %p172
      $region34: #{cnn_forward_pallas.1} parent=11 // pred_check_branch
        %335 = sbr.rel (%p333) target = $region36
      $region35: #{cnn_forward_pallas.1} parent=11 // pred_region
        _
      $region36: #{cnn_forward_pallas.1} parent=11 // pred_fallthru
        _
      // Predicated region
      $region37: #{cnn_forward_pallas.1} parent=11 // pred_check
        %p336 = pneg %p193
      $region38: #{cnn_forward_pallas.1} parent=11 // pred_check_branch
        %338 = sbr.rel (%p336) target = $region40
      $region39: #{cnn_forward_pallas.1} parent=11 // pred_region
        _
      $region40: #{cnn_forward_pallas.1} parent=11 // pred_fallthru
        _
      // Predicated region
      $region41: #{cnn_forward_pallas.1} parent=11 // pred_check
        %p339 = pneg %p214
      $region42: #{cnn_forward_pallas.1} parent=11 // pred_check_branch
        %341 = sbr.rel (%p339) target = $region44
      $region43: #{cnn_forward_pallas.1} parent=11 // pred_region
        _
      $region44: #{cnn_forward_pallas.1} parent=11 // pred_fallthru
        _
      // Predicated region
      $region45: #{cnn_forward_pallas.1} parent=11 // pred_check
        %p342 = pneg %p235
      $region46: #{cnn_forward_pallas.1} parent=11 // pred_check_branch
        %344 = sbr.rel (%p342) target = $region48
      $region47: #{cnn_forward_pallas.1} parent=11 // pred_region
        _
      $region48: #{cnn_forward_pallas.1} parent=11 // pred_fallthru
        _
      // Predicated region
      $region49: #{cnn_forward_pallas.1} parent=11 // pred_check
        %p345 = pneg %p256
      $region50: #{cnn_forward_pallas.1} parent=11 // pred_check_branch
        %347 = sbr.rel (%p345) target = $region52
      $region51: #{cnn_forward_pallas.1} parent=11 // pred_region
        _
      $region52: #{cnn_forward_pallas.1} parent=11 // pred_fallthru
        _
      // Predicated region
      $region53: #{cnn_forward_pallas.1} parent=11 // pred_check
        %p348 = pneg %p277
      $region54: #{cnn_forward_pallas.1} parent=11 // pred_check_branch
        %350 = sbr.rel (%p348) target = $region56
      $region55: #{cnn_forward_pallas.1} parent=11 // pred_region
        _
      $region56: #{cnn_forward_pallas.1} parent=11 // pred_fallthru
        _
    $region12: #{cnn_forward_pallas.1} parent=5 // pred_fallthru
      _
    %p351 = scmp.lt.s32.totalorder %s20, 2
    // Predicated region
    $region57: #{cnn_forward_pallas.1} parent=5 // pred_check
      %p352 = pneg %p351
    $region58: #{cnn_forward_pallas.1} parent=5 // pred_check_branch
      %354 = sbr.rel (%p352) target = $region60
    $region59: #{cnn_forward_pallas.1} parent=5 // pred_region
      // Predicated region
      $region61: #{cnn_forward_pallas.1} parent=59 // pred_check
        %p355 = pneg %p40
      $region62: #{cnn_forward_pallas.1} parent=59 // pred_check_branch
        %357 = sbr.rel (%p355) target = $region64
      $region63: #{cnn_forward_pallas.1} parent=59 // pred_region
        %p358 = scmp.lt.s32.totalorder %s20, 1
        %s359 = scalar_select %p358, %s20, 1
        %s360 = smul.addr %s359, 41
        %s361 = smul.addr %s360, 8
        %s362 = scalar_lea.vmem %s0, %s361
      $region64: #{cnn_forward_pallas.1} parent=59 // pred_fallthru
        _
    $region60: #{cnn_forward_pallas.1} parent=5 // pred_fallthru
      _
    %p363 = scmp.le.s32.totalorder 1, %s20
    %p364 = scmp.lt.s32.totalorder %s20, 3
    %p365 = pnand %p363, %p364
    %p366 = pneg %p365
    // Predicated region
    $region65: #{cnn_forward_pallas.1} parent=5 // pred_check
      _
    $region66: #{cnn_forward_pallas.1} parent=5 // pred_check_branch
      %368 = sbr.rel (%p365) target = $region68
    $region67: #{cnn_forward_pallas.1} parent=5 // pred_region
      %s369 = ssub.s32 %s20, 1
      %p370 = scmp.lt.s32.totalorder %s25, 1
      %s371 = scalar_select %p370, %s25, 1
      %s372 = smul.addr %s371, 41
      %s373 = smul.addr %s372, 8
      %s374 = scalar_lea.vmem %s0, %s373
      %p375 = pneg %p46
      %p376 = pneg %p43
      %p377 = pneg %p67
      %p378 = pneg %p64
      %p379 = pneg %p88
      %p380 = pneg %p85
      %p381 = pneg %p109
      %p382 = pneg %p106
      %p383 = pneg %p130
      %p384 = pneg %p127
      %p385 = pneg %p151
      %p386 = pneg %p148
      %p387 = pneg %p172
      %p388 = pneg %p169
      %p389 = pneg %p193
      %p390 = pneg %p190
      %p391 = pneg %p214
      %p392 = pneg %p211
      %p393 = pneg %p235
      %p394 = pneg %p232
      %p395 = pneg %p256
      %p396 = pneg %p253
      %p397 = pneg %p277
      %p398 = pneg %p274
      %p399 = pneg %p303
      %p400 = pneg %p300
      %p401 = scmp.lt.s32.totalorder %s25, 1
      %s402 = scalar_select %p401, %s25, 1
      %s403 = scalar_lea.vmem %s12, %s402
      %p404 = scmp.lt.s32.totalorder %s25, 1
      %s405 = scalar_select %p404, %s25, 1
      %s406 = smul.addr %s405, 41
      %s407 = smul.addr %s406, 8
      %s408 = scalar_lea.vmem %s0, %s407
      %p409 = scmp.lt.s32.totalorder %s25, 1
      %s410 = scalar_select %p409, %s25, 1
      %s411 = scalar_lea.vmem %s12, %s410
      %v413 = vld [vmem:[%s408] sm:$0xff]
      %v414 = vld [vmem:[%s408 + $0x8] sm:$0xff]
      %v415 = vld [vmem:[%s408 + $0x10] sm:$0xff]
      %v416 = vld [vmem:[%s408 + $0x18] sm:$0xff]
      %v417 = vld [vmem:[%s408 + $0x20] sm:$0xff]
      %v418 = vld [vmem:[%s408 + $0x28] sm:$0xff]
      %v419 = vld [vmem:[%s408 + $0x30] sm:$0xff]
      %v420 = vld [vmem:[%s408 + $0x38] sm:$0xff]
      %v421 = vld [vmem:[%s408 + $0x40] sm:$0xff]
      %v422 = vld [vmem:[%s408 + $0x48] sm:$0xff]
      %v423 = vld [vmem:[%s408 + $0x50] sm:$0xff]
      %v424 = vld [vmem:[%s408 + $0x58] sm:$0xff]
      %v425 = vld [vmem:[%s408 + $0x60] sm:$0xff]
      %v426 = vld [vmem:[%s408 + $0x68] sm:$0xff]
      %v427 = vld [vmem:[%s408 + $0x70] sm:$0xff]
      %v428 = vld [vmem:[%s408 + $0x78] sm:$0xff]
      %v429 = vld [vmem:[%s408 + $0x80] sm:$0xff]
      %v430 = vld [vmem:[%s408 + $0x88] sm:$0xff]
      %v431 = vld [vmem:[%s408 + $0x90] sm:$0xff]
      %v432 = vld [vmem:[%s408 + $0x98] sm:$0xff]
      %v433 = vld [vmem:[%s408 + $0xa0] sm:$0xff]
      %v434 = vld [vmem:[%s408 + $0xa8] sm:$0xff]
      %v435 = vld [vmem:[%s408 + $0xb0] sm:$0xff]
      %v436 = vld [vmem:[%s408 + $0xb8] sm:$0xff]
      %v437 = vld [vmem:[%s408 + $0xc0] sm:$0xff]
      %v438 = vld [vmem:[%s408 + $0xc8] sm:$0xff]
      %v439 = vld [vmem:[%s408 + $0xd0] sm:$0xff]
      %v440 = vld [vmem:[%s408 + $0xd8] sm:$0xff]
      %v441 = vld [vmem:[%s408 + $0xe0] sm:$0xff]
      %v442 = vld [vmem:[%s408 + $0xe8] sm:$0xff]
      %v443 = vld [vmem:[%s408 + $0xf0] sm:$0xff]
      %v444 = vld [vmem:[%s408 + $0xf8] sm:$0xff]
      %v445 = vld [vmem:[%s408 + $0x100] sm:$0xff]
      %v446 = vld [vmem:[%s408 + $0x108] sm:$0xff]
      %v447 = vld [vmem:[%s408 + $0x110] sm:$0xff]
      %v448 = vld [vmem:[%s408 + $0x118] sm:$0xff]
      %v449 = vld [vmem:[%s408 + $0x120] sm:$0xff]
      %v450 = vld [vmem:[%s408 + $0x128] sm:$0xff]
      %v451 = vld [vmem:[%s408 + $0x130] sm:$0xff]
      %v452 = vld [vmem:[%s408 + $0x138] sm:$0xff]
      %v453 = vld [vmem:[%s408 + $0x140] sm:$0xf]
      %v454 = vpack.c.bf16 %v414, %v413
      %v455 = vpack.c.bf16 %v416, %v415
      %v456 = vpack.c.bf16 %v418, %v417
      %v457 = vpack.c.bf16 %v420, %v419
      %v458 = vpack.c.bf16 %v422, %v421
      %v459 = vpack.c.bf16 %v424, %v423
      %v460 = vpack.c.bf16 %v426, %v425
      %v461 = vpack.c.bf16 %v428, %v427
      %v462 = vpack.c.bf16 %v430, %v429
      %v463 = vpack.c.bf16 %v432, %v431
      %v464 = vpack.c.bf16 %v434, %v433
      %v465 = vpack.c.bf16 %v436, %v435
      %v466 = vpack.c.bf16 %v438, %v437
      %v467 = vpack.c.bf16 %v440, %v439
      %v468 = vpack.c.bf16 %v442, %v441
      %v469 = vpack.c.bf16 %v444, %v443
      %v470 = vpack.c.bf16 %v446, %v445
      %v471 = vpack.c.bf16 %v448, %v447
      %v472 = vld [vmem:[%s1] sm:$0x3]
      %s473 = scalar_lea.vmem %s1, 2
      %v474 = vld [vmem:[%s473] sm:$0x3]
      %vm475 = vsmask.f32 7424
      %v477 = vshrl.u32 %v454, 16
      %v479 = vshll.u32 %v454, 16
      %v481 = vrot.slane %v479, 1
      %v482 = vor.u32 %v477, %v481
      %v484 = vshll.u32 %v455, 16
      %v486 = vrot.slane %v484, 1
      %v487 = vsel %vm475, %v482, %v486
      %v488 = vshrl.u32 %v455, 16
      %v490 = vor.u32 %v488, %v486
      %v492 = vshll.u32 %v456, 16
      %v494 = vrot.slane %v492, 1
      %v495 = vsel %vm475, %v490, %v494
      %v496 = vshrl.u32 %v456, 16
      %v498 = vor.u32 %v496, %v494
      %v500 = vshll.u32 %v457, 16
      %v502 = vrot.slane %v500, 1
      %v503 = vsel %vm475, %v498, %v502
      %v504 = vshrl.u32 %v457, 16
      %v506 = vor.u32 %v504, %v502
      %v508 = vshll.u32 %v458, 16
      %v510 = vrot.slane %v508, 1
      %v511 = vsel %vm475, %v506, %v510
      %v512 = vshrl.u32 %v458, 16
      %v514 = vor.u32 %v512, %v510
      %v516 = vshll.u32 %v459, 16
      %v518 = vrot.slane %v516, 1
      %v519 = vsel %vm475, %v514, %v518
      %v520 = vshrl.u32 %v459, 16
      %v522 = vor.u32 %v520, %v518
      %v524 = vshll.u32 %v460, 16
      %v526 = vrot.slane %v524, 1
      %v527 = vsel %vm475, %v522, %v526
      %v528 = vshrl.u32 %v460, 16
      %v530 = vor.u32 %v528, %v526
      %v532 = vshll.u32 %v461, 16
      %v534 = vrot.slane %v532, 1
      %v535 = vsel %vm475, %v530, %v534
      %v536 = vshrl.u32 %v461, 16
      %v538 = vor.u32 %v536, %v534
      %v540 = vshll.u32 %v462, 16
      %v542 = vrot.slane %v540, 1
      %v543 = vsel %vm475, %v538, %v542
      %v544 = vshrl.u32 %v462, 16
      %v546 = vor.u32 %v544, %v542
      %v548 = vshll.u32 %v463, 16
      %v550 = vrot.slane %v548, 1
      %v551 = vsel %vm475, %v546, %v550
      %v552 = vshrl.u32 %v463, 16
      %v554 = vor.u32 %v552, %v550
      %v556 = vshll.u32 %v464, 16
      %v558 = vrot.slane %v556, 1
      %v559 = vsel %vm475, %v554, %v558
      %v560 = vshrl.u32 %v464, 16
      %v562 = vor.u32 %v560, %v558
      %v564 = vshll.u32 %v465, 16
      %v566 = vrot.slane %v564, 1
      %v567 = vsel %vm475, %v562, %v566
      %v568 = vshrl.u32 %v465, 16
      %v570 = vor.u32 %v568, %v566
      %v572 = vshll.u32 %v466, 16
      %v574 = vrot.slane %v572, 1
      %v575 = vsel %vm475, %v570, %v574
      %v576 = vshrl.u32 %v466, 16
      %v578 = vor.u32 %v576, %v574
      %v580 = vshll.u32 %v467, 16
      %v582 = vrot.slane %v580, 1
      %v583 = vsel %vm475, %v578, %v582
      %v584 = vshrl.u32 %v467, 16
      %v586 = vor.u32 %v584, %v582
      %v588 = vshll.u32 %v468, 16
      %v590 = vrot.slane %v588, 1
      %v591 = vsel %vm475, %v586, %v590
      %v592 = vshrl.u32 %v468, 16
      %v594 = vor.u32 %v592, %v590
      %v596 = vshll.u32 %v469, 16
      %v598 = vrot.slane %v596, 1
      %v599 = vsel %vm475, %v594, %v598
      %v600 = vshrl.u32 %v469, 16
      %v602 = vor.u32 %v600, %v598
      %v604 = vshll.u32 %v470, 16
      %v606 = vrot.slane %v604, 1
      %v607 = vsel %vm475, %v602, %v606
      %v608 = vshrl.u32 %v470, 16
      %v610 = vor.u32 %v608, %v606
      %v612 = vshll.u32 %v471, 16
      %v614 = vrot.slane %v612, 1
      %v615 = vsel %vm475, %v610, %v614
      %v616 = vshrl.u32 %v471, 16
      %v618 = vor.u32 %v616, %v614
      %vm619 = vcmask 31744
      %v621 = vsel %vm619, %v487, 0
      %v624 = vsel %vm619, %v495, 0
      %v627 = vsel %vm619, %v503, 0
      %v630 = vsel %vm619, %v511, 0
      %v633 = vsel %vm619, %v519, 0
      %v636 = vsel %vm619, %v527, 0
      %v639 = vsel %vm619, %v535, 0
      %v642 = vsel %vm619, %v543, 0
      %v645 = vsel %vm619, %v551, 0
      %v648 = vsel %vm619, %v559, 0
      %v651 = vsel %vm619, %v567, 0
      %v654 = vsel %vm619, %v575, 0
      %v657 = vsel %vm619, %v583, 0
      %v660 = vsel %vm619, %v591, 0
      %v663 = vsel %vm619, %v599, 0
      %v666 = vsel %vm619, %v607, 0
      %v669 = vsel %vm619, %v615, 0
      %v672 = vsel %vm619, %v618, 0
      %vm674 = vcmask 1041408
      %v676 = vsel %vm674, %v474, 0
      %678 = vmatprep.subr.bf16.mxu0 0
      %679 = vmatpush1.bf16.msra.mxu0 0
      %680 = vmatprep.subr.bf16.mxu0 0
      %681 = vmatpush1.bf16.msra.mxu0 0
      %682 = vmatprep.subr.bf16.mxu0 0
      %683 = vmatpush1.bf16.msra.mxu0 0
      %684 = vmatprep.subr.bf16.mxu0 0
      %685 = vmatpush1.bf16.msra.mxu0 0
      %686 = vmatprep.subr.bf16.mxu0 0
      %687 = vmatpush1.bf16.msra.mxu0 0
      %688 = vmatprep.subr.bf16.mxu0 0
      %689 = vmatpush1.bf16.msra.mxu0 0
      %690 = vmatprep.subr.bf16.mxu0 0
      %691 = vmatpush1.bf16.msra.mxu0 0
      %692 = vmatprep.subr.bf16.mxu0 0
      %693 = vmatpush1.bf16.msra.mxu0 %v676
      %694 = vmatprep.subr.bf16.mxu0 0
      %695 = vmatpush2.bf16.msra.mxu0 0
      %696 = vmatprep.subr.bf16.mxu0 0
      %697 = vmatpush2.bf16.msra.mxu0 0
      %698 = vmatprep.subr.bf16.mxu0 0
      %699 = vmatpush2.bf16.msra.mxu0 0
      %700 = vmatprep.subr.bf16.mxu0 0
      %701 = vmatpush2.bf16.msra.mxu0 0
      %702 = vmatprep.subr.bf16.mxu0 0
      %703 = vmatpush2.bf16.msra.mxu0 0
      %704 = vmatprep.subr.bf16.mxu0 0
      %705 = vmatpush2.bf16.msra.mxu0 0
      %706 = vmatprep.subr.bf16.mxu0 0
      %707 = vmatpush2.bf16.msra.mxu0 0
      %708 = vmatprep.subr.bf16.mxu0 0
      %709 = vmatpush2.bf16.msra.mxu0 0
      %710 = vmatprep.mubr.bf16.mxu0 0
      %711 = vmatmul.mubr.bf16.gmra.mxu0 %v621
      %v712 = vpop.f32.mrf.mxu0
      %v713 = vadd.f32 0.0, %v712
      %v714 = vpop.f32.mrf.mxu0
      %v715 = vpop.f32.mrf.mxu0
      %v716 = vadd.f32 0.0, %v715
      %v717 = vpop.f32.mrf.mxu0
      %718 = vmatprep.mubr.bf16.mxu0 0
      %719 = vmatmul.mubr.bf16.gmra.mxu0 %v624
      %v720 = vpop.f32.mrf.mxu0
      %v721 = vadd.f32 0.0, %v720
      %v722 = vpop.f32.mrf.mxu0
      %v723 = vpop.f32.mrf.mxu0
      %v724 = vadd.f32 0.0, %v723
      %v725 = vpop.f32.mrf.mxu0
      %726 = vmatprep.mubr.bf16.mxu0 0
      %727 = vmatmul.mubr.bf16.gmra.mxu0 %v627
      %v728 = vpop.f32.mrf.mxu0
      %v729 = vadd.f32 0.0, %v728
      %v730 = vpop.f32.mrf.mxu0
      %v731 = vpop.f32.mrf.mxu0
      %v732 = vadd.f32 0.0, %v731
      %v733 = vpop.f32.mrf.mxu0
      %734 = vmatprep.mubr.bf16.mxu0 0
      %735 = vmatmul.mubr.bf16.gmra.mxu0 %v630
      %v736 = vpop.f32.mrf.mxu0
      %v737 = vadd.f32 0.0, %v736
      %v738 = vpop.f32.mrf.mxu0
      %v739 = vpop.f32.mrf.mxu0
      %v740 = vadd.f32 0.0, %v739
      %v741 = vpop.f32.mrf.mxu0
      %742 = vmatprep.mubr.bf16.mxu0 0
      %743 = vmatmul.mubr.bf16.gmra.mxu0 %v633
      %v744 = vpop.f32.mrf.mxu0
      %v745 = vadd.f32 0.0, %v744
      %v746 = vpop.f32.mrf.mxu0
      %v747 = vpop.f32.mrf.mxu0
      %v748 = vadd.f32 0.0, %v747
      %v749 = vpop.f32.mrf.mxu0
      %750 = vmatprep.mubr.bf16.mxu0 0
      %751 = vmatmul.mubr.bf16.gmra.mxu0 %v636
      %v752 = vpop.f32.mrf.mxu0
      %v753 = vadd.f32 0.0, %v752
      %v754 = vpop.f32.mrf.mxu0
      %v755 = vpop.f32.mrf.mxu0
      %v756 = vadd.f32 0.0, %v755
      %v757 = vpop.f32.mrf.mxu0
      %758 = vmatprep.mubr.bf16.mxu0 0
      %759 = vmatmul.mubr.bf16.gmra.mxu0 %v639
      %v760 = vpop.f32.mrf.mxu0
      %v761 = vadd.f32 0.0, %v760
      %v762 = vpop.f32.mrf.mxu0
      %v763 = vpop.f32.mrf.mxu0
      %v764 = vadd.f32 0.0, %v763
      %v765 = vpop.f32.mrf.mxu0
      %766 = vmatprep.mubr.bf16.mxu0 0
      %767 = vmatmul.mubr.bf16.gmra.mxu0 %v642
      %v768 = vpop.f32.mrf.mxu0
      %v769 = vadd.f32 0.0, %v768
      %v770 = vpop.f32.mrf.mxu0
      %v771 = vpop.f32.mrf.mxu0
      %v772 = vadd.f32 0.0, %v771
      %v773 = vpop.f32.mrf.mxu0
      %774 = vmatprep.mubr.bf16.mxu0 0
      %775 = vmatmul.mubr.bf16.gmra.mxu0 %v645
      %v776 = vpop.f32.mrf.mxu0
      %v777 = vadd.f32 0.0, %v776
      %v778 = vpop.f32.mrf.mxu0
      %v779 = vpop.f32.mrf.mxu0
      %v780 = vadd.f32 0.0, %v779
      %v781 = vpop.f32.mrf.mxu0
      %782 = vmatprep.mubr.bf16.mxu0 0
      %783 = vmatmul.mubr.bf16.gmra.mxu0 %v648
      %v784 = vpop.f32.mrf.mxu0
      %v785 = vadd.f32 0.0, %v784
      %v786 = vpop.f32.mrf.mxu0
      %v787 = vpop.f32.mrf.mxu0
      %v788 = vadd.f32 0.0, %v787
      %v789 = vpop.f32.mrf.mxu0
      %790 = vmatprep.mubr.bf16.mxu0 0
      %791 = vmatmul.mubr.bf16.gmra.mxu0 %v651
      %v792 = vpop.f32.mrf.mxu0
      %v793 = vadd.f32 0.0, %v792
      %v794 = vpop.f32.mrf.mxu0
      %v795 = vpop.f32.mrf.mxu0
      %v796 = vadd.f32 0.0, %v795
      %v797 = vpop.f32.mrf.mxu0
      %798 = vmatprep.mubr.bf16.mxu0 0
      %799 = vmatmul.mubr.bf16.gmra.mxu0 %v654
      %v800 = vpop.f32.mrf.mxu0
      %v801 = vadd.f32 0.0, %v800
      %v802 = vpop.f32.mrf.mxu0
      %v803 = vpop.f32.mrf.mxu0
      %v804 = vadd.f32 0.0, %v803
      %v805 = vpop.f32.mrf.mxu0
      %806 = vmatprep.mubr.bf16.mxu0 0
      %807 = vmatmul.mubr.bf16.gmra.mxu0 %v657
      %v808 = vpop.f32.mrf.mxu0
      %v809 = vadd.f32 0.0, %v808
      %v810 = vpop.f32.mrf.mxu0
      %v811 = vpop.f32.mrf.mxu0
      %v812 = vadd.f32 0.0, %v811
      %v813 = vpop.f32.mrf.mxu0
      %814 = vmatprep.mubr.bf16.mxu0 0
      %815 = vmatmul.mubr.bf16.gmra.mxu0 %v660
      %v816 = vpop.f32.mrf.mxu0
      %v817 = vadd.f32 0.0, %v816
      %v818 = vpop.f32.mrf.mxu0
      %v819 = vpop.f32.mrf.mxu0
      %v820 = vadd.f32 0.0, %v819
      %v821 = vpop.f32.mrf.mxu0
      %822 = vmatprep.mubr.bf16.mxu0 0
      %823 = vmatmul.mubr.bf16.gmra.mxu0 %v663
      %v824 = vpop.f32.mrf.mxu0
      %v825 = vadd.f32 0.0, %v824
      %v826 = vpop.f32.mrf.mxu0
      %v827 = vpop.f32.mrf.mxu0
      %v828 = vadd.f32 0.0, %v827
      %v829 = vpop.f32.mrf.mxu0
      %830 = vmatprep.mubr.bf16.mxu0 0
      %831 = vmatmul.mubr.bf16.gmra.mxu0 %v666
      %v832 = vpop.f32.mrf.mxu0
      %v833 = vadd.f32 0.0, %v832
      %v834 = vpop.f32.mrf.mxu0
      %v835 = vpop.f32.mrf.mxu0
      %v836 = vadd.f32 0.0, %v835
      %v837 = vpop.f32.mrf.mxu0
      %838 = vmatprep.mubr.bf16.mxu0 0
      %839 = vmatmul.mubr.bf16.gmra.mxu0 %v669
      %v840 = vpop.f32.mrf.mxu0
      %v841 = vadd.f32 0.0, %v840
      %v842 = vpop.f32.mrf.mxu0
      %v843 = vpop.f32.mrf.mxu0
      %v844 = vadd.f32 0.0, %v843
      %v845 = vpop.f32.mrf.mxu0
      %846 = vmatprep.mubr.bf16.mxu0 0
      %847 = vmatmul.mubr.bf16.gmra.mxu0 %v672
      %v848 = vpop.f32.mrf.mxu0
      %v849 = vadd.f32 0.0, %v848
      %v850 = vpop.f32.mrf.mxu0
      %v851 = vpop.f32.mrf.mxu0
      %v852 = vadd.f32 0.0, %v851
      %v853 = vpop.f32.mrf.mxu0
      %854 = vdwg.mxu0
      %v855 = vsel %vm619, %v454, 0
      %v857 = vsel %vm619, %v455, 0
      %v859 = vsel %vm619, %v456, 0
      %v861 = vsel %vm619, %v457, 0
      %v863 = vsel %vm619, %v458, 0
      %v865 = vsel %vm619, %v459, 0
      %v867 = vsel %vm619, %v460, 0
      %v869 = vsel %vm619, %v461, 0
      %v871 = vsel %vm619, %v462, 0
      %v873 = vsel %vm619, %v463, 0
      %v875 = vsel %vm619, %v464, 0
      %v877 = vsel %vm619, %v465, 0
      %v879 = vsel %vm619, %v466, 0
      %v881 = vsel %vm619, %v467, 0
      %v883 = vsel %vm619, %v468, 0
      %v885 = vsel %vm619, %v469, 0
      %v887 = vsel %vm619, %v470, 0
      %v889 = vsel %vm619, %v471, 0
      %v892 = vsel %vm674, %v472, 0
      %894 = vmatprep.subr.bf16.mxu0 0
      %895 = vmatpush1.bf16.msra.mxu0 0
      %896 = vmatprep.subr.bf16.mxu0 0
      %897 = vmatpush1.bf16.msra.mxu0 0
      %898 = vmatprep.subr.bf16.mxu0 0
      %899 = vmatpush1.bf16.msra.mxu0 0
      %900 = vmatprep.subr.bf16.mxu0 0
      %901 = vmatpush1.bf16.msra.mxu0 0
      %902 = vmatprep.subr.bf16.mxu0 0
      %903 = vmatpush1.bf16.msra.mxu0 0
      %904 = vmatprep.subr.bf16.mxu0 0
      %905 = vmatpush1.bf16.msra.mxu0 0
      %906 = vmatprep.subr.bf16.mxu0 0
      %907 = vmatpush1.bf16.msra.mxu0 0
      %908 = vmatprep.subr.bf16.mxu0 0
      %909 = vmatpush1.bf16.msra.mxu0 %v892
      %910 = vmatprep.subr.bf16.mxu0 0
      %911 = vmatpush2.bf16.msra.mxu0 0
      %912 = vmatprep.subr.bf16.mxu0 0
      %913 = vmatpush2.bf16.msra.mxu0 0
      %914 = vmatprep.subr.bf16.mxu0 0
      %915 = vmatpush2.bf16.msra.mxu0 0
      %916 = vmatprep.subr.bf16.mxu0 0
      %917 = vmatpush2.bf16.msra.mxu0 0
      %918 = vmatprep.subr.bf16.mxu0 0
      %919 = vmatpush2.bf16.msra.mxu0 0
      %920 = vmatprep.subr.bf16.mxu0 0
      %921 = vmatpush2.bf16.msra.mxu0 0
      %922 = vmatprep.subr.bf16.mxu0 0
      %923 = vmatpush2.bf16.msra.mxu0 0
      %924 = vmatprep.subr.bf16.mxu0 0
      %925 = vmatpush2.bf16.msra.mxu0 0
      %926 = vmatprep.mubr.bf16.mxu0 0
      %927 = vmatmul.mubr.bf16.gmra.mxu0 %v855
      %v928 = vpop.f32.mrf.mxu0
      %v929 = vadd.f32 %v713, %v928
      %v930 = vpop.f32.mrf.mxu0
      %v931 = vpop.f32.mrf.mxu0
      %v932 = vadd.f32 %v716, %v931
      %v933 = vpop.f32.mrf.mxu0
      %934 = vmatprep.mubr.bf16.mxu0 0
      %935 = vmatmul.mubr.bf16.gmra.mxu0 %v857
      %v936 = vpop.f32.mrf.mxu0
      %v937 = vadd.f32 %v721, %v936
      %v938 = vpop.f32.mrf.mxu0
      %v939 = vpop.f32.mrf.mxu0
      %v940 = vadd.f32 %v724, %v939
      %v941 = vpop.f32.mrf.mxu0
      %942 = vmatprep.mubr.bf16.mxu0 0
      %943 = vmatmul.mubr.bf16.gmra.mxu0 %v859
      %v944 = vpop.f32.mrf.mxu0
      %v945 = vadd.f32 %v729, %v944
      %v946 = vpop.f32.mrf.mxu0
      %v947 = vpop.f32.mrf.mxu0
      %v948 = vadd.f32 %v732, %v947
      %v949 = vpop.f32.mrf.mxu0
      %950 = vmatprep.mubr.bf16.mxu0 0
      %951 = vmatmul.mubr.bf16.gmra.mxu0 %v861
      %v952 = vpop.f32.mrf.mxu0
      %v953 = vadd.f32 %v737, %v952
      %v954 = vpop.f32.mrf.mxu0
      %v955 = vpop.f32.mrf.mxu0
      %v956 = vadd.f32 %v740, %v955
      %v957 = vpop.f32.mrf.mxu0
      %958 = vmatprep.mubr.bf16.mxu0 0
      %959 = vmatmul.mubr.bf16.gmra.mxu0 %v863
      %v960 = vpop.f32.mrf.mxu0
      %v961 = vadd.f32 %v745, %v960
      %v962 = vpop.f32.mrf.mxu0
      %v963 = vpop.f32.mrf.mxu0
      %v964 = vadd.f32 %v748, %v963
      %v965 = vpop.f32.mrf.mxu0
      %966 = vmatprep.mubr.bf16.mxu0 0
      %967 = vmatmul.mubr.bf16.gmra.mxu0 %v865
      %v968 = vpop.f32.mrf.mxu0
      %v969 = vadd.f32 %v753, %v968
      %v970 = vpop.f32.mrf.mxu0
      %v971 = vpop.f32.mrf.mxu0
      %v972 = vadd.f32 %v756, %v971
      %v973 = vpop.f32.mrf.mxu0
      %974 = vmatprep.mubr.bf16.mxu0 0
      %975 = vmatmul.mubr.bf16.gmra.mxu0 %v867
      %v976 = vpop.f32.mrf.mxu0
      %v977 = vadd.f32 %v761, %v976
      %v978 = vpop.f32.mrf.mxu0
      %v979 = vpop.f32.mrf.mxu0
      %v980 = vadd.f32 %v764, %v979
      %v981 = vpop.f32.mrf.mxu0
      %982 = vmatprep.mubr.bf16.mxu0 0
      %983 = vmatmul.mubr.bf16.gmra.mxu0 %v869
      %v984 = vpop.f32.mrf.mxu0
      %v985 = vadd.f32 %v769, %v984
      %v986 = vpop.f32.mrf.mxu0
      %v987 = vpop.f32.mrf.mxu0
      %v988 = vadd.f32 %v772, %v987
      %v989 = vpop.f32.mrf.mxu0
      %990 = vmatprep.mubr.bf16.mxu0 0
      %991 = vmatmul.mubr.bf16.gmra.mxu0 %v871
      %v992 = vpop.f32.mrf.mxu0
      %v993 = vadd.f32 %v777, %v992
      %v994 = vpop.f32.mrf.mxu0
      %v995 = vpop.f32.mrf.mxu0
      %v996 = vadd.f32 %v780, %v995
      %v997 = vpop.f32.mrf.mxu0
      %998 = vmatprep.mubr.bf16.mxu0 0
      %999 = vmatmul.mubr.bf16.gmra.mxu0 %v873
      %v1000 = vpop.f32.mrf.mxu0
      %v1001 = vadd.f32 %v785, %v1000
      %v1002 = vpop.f32.mrf.mxu0
      %v1003 = vpop.f32.mrf.mxu0
      %v1004 = vadd.f32 %v788, %v1003
      %v1005 = vpop.f32.mrf.mxu0
      %1006 = vmatprep.mubr.bf16.mxu0 0
      %1007 = vmatmul.mubr.bf16.gmra.mxu0 %v875
      %v1008 = vpop.f32.mrf.mxu0
      %v1009 = vadd.f32 %v793, %v1008
      %v1010 = vpop.f32.mrf.mxu0
      %v1011 = vpop.f32.mrf.mxu0
      %v1012 = vadd.f32 %v796, %v1011
      %v1013 = vpop.f32.mrf.mxu0
      %1014 = vmatprep.mubr.bf16.mxu0 0
      %1015 = vmatmul.mubr.bf16.gmra.mxu0 %v877
      %v1016 = vpop.f32.mrf.mxu0
      %v1017 = vadd.f32 %v801, %v1016
      %v1018 = vpop.f32.mrf.mxu0
      %v1019 = vpop.f32.mrf.mxu0
      %v1020 = vadd.f32 %v804, %v1019
      %v1021 = vpop.f32.mrf.mxu0
      %1022 = vmatprep.mubr.bf16.mxu0 0
      %1023 = vmatmul.mubr.bf16.gmra.mxu0 %v879
      %v1024 = vpop.f32.mrf.mxu0
      %v1025 = vadd.f32 %v809, %v1024
      %v1026 = vpop.f32.mrf.mxu0
      %v1027 = vpop.f32.mrf.mxu0
      %v1028 = vadd.f32 %v812, %v1027
      %v1029 = vpop.f32.mrf.mxu0
      %1030 = vmatprep.mubr.bf16.mxu0 0
      %1031 = vmatmul.mubr.bf16.gmra.mxu0 %v881
      %v1032 = vpop.f32.mrf.mxu0
      %v1033 = vadd.f32 %v817, %v1032
      %v1034 = vpop.f32.mrf.mxu0
      %v1035 = vpop.f32.mrf.mxu0
      %v1036 = vadd.f32 %v820, %v1035
      %v1037 = vpop.f32.mrf.mxu0
      %1038 = vmatprep.mubr.bf16.mxu0 0
      %1039 = vmatmul.mubr.bf16.gmra.mxu0 %v883
      %v1040 = vpop.f32.mrf.mxu0
      %v1041 = vadd.f32 %v825, %v1040
      %v1042 = vpop.f32.mrf.mxu0
      %v1043 = vpop.f32.mrf.mxu0
      %v1044 = vadd.f32 %v828, %v1043
      %v1045 = vpop.f32.mrf.mxu0
      %1046 = vmatprep.mubr.bf16.mxu0 0
      %1047 = vmatmul.mubr.bf16.gmra.mxu0 %v885
      %v1048 = vpop.f32.mrf.mxu0
      %v1049 = vadd.f32 %v833, %v1048
      %v1050 = vpop.f32.mrf.mxu0
      %v1051 = vpop.f32.mrf.mxu0
      %v1052 = vadd.f32 %v836, %v1051
      %v1053 = vpop.f32.mrf.mxu0
      %1054 = vmatprep.mubr.bf16.mxu0 0
      %1055 = vmatmul.mubr.bf16.gmra.mxu0 %v887
      %v1056 = vpop.f32.mrf.mxu0
      %v1057 = vadd.f32 %v841, %v1056
      %v1058 = vpop.f32.mrf.mxu0
      %v1059 = vpop.f32.mrf.mxu0
      %v1060 = vadd.f32 %v844, %v1059
      %v1061 = vpop.f32.mrf.mxu0
      %1062 = vmatprep.mubr.bf16.mxu0 0
      %1063 = vmatmul.mubr.bf16.gmra.mxu0 %v889
      %v1064 = vpop.f32.mrf.mxu0
      %v1065 = vadd.f32 %v849, %v1064
      %v1066 = vpop.f32.mrf.mxu0
      %v1067 = vpop.f32.mrf.mxu0
      %v1068 = vadd.f32 %v852, %v1067
      %v1069 = vpop.f32.mrf.mxu0
      %1070 = vdwg.mxu0
      %s1071 = scalar_lea.vmem %s1, 4
      %v1072 = vld [vmem:[%s1071] sm:$0x3]
      %vm1091 = vcmask 1046528
      %v1092 = vrot.slane %v454, 1
      %v1093 = vrot.slane %v455, 1
      %v1094 = vsel %vm1091, %v1092, %v1093
      %v1095 = vrot.slane %v456, 1
      %v1096 = vsel %vm1091, %v1093, %v1095
      %v1097 = vrot.slane %v457, 1
      %v1098 = vsel %vm1091, %v1095, %v1097
      %v1099 = vrot.slane %v458, 1
      %v1100 = vsel %vm1091, %v1097, %v1099
      %v1101 = vrot.slane %v459, 1
      %v1102 = vsel %vm1091, %v1099, %v1101
      %v1103 = vrot.slane %v460, 1
      %v1104 = vsel %vm1091, %v1101, %v1103
      %v1105 = vrot.slane %v461, 1
      %v1106 = vsel %vm1091, %v1103, %v1105
      %v1107 = vrot.slane %v462, 1
      %v1108 = vsel %vm1091, %v1105, %v1107
      %v1109 = vrot.slane %v463, 1
      %v1110 = vsel %vm1091, %v1107, %v1109
      %v1111 = vrot.slane %v464, 1
      %v1112 = vsel %vm1091, %v1109, %v1111
      %v1113 = vrot.slane %v465, 1
      %v1114 = vsel %vm1091, %v1111, %v1113
      %v1115 = vrot.slane %v466, 1
      %v1116 = vsel %vm1091, %v1113, %v1115
      %v1117 = vrot.slane %v467, 1
      %v1118 = vsel %vm1091, %v1115, %v1117
      %v1119 = vrot.slane %v468, 1
      %v1120 = vsel %vm1091, %v1117, %v1119
      %v1121 = vrot.slane %v469, 1
      %v1122 = vsel %vm1091, %v1119, %v1121
      %v1123 = vrot.slane %v470, 1
      %v1124 = vsel %vm1091, %v1121, %v1123
      %v1125 = vrot.slane %v471, 1
      %v1126 = vsel %vm1091, %v1123, %v1125
      %v1128 = vsel %vm619, %v1094, 0
      %v1131 = vsel %vm619, %v1096, 0
      %v1134 = vsel %vm619, %v1098, 0
      %v1137 = vsel %vm619, %v1100, 0
      %v1140 = vsel %vm619, %v1102, 0
      %v1143 = vsel %vm619, %v1104, 0
      %v1146 = vsel %vm619, %v1106, 0
      %v1149 = vsel %vm619, %v1108, 0
      %v1152 = vsel %vm619, %v1110, 0
      %v1155 = vsel %vm619, %v1112, 0
      %v1158 = vsel %vm619, %v1114, 0
      %v1161 = vsel %vm619, %v1116, 0
      %v1164 = vsel %vm619, %v1118, 0
      %v1167 = vsel %vm619, %v1120, 0
      %v1170 = vsel %vm619, %v1122, 0
      %v1173 = vsel %vm619, %v1124, 0
      %v1176 = vsel %vm619, %v1126, 0
      %v1179 = vsel %vm619, %v1125, 0
      %v1182 = vsel %vm674, %v1072, 0
      %1184 = vmatprep.subr.bf16.mxu0 0
      %1185 = vmatpush1.bf16.msra.mxu0 0
      %1186 = vmatprep.subr.bf16.mxu0 0
      %1187 = vmatpush1.bf16.msra.mxu0 0
      %1188 = vmatprep.subr.bf16.mxu0 0
      %1189 = vmatpush1.bf16.msra.mxu0 0
      %1190 = vmatprep.subr.bf16.mxu0 0
      %1191 = vmatpush1.bf16.msra.mxu0 0
      %1192 = vmatprep.subr.bf16.mxu0 0
      %1193 = vmatpush1.bf16.msra.mxu0 0
      %1194 = vmatprep.subr.bf16.mxu0 0
      %1195 = vmatpush1.bf16.msra.mxu0 0
      %1196 = vmatprep.subr.bf16.mxu0 0
      %1197 = vmatpush1.bf16.msra.mxu0 0
      %1198 = vmatprep.subr.bf16.mxu0 0
      %1199 = vmatpush1.bf16.msra.mxu0 %v1182
      %1200 = vmatprep.subr.bf16.mxu0 0
      %1201 = vmatpush2.bf16.msra.mxu0 0
      %1202 = vmatprep.subr.bf16.mxu0 0
      %1203 = vmatpush2.bf16.msra.mxu0 0
      %1204 = vmatprep.subr.bf16.mxu0 0
      %1205 = vmatpush2.bf16.msra.mxu0 0
      %1206 = vmatprep.subr.bf16.mxu0 0
      %1207 = vmatpush2.bf16.msra.mxu0 0
      %1208 = vmatprep.subr.bf16.mxu0 0
      %1209 = vmatpush2.bf16.msra.mxu0 0
      %1210 = vmatprep.subr.bf16.mxu0 0
      %1211 = vmatpush2.bf16.msra.mxu0 0
      %1212 = vmatprep.subr.bf16.mxu0 0
      %1213 = vmatpush2.bf16.msra.mxu0 0
      %1214 = vmatprep.subr.bf16.mxu0 0
      %1215 = vmatpush2.bf16.msra.mxu0 0
      %1216 = vmatprep.mubr.bf16.mxu0 0
      %1217 = vmatmul.mubr.bf16.gmra.mxu0 %v1128
      %v1218 = vpop.f32.mrf.mxu0
      %v1219 = vadd.f32 0.0, %v1218
      %v1220 = vpop.f32.mrf.mxu0
      %v1221 = vpop.f32.mrf.mxu0
      %v1222 = vadd.f32 0.0, %v1221
      %v1223 = vpop.f32.mrf.mxu0
      %1224 = vmatprep.mubr.bf16.mxu0 0
      %1225 = vmatmul.mubr.bf16.gmra.mxu0 %v1131
      %v1226 = vpop.f32.mrf.mxu0
      %v1227 = vadd.f32 0.0, %v1226
      %v1228 = vpop.f32.mrf.mxu0
      %v1229 = vpop.f32.mrf.mxu0
      %v1230 = vadd.f32 0.0, %v1229
      %v1231 = vpop.f32.mrf.mxu0
      %1232 = vmatprep.mubr.bf16.mxu0 0
      %1233 = vmatmul.mubr.bf16.gmra.mxu0 %v1134
      %v1234 = vpop.f32.mrf.mxu0
      %v1235 = vadd.f32 0.0, %v1234
      %v1236 = vpop.f32.mrf.mxu0
      %v1237 = vpop.f32.mrf.mxu0
      %v1238 = vadd.f32 0.0, %v1237
      %v1239 = vpop.f32.mrf.mxu0
      %1240 = vmatprep.mubr.bf16.mxu0 0
      %1241 = vmatmul.mubr.bf16.gmra.mxu0 %v1137
      %v1242 = vpop.f32.mrf.mxu0
      %v1243 = vadd.f32 0.0, %v1242
      %v1244 = vpop.f32.mrf.mxu0
      %v1245 = vpop.f32.mrf.mxu0
      %v1246 = vadd.f32 0.0, %v1245
      %v1247 = vpop.f32.mrf.mxu0
      %1248 = vmatprep.mubr.bf16.mxu0 0
      %1249 = vmatmul.mubr.bf16.gmra.mxu0 %v1140
      %v1250 = vpop.f32.mrf.mxu0
      %v1251 = vadd.f32 0.0, %v1250
      %v1252 = vpop.f32.mrf.mxu0
      %v1253 = vpop.f32.mrf.mxu0
      %v1254 = vadd.f32 0.0, %v1253
      %v1255 = vpop.f32.mrf.mxu0
      %1256 = vmatprep.mubr.bf16.mxu0 0
      %1257 = vmatmul.mubr.bf16.gmra.mxu0 %v1143
      %v1258 = vpop.f32.mrf.mxu0
      %v1259 = vadd.f32 0.0, %v1258
      %v1260 = vpop.f32.mrf.mxu0
      %v1261 = vpop.f32.mrf.mxu0
      %v1262 = vadd.f32 0.0, %v1261
      %v1263 = vpop.f32.mrf.mxu0
      %1264 = vmatprep.mubr.bf16.mxu0 0
      %1265 = vmatmul.mubr.bf16.gmra.mxu0 %v1146
      %v1266 = vpop.f32.mrf.mxu0
      %v1267 = vadd.f32 0.0, %v1266
      %v1268 = vpop.f32.mrf.mxu0
      %v1269 = vpop.f32.mrf.mxu0
      %v1270 = vadd.f32 0.0, %v1269
      %v1271 = vpop.f32.mrf.mxu0
      %1272 = vmatprep.mubr.bf16.mxu0 0
      %1273 = vmatmul.mubr.bf16.gmra.mxu0 %v1149
      %v1274 = vpop.f32.mrf.mxu0
      %v1275 = vadd.f32 0.0, %v1274
      %v1276 = vpop.f32.mrf.mxu0
      %v1277 = vpop.f32.mrf.mxu0
      %v1278 = vadd.f32 0.0, %v1277
      %v1279 = vpop.f32.mrf.mxu0
      %1280 = vmatprep.mubr.bf16.mxu0 0
      %1281 = vmatmul.mubr.bf16.gmra.mxu0 %v1152
      %v1282 = vpop.f32.mrf.mxu0
      %v1283 = vadd.f32 0.0, %v1282
      %v1284 = vpop.f32.mrf.mxu0
      %v1285 = vpop.f32.mrf.mxu0
      %v1286 = vadd.f32 0.0, %v1285
      %v1287 = vpop.f32.mrf.mxu0
      %1288 = vmatprep.mubr.bf16.mxu0 0
      %1289 = vmatmul.mubr.bf16.gmra.mxu0 %v1155
      %v1290 = vpop.f32.mrf.mxu0
      %v1291 = vadd.f32 0.0, %v1290
      %v1292 = vpop.f32.mrf.mxu0
      %v1293 = vpop.f32.mrf.mxu0
      %v1294 = vadd.f32 0.0, %v1293
      %v1295 = vpop.f32.mrf.mxu0
      %1296 = vmatprep.mubr.bf16.mxu0 0
      %1297 = vmatmul.mubr.bf16.gmra.mxu0 %v1158
      %v1298 = vpop.f32.mrf.mxu0
      %v1299 = vadd.f32 0.0, %v1298
      %v1300 = vpop.f32.mrf.mxu0
      %v1301 = vpop.f32.mrf.mxu0
      %v1302 = vadd.f32 0.0, %v1301
      %v1303 = vpop.f32.mrf.mxu0
      %1304 = vmatprep.mubr.bf16.mxu0 0
      %1305 = vmatmul.mubr.bf16.gmra.mxu0 %v1161
      %v1306 = vpop.f32.mrf.mxu0
      %v1307 = vadd.f32 0.0, %v1306
      %v1308 = vpop.f32.mrf.mxu0
      %v1309 = vpop.f32.mrf.mxu0
      %v1310 = vadd.f32 0.0, %v1309
      %v1311 = vpop.f32.mrf.mxu0
      %1312 = vmatprep.mubr.bf16.mxu0 0
      %1313 = vmatmul.mubr.bf16.gmra.mxu0 %v1164
      %v1314 = vpop.f32.mrf.mxu0
      %v1315 = vadd.f32 0.0, %v1314
      %v1316 = vpop.f32.mrf.mxu0
      %v1317 = vpop.f32.mrf.mxu0
      %v1318 = vadd.f32 0.0, %v1317
      %v1319 = vpop.f32.mrf.mxu0
      %1320 = vmatprep.mubr.bf16.mxu0 0
      %1321 = vmatmul.mubr.bf16.gmra.mxu0 %v1167
      %v1322 = vpop.f32.mrf.mxu0
      %v1323 = vadd.f32 0.0, %v1322
      %v1324 = vpop.f32.mrf.mxu0
      %v1325 = vpop.f32.mrf.mxu0
      %v1326 = vadd.f32 0.0, %v1325
      %v1327 = vpop.f32.mrf.mxu0
      %1328 = vmatprep.mubr.bf16.mxu0 0
      %1329 = vmatmul.mubr.bf16.gmra.mxu0 %v1170
      %v1330 = vpop.f32.mrf.mxu0
      %v1331 = vadd.f32 0.0, %v1330
      %v1332 = vpop.f32.mrf.mxu0
      %v1333 = vpop.f32.mrf.mxu0
      %v1334 = vadd.f32 0.0, %v1333
      %v1335 = vpop.f32.mrf.mxu0
      %1336 = vmatprep.mubr.bf16.mxu0 0
      %1337 = vmatmul.mubr.bf16.gmra.mxu0 %v1173
      %v1338 = vpop.f32.mrf.mxu0
      %v1339 = vadd.f32 0.0, %v1338
      %v1340 = vpop.f32.mrf.mxu0
      %v1341 = vpop.f32.mrf.mxu0
      %v1342 = vadd.f32 0.0, %v1341
      %v1343 = vpop.f32.mrf.mxu0
      %1344 = vmatprep.mubr.bf16.mxu0 0
      %1345 = vmatmul.mubr.bf16.gmra.mxu0 %v1176
      %v1346 = vpop.f32.mrf.mxu0
      %v1347 = vadd.f32 0.0, %v1346
      %v1348 = vpop.f32.mrf.mxu0
      %v1349 = vpop.f32.mrf.mxu0
      %v1350 = vadd.f32 0.0, %v1349
      %v1351 = vpop.f32.mrf.mxu0
      %1352 = vmatprep.mubr.bf16.mxu0 0
      %1353 = vmatmul.mubr.bf16.gmra.mxu0 %v1179
      %v1354 = vpop.f32.mrf.mxu0
      %v1355 = vadd.f32 0.0, %v1354
      %v1356 = vpop.f32.mrf.mxu0
      %v1357 = vpop.f32.mrf.mxu0
      %v1358 = vadd.f32 0.0, %v1357
      %v1359 = vpop.f32.mrf.mxu0
      %1360 = vdwg.mxu0
      %v1361 = vadd.f32 %v929, %v1219
      %v1362 = vadd.f32 %v932, %v1222
      %v1363 = vadd.f32 %v937, %v1227
      %v1364 = vadd.f32 %v940, %v1230
      %v1365 = vadd.f32 %v945, %v1235
      %v1366 = vadd.f32 %v948, %v1238
      %v1367 = vadd.f32 %v953, %v1243
      %v1368 = vadd.f32 %v956, %v1246
      %v1369 = vadd.f32 %v961, %v1251
      %v1370 = vadd.f32 %v964, %v1254
      %v1371 = vadd.f32 %v969, %v1259
      %v1372 = vadd.f32 %v972, %v1262
      %v1373 = vadd.f32 %v977, %v1267
      %v1374 = vadd.f32 %v980, %v1270
      %v1375 = vadd.f32 %v985, %v1275
      %v1376 = vadd.f32 %v988, %v1278
      %v1377 = vadd.f32 %v993, %v1283
      %v1378 = vadd.f32 %v996, %v1286
      %v1379 = vadd.f32 %v1001, %v1291
      %v1380 = vadd.f32 %v1004, %v1294
      %v1381 = vadd.f32 %v1009, %v1299
      %v1382 = vadd.f32 %v1012, %v1302
      %v1383 = vadd.f32 %v1017, %v1307
      %v1384 = vadd.f32 %v1020, %v1310
      %v1385 = vadd.f32 %v1025, %v1315
      %v1386 = vadd.f32 %v1028, %v1318
      %v1387 = vadd.f32 %v1033, %v1323
      %v1388 = vadd.f32 %v1036, %v1326
      %v1389 = vadd.f32 %v1041, %v1331
      %v1390 = vadd.f32 %v1044, %v1334
      %v1391 = vadd.f32 %v1049, %v1339
      %v1392 = vadd.f32 %v1052, %v1342
      %v1393 = vadd.f32 %v1057, %v1347
      %v1394 = vadd.f32 %v1060, %v1350
      %v1395 = vadd.f32 %v1065, %v1355
      %v1396 = vadd.f32 %v1068, %v1358
      %s1397 = scalar_lea.vmem %s1, 6
      %v1398 = vld [vmem:[%s1397] sm:$0x3]
      %vm1399 = vsmask.f32 6400
      %v1400 = vrot.slane %v477, 1
      %v1401 = vrot.slane %v479, 2
      %v1402 = vor.u32 %v1400, %v1401
      %v1403 = vrot.slane %v488, 1
      %v1404 = vrot.slane %v484, 2
      %v1405 = vor.u32 %v1403, %v1404
      %v1406 = vsel %vm1399, %v1402, %v1405
      %v1407 = vrot.slane %v496, 1
      %v1408 = vrot.slane %v492, 2
      %v1409 = vor.u32 %v1407, %v1408
      %v1410 = vsel %vm1399, %v1405, %v1409
      %v1411 = vrot.slane %v504, 1
      %v1412 = vrot.slane %v500, 2
      %v1413 = vor.u32 %v1411, %v1412
      %v1414 = vsel %vm1399, %v1409, %v1413
      %v1415 = vrot.slane %v512, 1
      %v1416 = vrot.slane %v508, 2
      %v1417 = vor.u32 %v1415, %v1416
      %v1418 = vsel %vm1399, %v1413, %v1417
      %v1419 = vrot.slane %v520, 1
      %v1420 = vrot.slane %v516, 2
      %v1421 = vor.u32 %v1419, %v1420
      %v1422 = vsel %vm1399, %v1417, %v1421
      %v1423 = vrot.slane %v528, 1
      %v1424 = vrot.slane %v524, 2
      %v1425 = vor.u32 %v1423, %v1424
      %v1426 = vsel %vm1399, %v1421, %v1425
      %v1427 = vrot.slane %v536, 1
      %v1428 = vrot.slane %v532, 2
      %v1429 = vor.u32 %v1427, %v1428
      %v1430 = vsel %vm1399, %v1425, %v1429
      %v1431 = vrot.slane %v544, 1
      %v1432 = vrot.slane %v540, 2
      %v1433 = vor.u32 %v1431, %v1432
      %v1434 = vsel %vm1399, %v1429, %v1433
      %v1435 = vrot.slane %v552, 1
      %v1436 = vrot.slane %v548, 2
      %v1437 = vor.u32 %v1435, %v1436
      %v1438 = vsel %vm1399, %v1433, %v1437
      %v1439 = vrot.slane %v560, 1
      %v1440 = vrot.slane %v556, 2
      %v1441 = vor.u32 %v1439, %v1440
      %v1442 = vsel %vm1399, %v1437, %v1441
      %v1443 = vrot.slane %v568, 1
      %v1444 = vrot.slane %v564, 2
      %v1445 = vor.u32 %v1443, %v1444
      %v1446 = vsel %vm1399, %v1441, %v1445
      %v1447 = vrot.slane %v576, 1
      %v1448 = vrot.slane %v572, 2
      %v1449 = vor.u32 %v1447, %v1448
      %v1450 = vsel %vm1399, %v1445, %v1449
      %v1451 = vrot.slane %v584, 1
      %v1452 = vrot.slane %v580, 2
      %v1453 = vor.u32 %v1451, %v1452
      %v1454 = vsel %vm1399, %v1449, %v1453
      %v1455 = vrot.slane %v592, 1
      %v1456 = vrot.slane %v588, 2
      %v1457 = vor.u32 %v1455, %v1456
      %v1458 = vsel %vm1399, %v1453, %v1457
      %v1459 = vrot.slane %v600, 1
      %v1460 = vrot.slane %v596, 2
      %v1461 = vor.u32 %v1459, %v1460
      %v1462 = vsel %vm1399, %v1457, %v1461
      %v1463 = vrot.slane %v608, 1
      %v1464 = vrot.slane %v604, 2
      %v1465 = vor.u32 %v1463, %v1464
      %v1466 = vsel %vm1399, %v1461, %v1465
      %v1467 = vrot.slane %v616, 1
      %v1468 = vrot.slane %v612, 2
      %v1469 = vor.u32 %v1467, %v1468
      %v1470 = vsel %vm1399, %v1465, %v1469
      %v1472 = vsel %vm619, %v1406, 0
      %v1475 = vsel %vm619, %v1410, 0
      %v1478 = vsel %vm619, %v1414, 0
      %v1481 = vsel %vm619, %v1418, 0
      %v1484 = vsel %vm619, %v1422, 0
      %v1487 = vsel %vm619, %v1426, 0
      %v1490 = vsel %vm619, %v1430, 0
      %v1493 = vsel %vm619, %v1434, 0
      %v1496 = vsel %vm619, %v1438, 0
      %v1499 = vsel %vm619, %v1442, 0
      %v1502 = vsel %vm619, %v1446, 0
      %v1505 = vsel %vm619, %v1450, 0
      %v1508 = vsel %vm619, %v1454, 0
      %v1511 = vsel %vm619, %v1458, 0
      %v1514 = vsel %vm619, %v1462, 0
      %v1517 = vsel %vm619, %v1466, 0
      %v1520 = vsel %vm619, %v1470, 0
      %v1523 = vsel %vm619, %v1469, 0
      %v1526 = vsel %vm674, %v1398, 0
      %1528 = vmatprep.subr.bf16.mxu0 0
      %1529 = vmatpush1.bf16.msra.mxu0 0
      %1530 = vmatprep.subr.bf16.mxu0 0
      %1531 = vmatpush1.bf16.msra.mxu0 0
      %1532 = vmatprep.subr.bf16.mxu0 0
      %1533 = vmatpush1.bf16.msra.mxu0 0
      %1534 = vmatprep.subr.bf16.mxu0 0
      %1535 = vmatpush1.bf16.msra.mxu0 0
      %1536 = vmatprep.subr.bf16.mxu0 0
      %1537 = vmatpush1.bf16.msra.mxu0 0
      %1538 = vmatprep.subr.bf16.mxu0 0
      %1539 = vmatpush1.bf16.msra.mxu0 0
      %1540 = vmatprep.subr.bf16.mxu0 0
      %1541 = vmatpush1.bf16.msra.mxu0 0
      %1542 = vmatprep.subr.bf16.mxu0 0
      %1543 = vmatpush1.bf16.msra.mxu0 %v1526
      %1544 = vmatprep.subr.bf16.mxu0 0
      %1545 = vmatpush2.bf16.msra.mxu0 0
      %1546 = vmatprep.subr.bf16.mxu0 0
      %1547 = vmatpush2.bf16.msra.mxu0 0
      %1548 = vmatprep.subr.bf16.mxu0 0
      %1549 = vmatpush2.bf16.msra.mxu0 0
      %1550 = vmatprep.subr.bf16.mxu0 0
      %1551 = vmatpush2.bf16.msra.mxu0 0
      %1552 = vmatprep.subr.bf16.mxu0 0
      %1553 = vmatpush2.bf16.msra.mxu0 0
      %1554 = vmatprep.subr.bf16.mxu0 0
      %1555 = vmatpush2.bf16.msra.mxu0 0
      %1556 = vmatprep.subr.bf16.mxu0 0
      %1557 = vmatpush2.bf16.msra.mxu0 0
      %1558 = vmatprep.subr.bf16.mxu0 0
      %1559 = vmatpush2.bf16.msra.mxu0 0
      %1560 = vmatprep.mubr.bf16.mxu0 0
      %1561 = vmatmul.mubr.bf16.gmra.mxu0 %v1472
      %v1562 = vpop.f32.mrf.mxu0
      %v1563 = vadd.f32 0.0, %v1562
      %v1564 = vpop.f32.mrf.mxu0
      %v1565 = vpop.f32.mrf.mxu0
      %v1566 = vadd.f32 0.0, %v1565
      %v1567 = vpop.f32.mrf.mxu0
      %1568 = vmatprep.mubr.bf16.mxu0 0
      %1569 = vmatmul.mubr.bf16.gmra.mxu0 %v1475
      %v1570 = vpop.f32.mrf.mxu0
      %v1571 = vadd.f32 0.0, %v1570
      %v1572 = vpop.f32.mrf.mxu0
      %v1573 = vpop.f32.mrf.mxu0
      %v1574 = vadd.f32 0.0, %v1573
      %v1575 = vpop.f32.mrf.mxu0
      %1576 = vmatprep.mubr.bf16.mxu0 0
      %1577 = vmatmul.mubr.bf16.gmra.mxu0 %v1478
      %v1578 = vpop.f32.mrf.mxu0
      %v1579 = vadd.f32 0.0, %v1578
      %v1580 = vpop.f32.mrf.mxu0
      %v1581 = vpop.f32.mrf.mxu0
      %v1582 = vadd.f32 0.0, %v1581
      %v1583 = vpop.f32.mrf.mxu0
      %1584 = vmatprep.mubr.bf16.mxu0 0
      %1585 = vmatmul.mubr.bf16.gmra.mxu0 %v1481
      %v1586 = vpop.f32.mrf.mxu0
      %v1587 = vadd.f32 0.0, %v1586
      %v1588 = vpop.f32.mrf.mxu0
      %v1589 = vpop.f32.mrf.mxu0
      %v1590 = vadd.f32 0.0, %v1589
      %v1591 = vpop.f32.mrf.mxu0
      %1592 = vmatprep.mubr.bf16.mxu0 0
      %1593 = vmatmul.mubr.bf16.gmra.mxu0 %v1484
      %v1594 = vpop.f32.mrf.mxu0
      %v1595 = vadd.f32 0.0, %v1594
      %v1596 = vpop.f32.mrf.mxu0
      %v1597 = vpop.f32.mrf.mxu0
      %v1598 = vadd.f32 0.0, %v1597
      %v1599 = vpop.f32.mrf.mxu0
      %1600 = vmatprep.mubr.bf16.mxu0 0
      %1601 = vmatmul.mubr.bf16.gmra.mxu0 %v1487
      %v1602 = vpop.f32.mrf.mxu0
      %v1603 = vadd.f32 0.0, %v1602
      %v1604 = vpop.f32.mrf.mxu0
      %v1605 = vpop.f32.mrf.mxu0
      %v1606 = vadd.f32 0.0, %v1605
      %v1607 = vpop.f32.mrf.mxu0
      %1608 = vmatprep.mubr.bf16.mxu0 0
      %1609 = vmatmul.mubr.bf16.gmra.mxu0 %v1490
      %v1610 = vpop.f32.mrf.mxu0
      %v1611 = vadd.f32 0.0, %v1610
      %v1612 = vpop.f32.mrf.mxu0
      %v1613 = vpop.f32.mrf.mxu0
      %v1614 = vadd.f32 0.0, %v1613
      %v1615 = vpop.f32.mrf.mxu0
      %1616 = vmatprep.mubr.bf16.mxu0 0
      %1617 = vmatmul.mubr.bf16.gmra.mxu0 %v1493
      %v1618 = vpop.f32.mrf.mxu0
      %v1619 = vadd.f32 0.0, %v1618
      %v1620 = vpop.f32.mrf.mxu0
      %v1621 = vpop.f32.mrf.mxu0
      %v1622 = vadd.f32 0.0, %v1621
      %v1623 = vpop.f32.mrf.mxu0
      %1624 = vmatprep.mubr.bf16.mxu0 0
      %1625 = vmatmul.mubr.bf16.gmra.mxu0 %v1496
      %v1626 = vpop.f32.mrf.mxu0
      %v1627 = vadd.f32 0.0, %v1626
      %v1628 = vpop.f32.mrf.mxu0
      %v1629 = vpop.f32.mrf.mxu0
      %v1630 = vadd.f32 0.0, %v1629
      %v1631 = vpop.f32.mrf.mxu0
      %1632 = vmatprep.mubr.bf16.mxu0 0
      %1633 = vmatmul.mubr.bf16.gmra.mxu0 %v1499
      %v1634 = vpop.f32.mrf.mxu0
      %v1635 = vadd.f32 0.0, %v1634
      %v1636 = vpop.f32.mrf.mxu0
      %v1637 = vpop.f32.mrf.mxu0
      %v1638 = vadd.f32 0.0, %v1637
      %v1639 = vpop.f32.mrf.mxu0
      %1640 = vmatprep.mubr.bf16.mxu0 0
      %1641 = vmatmul.mubr.bf16.gmra.mxu0 %v1502
      %v1642 = vpop.f32.mrf.mxu0
      %v1643 = vadd.f32 0.0, %v1642
      %v1644 = vpop.f32.mrf.mxu0
      %v1645 = vpop.f32.mrf.mxu0
      %v1646 = vadd.f32 0.0, %v1645
      %v1647 = vpop.f32.mrf.mxu0
      %1648 = vmatprep.mubr.bf16.mxu0 0
      %1649 = vmatmul.mubr.bf16.gmra.mxu0 %v1505
      %v1650 = vpop.f32.mrf.mxu0
      %v1651 = vadd.f32 0.0, %v1650
      %v1652 = vpop.f32.mrf.mxu0
      %v1653 = vpop.f32.mrf.mxu0
      %v1654 = vadd.f32 0.0, %v1653
      %v1655 = vpop.f32.mrf.mxu0
      %1656 = vmatprep.mubr.bf16.mxu0 0
      %1657 = vmatmul.mubr.bf16.gmra.mxu0 %v1508
      %v1658 = vpop.f32.mrf.mxu0
      %v1659 = vadd.f32 0.0, %v1658
      %v1660 = vpop.f32.mrf.mxu0
      %v1661 = vpop.f32.mrf.mxu0
      %v1662 = vadd.f32 0.0, %v1661
      %v1663 = vpop.f32.mrf.mxu0
      %1664 = vmatprep.mubr.bf16.mxu0 0
      %1665 = vmatmul.mubr.bf16.gmra.mxu0 %v1511
      %v1666 = vpop.f32.mrf.mxu0
      %v1667 = vadd.f32 0.0, %v1666
      %v1668 = vpop.f32.mrf.mxu0
      %v1669 = vpop.f32.mrf.mxu0
      %v1670 = vadd.f32 0.0, %v1669
      %v1671 = vpop.f32.mrf.mxu0
      %1672 = vmatprep.mubr.bf16.mxu0 0
      %1673 = vmatmul.mubr.bf16.gmra.mxu0 %v1514
      %v1674 = vpop.f32.mrf.mxu0
      %v1675 = vadd.f32 0.0, %v1674
      %v1676 = vpop.f32.mrf.mxu0
      %v1677 = vpop.f32.mrf.mxu0
      %v1678 = vadd.f32 0.0, %v1677
      %v1679 = vpop.f32.mrf.mxu0
      %1680 = vmatprep.mubr.bf16.mxu0 0
      %1681 = vmatmul.mubr.bf16.gmra.mxu0 %v1517
      %v1682 = vpop.f32.mrf.mxu0
      %v1683 = vadd.f32 0.0, %v1682
      %v1684 = vpop.f32.mrf.mxu0
      %v1685 = vpop.f32.mrf.mxu0
      %v1686 = vadd.f32 0.0, %v1685
      %v1687 = vpop.f32.mrf.mxu0
      %1688 = vmatprep.mubr.bf16.mxu0 0
      %1689 = vmatmul.mubr.bf16.gmra.mxu0 %v1520
      %v1690 = vpop.f32.mrf.mxu0
      %v1691 = vadd.f32 0.0, %v1690
      %v1692 = vpop.f32.mrf.mxu0
      %v1693 = vpop.f32.mrf.mxu0
      %v1694 = vadd.f32 0.0, %v1693
      %v1695 = vpop.f32.mrf.mxu0
      %1696 = vmatprep.mubr.bf16.mxu0 0
      %1697 = vmatmul.mubr.bf16.gmra.mxu0 %v1523
      %v1698 = vpop.f32.mrf.mxu0
      %v1699 = vadd.f32 0.0, %v1698
      %v1700 = vpop.f32.mrf.mxu0
      %v1701 = vpop.f32.mrf.mxu0
      %v1702 = vadd.f32 0.0, %v1701
      %v1703 = vpop.f32.mrf.mxu0
      %1704 = vdwg.mxu0
      %v1705 = vadd.f32 %v1361, %v1563
      %v1706 = vadd.f32 %v1362, %v1566
      %v1707 = vadd.f32 %v1363, %v1571
      %v1708 = vadd.f32 %v1364, %v1574
      %v1709 = vadd.f32 %v1365, %v1579
      %v1710 = vadd.f32 %v1366, %v1582
      %v1711 = vadd.f32 %v1367, %v1587
      %v1712 = vadd.f32 %v1368, %v1590
      %v1713 = vadd.f32 %v1369, %v1595
      %v1714 = vadd.f32 %v1370, %v1598
      %v1715 = vadd.f32 %v1371, %v1603
      %v1716 = vadd.f32 %v1372, %v1606
      %v1717 = vadd.f32 %v1373, %v1611
      %v1718 = vadd.f32 %v1374, %v1614
      %v1719 = vadd.f32 %v1375, %v1619
      %v1720 = vadd.f32 %v1376, %v1622
      %v1721 = vadd.f32 %v1377, %v1627
      %v1722 = vadd.f32 %v1378, %v1630
      %v1723 = vadd.f32 %v1379, %v1635
      %v1724 = vadd.f32 %v1380, %v1638
      %v1725 = vadd.f32 %v1381, %v1643
      %v1726 = vadd.f32 %v1382, %v1646
      %v1727 = vadd.f32 %v1383, %v1651
      %v1728 = vadd.f32 %v1384, %v1654
      %v1729 = vadd.f32 %v1385, %v1659
      %v1730 = vadd.f32 %v1386, %v1662
      %v1731 = vadd.f32 %v1387, %v1667
      %v1732 = vadd.f32 %v1388, %v1670
      %v1733 = vadd.f32 %v1389, %v1675
      %v1734 = vadd.f32 %v1390, %v1678
      %v1735 = vadd.f32 %v1391, %v1683
      %v1736 = vadd.f32 %v1392, %v1686
      %v1737 = vadd.f32 %v1393, %v1691
      %v1738 = vadd.f32 %v1394, %v1694
      %v1739 = vadd.f32 %v1395, %v1699
      %v1740 = vadd.f32 %v1396, %v1702
      %v1741 = vpack.c.bf16 %v450, %v449
      %s1742 = scalar_lea.vmem %s1, 8
      %v1743 = vld [vmem:[%s1742] sm:$0x3]
      %v1745 = vrot.slane %v1741, 1
      %v1746 = vsel %vm1091, %v1125, %v1745
      %v1748 = vsel %vm619, %v1746, 0
      %v1751 = vsel %vm619, %v1745, 0
      %v1754 = vsel %vm674, %v1743, 0
      %1756 = vmatprep.subr.bf16.mxu0 0
      %1757 = vmatpush1.bf16.msra.mxu0 0
      %1758 = vmatprep.subr.bf16.mxu0 0
      %1759 = vmatpush1.bf16.msra.mxu0 0
      %1760 = vmatprep.subr.bf16.mxu0 0
      %1761 = vmatpush1.bf16.msra.mxu0 0
      %1762 = vmatprep.subr.bf16.mxu0 0
      %1763 = vmatpush1.bf16.msra.mxu0 0
      %1764 = vmatprep.subr.bf16.mxu0 0
      %1765 = vmatpush1.bf16.msra.mxu0 0
      %1766 = vmatprep.subr.bf16.mxu0 0
      %1767 = vmatpush1.bf16.msra.mxu0 0
      %1768 = vmatprep.subr.bf16.mxu0 0
      %1769 = vmatpush1.bf16.msra.mxu0 0
      %1770 = vmatprep.subr.bf16.mxu0 0
      %1771 = vmatpush1.bf16.msra.mxu0 %v1754
      %1772 = vmatprep.subr.bf16.mxu0 0
      %1773 = vmatpush2.bf16.msra.mxu0 0
      %1774 = vmatprep.subr.bf16.mxu0 0
      %1775 = vmatpush2.bf16.msra.mxu0 0
      %1776 = vmatprep.subr.bf16.mxu0 0
      %1777 = vmatpush2.bf16.msra.mxu0 0
      %1778 = vmatprep.subr.bf16.mxu0 0
      %1779 = vmatpush2.bf16.msra.mxu0 0
      %1780 = vmatprep.subr.bf16.mxu0 0
      %1781 = vmatpush2.bf16.msra.mxu0 0
      %1782 = vmatprep.subr.bf16.mxu0 0
      %1783 = vmatpush2.bf16.msra.mxu0 0
      %1784 = vmatprep.subr.bf16.mxu0 0
      %1785 = vmatpush2.bf16.msra.mxu0 0
      %1786 = vmatprep.subr.bf16.mxu0 0
      %1787 = vmatpush2.bf16.msra.mxu0 0
      %1788 = vmatprep.mubr.bf16.mxu0 0
      %1789 = vmatmul.mubr.bf16.gmra.mxu0 %v1131
      %v1790 = vpop.f32.mrf.mxu0
      %v1791 = vadd.f32 0.0, %v1790
      %v1792 = vpop.f32.mrf.mxu0
      %v1793 = vpop.f32.mrf.mxu0
      %v1794 = vadd.f32 0.0, %v1793
      %v1795 = vpop.f32.mrf.mxu0
      %1796 = vmatprep.mubr.bf16.mxu0 0
      %1797 = vmatmul.mubr.bf16.gmra.mxu0 %v1134
      %v1798 = vpop.f32.mrf.mxu0
      %v1799 = vadd.f32 0.0, %v1798
      %v1800 = vpop.f32.mrf.mxu0
      %v1801 = vpop.f32.mrf.mxu0
      %v1802 = vadd.f32 0.0, %v1801
      %v1803 = vpop.f32.mrf.mxu0
      %1804 = vmatprep.mubr.bf16.mxu0 0
      %1805 = vmatmul.mubr.bf16.gmra.mxu0 %v1137
      %v1806 = vpop.f32.mrf.mxu0
      %v1807 = vadd.f32 0.0, %v1806
      %v1808 = vpop.f32.mrf.mxu0
      %v1809 = vpop.f32.mrf.mxu0
      %v1810 = vadd.f32 0.0, %v1809
      %v1811 = vpop.f32.mrf.mxu0
      %1812 = vmatprep.mubr.bf16.mxu0 0
      %1813 = vmatmul.mubr.bf16.gmra.mxu0 %v1140
      %v1814 = vpop.f32.mrf.mxu0
      %v1815 = vadd.f32 0.0, %v1814
      %v1816 = vpop.f32.mrf.mxu0
      %v1817 = vpop.f32.mrf.mxu0
      %v1818 = vadd.f32 0.0, %v1817
      %v1819 = vpop.f32.mrf.mxu0
      %1820 = vmatprep.mubr.bf16.mxu0 0
      %1821 = vmatmul.mubr.bf16.gmra.mxu0 %v1143
      %v1822 = vpop.f32.mrf.mxu0
      %v1823 = vadd.f32 0.0, %v1822
      %v1824 = vpop.f32.mrf.mxu0
      %v1825 = vpop.f32.mrf.mxu0
      %v1826 = vadd.f32 0.0, %v1825
      %v1827 = vpop.f32.mrf.mxu0
      %1828 = vmatprep.mubr.bf16.mxu0 0
      %1829 = vmatmul.mubr.bf16.gmra.mxu0 %v1146
      %v1830 = vpop.f32.mrf.mxu0
      %v1831 = vadd.f32 0.0, %v1830
      %v1832 = vpop.f32.mrf.mxu0
      %v1833 = vpop.f32.mrf.mxu0
      %v1834 = vadd.f32 0.0, %v1833
      %v1835 = vpop.f32.mrf.mxu0
      %1836 = vmatprep.mubr.bf16.mxu0 0
      %1837 = vmatmul.mubr.bf16.gmra.mxu0 %v1149
      %v1838 = vpop.f32.mrf.mxu0
      %v1839 = vadd.f32 0.0, %v1838
      %v1840 = vpop.f32.mrf.mxu0
      %v1841 = vpop.f32.mrf.mxu0
      %v1842 = vadd.f32 0.0, %v1841
      %v1843 = vpop.f32.mrf.mxu0
      %1844 = vmatprep.mubr.bf16.mxu0 0
      %1845 = vmatmul.mubr.bf16.gmra.mxu0 %v1152
      %v1846 = vpop.f32.mrf.mxu0
      %v1847 = vadd.f32 0.0, %v1846
      %v1848 = vpop.f32.mrf.mxu0
      %v1849 = vpop.f32.mrf.mxu0
      %v1850 = vadd.f32 0.0, %v1849
      %v1851 = vpop.f32.mrf.mxu0
      %1852 = vmatprep.mubr.bf16.mxu0 0
      %1853 = vmatmul.mubr.bf16.gmra.mxu0 %v1155
      %v1854 = vpop.f32.mrf.mxu0
      %v1855 = vadd.f32 0.0, %v1854
      %v1856 = vpop.f32.mrf.mxu0
      %v1857 = vpop.f32.mrf.mxu0
      %v1858 = vadd.f32 0.0, %v1857
      %v1859 = vpop.f32.mrf.mxu0
      %1860 = vmatprep.mubr.bf16.mxu0 0
      %1861 = vmatmul.mubr.bf16.gmra.mxu0 %v1158
      %v1862 = vpop.f32.mrf.mxu0
      %v1863 = vadd.f32 0.0, %v1862
      %v1864 = vpop.f32.mrf.mxu0
      %v1865 = vpop.f32.mrf.mxu0
      %v1866 = vadd.f32 0.0, %v1865
      %v1867 = vpop.f32.mrf.mxu0
      %1868 = vmatprep.mubr.bf16.mxu0 0
      %1869 = vmatmul.mubr.bf16.gmra.mxu0 %v1161
      %v1870 = vpop.f32.mrf.mxu0
      %v1871 = vadd.f32 0.0, %v1870
      %v1872 = vpop.f32.mrf.mxu0
      %v1873 = vpop.f32.mrf.mxu0
      %v1874 = vadd.f32 0.0, %v1873
      %v1875 = vpop.f32.mrf.mxu0
      %1876 = vmatprep.mubr.bf16.mxu0 0
      %1877 = vmatmul.mubr.bf16.gmra.mxu0 %v1164
      %v1878 = vpop.f32.mrf.mxu0
      %v1879 = vadd.f32 0.0, %v1878
      %v1880 = vpop.f32.mrf.mxu0
      %v1881 = vpop.f32.mrf.mxu0
      %v1882 = vadd.f32 0.0, %v1881
      %v1883 = vpop.f32.mrf.mxu0
      %1884 = vmatprep.mubr.bf16.mxu0 0
      %1885 = vmatmul.mubr.bf16.gmra.mxu0 %v1167
      %v1886 = vpop.f32.mrf.mxu0
      %v1887 = vadd.f32 0.0, %v1886
      %v1888 = vpop.f32.mrf.mxu0
      %v1889 = vpop.f32.mrf.mxu0
      %v1890 = vadd.f32 0.0, %v1889
      %v1891 = vpop.f32.mrf.mxu0
      %1892 = vmatprep.mubr.bf16.mxu0 0
      %1893 = vmatmul.mubr.bf16.gmra.mxu0 %v1170
      %v1894 = vpop.f32.mrf.mxu0
      %v1895 = vadd.f32 0.0, %v1894
      %v1896 = vpop.f32.mrf.mxu0
      %v1897 = vpop.f32.mrf.mxu0
      %v1898 = vadd.f32 0.0, %v1897
      %v1899 = vpop.f32.mrf.mxu0
      %1900 = vmatprep.mubr.bf16.mxu0 0
      %1901 = vmatmul.mubr.bf16.gmra.mxu0 %v1173
      %v1902 = vpop.f32.mrf.mxu0
      %v1903 = vadd.f32 0.0, %v1902
      %v1904 = vpop.f32.mrf.mxu0
      %v1905 = vpop.f32.mrf.mxu0
      %v1906 = vadd.f32 0.0, %v1905
      %v1907 = vpop.f32.mrf.mxu0
      %1908 = vmatprep.mubr.bf16.mxu0 0
      %1909 = vmatmul.mubr.bf16.gmra.mxu0 %v1176
      %v1910 = vpop.f32.mrf.mxu0
      %v1911 = vadd.f32 0.0, %v1910
      %v1912 = vpop.f32.mrf.mxu0
      %v1913 = vpop.f32.mrf.mxu0
      %v1914 = vadd.f32 0.0, %v1913
      %v1915 = vpop.f32.mrf.mxu0
      %1916 = vmatprep.mubr.bf16.mxu0 0
      %1917 = vmatmul.mubr.bf16.gmra.mxu0 %v1748
      %v1918 = vpop.f32.mrf.mxu0
      %v1919 = vadd.f32 0.0, %v1918
      %v1920 = vpop.f32.mrf.mxu0
      %v1921 = vpop.f32.mrf.mxu0
      %v1922 = vadd.f32 0.0, %v1921
      %v1923 = vpop.f32.mrf.mxu0
      %1924 = vmatprep.mubr.bf16.mxu0 0
      %1925 = vmatmul.mubr.bf16.gmra.mxu0 %v1751
      %v1926 = vpop.f32.mrf.mxu0
      %v1927 = vadd.f32 0.0, %v1926
      %v1928 = vpop.f32.mrf.mxu0
      %v1929 = vpop.f32.mrf.mxu0
      %v1930 = vadd.f32 0.0, %v1929
      %v1931 = vpop.f32.mrf.mxu0
      %1932 = vdwg.mxu0
      %v1933 = vadd.f32 %v1705, %v1791
      %v1934 = vadd.f32 %v1706, %v1794
      %v1935 = vadd.f32 %v1707, %v1799
      %v1936 = vadd.f32 %v1708, %v1802
      %v1937 = vadd.f32 %v1709, %v1807
      %v1938 = vadd.f32 %v1710, %v1810
      %v1939 = vadd.f32 %v1711, %v1815
      %v1940 = vadd.f32 %v1712, %v1818
      %v1941 = vadd.f32 %v1713, %v1823
      %v1942 = vadd.f32 %v1714, %v1826
      %v1943 = vadd.f32 %v1715, %v1831
      %v1944 = vadd.f32 %v1716, %v1834
      %v1945 = vadd.f32 %v1717, %v1839
      %v1946 = vadd.f32 %v1718, %v1842
      %v1947 = vadd.f32 %v1719, %v1847
      %v1948 = vadd.f32 %v1720, %v1850
      %v1949 = vadd.f32 %v1721, %v1855
      %v1950 = vadd.f32 %v1722, %v1858
      %v1951 = vadd.f32 %v1723, %v1863
      %v1952 = vadd.f32 %v1724, %v1866
      %v1953 = vadd.f32 %v1725, %v1871
      %v1954 = vadd.f32 %v1726, %v1874
      %v1955 = vadd.f32 %v1727, %v1879
      %v1956 = vadd.f32 %v1728, %v1882
      %v1957 = vadd.f32 %v1729, %v1887
      %v1958 = vadd.f32 %v1730, %v1890
      %v1959 = vadd.f32 %v1731, %v1895
      %v1960 = vadd.f32 %v1732, %v1898
      %v1961 = vadd.f32 %v1733, %v1903
      %v1962 = vadd.f32 %v1734, %v1906
      %v1963 = vadd.f32 %v1735, %v1911
      %v1964 = vadd.f32 %v1736, %v1914
      %v1965 = vadd.f32 %v1737, %v1919
      %v1966 = vadd.f32 %v1738, %v1922
      %v1967 = vadd.f32 %v1739, %v1927
      %v1968 = vadd.f32 %v1740, %v1930
      %s1969 = scalar_lea.vmem %s1, 10
      %v1970 = vld [vmem:[%s1969] sm:$0x3]
      %v1972 = vshrl.u32 %v1741, 16
      %v1974 = vrot.slane %v1972, 1
      %v1975 = vshll.u32 %v1741, 16
      %v1977 = vrot.slane %v1975, 2
      %v1978 = vor.u32 %v1974, %v1977
      %v1979 = vsel %vm1399, %v1469, %v1978
      %v1981 = vsel %vm619, %v1979, 0
      %v1984 = vsel %vm619, %v1978, 0
      %v1987 = vsel %vm674, %v1970, 0
      %1989 = vmatprep.subr.bf16.mxu0 0
      %1990 = vmatpush1.bf16.msra.mxu0 0
      %1991 = vmatprep.subr.bf16.mxu0 0
      %1992 = vmatpush1.bf16.msra.mxu0 0
      %1993 = vmatprep.subr.bf16.mxu0 0
      %1994 = vmatpush1.bf16.msra.mxu0 0
      %1995 = vmatprep.subr.bf16.mxu0 0
      %1996 = vmatpush1.bf16.msra.mxu0 0
      %1997 = vmatprep.subr.bf16.mxu0 0
      %1998 = vmatpush1.bf16.msra.mxu0 0
      %1999 = vmatprep.subr.bf16.mxu0 0
      %2000 = vmatpush1.bf16.msra.mxu0 0
      %2001 = vmatprep.subr.bf16.mxu0 0
      %2002 = vmatpush1.bf16.msra.mxu0 0
      %2003 = vmatprep.subr.bf16.mxu0 0
      %2004 = vmatpush1.bf16.msra.mxu0 %v1987
      %2005 = vmatprep.subr.bf16.mxu0 0
      %2006 = vmatpush2.bf16.msra.mxu0 0
      %2007 = vmatprep.subr.bf16.mxu0 0
      %2008 = vmatpush2.bf16.msra.mxu0 0
      %2009 = vmatprep.subr.bf16.mxu0 0
      %2010 = vmatpush2.bf16.msra.mxu0 0
      %2011 = vmatprep.subr.bf16.mxu0 0
      %2012 = vmatpush2.bf16.msra.mxu0 0
      %2013 = vmatprep.subr.bf16.mxu0 0
      %2014 = vmatpush2.bf16.msra.mxu0 0
      %2015 = vmatprep.subr.bf16.mxu0 0
      %2016 = vmatpush2.bf16.msra.mxu0 0
      %2017 = vmatprep.subr.bf16.mxu0 0
      %2018 = vmatpush2.bf16.msra.mxu0 0
      %2019 = vmatprep.subr.bf16.mxu0 0
      %2020 = vmatpush2.bf16.msra.mxu0 0
      %2021 = vmatprep.mubr.bf16.mxu0 0
      %2022 = vmatmul.mubr.bf16.gmra.mxu0 %v1475
      %v2023 = vpop.f32.mrf.mxu0
      %v2024 = vadd.f32 0.0, %v2023
      %v2025 = vpop.f32.mrf.mxu0
      %v2026 = vpop.f32.mrf.mxu0
      %v2027 = vadd.f32 0.0, %v2026
      %v2028 = vpop.f32.mrf.mxu0
      %2029 = vmatprep.mubr.bf16.mxu0 0
      %2030 = vmatmul.mubr.bf16.gmra.mxu0 %v1478
      %v2031 = vpop.f32.mrf.mxu0
      %v2032 = vadd.f32 0.0, %v2031
      %v2033 = vpop.f32.mrf.mxu0
      %v2034 = vpop.f32.mrf.mxu0
      %v2035 = vadd.f32 0.0, %v2034
      %v2036 = vpop.f32.mrf.mxu0
      %2037 = vmatprep.mubr.bf16.mxu0 0
      %2038 = vmatmul.mubr.bf16.gmra.mxu0 %v1481
      %v2039 = vpop.f32.mrf.mxu0
      %v2040 = vadd.f32 0.0, %v2039
      %v2041 = vpop.f32.mrf.mxu0
      %v2042 = vpop.f32.mrf.mxu0
      %v2043 = vadd.f32 0.0, %v2042
      %v2044 = vpop.f32.mrf.mxu0
      %2045 = vmatprep.mubr.bf16.mxu0 0
      %2046 = vmatmul.mubr.bf16.gmra.mxu0 %v1484
      %v2047 = vpop.f32.mrf.mxu0
      %v2048 = vadd.f32 0.0, %v2047
      %v2049 = vpop.f32.mrf.mxu0
      %v2050 = vpop.f32.mrf.mxu0
      %v2051 = vadd.f32 0.0, %v2050
      %v2052 = vpop.f32.mrf.mxu0
      %2053 = vmatprep.mubr.bf16.mxu0 0
      %2054 = vmatmul.mubr.bf16.gmra.mxu0 %v1487
      %v2055 = vpop.f32.mrf.mxu0
      %v2056 = vadd.f32 0.0, %v2055
      %v2057 = vpop.f32.mrf.mxu0
      %v2058 = vpop.f32.mrf.mxu0
      %v2059 = vadd.f32 0.0, %v2058
      %v2060 = vpop.f32.mrf.mxu0
      %2061 = vmatprep.mubr.bf16.mxu0 0
      %2062 = vmatmul.mubr.bf16.gmra.mxu0 %v1490
      %v2063 = vpop.f32.mrf.mxu0
      %v2064 = vadd.f32 0.0, %v2063
      %v2065 = vpop.f32.mrf.mxu0
      %v2066 = vpop.f32.mrf.mxu0
      %v2067 = vadd.f32 0.0, %v2066
      %v2068 = vpop.f32.mrf.mxu0
      %2069 = vmatprep.mubr.bf16.mxu0 0
      %2070 = vmatmul.mubr.bf16.gmra.mxu0 %v1493
      %v2071 = vpop.f32.mrf.mxu0
      %v2072 = vadd.f32 0.0, %v2071
      %v2073 = vpop.f32.mrf.mxu0
      %v2074 = vpop.f32.mrf.mxu0
      %v2075 = vadd.f32 0.0, %v2074
      %v2076 = vpop.f32.mrf.mxu0
      %2077 = vmatprep.mubr.bf16.mxu0 0
      %2078 = vmatmul.mubr.bf16.gmra.mxu0 %v1496
      %v2079 = vpop.f32.mrf.mxu0
      %v2080 = vadd.f32 0.0, %v2079
      %v2081 = vpop.f32.mrf.mxu0
      %v2082 = vpop.f32.mrf.mxu0
      %v2083 = vadd.f32 0.0, %v2082
      %v2084 = vpop.f32.mrf.mxu0
      %2085 = vmatprep.mubr.bf16.mxu0 0
      %2086 = vmatmul.mubr.bf16.gmra.mxu0 %v1499
      %v2087 = vpop.f32.mrf.mxu0
      %v2088 = vadd.f32 0.0, %v2087
      %v2089 = vpop.f32.mrf.mxu0
      %v2090 = vpop.f32.mrf.mxu0
      %v2091 = vadd.f32 0.0, %v2090
      %v2092 = vpop.f32.mrf.mxu0
      %2093 = vmatprep.mubr.bf16.mxu0 0
      %2094 = vmatmul.mubr.bf16.gmra.mxu0 %v1502
      %v2095 = vpop.f32.mrf.mxu0
      %v2096 = vadd.f32 0.0, %v2095
      %v2097 = vpop.f32.mrf.mxu0
      %v2098 = vpop.f32.mrf.mxu0
      %v2099 = vadd.f32 0.0, %v2098
      %v2100 = vpop.f32.mrf.mxu0
      %2101 = vmatprep.mubr.bf16.mxu0 0
      %2102 = vmatmul.mubr.bf16.gmra.mxu0 %v1505
      %v2103 = vpop.f32.mrf.mxu0
      %v2104 = vadd.f32 0.0, %v2103
      %v2105 = vpop.f32.mrf.mxu0
      %v2106 = vpop.f32.mrf.mxu0
      %v2107 = vadd.f32 0.0, %v2106
      %v2108 = vpop.f32.mrf.mxu0
      %2109 = vmatprep.mubr.bf16.mxu0 0
      %2110 = vmatmul.mubr.bf16.gmra.mxu0 %v1508
      %v2111 = vpop.f32.mrf.mxu0
      %v2112 = vadd.f32 0.0, %v2111
      %v2113 = vpop.f32.mrf.mxu0
      %v2114 = vpop.f32.mrf.mxu0
      %v2115 = vadd.f32 0.0, %v2114
      %v2116 = vpop.f32.mrf.mxu0
      %2117 = vmatprep.mubr.bf16.mxu0 0
      %2118 = vmatmul.mubr.bf16.gmra.mxu0 %v1511
      %v2119 = vpop.f32.mrf.mxu0
      %v2120 = vadd.f32 0.0, %v2119
      %v2121 = vpop.f32.mrf.mxu0
      %v2122 = vpop.f32.mrf.mxu0
      %v2123 = vadd.f32 0.0, %v2122
      %v2124 = vpop.f32.mrf.mxu0
      %2125 = vmatprep.mubr.bf16.mxu0 0
      %2126 = vmatmul.mubr.bf16.gmra.mxu0 %v1514
      %v2127 = vpop.f32.mrf.mxu0
      %v2128 = vadd.f32 0.0, %v2127
      %v2129 = vpop.f32.mrf.mxu0
      %v2130 = vpop.f32.mrf.mxu0
      %v2131 = vadd.f32 0.0, %v2130
      %v2132 = vpop.f32.mrf.mxu0
      %2133 = vmatprep.mubr.bf16.mxu0 0
      %2134 = vmatmul.mubr.bf16.gmra.mxu0 %v1517
      %v2135 = vpop.f32.mrf.mxu0
      %v2136 = vadd.f32 0.0, %v2135
      %v2137 = vpop.f32.mrf.mxu0
      %v2138 = vpop.f32.mrf.mxu0
      %v2139 = vadd.f32 0.0, %v2138
      %v2140 = vpop.f32.mrf.mxu0
      %2141 = vmatprep.mubr.bf16.mxu0 0
      %2142 = vmatmul.mubr.bf16.gmra.mxu0 %v1520
      %v2143 = vpop.f32.mrf.mxu0
      %v2144 = vadd.f32 0.0, %v2143
      %v2145 = vpop.f32.mrf.mxu0
      %v2146 = vpop.f32.mrf.mxu0
      %v2147 = vadd.f32 0.0, %v2146
      %v2148 = vpop.f32.mrf.mxu0
      %2149 = vmatprep.mubr.bf16.mxu0 0
      %2150 = vmatmul.mubr.bf16.gmra.mxu0 %v1981
      %v2151 = vpop.f32.mrf.mxu0
      %v2152 = vadd.f32 0.0, %v2151
      %v2153 = vpop.f32.mrf.mxu0
      %v2154 = vpop.f32.mrf.mxu0
      %v2155 = vadd.f32 0.0, %v2154
      %v2156 = vpop.f32.mrf.mxu0
      %2157 = vmatprep.mubr.bf16.mxu0 0
      %2158 = vmatmul.mubr.bf16.gmra.mxu0 %v1984
      %v2159 = vpop.f32.mrf.mxu0
      %v2160 = vadd.f32 0.0, %v2159
      %v2161 = vpop.f32.mrf.mxu0
      %v2162 = vpop.f32.mrf.mxu0
      %v2163 = vadd.f32 0.0, %v2162
      %v2164 = vpop.f32.mrf.mxu0
      %2165 = vdwg.mxu0
      %v2166 = vadd.f32 %v1933, %v2024
      %v2167 = vadd.f32 %v1934, %v2027
      %v2168 = vadd.f32 %v1935, %v2032
      %v2169 = vadd.f32 %v1936, %v2035
      %v2170 = vadd.f32 %v1937, %v2040
      %v2171 = vadd.f32 %v1938, %v2043
      %v2172 = vadd.f32 %v1939, %v2048
      %v2173 = vadd.f32 %v1940, %v2051
      %v2174 = vadd.f32 %v1941, %v2056
      %v2175 = vadd.f32 %v1942, %v2059
      %v2176 = vadd.f32 %v1943, %v2064
      %v2177 = vadd.f32 %v1944, %v2067
      %v2178 = vadd.f32 %v1945, %v2072
      %v2179 = vadd.f32 %v1946, %v2075
      %v2180 = vadd.f32 %v1947, %v2080
      %v2181 = vadd.f32 %v1948, %v2083
      %v2182 = vadd.f32 %v1949, %v2088
      %v2183 = vadd.f32 %v1950, %v2091
      %v2184 = vadd.f32 %v1951, %v2096
      %v2185 = vadd.f32 %v1952, %v2099
      %v2186 = vadd.f32 %v1953, %v2104
      %v2187 = vadd.f32 %v1954, %v2107
      %v2188 = vadd.f32 %v1955, %v2112
      %v2189 = vadd.f32 %v1956, %v2115
      %v2190 = vadd.f32 %v1957, %v2120
      %v2191 = vadd.f32 %v1958, %v2123
      %v2192 = vadd.f32 %v1959, %v2128
      %v2193 = vadd.f32 %v1960, %v2131
      %v2194 = vadd.f32 %v1961, %v2136
      %v2195 = vadd.f32 %v1962, %v2139
      %v2196 = vadd.f32 %v1963, %v2144
      %v2197 = vadd.f32 %v1964, %v2147
      %v2198 = vadd.f32 %v1965, %v2152
      %v2199 = vadd.f32 %v1966, %v2155
      %v2200 = vadd.f32 %v1967, %v2160
      %v2201 = vadd.f32 %v1968, %v2163
      %v2202 = vpack.c.bf16 %v451, %v451
      %s2203 = scalar_lea.vmem %s1, 12
      %v2204 = vld [vmem:[%s2203] sm:$0x3]
      %vm2206 = vcmask 1045504
      %v2207 = vrot.slane %v455, 2
      %v2208 = vrot.slane %v456, 2
      %v2209 = vsel %vm2206, %v2207, %v2208
      %v2210 = vrot.slane %v457, 2
      %v2211 = vsel %vm2206, %v2208, %v2210
      %v2212 = vrot.slane %v458, 2
      %v2213 = vsel %vm2206, %v2210, %v2212
      %v2214 = vrot.slane %v459, 2
      %v2215 = vsel %vm2206, %v2212, %v2214
      %v2216 = vrot.slane %v460, 2
      %v2217 = vsel %vm2206, %v2214, %v2216
      %v2218 = vrot.slane %v461, 2
      %v2219 = vsel %vm2206, %v2216, %v2218
      %v2220 = vrot.slane %v462, 2
      %v2221 = vsel %vm2206, %v2218, %v2220
      %v2222 = vrot.slane %v463, 2
      %v2223 = vsel %vm2206, %v2220, %v2222
      %v2224 = vrot.slane %v464, 2
      %v2225 = vsel %vm2206, %v2222, %v2224
      %v2226 = vrot.slane %v465, 2
      %v2227 = vsel %vm2206, %v2224, %v2226
      %v2228 = vrot.slane %v466, 2
      %v2229 = vsel %vm2206, %v2226, %v2228
      %v2230 = vrot.slane %v467, 2
      %v2231 = vsel %vm2206, %v2228, %v2230
      %v2232 = vrot.slane %v468, 2
      %v2233 = vsel %vm2206, %v2230, %v2232
      %v2234 = vrot.slane %v469, 2
      %v2235 = vsel %vm2206, %v2232, %v2234
      %v2236 = vrot.slane %v470, 2
      %v2237 = vsel %vm2206, %v2234, %v2236
      %v2238 = vrot.slane %v471, 2
      %v2239 = vsel %vm2206, %v2236, %v2238
      %v2240 = vrot.slane %v1741, 2
      %v2241 = vsel %vm2206, %v2238, %v2240
      %v2242 = vrot.slane %v2202, 2
      %v2243 = vsel %vm2206, %v2240, %v2242
      %v2245 = vsel %vm619, %v2209, 0
      %v2248 = vsel %vm619, %v2211, 0
      %v2251 = vsel %vm619, %v2213, 0
      %v2254 = vsel %vm619, %v2215, 0
      %v2257 = vsel %vm619, %v2217, 0
      %v2260 = vsel %vm619, %v2219, 0
      %v2263 = vsel %vm619, %v2221, 0
      %v2266 = vsel %vm619, %v2223, 0
      %v2269 = vsel %vm619, %v2225, 0
      %v2272 = vsel %vm619, %v2227, 0
      %v2275 = vsel %vm619, %v2229, 0
      %v2278 = vsel %vm619, %v2231, 0
      %v2281 = vsel %vm619, %v2233, 0
      %v2284 = vsel %vm619, %v2235, 0
      %v2287 = vsel %vm619, %v2237, 0
      %v2290 = vsel %vm619, %v2239, 0
      %v2293 = vsel %vm619, %v2241, 0
      %v2296 = vsel %vm619, %v2243, 0
      %v2299 = vsel %vm674, %v2204, 0
      %2301 = vmatprep.subr.bf16.mxu0 0
      %2302 = vmatpush1.bf16.msra.mxu0 0
      %2303 = vmatprep.subr.bf16.mxu0 0
      %2304 = vmatpush1.bf16.msra.mxu0 0
      %2305 = vmatprep.subr.bf16.mxu0 0
      %2306 = vmatpush1.bf16.msra.mxu0 0
      %2307 = vmatprep.subr.bf16.mxu0 0
      %2308 = vmatpush1.bf16.msra.mxu0 0
      %2309 = vmatprep.subr.bf16.mxu0 0
      %2310 = vmatpush1.bf16.msra.mxu0 0
      %2311 = vmatprep.subr.bf16.mxu0 0
      %2312 = vmatpush1.bf16.msra.mxu0 0
      %2313 = vmatprep.subr.bf16.mxu0 0
      %2314 = vmatpush1.bf16.msra.mxu0 0
      %2315 = vmatprep.subr.bf16.mxu0 0
      %2316 = vmatpush1.bf16.msra.mxu0 %v2299
      %2317 = vmatprep.subr.bf16.mxu0 0
      %2318 = vmatpush2.bf16.msra.mxu0 0
      %2319 = vmatprep.subr.bf16.mxu0 0
      %2320 = vmatpush2.bf16.msra.mxu0 0
      %2321 = vmatprep.subr.bf16.mxu0 0
      %2322 = vmatpush2.bf16.msra.mxu0 0
      %2323 = vmatprep.subr.bf16.mxu0 0
      %2324 = vmatpush2.bf16.msra.mxu0 0
      %2325 = vmatprep.subr.bf16.mxu0 0
      %2326 = vmatpush2.bf16.msra.mxu0 0
      %2327 = vmatprep.subr.bf16.mxu0 0
      %2328 = vmatpush2.bf16.msra.mxu0 0
      %2329 = vmatprep.subr.bf16.mxu0 0
      %2330 = vmatpush2.bf16.msra.mxu0 0
      %2331 = vmatprep.subr.bf16.mxu0 0
      %2332 = vmatpush2.bf16.msra.mxu0 0
      %2333 = vmatprep.mubr.bf16.mxu0 0
      %2334 = vmatmul.mubr.bf16.gmra.mxu0 %v2245
      %v2335 = vpop.f32.mrf.mxu0
      %v2336 = vadd.f32 0.0, %v2335
      %v2337 = vpop.f32.mrf.mxu0
      %v2338 = vpop.f32.mrf.mxu0
      %v2339 = vadd.f32 0.0, %v2338
      %v2340 = vpop.f32.mrf.mxu0
      %2341 = vmatprep.mubr.bf16.mxu0 0
      %2342 = vmatmul.mubr.bf16.gmra.mxu0 %v2248
      %v2343 = vpop.f32.mrf.mxu0
      %v2344 = vadd.f32 0.0, %v2343
      %v2345 = vpop.f32.mrf.mxu0
      %v2346 = vpop.f32.mrf.mxu0
      %v2347 = vadd.f32 0.0, %v2346
      %v2348 = vpop.f32.mrf.mxu0
      %2349 = vmatprep.mubr.bf16.mxu0 0
      %2350 = vmatmul.mubr.bf16.gmra.mxu0 %v2251
      %v2351 = vpop.f32.mrf.mxu0
      %v2352 = vadd.f32 0.0, %v2351
      %v2353 = vpop.f32.mrf.mxu0
      %v2354 = vpop.f32.mrf.mxu0
      %v2355 = vadd.f32 0.0, %v2354
      %v2356 = vpop.f32.mrf.mxu0
      %2357 = vmatprep.mubr.bf16.mxu0 0
      %2358 = vmatmul.mubr.bf16.gmra.mxu0 %v2254
      %v2359 = vpop.f32.mrf.mxu0
      %v2360 = vadd.f32 0.0, %v2359
      %v2361 = vpop.f32.mrf.mxu0
      %v2362 = vpop.f32.mrf.mxu0
      %v2363 = vadd.f32 0.0, %v2362
      %v2364 = vpop.f32.mrf.mxu0
      %2365 = vmatprep.mubr.bf16.mxu0 0
      %2366 = vmatmul.mubr.bf16.gmra.mxu0 %v2257
      %v2367 = vpop.f32.mrf.mxu0
      %v2368 = vadd.f32 0.0, %v2367
      %v2369 = vpop.f32.mrf.mxu0
      %v2370 = vpop.f32.mrf.mxu0
      %v2371 = vadd.f32 0.0, %v2370
      %v2372 = vpop.f32.mrf.mxu0
      %2373 = vmatprep.mubr.bf16.mxu0 0
      %2374 = vmatmul.mubr.bf16.gmra.mxu0 %v2260
      %v2375 = vpop.f32.mrf.mxu0
      %v2376 = vadd.f32 0.0, %v2375
      %v2377 = vpop.f32.mrf.mxu0
      %v2378 = vpop.f32.mrf.mxu0
      %v2379 = vadd.f32 0.0, %v2378
      %v2380 = vpop.f32.mrf.mxu0
      %2381 = vmatprep.mubr.bf16.mxu0 0
      %2382 = vmatmul.mubr.bf16.gmra.mxu0 %v2263
      %v2383 = vpop.f32.mrf.mxu0
      %v2384 = vadd.f32 0.0, %v2383
      %v2385 = vpop.f32.mrf.mxu0
      %v2386 = vpop.f32.mrf.mxu0
      %v2387 = vadd.f32 0.0, %v2386
      %v2388 = vpop.f32.mrf.mxu0
      %2389 = vmatprep.mubr.bf16.mxu0 0
      %2390 = vmatmul.mubr.bf16.gmra.mxu0 %v2266
      %v2391 = vpop.f32.mrf.mxu0
      %v2392 = vadd.f32 0.0, %v2391
      %v2393 = vpop.f32.mrf.mxu0
      %v2394 = vpop.f32.mrf.mxu0
      %v2395 = vadd.f32 0.0, %v2394
      %v2396 = vpop.f32.mrf.mxu0
      %2397 = vmatprep.mubr.bf16.mxu0 0
      %2398 = vmatmul.mubr.bf16.gmra.mxu0 %v2269
      %v2399 = vpop.f32.mrf.mxu0
      %v2400 = vadd.f32 0.0, %v2399
      %v2401 = vpop.f32.mrf.mxu0
      %v2402 = vpop.f32.mrf.mxu0
      %v2403 = vadd.f32 0.0, %v2402
      %v2404 = vpop.f32.mrf.mxu0
      %2405 = vmatprep.mubr.bf16.mxu0 0
      %2406 = vmatmul.mubr.bf16.gmra.mxu0 %v2272
      %v2407 = vpop.f32.mrf.mxu0
      %v2408 = vadd.f32 0.0, %v2407
      %v2409 = vpop.f32.mrf.mxu0
      %v2410 = vpop.f32.mrf.mxu0
      %v2411 = vadd.f32 0.0, %v2410
      %v2412 = vpop.f32.mrf.mxu0
      %2413 = vmatprep.mubr.bf16.mxu0 0
      %2414 = vmatmul.mubr.bf16.gmra.mxu0 %v2275
      %v2415 = vpop.f32.mrf.mxu0
      %v2416 = vadd.f32 0.0, %v2415
      %v2417 = vpop.f32.mrf.mxu0
      %v2418 = vpop.f32.mrf.mxu0
      %v2419 = vadd.f32 0.0, %v2418
      %v2420 = vpop.f32.mrf.mxu0
      %2421 = vmatprep.mubr.bf16.mxu0 0
      %2422 = vmatmul.mubr.bf16.gmra.mxu0 %v2278
      %v2423 = vpop.f32.mrf.mxu0
      %v2424 = vadd.f32 0.0, %v2423
      %v2425 = vpop.f32.mrf.mxu0
      %v2426 = vpop.f32.mrf.mxu0
      %v2427 = vadd.f32 0.0, %v2426
      %v2428 = vpop.f32.mrf.mxu0
      %2429 = vmatprep.mubr.bf16.mxu0 0
      %2430 = vmatmul.mubr.bf16.gmra.mxu0 %v2281
      %v2431 = vpop.f32.mrf.mxu0
      %v2432 = vadd.f32 0.0, %v2431
      %v2433 = vpop.f32.mrf.mxu0
      %v2434 = vpop.f32.mrf.mxu0
      %v2435 = vadd.f32 0.0, %v2434
      %v2436 = vpop.f32.mrf.mxu0
      %2437 = vmatprep.mubr.bf16.mxu0 0
      %2438 = vmatmul.mubr.bf16.gmra.mxu0 %v2284
      %v2439 = vpop.f32.mrf.mxu0
      %v2440 = vadd.f32 0.0, %v2439
      %v2441 = vpop.f32.mrf.mxu0
      %v2442 = vpop.f32.mrf.mxu0
      %v2443 = vadd.f32 0.0, %v2442
      %v2444 = vpop.f32.mrf.mxu0
      %2445 = vmatprep.mubr.bf16.mxu0 0
      %2446 = vmatmul.mubr.bf16.gmra.mxu0 %v2287
      %v2447 = vpop.f32.mrf.mxu0
      %v2448 = vadd.f32 0.0, %v2447
      %v2449 = vpop.f32.mrf.mxu0
      %v2450 = vpop.f32.mrf.mxu0
      %v2451 = vadd.f32 0.0, %v2450
      %v2452 = vpop.f32.mrf.mxu0
      %2453 = vmatprep.mubr.bf16.mxu0 0
      %2454 = vmatmul.mubr.bf16.gmra.mxu0 %v2290
      %v2455 = vpop.f32.mrf.mxu0
      %v2456 = vadd.f32 0.0, %v2455
      %v2457 = vpop.f32.mrf.mxu0
      %v2458 = vpop.f32.mrf.mxu0
      %v2459 = vadd.f32 0.0, %v2458
      %v2460 = vpop.f32.mrf.mxu0
      %2461 = vmatprep.mubr.bf16.mxu0 0
      %2462 = vmatmul.mubr.bf16.gmra.mxu0 %v2293
      %v2463 = vpop.f32.mrf.mxu0
      %v2464 = vadd.f32 0.0, %v2463
      %v2465 = vpop.f32.mrf.mxu0
      %v2466 = vpop.f32.mrf.mxu0
      %v2467 = vadd.f32 0.0, %v2466
      %v2468 = vpop.f32.mrf.mxu0
      %2469 = vmatprep.mubr.bf16.mxu0 0
      %2470 = vmatmul.mubr.bf16.gmra.mxu0 %v2296
      %v2471 = vpop.f32.mrf.mxu0
      %v2472 = vadd.f32 0.0, %v2471
      %v2473 = vpop.f32.mrf.mxu0
      %v2474 = vpop.f32.mrf.mxu0
      %v2475 = vadd.f32 0.0, %v2474
      %v2476 = vpop.f32.mrf.mxu0
      %2477 = vdwg.mxu0
      %v2478 = vadd.f32 %v2166, %v2336
      %v2479 = vadd.f32 %v2167, %v2339
      %v2480 = vadd.f32 %v2168, %v2344
      %v2481 = vadd.f32 %v2169, %v2347
      %v2482 = vadd.f32 %v2170, %v2352
      %v2483 = vadd.f32 %v2171, %v2355
      %v2484 = vadd.f32 %v2172, %v2360
      %v2485 = vadd.f32 %v2173, %v2363
      %v2486 = vadd.f32 %v2174, %v2368
      %v2487 = vadd.f32 %v2175, %v2371
      %v2488 = vadd.f32 %v2176, %v2376
      %v2489 = vadd.f32 %v2177, %v2379
      %v2490 = vadd.f32 %v2178, %v2384
      %v2491 = vadd.f32 %v2179, %v2387
      %v2492 = vadd.f32 %v2180, %v2392
      %v2493 = vadd.f32 %v2181, %v2395
      %v2494 = vadd.f32 %v2182, %v2400
      %v2495 = vadd.f32 %v2183, %v2403
      %v2496 = vadd.f32 %v2184, %v2408
      %v2497 = vadd.f32 %v2185, %v2411
      %v2498 = vadd.f32 %v2186, %v2416
      %v2499 = vadd.f32 %v2187, %v2419
      %v2500 = vadd.f32 %v2188, %v2424
      %v2501 = vadd.f32 %v2189, %v2427
      %v2502 = vadd.f32 %v2190, %v2432
      %v2503 = vadd.f32 %v2191, %v2435
      %v2504 = vadd.f32 %v2192, %v2440
      %v2505 = vadd.f32 %v2193, %v2443
      %v2506 = vadd.f32 %v2194, %v2448
      %v2507 = vadd.f32 %v2195, %v2451
      %v2508 = vadd.f32 %v2196, %v2456
      %v2509 = vadd.f32 %v2197, %v2459
      %v2510 = vadd.f32 %v2198, %v2464
      %v2511 = vadd.f32 %v2199, %v2467
      %v2512 = vadd.f32 %v2200, %v2472
      %v2513 = vadd.f32 %v2201, %v2475
      %s2514 = scalar_lea.vmem %s1, 14
      %v2515 = vld [vmem:[%s2514] sm:$0x3]
      %vm2516 = vsmask.f32 5376
      %v2517 = vrot.slane %v488, 2
      %v2518 = vrot.slane %v484, 3
      %v2519 = vor.u32 %v2517, %v2518
      %v2520 = vrot.slane %v496, 2
      %v2521 = vrot.slane %v492, 3
      %v2522 = vor.u32 %v2520, %v2521
      %v2523 = vsel %vm2516, %v2519, %v2522
      %v2524 = vrot.slane %v504, 2
      %v2525 = vrot.slane %v500, 3
      %v2526 = vor.u32 %v2524, %v2525
      %v2527 = vsel %vm2516, %v2522, %v2526
      %v2528 = vrot.slane %v512, 2
      %v2529 = vrot.slane %v508, 3
      %v2530 = vor.u32 %v2528, %v2529
      %v2531 = vsel %vm2516, %v2526, %v2530
      %v2532 = vrot.slane %v520, 2
      %v2533 = vrot.slane %v516, 3
      %v2534 = vor.u32 %v2532, %v2533
      %v2535 = vsel %vm2516, %v2530, %v2534
      %v2536 = vrot.slane %v528, 2
      %v2537 = vrot.slane %v524, 3
      %v2538 = vor.u32 %v2536, %v2537
      %v2539 = vsel %vm2516, %v2534, %v2538
      %v2540 = vrot.slane %v536, 2
      %v2541 = vrot.slane %v532, 3
      %v2542 = vor.u32 %v2540, %v2541
      %v2543 = vsel %vm2516, %v2538, %v2542
      %v2544 = vrot.slane %v544, 2
      %v2545 = vrot.slane %v540, 3
      %v2546 = vor.u32 %v2544, %v2545
      %v2547 = vsel %vm2516, %v2542, %v2546
      %v2548 = vrot.slane %v552, 2
      %v2549 = vrot.slane %v548, 3
      %v2550 = vor.u32 %v2548, %v2549
      %v2551 = vsel %vm2516, %v2546, %v2550
      %v2552 = vrot.slane %v560, 2
      %v2553 = vrot.slane %v556, 3
      %v2554 = vor.u32 %v2552, %v2553
      %v2555 = vsel %vm2516, %v2550, %v2554
      %v2556 = vrot.slane %v568, 2
      %v2557 = vrot.slane %v564, 3
      %v2558 = vor.u32 %v2556, %v2557
      %v2559 = vsel %vm2516, %v2554, %v2558
      %v2560 = vrot.slane %v576, 2
      %v2561 = vrot.slane %v572, 3
      %v2562 = vor.u32 %v2560, %v2561
      %v2563 = vsel %vm2516, %v2558, %v2562
      %v2564 = vrot.slane %v584, 2
      %v2565 = vrot.slane %v580, 3
      %v2566 = vor.u32 %v2564, %v2565
      %v2567 = vsel %vm2516, %v2562, %v2566
      %v2568 = vrot.slane %v592, 2
      %v2569 = vrot.slane %v588, 3
      %v2570 = vor.u32 %v2568, %v2569
      %v2571 = vsel %vm2516, %v2566, %v2570
      %v2572 = vrot.slane %v600, 2
      %v2573 = vrot.slane %v596, 3
      %v2574 = vor.u32 %v2572, %v2573
      %v2575 = vsel %vm2516, %v2570, %v2574
      %v2576 = vrot.slane %v608, 2
      %v2577 = vrot.slane %v604, 3
      %v2578 = vor.u32 %v2576, %v2577
      %v2579 = vsel %vm2516, %v2574, %v2578
      %v2580 = vrot.slane %v616, 2
      %v2581 = vrot.slane %v612, 3
      %v2582 = vor.u32 %v2580, %v2581
      %v2583 = vsel %vm2516, %v2578, %v2582
      %v2584 = vrot.slane %v1972, 2
      %v2585 = vrot.slane %v1975, 3
      %v2586 = vor.u32 %v2584, %v2585
      %v2587 = vsel %vm2516, %v2582, %v2586
      %v2589 = vshrl.u32 %v2202, 16
      %v2591 = vrot.slane %v2589, 2
      %v2592 = vshll.u32 %v2202, 16
      %v2594 = vrot.slane %v2592, 3
      %v2595 = vor.u32 %v2591, %v2594
      %v2596 = vsel %vm2516, %v2586, %v2595
      %v2598 = vsel %vm619, %v2523, 0
      %v2601 = vsel %vm619, %v2527, 0
      %v2604 = vsel %vm619, %v2531, 0
      %v2607 = vsel %vm619, %v2535, 0
      %v2610 = vsel %vm619, %v2539, 0
      %v2613 = vsel %vm619, %v2543, 0
      %v2616 = vsel %vm619, %v2547, 0
      %v2619 = vsel %vm619, %v2551, 0
      %v2622 = vsel %vm619, %v2555, 0
      %v2625 = vsel %vm619, %v2559, 0
      %v2628 = vsel %vm619, %v2563, 0
      %v2631 = vsel %vm619, %v2567, 0
      %v2634 = vsel %vm619, %v2571, 0
      %v2637 = vsel %vm619, %v2575, 0
      %v2640 = vsel %vm619, %v2579, 0
      %v2643 = vsel %vm619, %v2583, 0
      %v2646 = vsel %vm619, %v2587, 0
      %v2649 = vsel %vm619, %v2596, 0
      %v2652 = vsel %vm674, %v2515, 0
      %2654 = vmatprep.subr.bf16.mxu0 0
      %2655 = vmatpush1.bf16.msra.mxu0 0
      %2656 = vmatprep.subr.bf16.mxu0 0
      %2657 = vmatpush1.bf16.msra.mxu0 0
      %2658 = vmatprep.subr.bf16.mxu0 0
      %2659 = vmatpush1.bf16.msra.mxu0 0
      %2660 = vmatprep.subr.bf16.mxu0 0
      %2661 = vmatpush1.bf16.msra.mxu0 0
      %2662 = vmatprep.subr.bf16.mxu0 0
      %2663 = vmatpush1.bf16.msra.mxu0 0
      %2664 = vmatprep.subr.bf16.mxu0 0
      %2665 = vmatpush1.bf16.msra.mxu0 0
      %2666 = vmatprep.subr.bf16.mxu0 0
      %2667 = vmatpush1.bf16.msra.mxu0 0
      %2668 = vmatprep.subr.bf16.mxu0 0
      %2669 = vmatpush1.bf16.msra.mxu0 %v2652
      %2670 = vmatprep.subr.bf16.mxu0 0
      %2671 = vmatpush2.bf16.msra.mxu0 0
      %2672 = vmatprep.subr.bf16.mxu0 0
      %2673 = vmatpush2.bf16.msra.mxu0 0
      %2674 = vmatprep.subr.bf16.mxu0 0
      %2675 = vmatpush2.bf16.msra.mxu0 0
      %2676 = vmatprep.subr.bf16.mxu0 0
      %2677 = vmatpush2.bf16.msra.mxu0 0
      %2678 = vmatprep.subr.bf16.mxu0 0
      %2679 = vmatpush2.bf16.msra.mxu0 0
      %2680 = vmatprep.subr.bf16.mxu0 0
      %2681 = vmatpush2.bf16.msra.mxu0 0
      %2682 = vmatprep.subr.bf16.mxu0 0
      %2683 = vmatpush2.bf16.msra.mxu0 0
      %2684 = vmatprep.subr.bf16.mxu0 0
      %2685 = vmatpush2.bf16.msra.mxu0 0
      %2686 = vmatprep.mubr.bf16.mxu0 0
      %2687 = vmatmul.mubr.bf16.gmra.mxu0 %v2598
      %v2688 = vpop.f32.mrf.mxu0
      %v2689 = vadd.f32 0.0, %v2688
      %v2690 = vpop.f32.mrf.mxu0
      %v2691 = vpop.f32.mrf.mxu0
      %v2692 = vadd.f32 0.0, %v2691
      %v2693 = vpop.f32.mrf.mxu0
      %2694 = vmatprep.mubr.bf16.mxu0 0
      %2695 = vmatmul.mubr.bf16.gmra.mxu0 %v2601
      %v2696 = vpop.f32.mrf.mxu0
      %v2697 = vadd.f32 0.0, %v2696
      %v2698 = vpop.f32.mrf.mxu0
      %v2699 = vpop.f32.mrf.mxu0
      %v2700 = vadd.f32 0.0, %v2699
      %v2701 = vpop.f32.mrf.mxu0
      %2702 = vmatprep.mubr.bf16.mxu0 0
      %2703 = vmatmul.mubr.bf16.gmra.mxu0 %v2604
      %v2704 = vpop.f32.mrf.mxu0
      %v2705 = vadd.f32 0.0, %v2704
      %v2706 = vpop.f32.mrf.mxu0
      %v2707 = vpop.f32.mrf.mxu0
      %v2708 = vadd.f32 0.0, %v2707
      %v2709 = vpop.f32.mrf.mxu0
      %2710 = vmatprep.mubr.bf16.mxu0 0
      %2711 = vmatmul.mubr.bf16.gmra.mxu0 %v2607
      %v2712 = vpop.f32.mrf.mxu0
      %v2713 = vadd.f32 0.0, %v2712
      %v2714 = vpop.f32.mrf.mxu0
      %v2715 = vpop.f32.mrf.mxu0
      %v2716 = vadd.f32 0.0, %v2715
      %v2717 = vpop.f32.mrf.mxu0
      %2718 = vmatprep.mubr.bf16.mxu0 0
      %2719 = vmatmul.mubr.bf16.gmra.mxu0 %v2610
      %v2720 = vpop.f32.mrf.mxu0
      %v2721 = vadd.f32 0.0, %v2720
      %v2722 = vpop.f32.mrf.mxu0
      %v2723 = vpop.f32.mrf.mxu0
      %v2724 = vadd.f32 0.0, %v2723
      %v2725 = vpop.f32.mrf.mxu0
      %2726 = vmatprep.mubr.bf16.mxu0 0
      %2727 = vmatmul.mubr.bf16.gmra.mxu0 %v2613
      %v2728 = vpop.f32.mrf.mxu0
      %v2729 = vadd.f32 0.0, %v2728
      %v2730 = vpop.f32.mrf.mxu0
      %v2731 = vpop.f32.mrf.mxu0
      %v2732 = vadd.f32 0.0, %v2731
      %v2733 = vpop.f32.mrf.mxu0
      %2734 = vmatprep.mubr.bf16.mxu0 0
      %2735 = vmatmul.mubr.bf16.gmra.mxu0 %v2616
      %v2736 = vpop.f32.mrf.mxu0
      %v2737 = vadd.f32 0.0, %v2736
      %v2738 = vpop.f32.mrf.mxu0
      %v2739 = vpop.f32.mrf.mxu0
      %v2740 = vadd.f32 0.0, %v2739
      %v2741 = vpop.f32.mrf.mxu0
      %2742 = vmatprep.mubr.bf16.mxu0 0
      %2743 = vmatmul.mubr.bf16.gmra.mxu0 %v2619
      %v2744 = vpop.f32.mrf.mxu0
      %v2745 = vadd.f32 0.0, %v2744
      %v2746 = vpop.f32.mrf.mxu0
      %v2747 = vpop.f32.mrf.mxu0
      %v2748 = vadd.f32 0.0, %v2747
      %v2749 = vpop.f32.mrf.mxu0
      %2750 = vmatprep.mubr.bf16.mxu0 0
      %2751 = vmatmul.mubr.bf16.gmra.mxu0 %v2622
      %v2752 = vpop.f32.mrf.mxu0
      %v2753 = vadd.f32 0.0, %v2752
      %v2754 = vpop.f32.mrf.mxu0
      %v2755 = vpop.f32.mrf.mxu0
      %v2756 = vadd.f32 0.0, %v2755
      %v2757 = vpop.f32.mrf.mxu0
      %2758 = vmatprep.mubr.bf16.mxu0 0
      %2759 = vmatmul.mubr.bf16.gmra.mxu0 %v2625
      %v2760 = vpop.f32.mrf.mxu0
      %v2761 = vadd.f32 0.0, %v2760
      %v2762 = vpop.f32.mrf.mxu0
      %v2763 = vpop.f32.mrf.mxu0
      %v2764 = vadd.f32 0.0, %v2763
      %v2765 = vpop.f32.mrf.mxu0
      %2766 = vmatprep.mubr.bf16.mxu0 0
      %2767 = vmatmul.mubr.bf16.gmra.mxu0 %v2628
      %v2768 = vpop.f32.mrf.mxu0
      %v2769 = vadd.f32 0.0, %v2768
      %v2770 = vpop.f32.mrf.mxu0
      %v2771 = vpop.f32.mrf.mxu0
      %v2772 = vadd.f32 0.0, %v2771
      %v2773 = vpop.f32.mrf.mxu0
      %2774 = vmatprep.mubr.bf16.mxu0 0
      %2775 = vmatmul.mubr.bf16.gmra.mxu0 %v2631
      %v2776 = vpop.f32.mrf.mxu0
      %v2777 = vadd.f32 0.0, %v2776
      %v2778 = vpop.f32.mrf.mxu0
      %v2779 = vpop.f32.mrf.mxu0
      %v2780 = vadd.f32 0.0, %v2779
      %v2781 = vpop.f32.mrf.mxu0
      %2782 = vmatprep.mubr.bf16.mxu0 0
      %2783 = vmatmul.mubr.bf16.gmra.mxu0 %v2634
      %v2784 = vpop.f32.mrf.mxu0
      %v2785 = vadd.f32 0.0, %v2784
      %v2786 = vpop.f32.mrf.mxu0
      %v2787 = vpop.f32.mrf.mxu0
      %v2788 = vadd.f32 0.0, %v2787
      %v2789 = vpop.f32.mrf.mxu0
      %2790 = vmatprep.mubr.bf16.mxu0 0
      %2791 = vmatmul.mubr.bf16.gmra.mxu0 %v2637
      %v2792 = vpop.f32.mrf.mxu0
      %v2793 = vadd.f32 0.0, %v2792
      %v2794 = vpop.f32.mrf.mxu0
      %v2795 = vpop.f32.mrf.mxu0
      %v2796 = vadd.f32 0.0, %v2795
      %v2797 = vpop.f32.mrf.mxu0
      %2798 = vmatprep.mubr.bf16.mxu0 0
      %2799 = vmatmul.mubr.bf16.gmra.mxu0 %v2640
      %v2800 = vpop.f32.mrf.mxu0
      %v2801 = vadd.f32 0.0, %v2800
      %v2802 = vpop.f32.mrf.mxu0
      %v2803 = vpop.f32.mrf.mxu0
      %v2804 = vadd.f32 0.0, %v2803
      %v2805 = vpop.f32.mrf.mxu0
      %2806 = vmatprep.mubr.bf16.mxu0 0
      %2807 = vmatmul.mubr.bf16.gmra.mxu0 %v2643
      %v2808 = vpop.f32.mrf.mxu0
      %v2809 = vadd.f32 0.0, %v2808
      %v2810 = vpop.f32.mrf.mxu0
      %v2811 = vpop.f32.mrf.mxu0
      %v2812 = vadd.f32 0.0, %v2811
      %v2813 = vpop.f32.mrf.mxu0
      %2814 = vmatprep.mubr.bf16.mxu0 0
      %2815 = vmatmul.mubr.bf16.gmra.mxu0 %v2646
      %v2816 = vpop.f32.mrf.mxu0
      %v2817 = vadd.f32 0.0, %v2816
      %v2818 = vpop.f32.mrf.mxu0
      %v2819 = vpop.f32.mrf.mxu0
      %v2820 = vadd.f32 0.0, %v2819
      %v2821 = vpop.f32.mrf.mxu0
      %2822 = vmatprep.mubr.bf16.mxu0 0
      %2823 = vmatmul.mubr.bf16.gmra.mxu0 %v2649
      %v2824 = vpop.f32.mrf.mxu0
      %v2825 = vadd.f32 0.0, %v2824
      %v2826 = vpop.f32.mrf.mxu0
      %v2827 = vpop.f32.mrf.mxu0
      %v2828 = vadd.f32 0.0, %v2827
      %v2829 = vpop.f32.mrf.mxu0
      %2830 = vdwg.mxu0
      %v2831 = vadd.f32 %v2478, %v2689
      %v2832 = vadd.f32 %v2479, %v2692
      %v2833 = vadd.f32 %v2480, %v2697
      %v2834 = vadd.f32 %v2481, %v2700
      %v2835 = vadd.f32 %v2482, %v2705
      %v2836 = vadd.f32 %v2483, %v2708
      %v2837 = vadd.f32 %v2484, %v2713
      %v2838 = vadd.f32 %v2485, %v2716
      %v2839 = vadd.f32 %v2486, %v2721
      %v2840 = vadd.f32 %v2487, %v2724
      %v2841 = vadd.f32 %v2488, %v2729
      %v2842 = vadd.f32 %v2489, %v2732
      %v2843 = vadd.f32 %v2490, %v2737
      %v2844 = vadd.f32 %v2491, %v2740
      %v2845 = vadd.f32 %v2492, %v2745
      %v2846 = vadd.f32 %v2493, %v2748
      %v2847 = vadd.f32 %v2494, %v2753
      %v2848 = vadd.f32 %v2495, %v2756
      %v2849 = vadd.f32 %v2496, %v2761
      %v2850 = vadd.f32 %v2497, %v2764
      %v2851 = vadd.f32 %v2498, %v2769
      %v2852 = vadd.f32 %v2499, %v2772
      %v2853 = vadd.f32 %v2500, %v2777
      %v2854 = vadd.f32 %v2501, %v2780
      %v2855 = vadd.f32 %v2502, %v2785
      %v2856 = vadd.f32 %v2503, %v2788
      %v2857 = vadd.f32 %v2504, %v2793
      %v2858 = vadd.f32 %v2505, %v2796
      %v2859 = vadd.f32 %v2506, %v2801
      %v2860 = vadd.f32 %v2507, %v2804
      %v2861 = vadd.f32 %v2508, %v2809
      %v2862 = vadd.f32 %v2509, %v2812
      %v2863 = vadd.f32 %v2510, %v2817
      %v2864 = vadd.f32 %v2511, %v2820
      %v2865 = vadd.f32 %v2512, %v2825
      %v2866 = vadd.f32 %v2513, %v2828
      %v2867 = vpack.c.bf16 %v452, %v451
      %v2868 = vpack.c.bf16 %v453, %v453
      %s2869 = scalar_lea.vmem %s1, 16
      %v2870 = vld [vmem:[%s2869] sm:$0x3]
      %v2873 = vrot.slane %v2867, 2
      %v2874 = vsel %vm2206, %v2240, %v2873
      %v2875 = vrot.slane %v2868, 2
      %v2876 = vsel %vm2206, %v2873, %v2875
      %v2878 = vsel %vm619, %v2874, 0
      %v2881 = vsel %vm619, %v2876, 0
      %v2884 = vsel %vm674, %v2870, 0
      %2886 = vmatprep.subr.bf16.mxu0 0
      %2887 = vmatpush1.bf16.msra.mxu0 0
      %2888 = vmatprep.subr.bf16.mxu0 0
      %2889 = vmatpush1.bf16.msra.mxu0 0
      %2890 = vmatprep.subr.bf16.mxu0 0
      %2891 = vmatpush1.bf16.msra.mxu0 0
      %2892 = vmatprep.subr.bf16.mxu0 0
      %2893 = vmatpush1.bf16.msra.mxu0 0
      %2894 = vmatprep.subr.bf16.mxu0 0
      %2895 = vmatpush1.bf16.msra.mxu0 0
      %2896 = vmatprep.subr.bf16.mxu0 0
      %2897 = vmatpush1.bf16.msra.mxu0 0
      %2898 = vmatprep.subr.bf16.mxu0 0
      %2899 = vmatpush1.bf16.msra.mxu0 0
      %2900 = vmatprep.subr.bf16.mxu0 0
      %2901 = vmatpush1.bf16.msra.mxu0 %v2884
      %2902 = vmatprep.subr.bf16.mxu0 0
      %2903 = vmatpush2.bf16.msra.mxu0 0
      %2904 = vmatprep.subr.bf16.mxu0 0
      %2905 = vmatpush2.bf16.msra.mxu0 0
      %2906 = vmatprep.subr.bf16.mxu0 0
      %2907 = vmatpush2.bf16.msra.mxu0 0
      %2908 = vmatprep.subr.bf16.mxu0 0
      %2909 = vmatpush2.bf16.msra.mxu0 0
      %2910 = vmatprep.subr.bf16.mxu0 0
      %2911 = vmatpush2.bf16.msra.mxu0 0
      %2912 = vmatprep.subr.bf16.mxu0 0
      %2913 = vmatpush2.bf16.msra.mxu0 0
      %2914 = vmatprep.subr.bf16.mxu0 0
      %2915 = vmatpush2.bf16.msra.mxu0 0
      %2916 = vmatprep.subr.bf16.mxu0 0
      %2917 = vmatpush2.bf16.msra.mxu0 0
      %2918 = vmatprep.mubr.bf16.mxu0 0
      %2919 = vmatmul.mubr.bf16.gmra.mxu0 %v2248
      %v2920 = vpop.f32.mrf.mxu0
      %v2921 = vadd.f32 0.0, %v2920
      %v2922 = vpop.f32.mrf.mxu0
      %v2923 = vpop.f32.mrf.mxu0
      %v2924 = vadd.f32 0.0, %v2923
      %v2925 = vpop.f32.mrf.mxu0
      %2926 = vmatprep.mubr.bf16.mxu0 0
      %2927 = vmatmul.mubr.bf16.gmra.mxu0 %v2251
      %v2928 = vpop.f32.mrf.mxu0
      %v2929 = vadd.f32 0.0, %v2928
      %v2930 = vpop.f32.mrf.mxu0
      %v2931 = vpop.f32.mrf.mxu0
      %v2932 = vadd.f32 0.0, %v2931
      %v2933 = vpop.f32.mrf.mxu0
      %2934 = vmatprep.mubr.bf16.mxu0 0
      %2935 = vmatmul.mubr.bf16.gmra.mxu0 %v2254
      %v2936 = vpop.f32.mrf.mxu0
      %v2937 = vadd.f32 0.0, %v2936
      %v2938 = vpop.f32.mrf.mxu0
      %v2939 = vpop.f32.mrf.mxu0
      %v2940 = vadd.f32 0.0, %v2939
      %v2941 = vpop.f32.mrf.mxu0
      %2942 = vmatprep.mubr.bf16.mxu0 0
      %2943 = vmatmul.mubr.bf16.gmra.mxu0 %v2257
      %v2944 = vpop.f32.mrf.mxu0
      %v2945 = vadd.f32 0.0, %v2944
      %v2946 = vpop.f32.mrf.mxu0
      %v2947 = vpop.f32.mrf.mxu0
      %v2948 = vadd.f32 0.0, %v2947
      %v2949 = vpop.f32.mrf.mxu0
      %2950 = vmatprep.mubr.bf16.mxu0 0
      %2951 = vmatmul.mubr.bf16.gmra.mxu0 %v2260
      %v2952 = vpop.f32.mrf.mxu0
      %v2953 = vadd.f32 0.0, %v2952
      %v2954 = vpop.f32.mrf.mxu0
      %v2955 = vpop.f32.mrf.mxu0
      %v2956 = vadd.f32 0.0, %v2955
      %v2957 = vpop.f32.mrf.mxu0
      %2958 = vmatprep.mubr.bf16.mxu0 0
      %2959 = vmatmul.mubr.bf16.gmra.mxu0 %v2263
      %v2960 = vpop.f32.mrf.mxu0
      %v2961 = vadd.f32 0.0, %v2960
      %v2962 = vpop.f32.mrf.mxu0
      %v2963 = vpop.f32.mrf.mxu0
      %v2964 = vadd.f32 0.0, %v2963
      %v2965 = vpop.f32.mrf.mxu0
      %2966 = vmatprep.mubr.bf16.mxu0 0
      %2967 = vmatmul.mubr.bf16.gmra.mxu0 %v2266
      %v2968 = vpop.f32.mrf.mxu0
      %v2969 = vadd.f32 0.0, %v2968
      %v2970 = vpop.f32.mrf.mxu0
      %v2971 = vpop.f32.mrf.mxu0
      %v2972 = vadd.f32 0.0, %v2971
      %v2973 = vpop.f32.mrf.mxu0
      %2974 = vmatprep.mubr.bf16.mxu0 0
      %2975 = vmatmul.mubr.bf16.gmra.mxu0 %v2269
      %v2976 = vpop.f32.mrf.mxu0
      %v2977 = vadd.f32 0.0, %v2976
      %v2978 = vpop.f32.mrf.mxu0
      %v2979 = vpop.f32.mrf.mxu0
      %v2980 = vadd.f32 0.0, %v2979
      %v2981 = vpop.f32.mrf.mxu0
      %2982 = vmatprep.mubr.bf16.mxu0 0
      %2983 = vmatmul.mubr.bf16.gmra.mxu0 %v2272
      %v2984 = vpop.f32.mrf.mxu0
      %v2985 = vadd.f32 0.0, %v2984
      %v2986 = vpop.f32.mrf.mxu0
      %v2987 = vpop.f32.mrf.mxu0
      %v2988 = vadd.f32 0.0, %v2987
      %v2989 = vpop.f32.mrf.mxu0
      %2990 = vmatprep.mubr.bf16.mxu0 0
      %2991 = vmatmul.mubr.bf16.gmra.mxu0 %v2275
      %v2992 = vpop.f32.mrf.mxu0
      %v2993 = vadd.f32 0.0, %v2992
      %v2994 = vpop.f32.mrf.mxu0
      %v2995 = vpop.f32.mrf.mxu0
      %v2996 = vadd.f32 0.0, %v2995
      %v2997 = vpop.f32.mrf.mxu0
      %2998 = vmatprep.mubr.bf16.mxu0 0
      %2999 = vmatmul.mubr.bf16.gmra.mxu0 %v2278
      %v3000 = vpop.f32.mrf.mxu0
      %v3001 = vadd.f32 0.0, %v3000
      %v3002 = vpop.f32.mrf.mxu0
      %v3003 = vpop.f32.mrf.mxu0
      %v3004 = vadd.f32 0.0, %v3003
      %v3005 = vpop.f32.mrf.mxu0
      %3006 = vmatprep.mubr.bf16.mxu0 0
      %3007 = vmatmul.mubr.bf16.gmra.mxu0 %v2281
      %v3008 = vpop.f32.mrf.mxu0
      %v3009 = vadd.f32 0.0, %v3008
      %v3010 = vpop.f32.mrf.mxu0
      %v3011 = vpop.f32.mrf.mxu0
      %v3012 = vadd.f32 0.0, %v3011
      %v3013 = vpop.f32.mrf.mxu0
      %3014 = vmatprep.mubr.bf16.mxu0 0
      %3015 = vmatmul.mubr.bf16.gmra.mxu0 %v2284
      %v3016 = vpop.f32.mrf.mxu0
      %v3017 = vadd.f32 0.0, %v3016
      %v3018 = vpop.f32.mrf.mxu0
      %v3019 = vpop.f32.mrf.mxu0
      %v3020 = vadd.f32 0.0, %v3019
      %v3021 = vpop.f32.mrf.mxu0
      %3022 = vmatprep.mubr.bf16.mxu0 0
      %3023 = vmatmul.mubr.bf16.gmra.mxu0 %v2287
      %v3024 = vpop.f32.mrf.mxu0
      %v3025 = vadd.f32 0.0, %v3024
      %v3026 = vpop.f32.mrf.mxu0
      %v3027 = vpop.f32.mrf.mxu0
      %v3028 = vadd.f32 0.0, %v3027
      %v3029 = vpop.f32.mrf.mxu0
      %3030 = vmatprep.mubr.bf16.mxu0 0
      %3031 = vmatmul.mubr.bf16.gmra.mxu0 %v2290
      %v3032 = vpop.f32.mrf.mxu0
      %v3033 = vadd.f32 0.0, %v3032
      %v3034 = vpop.f32.mrf.mxu0
      %v3035 = vpop.f32.mrf.mxu0
      %v3036 = vadd.f32 0.0, %v3035
      %v3037 = vpop.f32.mrf.mxu0
      %3038 = vmatprep.mubr.bf16.mxu0 0
      %3039 = vmatmul.mubr.bf16.gmra.mxu0 %v2293
      %v3040 = vpop.f32.mrf.mxu0
      %v3041 = vadd.f32 0.0, %v3040
      %v3042 = vpop.f32.mrf.mxu0
      %v3043 = vpop.f32.mrf.mxu0
      %v3044 = vadd.f32 0.0, %v3043
      %v3045 = vpop.f32.mrf.mxu0
      %3046 = vmatprep.mubr.bf16.mxu0 0
      %3047 = vmatmul.mubr.bf16.gmra.mxu0 %v2878
      %v3048 = vpop.f32.mrf.mxu0
      %v3049 = vadd.f32 0.0, %v3048
      %v3050 = vpop.f32.mrf.mxu0
      %v3051 = vpop.f32.mrf.mxu0
      %v3052 = vadd.f32 0.0, %v3051
      %v3053 = vpop.f32.mrf.mxu0
      %3054 = vmatprep.mubr.bf16.mxu0 0
      %3055 = vmatmul.mubr.bf16.gmra.mxu0 %v2881
      %v3056 = vpop.f32.mrf.mxu0
      %v3057 = vadd.f32 0.0, %v3056
      %v3058 = vpop.f32.mrf.mxu0
      %v3059 = vpop.f32.mrf.mxu0
      %v3060 = vadd.f32 0.0, %v3059
      %v3061 = vpop.f32.mrf.mxu0
      %3062 = vdwg.mxu0
      %v3063 = vadd.f32 %v2831, %v2921
      %v3064 = vadd.f32 %v2832, %v2924
      %v3065 = vadd.f32 %v2833, %v2929
      %v3066 = vadd.f32 %v2834, %v2932
      %v3067 = vadd.f32 %v2835, %v2937
      %v3068 = vadd.f32 %v2836, %v2940
      %v3069 = vadd.f32 %v2837, %v2945
      %v3070 = vadd.f32 %v2838, %v2948
      %v3071 = vadd.f32 %v2839, %v2953
      %v3072 = vadd.f32 %v2840, %v2956
      %v3073 = vadd.f32 %v2841, %v2961
      %v3074 = vadd.f32 %v2842, %v2964
      %v3075 = vadd.f32 %v2843, %v2969
      %v3076 = vadd.f32 %v2844, %v2972
      %v3077 = vadd.f32 %v2845, %v2977
      %v3078 = vadd.f32 %v2846, %v2980
      %v3079 = vadd.f32 %v2847, %v2985
      %v3080 = vadd.f32 %v2848, %v2988
      %v3081 = vadd.f32 %v2849, %v2993
      %v3082 = vadd.f32 %v2850, %v2996
      %v3083 = vadd.f32 %v2851, %v3001
      %v3084 = vadd.f32 %v2852, %v3004
      %v3085 = vadd.f32 %v2853, %v3009
      %v3086 = vadd.f32 %v2854, %v3012
      %v3087 = vadd.f32 %v2855, %v3017
      %v3088 = vadd.f32 %v2856, %v3020
      %v3089 = vadd.f32 %v2857, %v3025
      %v3090 = vadd.f32 %v2858, %v3028
      %v3091 = vadd.f32 %v2859, %v3033
      %v3092 = vadd.f32 %v2860, %v3036
      %v3093 = vadd.f32 %v2861, %v3041
      %v3094 = vadd.f32 %v2862, %v3044
      %v3095 = vadd.f32 %v2863, %v3049
      %v3096 = vadd.f32 %v2864, %v3052
      %v3097 = vadd.f32 %v2865, %v3057
      %v3098 = vadd.f32 %v2866, %v3060
      %s3099 = scalar_lea.vmem %s1, 18
      %v3100 = vld [vmem:[%s3099] sm:$0x3]
      %v3102 = vshrl.u32 %v2867, 16
      %v3104 = vrot.slane %v3102, 2
      %v3105 = vshll.u32 %v2867, 16
      %v3107 = vrot.slane %v3105, 3
      %v3108 = vor.u32 %v3104, %v3107
      %v3109 = vsel %vm2516, %v2586, %v3108
      %v3111 = vshrl.u32 %v2868, 16
      %v3113 = vrot.slane %v3111, 2
      %v3114 = vshll.u32 %v2868, 16
      %v3116 = vrot.slane %v3114, 3
      %v3117 = vor.u32 %v3113, %v3116
      %v3118 = vsel %vm2516, %v3108, %v3117
      %v3120 = vsel %vm619, %v3109, 0
      %v3123 = vsel %vm619, %v3118, 0
      %v3126 = vsel %vm674, %v3100, 0
      %3128 = vmatprep.subr.bf16.mxu0 0
      %3129 = vmatpush1.bf16.msra.mxu0 0
      %3130 = vmatprep.subr.bf16.mxu0 0
      %3131 = vmatpush1.bf16.msra.mxu0 0
      %3132 = vmatprep.subr.bf16.mxu0 0
      %3133 = vmatpush1.bf16.msra.mxu0 0
      %3134 = vmatprep.subr.bf16.mxu0 0
      %3135 = vmatpush1.bf16.msra.mxu0 0
      %3136 = vmatprep.subr.bf16.mxu0 0
      %3137 = vmatpush1.bf16.msra.mxu0 0
      %3138 = vmatprep.subr.bf16.mxu0 0
      %3139 = vmatpush1.bf16.msra.mxu0 0
      %3140 = vmatprep.subr.bf16.mxu0 0
      %3141 = vmatpush1.bf16.msra.mxu0 0
      %3142 = vmatprep.subr.bf16.mxu0 0
      %3143 = vmatpush1.bf16.msra.mxu0 %v3126
      %3144 = vmatprep.subr.bf16.mxu0 0
      %3145 = vmatpush2.bf16.msra.mxu0 0
      %3146 = vmatprep.subr.bf16.mxu0 0
      %3147 = vmatpush2.bf16.msra.mxu0 0
      %3148 = vmatprep.subr.bf16.mxu0 0
      %3149 = vmatpush2.bf16.msra.mxu0 0
      %3150 = vmatprep.subr.bf16.mxu0 0
      %3151 = vmatpush2.bf16.msra.mxu0 0
      %3152 = vmatprep.subr.bf16.mxu0 0
      %3153 = vmatpush2.bf16.msra.mxu0 0
      %3154 = vmatprep.subr.bf16.mxu0 0
      %3155 = vmatpush2.bf16.msra.mxu0 0
      %3156 = vmatprep.subr.bf16.mxu0 0
      %3157 = vmatpush2.bf16.msra.mxu0 0
      %3158 = vmatprep.subr.bf16.mxu0 0
      %3159 = vmatpush2.bf16.msra.mxu0 0
      %3160 = vmatprep.mubr.bf16.mxu0 0
      %3161 = vmatmul.mubr.bf16.gmra.mxu0 %v2601
      %v3162 = vpop.f32.mrf.mxu0
      %v3163 = vadd.f32 0.0, %v3162
      %v3164 = vpop.f32.mrf.mxu0
      %v3165 = vpop.f32.mrf.mxu0
      %v3166 = vadd.f32 0.0, %v3165
      %v3167 = vpop.f32.mrf.mxu0
      %3168 = vmatprep.mubr.bf16.mxu0 0
      %3169 = vmatmul.mubr.bf16.gmra.mxu0 %v2604
      %v3170 = vpop.f32.mrf.mxu0
      %v3171 = vadd.f32 0.0, %v3170
      %v3172 = vpop.f32.mrf.mxu0
      %v3173 = vpop.f32.mrf.mxu0
      %v3174 = vadd.f32 0.0, %v3173
      %v3175 = vpop.f32.mrf.mxu0
      %3176 = vmatprep.mubr.bf16.mxu0 0
      %3177 = vmatmul.mubr.bf16.gmra.mxu0 %v2607
      %v3178 = vpop.f32.mrf.mxu0
      %v3179 = vadd.f32 0.0, %v3178
      %v3180 = vpop.f32.mrf.mxu0
      %v3181 = vpop.f32.mrf.mxu0
      %v3182 = vadd.f32 0.0, %v3181
      %v3183 = vpop.f32.mrf.mxu0
      %3184 = vmatprep.mubr.bf16.mxu0 0
      %3185 = vmatmul.mubr.bf16.gmra.mxu0 %v2610
      %v3186 = vpop.f32.mrf.mxu0
      %v3187 = vadd.f32 0.0, %v3186
      %v3188 = vpop.f32.mrf.mxu0
      %v3189 = vpop.f32.mrf.mxu0
      %v3190 = vadd.f32 0.0, %v3189
      %v3191 = vpop.f32.mrf.mxu0
      %3192 = vmatprep.mubr.bf16.mxu0 0
      %3193 = vmatmul.mubr.bf16.gmra.mxu0 %v2613
      %v3194 = vpop.f32.mrf.mxu0
      %v3195 = vadd.f32 0.0, %v3194
      %v3196 = vpop.f32.mrf.mxu0
      %v3197 = vpop.f32.mrf.mxu0
      %v3198 = vadd.f32 0.0, %v3197
      %v3199 = vpop.f32.mrf.mxu0
      %3200 = vmatprep.mubr.bf16.mxu0 0
      %3201 = vmatmul.mubr.bf16.gmra.mxu0 %v2616
      %v3202 = vpop.f32.mrf.mxu0
      %v3203 = vadd.f32 0.0, %v3202
      %v3204 = vpop.f32.mrf.mxu0
      %v3205 = vpop.f32.mrf.mxu0
      %v3206 = vadd.f32 0.0, %v3205
      %v3207 = vpop.f32.mrf.mxu0
      %3208 = vmatprep.mubr.bf16.mxu0 0
      %3209 = vmatmul.mubr.bf16.gmra.mxu0 %v2619
      %v3210 = vpop.f32.mrf.mxu0
      %v3211 = vadd.f32 0.0, %v3210
      %v3212 = vpop.f32.mrf.mxu0
      %v3213 = vpop.f32.mrf.mxu0
      %v3214 = vadd.f32 0.0, %v3213
      %v3215 = vpop.f32.mrf.mxu0
      %3216 = vmatprep.mubr.bf16.mxu0 0
      %3217 = vmatmul.mubr.bf16.gmra.mxu0 %v2622
      %v3218 = vpop.f32.mrf.mxu0
      %v3219 = vadd.f32 0.0, %v3218
      %v3220 = vpop.f32.mrf.mxu0
      %v3221 = vpop.f32.mrf.mxu0
      %v3222 = vadd.f32 0.0, %v3221
      %v3223 = vpop.f32.mrf.mxu0
      %3224 = vmatprep.mubr.bf16.mxu0 0
      %3225 = vmatmul.mubr.bf16.gmra.mxu0 %v2625
      %v3226 = vpop.f32.mrf.mxu0
      %v3227 = vadd.f32 0.0, %v3226
      %v3228 = vpop.f32.mrf.mxu0
      %v3229 = vpop.f32.mrf.mxu0
      %v3230 = vadd.f32 0.0, %v3229
      %v3231 = vpop.f32.mrf.mxu0
      %3232 = vmatprep.mubr.bf16.mxu0 0
      %3233 = vmatmul.mubr.bf16.gmra.mxu0 %v2628
      %v3234 = vpop.f32.mrf.mxu0
      %v3235 = vadd.f32 0.0, %v3234
      %v3236 = vpop.f32.mrf.mxu0
      %v3237 = vpop.f32.mrf.mxu0
      %v3238 = vadd.f32 0.0, %v3237
      %v3239 = vpop.f32.mrf.mxu0
      %3240 = vmatprep.mubr.bf16.mxu0 0
      %3241 = vmatmul.mubr.bf16.gmra.mxu0 %v2631
      %v3242 = vpop.f32.mrf.mxu0
      %v3243 = vadd.f32 0.0, %v3242
      %v3244 = vpop.f32.mrf.mxu0
      %v3245 = vpop.f32.mrf.mxu0
      %v3246 = vadd.f32 0.0, %v3245
      %v3247 = vpop.f32.mrf.mxu0
      %3248 = vmatprep.mubr.bf16.mxu0 0
      %3249 = vmatmul.mubr.bf16.gmra.mxu0 %v2634
      %v3250 = vpop.f32.mrf.mxu0
      %v3251 = vadd.f32 0.0, %v3250
      %v3252 = vpop.f32.mrf.mxu0
      %v3253 = vpop.f32.mrf.mxu0
      %v3254 = vadd.f32 0.0, %v3253
      %v3255 = vpop.f32.mrf.mxu0
      %3256 = vmatprep.mubr.bf16.mxu0 0
      %3257 = vmatmul.mubr.bf16.gmra.mxu0 %v2637
      %v3258 = vpop.f32.mrf.mxu0
      %v3259 = vadd.f32 0.0, %v3258
      %v3260 = vpop.f32.mrf.mxu0
      %v3261 = vpop.f32.mrf.mxu0
      %v3262 = vadd.f32 0.0, %v3261
      %v3263 = vpop.f32.mrf.mxu0
      %3264 = vmatprep.mubr.bf16.mxu0 0
      %3265 = vmatmul.mubr.bf16.gmra.mxu0 %v2640
      %v3266 = vpop.f32.mrf.mxu0
      %v3267 = vadd.f32 0.0, %v3266
      %v3268 = vpop.f32.mrf.mxu0
      %v3269 = vpop.f32.mrf.mxu0
      %v3270 = vadd.f32 0.0, %v3269
      %v3271 = vpop.f32.mrf.mxu0
      %3272 = vmatprep.mubr.bf16.mxu0 0
      %3273 = vmatmul.mubr.bf16.gmra.mxu0 %v2643
      %v3274 = vpop.f32.mrf.mxu0
      %v3275 = vadd.f32 0.0, %v3274
      %v3276 = vpop.f32.mrf.mxu0
      %v3277 = vpop.f32.mrf.mxu0
      %v3278 = vadd.f32 0.0, %v3277
      %v3279 = vpop.f32.mrf.mxu0
      %3280 = vmatprep.mubr.bf16.mxu0 0
      %3281 = vmatmul.mubr.bf16.gmra.mxu0 %v2646
      %v3282 = vpop.f32.mrf.mxu0
      %v3283 = vadd.f32 0.0, %v3282
      %v3284 = vpop.f32.mrf.mxu0
      %v3285 = vpop.f32.mrf.mxu0
      %v3286 = vadd.f32 0.0, %v3285
      %v3287 = vpop.f32.mrf.mxu0
      %3288 = vmatprep.mubr.bf16.mxu0 0
      %3289 = vmatmul.mubr.bf16.gmra.mxu0 %v3120
      %v3290 = vpop.f32.mrf.mxu0
      %v3291 = vadd.f32 0.0, %v3290
      %v3292 = vpop.f32.mrf.mxu0
      %v3293 = vpop.f32.mrf.mxu0
      %v3294 = vadd.f32 0.0, %v3293
      %v3295 = vpop.f32.mrf.mxu0
      %3296 = vmatprep.mubr.bf16.mxu0 0
      %3297 = vmatmul.mubr.bf16.gmra.mxu0 %v3123
      %v3298 = vpop.f32.mrf.mxu0
      %v3299 = vadd.f32 0.0, %v3298
      %v3300 = vpop.f32.mrf.mxu0
      %v3301 = vpop.f32.mrf.mxu0
      %v3302 = vadd.f32 0.0, %v3301
      %v3303 = vpop.f32.mrf.mxu0
      %3304 = vdwg.mxu0
      %v3305 = vadd.f32 %v3063, %v3163
      %v3306 = vadd.f32 %v3064, %v3166
      %v3307 = vadd.f32 %v3065, %v3171
      %v3308 = vadd.f32 %v3066, %v3174
      %v3309 = vadd.f32 %v3067, %v3179
      %v3310 = vadd.f32 %v3068, %v3182
      %v3311 = vadd.f32 %v3069, %v3187
      %v3312 = vadd.f32 %v3070, %v3190
      %v3313 = vadd.f32 %v3071, %v3195
      %v3314 = vadd.f32 %v3072, %v3198
      %v3315 = vadd.f32 %v3073, %v3203
      %v3316 = vadd.f32 %v3074, %v3206
      %v3317 = vadd.f32 %v3075, %v3211
      %v3318 = vadd.f32 %v3076, %v3214
      %v3319 = vadd.f32 %v3077, %v3219
      %v3320 = vadd.f32 %v3078, %v3222
      %v3321 = vadd.f32 %v3079, %v3227
      %v3322 = vadd.f32 %v3080, %v3230
      %v3323 = vadd.f32 %v3081, %v3235
      %v3324 = vadd.f32 %v3082, %v3238
      %v3325 = vadd.f32 %v3083, %v3243
      %v3326 = vadd.f32 %v3084, %v3246
      %v3327 = vadd.f32 %v3085, %v3251
      %v3328 = vadd.f32 %v3086, %v3254
      %v3329 = vadd.f32 %v3087, %v3259
      %v3330 = vadd.f32 %v3088, %v3262
      %v3331 = vadd.f32 %v3089, %v3267
      %v3332 = vadd.f32 %v3090, %v3270
      %v3333 = vadd.f32 %v3091, %v3275
      %v3334 = vadd.f32 %v3092, %v3278
      %v3335 = vadd.f32 %v3093, %v3283
      %v3336 = vadd.f32 %v3094, %v3286
      %v3337 = vadd.f32 %v3095, %v3291
      %v3338 = vadd.f32 %v3096, %v3294
      %v3339 = vadd.f32 %v3097, %v3299
      %v3340 = vadd.f32 %v3098, %v3302
      %s3341 = scalar_lea.vmem %s1, 20
      %v3342 = vld [vmem:[%s3341] sm:$0x3]
      %vm3343 = vcmask 1044480
      %v3344 = vrot.slane %v456, 3
      %v3345 = vrot.slane %v457, 3
      %v3346 = vsel %vm3343, %v3344, %v3345
      %v3347 = vrot.slane %v458, 3
      %v3348 = vsel %vm3343, %v3345, %v3347
      %v3349 = vrot.slane %v459, 3
      %v3350 = vsel %vm3343, %v3347, %v3349
      %v3351 = vrot.slane %v460, 3
      %v3352 = vsel %vm3343, %v3349, %v3351
      %v3353 = vrot.slane %v461, 3
      %v3354 = vsel %vm3343, %v3351, %v3353
      %v3355 = vrot.slane %v462, 3
      %v3356 = vsel %vm3343, %v3353, %v3355
      %v3357 = vrot.slane %v463, 3
      %v3358 = vsel %vm3343, %v3355, %v3357
      %v3359 = vrot.slane %v464, 3
      %v3360 = vsel %vm3343, %v3357, %v3359
      %v3361 = vrot.slane %v465, 3
      %v3362 = vsel %vm3343, %v3359, %v3361
      %v3363 = vrot.slane %v466, 3
      %v3364 = vsel %vm3343, %v3361, %v3363
      %v3365 = vrot.slane %v467, 3
      %v3366 = vsel %vm3343, %v3363, %v3365
      %v3367 = vrot.slane %v468, 3
      %v3368 = vsel %vm3343, %v3365, %v3367
      %v3369 = vrot.slane %v469, 3
      %v3370 = vsel %vm3343, %v3367, %v3369
      %v3371 = vrot.slane %v470, 3
      %v3372 = vsel %vm3343, %v3369, %v3371
      %v3373 = vrot.slane %v471, 3
      %v3374 = vsel %vm3343, %v3371, %v3373
      %v3375 = vrot.slane %v1741, 3
      %v3376 = vsel %vm3343, %v3373, %v3375
      %v3377 = vrot.slane %v2867, 3
      %v3378 = vsel %vm3343, %v3375, %v3377
      %v3379 = vrot.slane %v2868, 3
      %v3380 = vsel %vm3343, %v3377, %v3379
      %v3382 = vsel %vm619, %v3346, 0
      %v3385 = vsel %vm619, %v3348, 0
      %v3388 = vsel %vm619, %v3350, 0
      %v3391 = vsel %vm619, %v3352, 0
      %v3394 = vsel %vm619, %v3354, 0
      %v3397 = vsel %vm619, %v3356, 0
      %v3400 = vsel %vm619, %v3358, 0
      %v3403 = vsel %vm619, %v3360, 0
      %v3406 = vsel %vm619, %v3362, 0
      %v3409 = vsel %vm619, %v3364, 0
      %v3412 = vsel %vm619, %v3366, 0
      %v3415 = vsel %vm619, %v3368, 0
      %v3418 = vsel %vm619, %v3370, 0
      %v3421 = vsel %vm619, %v3372, 0
      %v3424 = vsel %vm619, %v3374, 0
      %v3427 = vsel %vm619, %v3376, 0
      %v3430 = vsel %vm619, %v3378, 0
      %v3433 = vsel %vm619, %v3380, 0
      %v3436 = vsel %vm674, %v3342, 0
      %3438 = vmatprep.subr.bf16.mxu0 0
      %3439 = vmatpush1.bf16.msra.mxu0 0
      %3440 = vmatprep.subr.bf16.mxu0 0
      %3441 = vmatpush1.bf16.msra.mxu0 0
      %3442 = vmatprep.subr.bf16.mxu0 0
      %3443 = vmatpush1.bf16.msra.mxu0 0
      %3444 = vmatprep.subr.bf16.mxu0 0
      %3445 = vmatpush1.bf16.msra.mxu0 0
      %3446 = vmatprep.subr.bf16.mxu0 0
      %3447 = vmatpush1.bf16.msra.mxu0 0
      %3448 = vmatprep.subr.bf16.mxu0 0
      %3449 = vmatpush1.bf16.msra.mxu0 0
      %3450 = vmatprep.subr.bf16.mxu0 0
      %3451 = vmatpush1.bf16.msra.mxu0 0
      %3452 = vmatprep.subr.bf16.mxu0 0
      %3453 = vmatpush1.bf16.msra.mxu0 %v3436
      %3454 = vmatprep.subr.bf16.mxu0 0
      %3455 = vmatpush2.bf16.msra.mxu0 0
      %3456 = vmatprep.subr.bf16.mxu0 0
      %3457 = vmatpush2.bf16.msra.mxu0 0
      %3458 = vmatprep.subr.bf16.mxu0 0
      %3459 = vmatpush2.bf16.msra.mxu0 0
      %3460 = vmatprep.subr.bf16.mxu0 0
      %3461 = vmatpush2.bf16.msra.mxu0 0
      %3462 = vmatprep.subr.bf16.mxu0 0
      %3463 = vmatpush2.bf16.msra.mxu0 0
      %3464 = vmatprep.subr.bf16.mxu0 0
      %3465 = vmatpush2.bf16.msra.mxu0 0
      %3466 = vmatprep.subr.bf16.mxu0 0
      %3467 = vmatpush2.bf16.msra.mxu0 0
      %3468 = vmatprep.subr.bf16.mxu0 0
      %3469 = vmatpush2.bf16.msra.mxu0 0
      %3470 = vmatprep.mubr.bf16.mxu0 0
      %3471 = vmatmul.mubr.bf16.gmra.mxu0 %v3382
      %v3472 = vpop.f32.mrf.mxu0
      %v3473 = vadd.f32 0.0, %v3472
      %v3474 = vpop.f32.mrf.mxu0
      %v3475 = vpop.f32.mrf.mxu0
      %v3476 = vadd.f32 0.0, %v3475
      %v3477 = vpop.f32.mrf.mxu0
      %3478 = vmatprep.mubr.bf16.mxu0 0
      %3479 = vmatmul.mubr.bf16.gmra.mxu0 %v3385
      %v3480 = vpop.f32.mrf.mxu0
      %v3481 = vadd.f32 0.0, %v3480
      %v3482 = vpop.f32.mrf.mxu0
      %v3483 = vpop.f32.mrf.mxu0
      %v3484 = vadd.f32 0.0, %v3483
      %v3485 = vpop.f32.mrf.mxu0
      %3486 = vmatprep.mubr.bf16.mxu0 0
      %3487 = vmatmul.mubr.bf16.gmra.mxu0 %v3388
      %v3488 = vpop.f32.mrf.mxu0
      %v3489 = vadd.f32 0.0, %v3488
      %v3490 = vpop.f32.mrf.mxu0
      %v3491 = vpop.f32.mrf.mxu0
      %v3492 = vadd.f32 0.0, %v3491
      %v3493 = vpop.f32.mrf.mxu0
      %3494 = vmatprep.mubr.bf16.mxu0 0
      %3495 = vmatmul.mubr.bf16.gmra.mxu0 %v3391
      %v3496 = vpop.f32.mrf.mxu0
      %v3497 = vadd.f32 0.0, %v3496
      %v3498 = vpop.f32.mrf.mxu0
      %v3499 = vpop.f32.mrf.mxu0
      %v3500 = vadd.f32 0.0, %v3499
      %v3501 = vpop.f32.mrf.mxu0
      %3502 = vmatprep.mubr.bf16.mxu0 0
      %3503 = vmatmul.mubr.bf16.gmra.mxu0 %v3394
      %v3504 = vpop.f32.mrf.mxu0
      %v3505 = vadd.f32 0.0, %v3504
      %v3506 = vpop.f32.mrf.mxu0
      %v3507 = vpop.f32.mrf.mxu0
      %v3508 = vadd.f32 0.0, %v3507
      %v3509 = vpop.f32.mrf.mxu0
      %3510 = vmatprep.mubr.bf16.mxu0 0
      %3511 = vmatmul.mubr.bf16.gmra.mxu0 %v3397
      %v3512 = vpop.f32.mrf.mxu0
      %v3513 = vadd.f32 0.0, %v3512
      %v3514 = vpop.f32.mrf.mxu0
      %v3515 = vpop.f32.mrf.mxu0
      %v3516 = vadd.f32 0.0, %v3515
      %v3517 = vpop.f32.mrf.mxu0
      %3518 = vmatprep.mubr.bf16.mxu0 0
      %3519 = vmatmul.mubr.bf16.gmra.mxu0 %v3400
      %v3520 = vpop.f32.mrf.mxu0
      %v3521 = vadd.f32 0.0, %v3520
      %v3522 = vpop.f32.mrf.mxu0
      %v3523 = vpop.f32.mrf.mxu0
      %v3524 = vadd.f32 0.0, %v3523
      %v3525 = vpop.f32.mrf.mxu0
      %3526 = vmatprep.mubr.bf16.mxu0 0
      %3527 = vmatmul.mubr.bf16.gmra.mxu0 %v3403
      %v3528 = vpop.f32.mrf.mxu0
      %v3529 = vadd.f32 0.0, %v3528
      %v3530 = vpop.f32.mrf.mxu0
      %v3531 = vpop.f32.mrf.mxu0
      %v3532 = vadd.f32 0.0, %v3531
      %v3533 = vpop.f32.mrf.mxu0
      %3534 = vmatprep.mubr.bf16.mxu0 0
      %3535 = vmatmul.mubr.bf16.gmra.mxu0 %v3406
      %v3536 = vpop.f32.mrf.mxu0
      %v3537 = vadd.f32 0.0, %v3536
      %v3538 = vpop.f32.mrf.mxu0
      %v3539 = vpop.f32.mrf.mxu0
      %v3540 = vadd.f32 0.0, %v3539
      %v3541 = vpop.f32.mrf.mxu0
      %3542 = vmatprep.mubr.bf16.mxu0 0
      %3543 = vmatmul.mubr.bf16.gmra.mxu0 %v3409
      %v3544 = vpop.f32.mrf.mxu0
      %v3545 = vadd.f32 0.0, %v3544
      %v3546 = vpop.f32.mrf.mxu0
      %v3547 = vpop.f32.mrf.mxu0
      %v3548 = vadd.f32 0.0, %v3547
      %v3549 = vpop.f32.mrf.mxu0
      %3550 = vmatprep.mubr.bf16.mxu0 0
      %3551 = vmatmul.mubr.bf16.gmra.mxu0 %v3412
      %v3552 = vpop.f32.mrf.mxu0
      %v3553 = vadd.f32 0.0, %v3552
      %v3554 = vpop.f32.mrf.mxu0
      %v3555 = vpop.f32.mrf.mxu0
      %v3556 = vadd.f32 0.0, %v3555
      %v3557 = vpop.f32.mrf.mxu0
      %3558 = vmatprep.mubr.bf16.mxu0 0
      %3559 = vmatmul.mubr.bf16.gmra.mxu0 %v3415
      %v3560 = vpop.f32.mrf.mxu0
      %v3561 = vadd.f32 0.0, %v3560
      %v3562 = vpop.f32.mrf.mxu0
      %v3563 = vpop.f32.mrf.mxu0
      %v3564 = vadd.f32 0.0, %v3563
      %v3565 = vpop.f32.mrf.mxu0
      %3566 = vmatprep.mubr.bf16.mxu0 0
      %3567 = vmatmul.mubr.bf16.gmra.mxu0 %v3418
      %v3568 = vpop.f32.mrf.mxu0
      %v3569 = vadd.f32 0.0, %v3568
      %v3570 = vpop.f32.mrf.mxu0
      %v3571 = vpop.f32.mrf.mxu0
      %v3572 = vadd.f32 0.0, %v3571
      %v3573 = vpop.f32.mrf.mxu0
      %3574 = vmatprep.mubr.bf16.mxu0 0
      %3575 = vmatmul.mubr.bf16.gmra.mxu0 %v3421
      %v3576 = vpop.f32.mrf.mxu0
      %v3577 = vadd.f32 0.0, %v3576
      %v3578 = vpop.f32.mrf.mxu0
      %v3579 = vpop.f32.mrf.mxu0
      %v3580 = vadd.f32 0.0, %v3579
      %v3581 = vpop.f32.mrf.mxu0
      %3582 = vmatprep.mubr.bf16.mxu0 0
      %3583 = vmatmul.mubr.bf16.gmra.mxu0 %v3424
      %v3584 = vpop.f32.mrf.mxu0
      %v3585 = vadd.f32 0.0, %v3584
      %v3586 = vpop.f32.mrf.mxu0
      %v3587 = vpop.f32.mrf.mxu0
      %v3588 = vadd.f32 0.0, %v3587
      %v3589 = vpop.f32.mrf.mxu0
      %3590 = vmatprep.mubr.bf16.mxu0 0
      %3591 = vmatmul.mubr.bf16.gmra.mxu0 %v3427
      %v3592 = vpop.f32.mrf.mxu0
      %v3593 = vadd.f32 0.0, %v3592
      %v3594 = vpop.f32.mrf.mxu0
      %v3595 = vpop.f32.mrf.mxu0
      %v3596 = vadd.f32 0.0, %v3595
      %v3597 = vpop.f32.mrf.mxu0
      %3598 = vmatprep.mubr.bf16.mxu0 0
      %3599 = vmatmul.mubr.bf16.gmra.mxu0 %v3430
      %v3600 = vpop.f32.mrf.mxu0
      %v3601 = vadd.f32 0.0, %v3600
      %v3602 = vpop.f32.mrf.mxu0
      %v3603 = vpop.f32.mrf.mxu0
      %v3604 = vadd.f32 0.0, %v3603
      %v3605 = vpop.f32.mrf.mxu0
      %3606 = vmatprep.mubr.bf16.mxu0 0
      %3607 = vmatmul.mubr.bf16.gmra.mxu0 %v3433
      %v3608 = vpop.f32.mrf.mxu0
      %v3609 = vadd.f32 0.0, %v3608
      %v3610 = vpop.f32.mrf.mxu0
      %v3611 = vpop.f32.mrf.mxu0
      %v3612 = vadd.f32 0.0, %v3611
      %v3613 = vpop.f32.mrf.mxu0
      %3614 = vdwg.mxu0
      %v3615 = vadd.f32 %v3305, %v3473
      %v3616 = vadd.f32 %v3306, %v3476
      %v3617 = vadd.f32 %v3307, %v3481
      %v3618 = vadd.f32 %v3308, %v3484
      %v3619 = vadd.f32 %v3309, %v3489
      %v3620 = vadd.f32 %v3310, %v3492
      %v3621 = vadd.f32 %v3311, %v3497
      %v3622 = vadd.f32 %v3312, %v3500
      %v3623 = vadd.f32 %v3313, %v3505
      %v3624 = vadd.f32 %v3314, %v3508
      %v3625 = vadd.f32 %v3315, %v3513
      %v3626 = vadd.f32 %v3316, %v3516
      %v3627 = vadd.f32 %v3317, %v3521
      %v3628 = vadd.f32 %v3318, %v3524
      %v3629 = vadd.f32 %v3319, %v3529
      %v3630 = vadd.f32 %v3320, %v3532
      %v3631 = vadd.f32 %v3321, %v3537
      %v3632 = vadd.f32 %v3322, %v3540
      %v3633 = vadd.f32 %v3323, %v3545
      %v3634 = vadd.f32 %v3324, %v3548
      %v3635 = vadd.f32 %v3325, %v3553
      %v3636 = vadd.f32 %v3326, %v3556
      %v3637 = vadd.f32 %v3327, %v3561
      %v3638 = vadd.f32 %v3328, %v3564
      %v3639 = vadd.f32 %v3329, %v3569
      %v3640 = vadd.f32 %v3330, %v3572
      %v3641 = vadd.f32 %v3331, %v3577
      %v3642 = vadd.f32 %v3332, %v3580
      %v3643 = vadd.f32 %v3333, %v3585
      %v3644 = vadd.f32 %v3334, %v3588
      %v3645 = vadd.f32 %v3335, %v3593
      %v3646 = vadd.f32 %v3336, %v3596
      %v3647 = vadd.f32 %v3337, %v3601
      %v3648 = vadd.f32 %v3338, %v3604
      %v3649 = vadd.f32 %v3339, %v3609
      %v3650 = vadd.f32 %v3340, %v3612
      %s3651 = scalar_lea.vmem %s1, 22
      %v3652 = vld [vmem:[%s3651] sm:$0x3]
      %vm3653 = vsmask.f32 4352
      %v3654 = vrot.slane %v496, 3
      %v3655 = vrot.slane %v492, 4
      %v3656 = vor.u32 %v3654, %v3655
      %v3657 = vrot.slane %v504, 3
      %v3658 = vrot.slane %v500, 4
      %v3659 = vor.u32 %v3657, %v3658
      %v3660 = vsel %vm3653, %v3656, %v3659
      %v3661 = vrot.slane %v512, 3
      %v3662 = vrot.slane %v508, 4
      %v3663 = vor.u32 %v3661, %v3662
      %v3664 = vsel %vm3653, %v3659, %v3663
      %v3665 = vrot.slane %v520, 3
      %v3666 = vrot.slane %v516, 4
      %v3667 = vor.u32 %v3665, %v3666
      %v3668 = vsel %vm3653, %v3663, %v3667
      %v3669 = vrot.slane %v528, 3
      %v3670 = vrot.slane %v524, 4
      %v3671 = vor.u32 %v3669, %v3670
      %v3672 = vsel %vm3653, %v3667, %v3671
      %v3673 = vrot.slane %v536, 3
      %v3674 = vrot.slane %v532, 4
      %v3675 = vor.u32 %v3673, %v3674
      %v3676 = vsel %vm3653, %v3671, %v3675
      %v3677 = vrot.slane %v544, 3
      %v3678 = vrot.slane %v540, 4
      %v3679 = vor.u32 %v3677, %v3678
      %v3680 = vsel %vm3653, %v3675, %v3679
      %v3681 = vrot.slane %v552, 3
      %v3682 = vrot.slane %v548, 4
      %v3683 = vor.u32 %v3681, %v3682
      %v3684 = vsel %vm3653, %v3679, %v3683
      %v3685 = vrot.slane %v560, 3
      %v3686 = vrot.slane %v556, 4
      %v3687 = vor.u32 %v3685, %v3686
      %v3688 = vsel %vm3653, %v3683, %v3687
      %v3689 = vrot.slane %v568, 3
      %v3690 = vrot.slane %v564, 4
      %v3691 = vor.u32 %v3689, %v3690
      %v3692 = vsel %vm3653, %v3687, %v3691
      %v3693 = vrot.slane %v576, 3
      %v3694 = vrot.slane %v572, 4
      %v3695 = vor.u32 %v3693, %v3694
      %v3696 = vsel %vm3653, %v3691, %v3695
      %v3697 = vrot.slane %v584, 3
      %v3698 = vrot.slane %v580, 4
      %v3699 = vor.u32 %v3697, %v3698
      %v3700 = vsel %vm3653, %v3695, %v3699
      %v3701 = vrot.slane %v592, 3
      %v3702 = vrot.slane %v588, 4
      %v3703 = vor.u32 %v3701, %v3702
      %v3704 = vsel %vm3653, %v3699, %v3703
      %v3705 = vrot.slane %v600, 3
      %v3706 = vrot.slane %v596, 4
      %v3707 = vor.u32 %v3705, %v3706
      %v3708 = vsel %vm3653, %v3703, %v3707
      %v3709 = vrot.slane %v608, 3
      %v3710 = vrot.slane %v604, 4
      %v3711 = vor.u32 %v3709, %v3710
      %v3712 = vsel %vm3653, %v3707, %v3711
      %v3713 = vrot.slane %v616, 3
      %v3714 = vrot.slane %v612, 4
      %v3715 = vor.u32 %v3713, %v3714
      %v3716 = vsel %vm3653, %v3711, %v3715
      %v3717 = vrot.slane %v1972, 3
      %v3718 = vrot.slane %v1975, 4
      %v3719 = vor.u32 %v3717, %v3718
      %v3720 = vsel %vm3653, %v3715, %v3719
      %v3721 = vrot.slane %v3102, 3
      %v3722 = vrot.slane %v3105, 4
      %v3723 = vor.u32 %v3721, %v3722
      %v3724 = vsel %vm3653, %v3719, %v3723
      %v3725 = vrot.slane %v3111, 3
      %v3726 = vrot.slane %v3114, 4
      %v3727 = vor.u32 %v3725, %v3726
      %v3728 = vsel %vm3653, %v3723, %v3727
      %v3730 = vsel %vm619, %v3660, 0
      %v3733 = vsel %vm619, %v3664, 0
      %v3736 = vsel %vm619, %v3668, 0
      %v3739 = vsel %vm619, %v3672, 0
      %v3742 = vsel %vm619, %v3676, 0
      %v3745 = vsel %vm619, %v3680, 0
      %v3748 = vsel %vm619, %v3684, 0
      %v3751 = vsel %vm619, %v3688, 0
      %v3754 = vsel %vm619, %v3692, 0
      %v3757 = vsel %vm619, %v3696, 0
      %v3760 = vsel %vm619, %v3700, 0
      %v3763 = vsel %vm619, %v3704, 0
      %v3766 = vsel %vm619, %v3708, 0
      %v3769 = vsel %vm619, %v3712, 0
      %v3772 = vsel %vm619, %v3716, 0
      %v3775 = vsel %vm619, %v3720, 0
      %v3778 = vsel %vm619, %v3724, 0
      %v3781 = vsel %vm619, %v3728, 0
      %v3784 = vsel %vm674, %v3652, 0
      %3786 = vmatprep.subr.bf16.mxu0 0
      %3787 = vmatpush1.bf16.msra.mxu0 0
      %3788 = vmatprep.subr.bf16.mxu0 0
      %3789 = vmatpush1.bf16.msra.mxu0 0
      %3790 = vmatprep.subr.bf16.mxu0 0
      %3791 = vmatpush1.bf16.msra.mxu0 0
      %3792 = vmatprep.subr.bf16.mxu0 0
      %3793 = vmatpush1.bf16.msra.mxu0 0
      %3794 = vmatprep.subr.bf16.mxu0 0
      %3795 = vmatpush1.bf16.msra.mxu0 0
      %3796 = vmatprep.subr.bf16.mxu0 0
      %3797 = vmatpush1.bf16.msra.mxu0 0
      %3798 = vmatprep.subr.bf16.mxu0 0
      %3799 = vmatpush1.bf16.msra.mxu0 0
      %3800 = vmatprep.subr.bf16.mxu0 0
      %3801 = vmatpush1.bf16.msra.mxu0 %v3784
      %3802 = vmatprep.subr.bf16.mxu0 0
      %3803 = vmatpush2.bf16.msra.mxu0 0
      %3804 = vmatprep.subr.bf16.mxu0 0
      %3805 = vmatpush2.bf16.msra.mxu0 0
      %3806 = vmatprep.subr.bf16.mxu0 0
      %3807 = vmatpush2.bf16.msra.mxu0 0
      %3808 = vmatprep.subr.bf16.mxu0 0
      %3809 = vmatpush2.bf16.msra.mxu0 0
      %3810 = vmatprep.subr.bf16.mxu0 0
      %3811 = vmatpush2.bf16.msra.mxu0 0
      %3812 = vmatprep.subr.bf16.mxu0 0
      %3813 = vmatpush2.bf16.msra.mxu0 0
      %3814 = vmatprep.subr.bf16.mxu0 0
      %3815 = vmatpush2.bf16.msra.mxu0 0
      %3816 = vmatprep.subr.bf16.mxu0 0
      %3817 = vmatpush2.bf16.msra.mxu0 0
      %3818 = vmatprep.mubr.bf16.mxu0 0
      %3819 = vmatmul.mubr.bf16.gmra.mxu0 %v3730
      %v3820 = vpop.f32.mrf.mxu0
      %v3821 = vadd.f32 0.0, %v3820
      %v3822 = vpop.f32.mrf.mxu0
      %v3823 = vpop.f32.mrf.mxu0
      %v3824 = vadd.f32 0.0, %v3823
      %v3825 = vpop.f32.mrf.mxu0
      %3826 = vmatprep.mubr.bf16.mxu0 0
      %3827 = vmatmul.mubr.bf16.gmra.mxu0 %v3733
      %v3828 = vpop.f32.mrf.mxu0
      %v3829 = vadd.f32 0.0, %v3828
      %v3830 = vpop.f32.mrf.mxu0
      %v3831 = vpop.f32.mrf.mxu0
      %v3832 = vadd.f32 0.0, %v3831
      %v3833 = vpop.f32.mrf.mxu0
      %3834 = vmatprep.mubr.bf16.mxu0 0
      %3835 = vmatmul.mubr.bf16.gmra.mxu0 %v3736
      %v3836 = vpop.f32.mrf.mxu0
      %v3837 = vadd.f32 0.0, %v3836
      %v3838 = vpop.f32.mrf.mxu0
      %v3839 = vpop.f32.mrf.mxu0
      %v3840 = vadd.f32 0.0, %v3839
      %v3841 = vpop.f32.mrf.mxu0
      %3842 = vmatprep.mubr.bf16.mxu0 0
      %3843 = vmatmul.mubr.bf16.gmra.mxu0 %v3739
      %v3844 = vpop.f32.mrf.mxu0
      %v3845 = vadd.f32 0.0, %v3844
      %v3846 = vpop.f32.mrf.mxu0
      %v3847 = vpop.f32.mrf.mxu0
      %v3848 = vadd.f32 0.0, %v3847
      %v3849 = vpop.f32.mrf.mxu0
      %3850 = vmatprep.mubr.bf16.mxu0 0
      %3851 = vmatmul.mubr.bf16.gmra.mxu0 %v3742
      %v3852 = vpop.f32.mrf.mxu0
      %v3853 = vadd.f32 0.0, %v3852
      %v3854 = vpop.f32.mrf.mxu0
      %v3855 = vpop.f32.mrf.mxu0
      %v3856 = vadd.f32 0.0, %v3855
      %v3857 = vpop.f32.mrf.mxu0
      %3858 = vmatprep.mubr.bf16.mxu0 0
      %3859 = vmatmul.mubr.bf16.gmra.mxu0 %v3745
      %v3860 = vpop.f32.mrf.mxu0
      %v3861 = vadd.f32 0.0, %v3860
      %v3862 = vpop.f32.mrf.mxu0
      %v3863 = vpop.f32.mrf.mxu0
      %v3864 = vadd.f32 0.0, %v3863
      %v3865 = vpop.f32.mrf.mxu0
      %3866 = vmatprep.mubr.bf16.mxu0 0
      %3867 = vmatmul.mubr.bf16.gmra.mxu0 %v3748
      %v3868 = vpop.f32.mrf.mxu0
      %v3869 = vadd.f32 0.0, %v3868
      %v3870 = vpop.f32.mrf.mxu0
      %v3871 = vpop.f32.mrf.mxu0
      %v3872 = vadd.f32 0.0, %v3871
      %v3873 = vpop.f32.mrf.mxu0
      %3874 = vmatprep.mubr.bf16.mxu0 0
      %3875 = vmatmul.mubr.bf16.gmra.mxu0 %v3751
      %v3876 = vpop.f32.mrf.mxu0
      %v3877 = vadd.f32 0.0, %v3876
      %v3878 = vpop.f32.mrf.mxu0
      %v3879 = vpop.f32.mrf.mxu0
      %v3880 = vadd.f32 0.0, %v3879
      %v3881 = vpop.f32.mrf.mxu0
      %3882 = vmatprep.mubr.bf16.mxu0 0
      %3883 = vmatmul.mubr.bf16.gmra.mxu0 %v3754
      %v3884 = vpop.f32.mrf.mxu0
      %v3885 = vadd.f32 0.0, %v3884
      %v3886 = vpop.f32.mrf.mxu0
      %v3887 = vpop.f32.mrf.mxu0
      %v3888 = vadd.f32 0.0, %v3887
      %v3889 = vpop.f32.mrf.mxu0
      %3890 = vmatprep.mubr.bf16.mxu0 0
      %3891 = vmatmul.mubr.bf16.gmra.mxu0 %v3757
      %v3892 = vpop.f32.mrf.mxu0
      %v3893 = vadd.f32 0.0, %v3892
      %v3894 = vpop.f32.mrf.mxu0
      %v3895 = vpop.f32.mrf.mxu0
      %v3896 = vadd.f32 0.0, %v3895
      %v3897 = vpop.f32.mrf.mxu0
      %3898 = vmatprep.mubr.bf16.mxu0 0
      %3899 = vmatmul.mubr.bf16.gmra.mxu0 %v3760
      %v3900 = vpop.f32.mrf.mxu0
      %v3901 = vadd.f32 0.0, %v3900
      %v3902 = vpop.f32.mrf.mxu0
      %v3903 = vpop.f32.mrf.mxu0
      %v3904 = vadd.f32 0.0, %v3903
      %v3905 = vpop.f32.mrf.mxu0
      %3906 = vmatprep.mubr.bf16.mxu0 0
      %3907 = vmatmul.mubr.bf16.gmra.mxu0 %v3763
      %v3908 = vpop.f32.mrf.mxu0
      %v3909 = vadd.f32 0.0, %v3908
      %v3910 = vpop.f32.mrf.mxu0
      %v3911 = vpop.f32.mrf.mxu0
      %v3912 = vadd.f32 0.0, %v3911
      %v3913 = vpop.f32.mrf.mxu0
      %3914 = vmatprep.mubr.bf16.mxu0 0
      %3915 = vmatmul.mubr.bf16.gmra.mxu0 %v3766
      %v3916 = vpop.f32.mrf.mxu0
      %v3917 = vadd.f32 0.0, %v3916
      %v3918 = vpop.f32.mrf.mxu0
      %v3919 = vpop.f32.mrf.mxu0
      %v3920 = vadd.f32 0.0, %v3919
      %v3921 = vpop.f32.mrf.mxu0
      %3922 = vmatprep.mubr.bf16.mxu0 0
      %3923 = vmatmul.mubr.bf16.gmra.mxu0 %v3769
      %v3924 = vpop.f32.mrf.mxu0
      %v3925 = vadd.f32 0.0, %v3924
      %v3926 = vpop.f32.mrf.mxu0
      %v3927 = vpop.f32.mrf.mxu0
      %v3928 = vadd.f32 0.0, %v3927
      %v3929 = vpop.f32.mrf.mxu0
      %3930 = vmatprep.mubr.bf16.mxu0 0
      %3931 = vmatmul.mubr.bf16.gmra.mxu0 %v3772
      %v3932 = vpop.f32.mrf.mxu0
      %v3933 = vadd.f32 0.0, %v3932
      %v3934 = vpop.f32.mrf.mxu0
      %v3935 = vpop.f32.mrf.mxu0
      %v3936 = vadd.f32 0.0, %v3935
      %v3937 = vpop.f32.mrf.mxu0
      %3938 = vmatprep.mubr.bf16.mxu0 0
      %3939 = vmatmul.mubr.bf16.gmra.mxu0 %v3775
      %v3940 = vpop.f32.mrf.mxu0
      %v3941 = vadd.f32 0.0, %v3940
      %v3942 = vpop.f32.mrf.mxu0
      %v3943 = vpop.f32.mrf.mxu0
      %v3944 = vadd.f32 0.0, %v3943
      %v3945 = vpop.f32.mrf.mxu0
      %3946 = vmatprep.mubr.bf16.mxu0 0
      %3947 = vmatmul.mubr.bf16.gmra.mxu0 %v3778
      %v3948 = vpop.f32.mrf.mxu0
      %v3949 = vadd.f32 0.0, %v3948
      %v3950 = vpop.f32.mrf.mxu0
      %v3951 = vpop.f32.mrf.mxu0
      %v3952 = vadd.f32 0.0, %v3951
      %v3953 = vpop.f32.mrf.mxu0
      %3954 = vmatprep.mubr.bf16.mxu0 0
      %3955 = vmatmul.mubr.bf16.gmra.mxu0 %v3781
      %v3956 = vpop.f32.mrf.mxu0
      %v3957 = vadd.f32 0.0, %v3956
      %v3958 = vpop.f32.mrf.mxu0
      %v3959 = vpop.f32.mrf.mxu0
      %v3960 = vadd.f32 0.0, %v3959
      %v3961 = vpop.f32.mrf.mxu0
      %3962 = vdwg.mxu0
      %v3963 = vadd.f32 %v3615, %v3821
      %v3964 = vadd.f32 %v3616, %v3824
      %v3965 = vadd.f32 %v3617, %v3829
      %v3966 = vadd.f32 %v3618, %v3832
      %v3967 = vadd.f32 %v3619, %v3837
      %v3968 = vadd.f32 %v3620, %v3840
      %v3969 = vadd.f32 %v3621, %v3845
      %v3970 = vadd.f32 %v3622, %v3848
      %v3971 = vadd.f32 %v3623, %v3853
      %v3972 = vadd.f32 %v3624, %v3856
      %v3973 = vadd.f32 %v3625, %v3861
      %v3974 = vadd.f32 %v3626, %v3864
      %v3975 = vadd.f32 %v3627, %v3869
      %v3976 = vadd.f32 %v3628, %v3872
      %v3977 = vadd.f32 %v3629, %v3877
      %v3978 = vadd.f32 %v3630, %v3880
      %v3979 = vadd.f32 %v3631, %v3885
      %v3980 = vadd.f32 %v3632, %v3888
      %v3981 = vadd.f32 %v3633, %v3893
      %v3982 = vadd.f32 %v3634, %v3896
      %v3983 = vadd.f32 %v3635, %v3901
      %v3984 = vadd.f32 %v3636, %v3904
      %v3985 = vadd.f32 %v3637, %v3909
      %v3986 = vadd.f32 %v3638, %v3912
      %v3987 = vadd.f32 %v3639, %v3917
      %v3988 = vadd.f32 %v3640, %v3920
      %v3989 = vadd.f32 %v3641, %v3925
      %v3990 = vadd.f32 %v3642, %v3928
      %v3991 = vadd.f32 %v3643, %v3933
      %v3992 = vadd.f32 %v3644, %v3936
      %v3993 = vadd.f32 %v3645, %v3941
      %v3994 = vadd.f32 %v3646, %v3944
      %v3995 = vadd.f32 %v3647, %v3949
      %v3996 = vadd.f32 %v3648, %v3952
      %v3997 = vadd.f32 %v3649, %v3957
      %v3998 = vadd.f32 %v3650, %v3960
      %v3999 = vld [vmem:[%s2] sm:$0x1]
      %v4001 = vlaneseq
      %v4002 = vshrl.u32 %v4001, 7
      %v4003 = vsub.s32 0, %v4002
      %v4004 = vrot.slane %v3999, %v4003
      %v4006 = vadd.f32 %v3963, %v4004
      %v4007 = vadd.f32 %v3964, %v4004
      %v4008 = vadd.f32 %v3965, %v4004
      %v4009 = vadd.f32 %v3966, %v4004
      %v4010 = vadd.f32 %v3967, %v4004
      %v4011 = vadd.f32 %v3968, %v4004
      %v4012 = vadd.f32 %v3969, %v4004
      %v4013 = vadd.f32 %v3970, %v4004
      %v4014 = vadd.f32 %v3971, %v4004
      %v4015 = vadd.f32 %v3972, %v4004
      %v4016 = vadd.f32 %v3973, %v4004
      %v4017 = vadd.f32 %v3974, %v4004
      %v4018 = vadd.f32 %v3975, %v4004
      %v4019 = vadd.f32 %v3976, %v4004
      %v4020 = vadd.f32 %v3977, %v4004
      %v4021 = vadd.f32 %v3978, %v4004
      %v4022 = vadd.f32 %v3979, %v4004
      %v4023 = vadd.f32 %v3980, %v4004
      %v4024 = vadd.f32 %v3981, %v4004
      %v4025 = vadd.f32 %v3982, %v4004
      %v4026 = vadd.f32 %v3983, %v4004
      %v4027 = vadd.f32 %v3984, %v4004
      %v4028 = vadd.f32 %v3985, %v4004
      %v4029 = vadd.f32 %v3986, %v4004
      %v4030 = vadd.f32 %v3987, %v4004
      %v4031 = vadd.f32 %v3988, %v4004
      %v4032 = vadd.f32 %v3989, %v4004
      %v4033 = vadd.f32 %v3990, %v4004
      %v4034 = vadd.f32 %v3991, %v4004
      %v4035 = vadd.f32 %v3992, %v4004
      %v4036 = vadd.f32 %v3993, %v4004
      %v4037 = vadd.f32 %v3994, %v4004
      %v4038 = vadd.f32 %v3995, %v4004
      %v4039 = vadd.f32 %v3996, %v4004
      %v4040 = vadd.f32 %v3997, %v4004
      %v4041 = vadd.f32 %v3998, %v4004
      %v4042 = vmax.f32 %v4006, 0.0
      %v4043 = vmax.f32 %v4007, 0.0
      %v4044 = vmax.f32 %v4008, 0.0
      %v4045 = vmax.f32 %v4009, 0.0
      %v4046 = vmax.f32 %v4010, 0.0
      %v4047 = vmax.f32 %v4011, 0.0
      %v4048 = vmax.f32 %v4012, 0.0
      %v4049 = vmax.f32 %v4013, 0.0
      %v4050 = vmax.f32 %v4014, 0.0
      %v4051 = vmax.f32 %v4015, 0.0
      %v4052 = vmax.f32 %v4016, 0.0
      %v4053 = vmax.f32 %v4017, 0.0
      %v4054 = vmax.f32 %v4018, 0.0
      %v4055 = vmax.f32 %v4019, 0.0
      %v4056 = vmax.f32 %v4020, 0.0
      %v4057 = vmax.f32 %v4021, 0.0
      %v4058 = vmax.f32 %v4022, 0.0
      %v4059 = vmax.f32 %v4023, 0.0
      %v4060 = vmax.f32 %v4024, 0.0
      %v4061 = vmax.f32 %v4025, 0.0
      %v4062 = vmax.f32 %v4026, 0.0
      %v4063 = vmax.f32 %v4027, 0.0
      %v4064 = vmax.f32 %v4028, 0.0
      %v4065 = vmax.f32 %v4029, 0.0
      %v4066 = vmax.f32 %v4030, 0.0
      %v4067 = vmax.f32 %v4031, 0.0
      %v4068 = vmax.f32 %v4032, 0.0
      %v4069 = vmax.f32 %v4033, 0.0
      %v4070 = vmax.f32 %v4034, 0.0
      %v4071 = vmax.f32 %v4035, 0.0
      %v4072 = vmax.f32 %v4036, 0.0
      %v4073 = vmax.f32 %v4037, 0.0
      %v4074 = vmax.f32 %v4038, 0.0
      %v4075 = vmax.f32 %v4039, 0.0
      %v4076 = vmax.f32 %v4040, 0.0
      %v4077 = vmax.f32 %v4041, 0.0
      %vm4078 = vcmask 261120
      %4079 = vst.msk [vmem:[#allocation2] sm:$0xff] %vm4078, 0.0
      %4080 = vst.msk [vmem:[#allocation2 + $0x8] sm:$0xff] %vm4078, 0.0
      %4081 = vst.msk [vmem:[#allocation2 + $0x10] sm:$0xff] %vm4078, 0.0
      %4082 = vst.msk [vmem:[#allocation2 + $0x18] sm:$0xff] %vm4078, 0.0
      %4083 = vst.msk [vmem:[#allocation2 + $0x20] sm:$0xff] %vm4078, 0.0
      %4084 = vst.msk [vmem:[#allocation2 + $0x28] sm:$0xff] %vm4078, 0.0
      %4085 = vst.msk [vmem:[#allocation2 + $0x30] sm:$0xff] %vm4078, 0.0
      %4086 = vst.msk [vmem:[#allocation2 + $0x38] sm:$0xff] %vm4078, 0.0
      %4087 = vst.msk [vmem:[#allocation2 + $0x40] sm:$0xff] %vm4078, 0.0
      %4088 = vst.msk [vmem:[#allocation2 + $0x48] sm:$0xff] %vm4078, 0.0
      %4089 = vst.msk [vmem:[#allocation2 + $0x50] sm:$0xff] %vm4078, 0.0
      %4090 = vst.msk [vmem:[#allocation2 + $0x58] sm:$0xff] %vm4078, 0.0
      %4091 = vst.msk [vmem:[#allocation2 + $0x60] sm:$0xff] %vm4078, 0.0
      %4092 = vst.msk [vmem:[#allocation2 + $0x68] sm:$0xff] %vm4078, 0.0
      %4093 = vst.msk [vmem:[#allocation2 + $0x70] sm:$0xff] %vm4078, 0.0
      %4094 = vst.msk [vmem:[#allocation2 + $0x78] sm:$0xff] %vm4078, 0.0
      %4095 = vst.msk [vmem:[#allocation2 + $0x80] sm:$0xff] %vm4078, 0.0
      %4096 = vst.msk [vmem:[#allocation2 + $0x88] sm:$0xff] %vm4078, 0.0
      %4097 = vst.msk [vmem:[#allocation2 + $0x90] sm:$0xff] %vm4078, 0.0
      %4098 = vst.msk [vmem:[#allocation2 + $0x98] sm:$0xff] %vm4078, 0.0
      %4099 = vst.msk [vmem:[#allocation2 + $0xa0] sm:$0xff] %vm4078, 0.0
      %4100 = vst.msk [vmem:[#allocation2 + $0xa8] sm:$0xff] %vm4078, 0.0
      %4101 = vst.msk [vmem:[#allocation2 + $0xb0] sm:$0xff] %vm4078, 0.0
      %4102 = vst.msk [vmem:[#allocation2 + $0xb8] sm:$0xff] %vm4078, 0.0
      %4103 = vst.msk [vmem:[#allocation2 + $0xc0] sm:$0xff] %vm4078, 0.0
      %4104 = vst.msk [vmem:[#allocation2 + $0xc8] sm:$0xff] %vm4078, 0.0
      %4105 = vst.msk [vmem:[#allocation2 + $0xd0] sm:$0xff] %vm4078, 0.0
      %4106 = vst.msk [vmem:[#allocation2 + $0xd8] sm:$0xff] %vm4078, 0.0
      %4107 = vst.msk [vmem:[#allocation2 + $0xe0] sm:$0xff] %vm4078, 0.0
      %4108 = vst.msk [vmem:[#allocation2 + $0xe8] sm:$0xff] %vm4078, 0.0
      %4109 = vst.msk [vmem:[#allocation2 + $0xf0] sm:$0xff] %vm4078, 0.0
      %4110 = vst.msk [vmem:[#allocation2 + $0xf8] sm:$0xff] %vm4078, 0.0
      %4111 = vst.msk [vmem:[#allocation2 + $0x100] sm:$0xff] %vm4078, 0.0
      %vm4112 = vcmask 259072
      %4113 = vst.msk [vmem:[#allocation2 + $0x108] sm:$0x3f] %vm4112, 0.0
      %4114 = vst.msk [vmem:[#allocation2 + $0xf] sm:$0xff] %vm4078, %v4042
      %vm4115 = vcmask 260096
      %4116 = vst.msk [vmem:[#allocation2 + $0x17] sm:$0x7f] %vm4115, %v4043
      %vm4117 = vcmask 261122
      %4118 = vst.msk [vmem:[#allocation2 + $0x1c] sm:$0xfc] %vm4117, %v4044
      %4119 = vst.msk [vmem:[#allocation2 + $0x24] sm:$0xff] %vm4078, %v4045
      %vm4120 = vcmask 253952
      %4121 = vst.msk [vmem:[#allocation2 + $0x2c] sm:$0x1] %vm4120, %v4046
      %vm4122 = vcmask 261124
      %4123 = vst.msk [vmem:[#allocation2 + $0x29] sm:$0xf0] %vm4122, %v4046
      %4124 = vst.msk [vmem:[#allocation2 + $0x31] sm:$0xff] %vm4078, %v4047
      %vm4125 = vcmask 256000
      %4126 = vst.msk [vmem:[#allocation2 + $0x39] sm:$0x7] %vm4125, %v4048
      %vm4127 = vcmask 261126
      %4128 = vst.msk [vmem:[#allocation2 + $0x36] sm:$0xc0] %vm4127, %v4048
      %4129 = vst.msk [vmem:[#allocation2 + $0x3e] sm:$0xff] %vm4078, %v4049
      %vm4130 = vcmask 258048
      %4131 = vst.msk [vmem:[#allocation2 + $0x46] sm:$0x1f] %vm4130, %v4050
      %4132 = vst.msk [vmem:[#allocation2 + $0x4b] sm:$0xff] %vm4078, %v4051
      %4133 = vst.msk [vmem:[#allocation2 + $0x53] sm:$0x7f] %vm4115, %v4052
      %4134 = vst.msk [vmem:[#allocation2 + $0x58] sm:$0xfc] %vm4117, %v4053
      %4135 = vst.msk [vmem:[#allocation2 + $0x60] sm:$0xff] %vm4078, %v4054
      %4136 = vst.msk [vmem:[#allocation2 + $0x68] sm:$0x1] %vm4120, %v4055
      %4137 = vst.msk [vmem:[#allocation2 + $0x65] sm:$0xf0] %vm4122, %v4055
      %4138 = vst.msk [vmem:[#allocation2 + $0x6d] sm:$0xff] %vm4078, %v4056
      %4139 = vst.msk [vmem:[#allocation2 + $0x75] sm:$0x7] %vm4125, %v4057
      %4140 = vst.msk [vmem:[#allocation2 + $0x72] sm:$0xc0] %vm4127, %v4057
      %4141 = vst.msk [vmem:[#allocation2 + $0x7a] sm:$0xff] %vm4078, %v4058
      %4142 = vst.msk [vmem:[#allocation2 + $0x82] sm:$0x1f] %vm4130, %v4059
      %4143 = vst.msk [vmem:[#allocation2 + $0x87] sm:$0xff] %vm4078, %v4060
      %4144 = vst.msk [vmem:[#allocation2 + $0x8f] sm:$0x7f] %vm4115, %v4061
      %4145 = vst.msk [vmem:[#allocation2 + $0x94] sm:$0xfc] %vm4117, %v4062
      %4146 = vst.msk [vmem:[#allocation2 + $0x9c] sm:$0xff] %vm4078, %v4063
      %4147 = vst.msk [vmem:[#allocation2 + $0xa4] sm:$0x1] %vm4120, %v4064
      %4148 = vst.msk [vmem:[#allocation2 + $0xa1] sm:$0xf0] %vm4122, %v4064
      %4149 = vst.msk [vmem:[#allocation2 + $0xa9] sm:$0xff] %vm4078, %v4065
      %4150 = vst.msk [vmem:[#allocation2 + $0xb1] sm:$0x7] %vm4125, %v4066
      %4151 = vst.msk [vmem:[#allocation2 + $0xae] sm:$0xc0] %vm4127, %v4066
      %4152 = vst.msk [vmem:[#allocation2 + $0xb6] sm:$0xff] %vm4078, %v4067
      %4153 = vst.msk [vmem:[#allocation2 + $0xbe] sm:$0x1f] %vm4130, %v4068
      %4154 = vst.msk [vmem:[#allocation2 + $0xc3] sm:$0xff] %vm4078, %v4069
      %4155 = vst.msk [vmem:[#allocation2 + $0xcb] sm:$0x7f] %vm4115, %v4070
      %4156 = vst.msk [vmem:[#allocation2 + $0xd0] sm:$0xfc] %vm4117, %v4071
      %4157 = vst.msk [vmem:[#allocation2 + $0xd8] sm:$0xff] %vm4078, %v4072
      %4158 = vst.msk [vmem:[#allocation2 + $0xe0] sm:$0x1] %vm4120, %v4073
      %4159 = vst.msk [vmem:[#allocation2 + $0xdd] sm:$0xf0] %vm4122, %v4073
      %4160 = vst.msk [vmem:[#allocation2 + $0xe5] sm:$0xff] %vm4078, %v4074
      %4161 = vst.msk [vmem:[#allocation2 + $0xed] sm:$0x7] %vm4125, %v4075
      %4162 = vst.msk [vmem:[#allocation2 + $0xea] sm:$0xc0] %vm4127, %v4075
      %4163 = vst.msk [vmem:[#allocation2 + $0xf2] sm:$0xff] %vm4078, %v4076
      %4164 = vst.msk [vmem:[#allocation2 + $0xfa] sm:$0x1f] %vm4130, %v4077
      %v4165 = vld [vmem:[#allocation2] sm:$0xff]
      %v4166 = vld [vmem:[#allocation2 + $0x8] sm:$0xff]
      %v4167 = vld [vmem:[#allocation2 + $0x10] sm:$0xff]
      %v4168 = vld [vmem:[#allocation2 + $0x18] sm:$0xff]
      %v4169 = vld [vmem:[#allocation2 + $0x20] sm:$0xff]
      %v4170 = vld [vmem:[#allocation2 + $0x28] sm:$0xff]
      %v4171 = vld [vmem:[#allocation2 + $0x30] sm:$0xff]
      %v4172 = vld [vmem:[#allocation2 + $0x38] sm:$0xff]
      %v4173 = vld [vmem:[#allocation2 + $0x40] sm:$0xff]
      %v4174 = vld [vmem:[#allocation2 + $0x48] sm:$0xff]
      %v4175 = vld [vmem:[#allocation2 + $0x50] sm:$0xff]
      %v4176 = vld [vmem:[#allocation2 + $0x58] sm:$0xff]
      %v4177 = vld [vmem:[#allocation2 + $0x60] sm:$0xff]
      %v4178 = vld [vmem:[#allocation2 + $0x68] sm:$0xff]
      %v4179 = vld [vmem:[#allocation2 + $0x70] sm:$0xff]
      %v4180 = vld [vmem:[#allocation2 + $0x78] sm:$0xff]
      %v4181 = vld [vmem:[#allocation2 + $0x80] sm:$0xff]
      %v4182 = vld [vmem:[#allocation2 + $0x88] sm:$0xff]
      %v4183 = vld [vmem:[#allocation2 + $0x90] sm:$0xff]
      %v4184 = vld [vmem:[#allocation2 + $0x98] sm:$0xff]
      %v4185 = vld [vmem:[#allocation2 + $0xa0] sm:$0xff]
      %v4186 = vld [vmem:[#allocation2 + $0xa8] sm:$0xff]
      %v4187 = vld [vmem:[#allocation2 + $0xb0] sm:$0xff]
      %v4188 = vld [vmem:[#allocation2 + $0xb8] sm:$0xff]
      %v4189 = vld [vmem:[#allocation2 + $0xc0] sm:$0xff]
      %v4190 = vld [vmem:[#allocation2 + $0xc8] sm:$0xff]
      %v4191 = vld [vmem:[#allocation2 + $0xd0] sm:$0xff]
      %v4192 = vld [vmem:[#allocation2 + $0xd8] sm:$0xff]
      %v4193 = vld [vmem:[#allocation2 + $0xe0] sm:$0xff]
      %v4194 = vld [vmem:[#allocation2 + $0xe8] sm:$0xff]
      %v4195 = vld [vmem:[#allocation2 + $0xf0] sm:$0xff]
      %v4196 = vld [vmem:[#allocation2 + $0xf8] sm:$0x3f]
      %v4197 = vpack.c.bf16 %v4166, %v4165
      %v4198 = vpack.c.bf16 %v4168, %v4167
      %v4199 = vpack.c.bf16 %v4170, %v4169
      %v4200 = vpack.c.bf16 %v4172, %v4171
      %v4201 = vpack.c.bf16 %v4174, %v4173
      %v4202 = vpack.c.bf16 %v4176, %v4175
      %v4203 = vpack.c.bf16 %v4178, %v4177
      %v4204 = vpack.c.bf16 %v4180, %v4179
      %v4205 = vpack.c.bf16 %v4182, %v4181
      %v4206 = vpack.c.bf16 %v4184, %v4183
      %v4207 = vpack.c.bf16 %v4186, %v4185
      %v4208 = vpack.c.bf16 %v4188, %v4187
      %v4209 = vpack.c.bf16 %v4190, %v4189
      %v4210 = vpack.c.bf16 %v4192, %v4191
      %v4211 = vpack.c.bf16 %v4194, %v4193
      %v4212 = vpack.c.bf16 %v4196, %v4195
      %v4213 = vld [vmem:[%s3] sm:$0xf]
      %v4214 = vld [vmem:[%s3 + $0x4] sm:$0xf]
      %v4215 = vld [vmem:[%s3 + $0x8] sm:$0xf]
      %v4216 = vld [vmem:[%s3 + $0xc] sm:$0xf]
      %v4217 = vld [vmem:[#allocation2 + $0x1] sm:$0xff]
      %v4218 = vld [vmem:[#allocation2 + $0x9] sm:$0xff]
      %v4219 = vld [vmem:[#allocation2 + $0x11] sm:$0xff]
      %v4220 = vld [vmem:[#allocation2 + $0x19] sm:$0xff]
      %v4221 = vld [vmem:[#allocation2 + $0x21] sm:$0xff]
      %v4222 = vld [vmem:[#allocation2 + $0x29] sm:$0xff]
      %v4223 = vld [vmem:[#allocation2 + $0x31] sm:$0xff]
      %v4224 = vld [vmem:[#allocation2 + $0x39] sm:$0xff]
      %v4225 = vld [vmem:[#allocation2 + $0x41] sm:$0xff]
      %v4226 = vld [vmem:[#allocation2 + $0x49] sm:$0xff]
      %v4227 = vld [vmem:[#allocation2 + $0x51] sm:$0xff]
      %v4228 = vld [vmem:[#allocation2 + $0x59] sm:$0xff]
      %v4229 = vld [vmem:[#allocation2 + $0x61] sm:$0xff]
      %v4230 = vld [vmem:[#allocation2 + $0x69] sm:$0xff]
      %v4231 = vld [vmem:[#allocation2 + $0x71] sm:$0xff]
      %v4232 = vld [vmem:[#allocation2 + $0x79] sm:$0xff]
      %v4233 = vld [vmem:[#allocation2 + $0x81] sm:$0xff]
      %v4234 = vld [vmem:[#allocation2 + $0x89] sm:$0xff]
      %v4235 = vld [vmem:[#allocation2 + $0x91] sm:$0xff]
      %v4236 = vld [vmem:[#allocation2 + $0x99] sm:$0xff]
      %v4237 = vld [vmem:[#allocation2 + $0xa1] sm:$0xff]
      %v4238 = vld [vmem:[#allocation2 + $0xa9] sm:$0xff]
      %v4239 = vld [vmem:[#allocation2 + $0xb1] sm:$0xff]
      %v4240 = vld [vmem:[#allocation2 + $0xb9] sm:$0xff]
      %v4241 = vld [vmem:[#allocation2 + $0xc1] sm:$0xff]
      %v4242 = vld [vmem:[#allocation2 + $0xc9] sm:$0xff]
      %v4243 = vld [vmem:[#allocation2 + $0xd1] sm:$0xff]
      %v4244 = vld [vmem:[#allocation2 + $0xd9] sm:$0xff]
      %v4245 = vld [vmem:[#allocation2 + $0xe1] sm:$0xff]
      %v4246 = vld [vmem:[#allocation2 + $0xe9] sm:$0xff]
      %v4247 = vld [vmem:[#allocation2 + $0xf1] sm:$0xff]
      %v4248 = vld [vmem:[#allocation2 + $0xf9] sm:$0x3f]
      %v4249 = vpack.c.bf16 %v4218, %v4217
      %v4250 = vpack.c.bf16 %v4220, %v4219
      %v4251 = vpack.c.bf16 %v4222, %v4221
      %v4252 = vpack.c.bf16 %v4224, %v4223
      %v4253 = vpack.c.bf16 %v4226, %v4225
      %v4254 = vpack.c.bf16 %v4228, %v4227
      %v4255 = vpack.c.bf16 %v4230, %v4229
      %v4256 = vpack.c.bf16 %v4232, %v4231
      %v4257 = vpack.c.bf16 %v4234, %v4233
      %v4258 = vpack.c.bf16 %v4236, %v4235
      %v4259 = vpack.c.bf16 %v4238, %v4237
      %v4260 = vpack.c.bf16 %v4240, %v4239
      %v4261 = vpack.c.bf16 %v4242, %v4241
      %v4262 = vpack.c.bf16 %v4244, %v4243
      %v4263 = vpack.c.bf16 %v4246, %v4245
      %v4264 = vpack.c.bf16 %v4248, %v4247
      %s4265 = scalar_lea.vmem %s3, 16
      %v4266 = vld [vmem:[%s4265] sm:$0xf]
      %v4267 = vld [vmem:[%s4265 + $0x4] sm:$0xf]
      %v4268 = vld [vmem:[%s4265 + $0x8] sm:$0xf]
      %v4269 = vld [vmem:[%s4265 + $0xc] sm:$0xf]
      %v4274 = vunpack.c.l.b16 %v4266
      %v4275 = vunpack.c.l.b16 %v4267
      %v4276 = vunpack.c.l.b16 %v4268
      %v4277 = vunpack.c.l.b16 %v4269
      %v4278 = vpack.c.b16 %v4275, %v4274
      %v4279 = vpack.c.b16 %v4277, %v4276
      %v4283 = vsel %vm4078, %v4249, 0
      %v4286 = vsel %vm4078, %v4250, 0
      %v4289 = vsel %vm4078, %v4251, 0
      %v4292 = vsel %vm4078, %v4252, 0
      %v4295 = vsel %vm4078, %v4253, 0
      %v4298 = vsel %vm4078, %v4254, 0
      %v4301 = vsel %vm4078, %v4255, 0
      %v4304 = vsel %vm4078, %v4256, 0
      %v4307 = vsel %vm4078, %v4257, 0
      %v4310 = vsel %vm4078, %v4258, 0
      %v4313 = vsel %vm4078, %v4259, 0
      %v4316 = vsel %vm4078, %v4260, 0
      %v4319 = vsel %vm4078, %v4261, 0
      %v4322 = vsel %vm4078, %v4262, 0
      %v4325 = vsel %vm4078, %v4263, 0
      %v4328 = vsel %vm4078, %v4264, 0
      %4330 = vmatprep.subr.bf16.mxu0 0
      %4331 = vmatpush1.bf16.msra.mxu0 0
      %4332 = vmatprep.subr.bf16.mxu0 0
      %4333 = vmatpush1.bf16.msra.mxu0 0
      %4334 = vmatprep.subr.bf16.mxu0 0
      %4335 = vmatpush1.bf16.msra.mxu0 0
      %4336 = vmatprep.subr.bf16.mxu0 0
      %4337 = vmatpush1.bf16.msra.mxu0 0
      %4338 = vmatprep.subr.bf16.mxu0 0
      %4339 = vmatpush1.bf16.msra.mxu0 0
      %4340 = vmatprep.subr.bf16.mxu0 0
      %4341 = vmatpush1.bf16.msra.mxu0 0
      %4342 = vmatprep.subr.bf16.mxu0 0
      %4343 = vmatpush1.bf16.msra.mxu0 %v4279
      %4344 = vmatprep.subr.bf16.mxu0 0
      %4345 = vmatpush1.bf16.msra.mxu0 %v4278
      %4346 = vmatprep.subr.bf16.mxu0 0
      %4347 = vmatpush2.bf16.msra.mxu0 0
      %4348 = vmatprep.subr.bf16.mxu0 0
      %4349 = vmatpush2.bf16.msra.mxu0 0
      %4350 = vmatprep.subr.bf16.mxu0 0
      %4351 = vmatpush2.bf16.msra.mxu0 0
      %4352 = vmatprep.subr.bf16.mxu0 0
      %4353 = vmatpush2.bf16.msra.mxu0 0
      %4354 = vmatprep.subr.bf16.mxu0 0
      %4355 = vmatpush2.bf16.msra.mxu0 0
      %4356 = vmatprep.subr.bf16.mxu0 0
      %4357 = vmatpush2.bf16.msra.mxu0 0
      %4358 = vmatprep.subr.bf16.mxu0 0
      %4359 = vmatpush2.bf16.msra.mxu0 0
      %4360 = vmatprep.subr.bf16.mxu0 0
      %4361 = vmatpush2.bf16.msra.mxu0 0
      %4362 = vmatprep.mubr.bf16.mxu0 0
      %4363 = vmatmul.mubr.bf16.gmra.mxu0 %v4283
      %v4364 = vpop.f32.mrf.mxu0
      %v4365 = vadd.f32 0.0, %v4364
      %v4366 = vpop.f32.mrf.mxu0
      %v4367 = vpop.f32.mrf.mxu0
      %v4368 = vadd.f32 0.0, %v4367
      %v4369 = vpop.f32.mrf.mxu0
      %4370 = vmatprep.mubr.bf16.mxu0 0
      %4371 = vmatmul.mubr.bf16.gmra.mxu0 %v4286
      %v4372 = vpop.f32.mrf.mxu0
      %v4373 = vadd.f32 0.0, %v4372
      %v4374 = vpop.f32.mrf.mxu0
      %v4375 = vpop.f32.mrf.mxu0
      %v4376 = vadd.f32 0.0, %v4375
      %v4377 = vpop.f32.mrf.mxu0
      %4378 = vmatprep.mubr.bf16.mxu0 0
      %4379 = vmatmul.mubr.bf16.gmra.mxu0 %v4289
      %v4380 = vpop.f32.mrf.mxu0
      %v4381 = vadd.f32 0.0, %v4380
      %v4382 = vpop.f32.mrf.mxu0
      %v4383 = vpop.f32.mrf.mxu0
      %v4384 = vadd.f32 0.0, %v4383
      %v4385 = vpop.f32.mrf.mxu0
      %4386 = vmatprep.mubr.bf16.mxu0 0
      %4387 = vmatmul.mubr.bf16.gmra.mxu0 %v4292
      %v4388 = vpop.f32.mrf.mxu0
      %v4389 = vadd.f32 0.0, %v4388
      %v4390 = vpop.f32.mrf.mxu0
      %v4391 = vpop.f32.mrf.mxu0
      %v4392 = vadd.f32 0.0, %v4391
      %v4393 = vpop.f32.mrf.mxu0
      %4394 = vmatprep.mubr.bf16.mxu0 0
      %4395 = vmatmul.mubr.bf16.gmra.mxu0 %v4295
      %v4396 = vpop.f32.mrf.mxu0
      %v4397 = vadd.f32 0.0, %v4396
      %v4398 = vpop.f32.mrf.mxu0
      %v4399 = vpop.f32.mrf.mxu0
      %v4400 = vadd.f32 0.0, %v4399
      %v4401 = vpop.f32.mrf.mxu0
      %4402 = vmatprep.mubr.bf16.mxu0 0
      %4403 = vmatmul.mubr.bf16.gmra.mxu0 %v4298
      %v4404 = vpop.f32.mrf.mxu0
      %v4405 = vadd.f32 0.0, %v4404
      %v4406 = vpop.f32.mrf.mxu0
      %v4407 = vpop.f32.mrf.mxu0
      %v4408 = vadd.f32 0.0, %v4407
      %v4409 = vpop.f32.mrf.mxu0
      %4410 = vmatprep.mubr.bf16.mxu0 0
      %4411 = vmatmul.mubr.bf16.gmra.mxu0 %v4301
      %v4412 = vpop.f32.mrf.mxu0
      %v4413 = vadd.f32 0.0, %v4412
      %v4414 = vpop.f32.mrf.mxu0
      %v4415 = vpop.f32.mrf.mxu0
      %v4416 = vadd.f32 0.0, %v4415
      %v4417 = vpop.f32.mrf.mxu0
      %4418 = vmatprep.mubr.bf16.mxu0 0
      %4419 = vmatmul.mubr.bf16.gmra.mxu0 %v4304
      %v4420 = vpop.f32.mrf.mxu0
      %v4421 = vadd.f32 0.0, %v4420
      %v4422 = vpop.f32.mrf.mxu0
      %v4423 = vpop.f32.mrf.mxu0
      %v4424 = vadd.f32 0.0, %v4423
      %v4425 = vpop.f32.mrf.mxu0
      %4426 = vmatprep.mubr.bf16.mxu0 0
      %4427 = vmatmul.mubr.bf16.gmra.mxu0 %v4307
      %v4428 = vpop.f32.mrf.mxu0
      %v4429 = vadd.f32 0.0, %v4428
      %v4430 = vpop.f32.mrf.mxu0
      %v4431 = vpop.f32.mrf.mxu0
      %v4432 = vadd.f32 0.0, %v4431
      %v4433 = vpop.f32.mrf.mxu0
      %4434 = vmatprep.mubr.bf16.mxu0 0
      %4435 = vmatmul.mubr.bf16.gmra.mxu0 %v4310
      %v4436 = vpop.f32.mrf.mxu0
      %v4437 = vadd.f32 0.0, %v4436
      %v4438 = vpop.f32.mrf.mxu0
      %v4439 = vpop.f32.mrf.mxu0
      %v4440 = vadd.f32 0.0, %v4439
      %v4441 = vpop.f32.mrf.mxu0
      %4442 = vmatprep.mubr.bf16.mxu0 0
      %4443 = vmatmul.mubr.bf16.gmra.mxu0 %v4313
      %v4444 = vpop.f32.mrf.mxu0
      %v4445 = vadd.f32 0.0, %v4444
      %v4446 = vpop.f32.mrf.mxu0
      %v4447 = vpop.f32.mrf.mxu0
      %v4448 = vadd.f32 0.0, %v4447
      %v4449 = vpop.f32.mrf.mxu0
      %4450 = vmatprep.mubr.bf16.mxu0 0
      %4451 = vmatmul.mubr.bf16.gmra.mxu0 %v4316
      %v4452 = vpop.f32.mrf.mxu0
      %v4453 = vadd.f32 0.0, %v4452
      %v4454 = vpop.f32.mrf.mxu0
      %v4455 = vpop.f32.mrf.mxu0
      %v4456 = vadd.f32 0.0, %v4455
      %v4457 = vpop.f32.mrf.mxu0
      %4458 = vmatprep.mubr.bf16.mxu0 0
      %4459 = vmatmul.mubr.bf16.gmra.mxu0 %v4319
      %v4460 = vpop.f32.mrf.mxu0
      %v4461 = vadd.f32 0.0, %v4460
      %v4462 = vpop.f32.mrf.mxu0
      %v4463 = vpop.f32.mrf.mxu0
      %v4464 = vadd.f32 0.0, %v4463
      %v4465 = vpop.f32.mrf.mxu0
      %4466 = vmatprep.mubr.bf16.mxu0 0
      %4467 = vmatmul.mubr.bf16.gmra.mxu0 %v4322
      %v4468 = vpop.f32.mrf.mxu0
      %v4469 = vadd.f32 0.0, %v4468
      %v4470 = vpop.f32.mrf.mxu0
      %v4471 = vpop.f32.mrf.mxu0
      %v4472 = vadd.f32 0.0, %v4471
      %v4473 = vpop.f32.mrf.mxu0
      %4474 = vmatprep.mubr.bf16.mxu0 0
      %4475 = vmatmul.mubr.bf16.gmra.mxu0 %v4325
      %v4476 = vpop.f32.mrf.mxu0
      %v4477 = vadd.f32 0.0, %v4476
      %v4478 = vpop.f32.mrf.mxu0
      %v4479 = vpop.f32.mrf.mxu0
      %v4480 = vadd.f32 0.0, %v4479
      %v4481 = vpop.f32.mrf.mxu0
      %4482 = vmatprep.mubr.bf16.mxu0 0
      %4483 = vmatmul.mubr.bf16.gmra.mxu0 %v4328
      %v4484 = vpop.f32.mrf.mxu0
      %v4485 = vadd.f32 0.0, %v4484
      %v4486 = vpop.f32.mrf.mxu0
      %v4487 = vpop.f32.mrf.mxu0
      %v4488 = vadd.f32 0.0, %v4487
      %v4489 = vpop.f32.mrf.mxu0
      %4490 = vdwg.mxu0
      %v4495 = vunpack.c.l.b16 %v4213
      %v4496 = vunpack.c.l.b16 %v4214
      %v4497 = vunpack.c.l.b16 %v4215
      %v4498 = vunpack.c.l.b16 %v4216
      %v4499 = vpack.c.b16 %v4496, %v4495
      %v4500 = vpack.c.b16 %v4498, %v4497
      %v4504 = vsel %vm4078, %v4197, 0
      %v4507 = vsel %vm4078, %v4198, 0
      %v4510 = vsel %vm4078, %v4199, 0
      %v4513 = vsel %vm4078, %v4200, 0
      %v4516 = vsel %vm4078, %v4201, 0
      %v4519 = vsel %vm4078, %v4202, 0
      %v4522 = vsel %vm4078, %v4203, 0
      %v4525 = vsel %vm4078, %v4204, 0
      %v4528 = vsel %vm4078, %v4205, 0
      %v4531 = vsel %vm4078, %v4206, 0
      %v4534 = vsel %vm4078, %v4207, 0
      %v4537 = vsel %vm4078, %v4208, 0
      %v4540 = vsel %vm4078, %v4209, 0
      %v4543 = vsel %vm4078, %v4210, 0
      %v4546 = vsel %vm4078, %v4211, 0
      %v4549 = vsel %vm4078, %v4212, 0
      %4551 = vmatprep.subr.bf16.mxu0 0
      %4552 = vmatpush1.bf16.msra.mxu0 0
      %4553 = vmatprep.subr.bf16.mxu0 0
      %4554 = vmatpush1.bf16.msra.mxu0 0
      %4555 = vmatprep.subr.bf16.mxu0 0
      %4556 = vmatpush1.bf16.msra.mxu0 0
      %4557 = vmatprep.subr.bf16.mxu0 0
      %4558 = vmatpush1.bf16.msra.mxu0 0
      %4559 = vmatprep.subr.bf16.mxu0 0
      %4560 = vmatpush1.bf16.msra.mxu0 0
      %4561 = vmatprep.subr.bf16.mxu0 0
      %4562 = vmatpush1.bf16.msra.mxu0 0
      %4563 = vmatprep.subr.bf16.mxu0 0
      %4564 = vmatpush1.bf16.msra.mxu0 %v4500
      %4565 = vmatprep.subr.bf16.mxu0 0
      %4566 = vmatpush1.bf16.msra.mxu0 %v4499
      %4567 = vmatprep.subr.bf16.mxu0 0
      %4568 = vmatpush2.bf16.msra.mxu0 0
      %4569 = vmatprep.subr.bf16.mxu0 0
      %4570 = vmatpush2.bf16.msra.mxu0 0
      %4571 = vmatprep.subr.bf16.mxu0 0
      %4572 = vmatpush2.bf16.msra.mxu0 0
      %4573 = vmatprep.subr.bf16.mxu0 0
      %4574 = vmatpush2.bf16.msra.mxu0 0
      %4575 = vmatprep.subr.bf16.mxu0 0
      %4576 = vmatpush2.bf16.msra.mxu0 0
      %4577 = vmatprep.subr.bf16.mxu0 0
      %4578 = vmatpush2.bf16.msra.mxu0 0
      %4579 = vmatprep.subr.bf16.mxu0 0
      %4580 = vmatpush2.bf16.msra.mxu0 0
      %4581 = vmatprep.subr.bf16.mxu0 0
      %4582 = vmatpush2.bf16.msra.mxu0 0
      %4583 = vmatprep.mubr.bf16.mxu0 0
      %4584 = vmatmul.mubr.bf16.gmra.mxu0 %v4504
      %v4585 = vpop.f32.mrf.mxu0
      %v4586 = vadd.f32 %v4365, %v4585
      %v4587 = vpop.f32.mrf.mxu0
      %v4588 = vpop.f32.mrf.mxu0
      %v4589 = vadd.f32 %v4368, %v4588
      %v4590 = vpop.f32.mrf.mxu0
      %4591 = vmatprep.mubr.bf16.mxu0 0
      %4592 = vmatmul.mubr.bf16.gmra.mxu0 %v4507
      %v4593 = vpop.f32.mrf.mxu0
      %v4594 = vadd.f32 %v4373, %v4593
      %v4595 = vpop.f32.mrf.mxu0
      %v4596 = vpop.f32.mrf.mxu0
      %v4597 = vadd.f32 %v4376, %v4596
      %v4598 = vpop.f32.mrf.mxu0
      %4599 = vmatprep.mubr.bf16.mxu0 0
      %4600 = vmatmul.mubr.bf16.gmra.mxu0 %v4510
      %v4601 = vpop.f32.mrf.mxu0
      %v4602 = vadd.f32 %v4381, %v4601
      %v4603 = vpop.f32.mrf.mxu0
      %v4604 = vpop.f32.mrf.mxu0
      %v4605 = vadd.f32 %v4384, %v4604
      %v4606 = vpop.f32.mrf.mxu0
      %4607 = vmatprep.mubr.bf16.mxu0 0
      %4608 = vmatmul.mubr.bf16.gmra.mxu0 %v4513
      %v4609 = vpop.f32.mrf.mxu0
      %v4610 = vadd.f32 %v4389, %v4609
      %v4611 = vpop.f32.mrf.mxu0
      %v4612 = vpop.f32.mrf.mxu0
      %v4613 = vadd.f32 %v4392, %v4612
      %v4614 = vpop.f32.mrf.mxu0
      %4615 = vmatprep.mubr.bf16.mxu0 0
      %4616 = vmatmul.mubr.bf16.gmra.mxu0 %v4516
      %v4617 = vpop.f32.mrf.mxu0
      %v4618 = vadd.f32 %v4397, %v4617
      %v4619 = vpop.f32.mrf.mxu0
      %v4620 = vpop.f32.mrf.mxu0
      %v4621 = vadd.f32 %v4400, %v4620
      %v4622 = vpop.f32.mrf.mxu0
      %4623 = vmatprep.mubr.bf16.mxu0 0
      %4624 = vmatmul.mubr.bf16.gmra.mxu0 %v4519
      %v4625 = vpop.f32.mrf.mxu0
      %v4626 = vadd.f32 %v4405, %v4625
      %v4627 = vpop.f32.mrf.mxu0
      %v4628 = vpop.f32.mrf.mxu0
      %v4629 = vadd.f32 %v4408, %v4628
      %v4630 = vpop.f32.mrf.mxu0
      %4631 = vmatprep.mubr.bf16.mxu0 0
      %4632 = vmatmul.mubr.bf16.gmra.mxu0 %v4522
      %v4633 = vpop.f32.mrf.mxu0
      %v4634 = vadd.f32 %v4413, %v4633
      %v4635 = vpop.f32.mrf.mxu0
      %v4636 = vpop.f32.mrf.mxu0
      %v4637 = vadd.f32 %v4416, %v4636
      %v4638 = vpop.f32.mrf.mxu0
      %4639 = vmatprep.mubr.bf16.mxu0 0
      %4640 = vmatmul.mubr.bf16.gmra.mxu0 %v4525
      %v4641 = vpop.f32.mrf.mxu0
      %v4642 = vadd.f32 %v4421, %v4641
      %v4643 = vpop.f32.mrf.mxu0
      %v4644 = vpop.f32.mrf.mxu0
      %v4645 = vadd.f32 %v4424, %v4644
      %v4646 = vpop.f32.mrf.mxu0
      %4647 = vmatprep.mubr.bf16.mxu0 0
      %4648 = vmatmul.mubr.bf16.gmra.mxu0 %v4528
      %v4649 = vpop.f32.mrf.mxu0
      %v4650 = vadd.f32 %v4429, %v4649
      %v4651 = vpop.f32.mrf.mxu0
      %v4652 = vpop.f32.mrf.mxu0
      %v4653 = vadd.f32 %v4432, %v4652
      %v4654 = vpop.f32.mrf.mxu0
      %4655 = vmatprep.mubr.bf16.mxu0 0
      %4656 = vmatmul.mubr.bf16.gmra.mxu0 %v4531
      %v4657 = vpop.f32.mrf.mxu0
      %v4658 = vadd.f32 %v4437, %v4657
      %v4659 = vpop.f32.mrf.mxu0
      %v4660 = vpop.f32.mrf.mxu0
      %v4661 = vadd.f32 %v4440, %v4660
      %v4662 = vpop.f32.mrf.mxu0
      %4663 = vmatprep.mubr.bf16.mxu0 0
      %4664 = vmatmul.mubr.bf16.gmra.mxu0 %v4534
      %v4665 = vpop.f32.mrf.mxu0
      %v4666 = vadd.f32 %v4445, %v4665
      %v4667 = vpop.f32.mrf.mxu0
      %v4668 = vpop.f32.mrf.mxu0
      %v4669 = vadd.f32 %v4448, %v4668
      %v4670 = vpop.f32.mrf.mxu0
      %4671 = vmatprep.mubr.bf16.mxu0 0
      %4672 = vmatmul.mubr.bf16.gmra.mxu0 %v4537
      %v4673 = vpop.f32.mrf.mxu0
      %v4674 = vadd.f32 %v4453, %v4673
      %v4675 = vpop.f32.mrf.mxu0
      %v4676 = vpop.f32.mrf.mxu0
      %v4677 = vadd.f32 %v4456, %v4676
      %v4678 = vpop.f32.mrf.mxu0
      %4679 = vmatprep.mubr.bf16.mxu0 0
      %4680 = vmatmul.mubr.bf16.gmra.mxu0 %v4540
      %v4681 = vpop.f32.mrf.mxu0
      %v4682 = vadd.f32 %v4461, %v4681
      %v4683 = vpop.f32.mrf.mxu0
      %v4684 = vpop.f32.mrf.mxu0
      %v4685 = vadd.f32 %v4464, %v4684
      %v4686 = vpop.f32.mrf.mxu0
      %4687 = vmatprep.mubr.bf16.mxu0 0
      %4688 = vmatmul.mubr.bf16.gmra.mxu0 %v4543
      %v4689 = vpop.f32.mrf.mxu0
      %v4690 = vadd.f32 %v4469, %v4689
      %v4691 = vpop.f32.mrf.mxu0
      %v4692 = vpop.f32.mrf.mxu0
      %v4693 = vadd.f32 %v4472, %v4692
      %v4694 = vpop.f32.mrf.mxu0
      %4695 = vmatprep.mubr.bf16.mxu0 0
      %4696 = vmatmul.mubr.bf16.gmra.mxu0 %v4546
      %v4697 = vpop.f32.mrf.mxu0
      %v4698 = vadd.f32 %v4477, %v4697
      %v4699 = vpop.f32.mrf.mxu0
      %v4700 = vpop.f32.mrf.mxu0
      %v4701 = vadd.f32 %v4480, %v4700
      %v4702 = vpop.f32.mrf.mxu0
      %4703 = vmatprep.mubr.bf16.mxu0 0
      %4704 = vmatmul.mubr.bf16.gmra.mxu0 %v4549
      %v4705 = vpop.f32.mrf.mxu0
      %v4706 = vadd.f32 %v4485, %v4705
      %v4707 = vpop.f32.mrf.mxu0
      %v4708 = vpop.f32.mrf.mxu0
      %v4709 = vadd.f32 %v4488, %v4708
      %v4710 = vpop.f32.mrf.mxu0
      %4711 = vdwg.mxu0
      %v4712 = vld [vmem:[#allocation2 + $0xf] sm:$0xff]
      %v4713 = vld [vmem:[#allocation2 + $0x17] sm:$0xff]
      %v4714 = vld [vmem:[#allocation2 + $0x1f] sm:$0xff]
      %v4715 = vld [vmem:[#allocation2 + $0x27] sm:$0xff]
      %v4716 = vld [vmem:[#allocation2 + $0x2f] sm:$0xff]
      %v4717 = vld [vmem:[#allocation2 + $0x37] sm:$0xff]
      %v4718 = vld [vmem:[#allocation2 + $0x3f] sm:$0xff]
      %v4719 = vld [vmem:[#allocation2 + $0x47] sm:$0xff]
      %v4720 = vld [vmem:[#allocation2 + $0x4f] sm:$0xff]
      %v4721 = vld [vmem:[#allocation2 + $0x57] sm:$0xff]
      %v4722 = vld [vmem:[#allocation2 + $0x5f] sm:$0xff]
      %v4723 = vld [vmem:[#allocation2 + $0x67] sm:$0xff]
      %v4724 = vld [vmem:[#allocation2 + $0x6f] sm:$0xff]
      %v4725 = vld [vmem:[#allocation2 + $0x77] sm:$0xff]
      %v4726 = vld [vmem:[#allocation2 + $0x7f] sm:$0xff]
      %v4727 = vld [vmem:[#allocation2 + $0x87] sm:$0xff]
      %v4728 = vld [vmem:[#allocation2 + $0x8f] sm:$0xff]
      %v4729 = vld [vmem:[#allocation2 + $0x97] sm:$0xff]
      %v4730 = vld [vmem:[#allocation2 + $0x9f] sm:$0xff]
      %v4731 = vld [vmem:[#allocation2 + $0xa7] sm:$0xff]
      %v4732 = vld [vmem:[#allocation2 + $0xaf] sm:$0xff]
      %v4733 = vld [vmem:[#allocation2 + $0xb7] sm:$0xff]
      %v4734 = vld [vmem:[#allocation2 + $0xbf] sm:$0xff]
      %v4735 = vld [vmem:[#allocation2 + $0xc7] sm:$0xff]
      %v4736 = vld [vmem:[#allocation2 + $0xcf] sm:$0xff]
      %v4737 = vld [vmem:[#allocation2 + $0xd7] sm:$0xff]
      %v4738 = vld [vmem:[#allocation2 + $0xdf] sm:$0xff]
      %v4739 = vld [vmem:[#allocation2 + $0xe7] sm:$0xff]
      %v4740 = vld [vmem:[#allocation2 + $0xef] sm:$0xff]
      %v4741 = vld [vmem:[#allocation2 + $0xf7] sm:$0xff]
      %v4742 = vld [vmem:[#allocation2 + $0xff] sm:$0xff]
      %v4743 = vld [vmem:[#allocation2 + $0x107] sm:$0x3f]
      %v4744 = vpack.c.bf16 %v4713, %v4712
      %v4745 = vpack.c.bf16 %v4715, %v4714
      %v4746 = vpack.c.bf16 %v4717, %v4716
      %v4747 = vpack.c.bf16 %v4719, %v4718
      %v4748 = vpack.c.bf16 %v4721, %v4720
      %v4749 = vpack.c.bf16 %v4723, %v4722
      %v4750 = vpack.c.bf16 %v4725, %v4724
      %v4751 = vpack.c.bf16 %v4727, %v4726
      %v4752 = vpack.c.bf16 %v4729, %v4728
      %v4753 = vpack.c.bf16 %v4731, %v4730
      %v4754 = vpack.c.bf16 %v4733, %v4732
      %v4755 = vpack.c.bf16 %v4735, %v4734
      %v4756 = vpack.c.bf16 %v4737, %v4736
      %v4757 = vpack.c.bf16 %v4739, %v4738
      %v4758 = vpack.c.bf16 %v4741, %v4740
      %v4759 = vpack.c.bf16 %v4743, %v4742
      %s4760 = scalar_lea.vmem %s3, 32
      %v4761 = vld [vmem:[%s4760] sm:$0xf]
      %v4762 = vld [vmem:[%s4760 + $0x4] sm:$0xf]
      %v4763 = vld [vmem:[%s4760 + $0x8] sm:$0xf]
      %v4764 = vld [vmem:[%s4760 + $0xc] sm:$0xf]
      %v4769 = vunpack.c.l.b16 %v4761
      %v4770 = vunpack.c.l.b16 %v4762
      %v4771 = vunpack.c.l.b16 %v4763
      %v4772 = vunpack.c.l.b16 %v4764
      %v4773 = vpack.c.b16 %v4770, %v4769
      %v4774 = vpack.c.b16 %v4772, %v4771
      %v4778 = vsel %vm4078, %v4744, 0
      %v4781 = vsel %vm4078, %v4745, 0
      %v4784 = vsel %vm4078, %v4746, 0
      %v4787 = vsel %vm4078, %v4747, 0
      %v4790 = vsel %vm4078, %v4748, 0
      %v4793 = vsel %vm4078, %v4749, 0
      %v4796 = vsel %vm4078, %v4750, 0
      %v4799 = vsel %vm4078, %v4751, 0
      %v4802 = vsel %vm4078, %v4752, 0
      %v4805 = vsel %vm4078, %v4753, 0
      %v4808 = vsel %vm4078, %v4754, 0
      %v4811 = vsel %vm4078, %v4755, 0
      %v4814 = vsel %vm4078, %v4756, 0
      %v4817 = vsel %vm4078, %v4757, 0
      %v4820 = vsel %vm4078, %v4758, 0
      %v4823 = vsel %vm4078, %v4759, 0
      %4825 = vmatprep.subr.bf16.mxu0 0
      %4826 = vmatpush1.bf16.msra.mxu0 0
      %4827 = vmatprep.subr.bf16.mxu0 0
      %4828 = vmatpush1.bf16.msra.mxu0 0
      %4829 = vmatprep.subr.bf16.mxu0 0
      %4830 = vmatpush1.bf16.msra.mxu0 0
      %4831 = vmatprep.subr.bf16.mxu0 0
      %4832 = vmatpush1.bf16.msra.mxu0 0
      %4833 = vmatprep.subr.bf16.mxu0 0
      %4834 = vmatpush1.bf16.msra.mxu0 0
      %4835 = vmatprep.subr.bf16.mxu0 0
      %4836 = vmatpush1.bf16.msra.mxu0 0
      %4837 = vmatprep.subr.bf16.mxu0 0
      %4838 = vmatpush1.bf16.msra.mxu0 %v4774
      %4839 = vmatprep.subr.bf16.mxu0 0
      %4840 = vmatpush1.bf16.msra.mxu0 %v4773
      %4841 = vmatprep.subr.bf16.mxu0 0
      %4842 = vmatpush2.bf16.msra.mxu0 0
      %4843 = vmatprep.subr.bf16.mxu0 0
      %4844 = vmatpush2.bf16.msra.mxu0 0
      %4845 = vmatprep.subr.bf16.mxu0 0
      %4846 = vmatpush2.bf16.msra.mxu0 0
      %4847 = vmatprep.subr.bf16.mxu0 0
      %4848 = vmatpush2.bf16.msra.mxu0 0
      %4849 = vmatprep.subr.bf16.mxu0 0
      %4850 = vmatpush2.bf16.msra.mxu0 0
      %4851 = vmatprep.subr.bf16.mxu0 0
      %4852 = vmatpush2.bf16.msra.mxu0 0
      %4853 = vmatprep.subr.bf16.mxu0 0
      %4854 = vmatpush2.bf16.msra.mxu0 0
      %4855 = vmatprep.subr.bf16.mxu0 0
      %4856 = vmatpush2.bf16.msra.mxu0 0
      %4857 = vmatprep.mubr.bf16.mxu0 0
      %4858 = vmatmul.mubr.bf16.gmra.mxu0 %v4778
      %v4859 = vpop.f32.mrf.mxu0
      %v4860 = vadd.f32 0.0, %v4859
      %v4861 = vpop.f32.mrf.mxu0
      %v4862 = vpop.f32.mrf.mxu0
      %v4863 = vadd.f32 0.0, %v4862
      %v4864 = vpop.f32.mrf.mxu0
      %4865 = vmatprep.mubr.bf16.mxu0 0
      %4866 = vmatmul.mubr.bf16.gmra.mxu0 %v4781
      %v4867 = vpop.f32.mrf.mxu0
      %v4868 = vadd.f32 0.0, %v4867
      %v4869 = vpop.f32.mrf.mxu0
      %v4870 = vpop.f32.mrf.mxu0
      %v4871 = vadd.f32 0.0, %v4870
      %v4872 = vpop.f32.mrf.mxu0
      %4873 = vmatprep.mubr.bf16.mxu0 0
      %4874 = vmatmul.mubr.bf16.gmra.mxu0 %v4784
      %v4875 = vpop.f32.mrf.mxu0
      %v4876 = vadd.f32 0.0, %v4875
      %v4877 = vpop.f32.mrf.mxu0
      %v4878 = vpop.f32.mrf.mxu0
      %v4879 = vadd.f32 0.0, %v4878
      %v4880 = vpop.f32.mrf.mxu0
      %4881 = vmatprep.mubr.bf16.mxu0 0
      %4882 = vmatmul.mubr.bf16.gmra.mxu0 %v4787
      %v4883 = vpop.f32.mrf.mxu0
      %v4884 = vadd.f32 0.0, %v4883
      %v4885 = vpop.f32.mrf.mxu0
      %v4886 = vpop.f32.mrf.mxu0
      %v4887 = vadd.f32 0.0, %v4886
      %v4888 = vpop.f32.mrf.mxu0
      %4889 = vmatprep.mubr.bf16.mxu0 0
      %4890 = vmatmul.mubr.bf16.gmra.mxu0 %v4790
      %v4891 = vpop.f32.mrf.mxu0
      %v4892 = vadd.f32 0.0, %v4891
      %v4893 = vpop.f32.mrf.mxu0
      %v4894 = vpop.f32.mrf.mxu0
      %v4895 = vadd.f32 0.0, %v4894
      %v4896 = vpop.f32.mrf.mxu0
      %4897 = vmatprep.mubr.bf16.mxu0 0
      %4898 = vmatmul.mubr.bf16.gmra.mxu0 %v4793
      %v4899 = vpop.f32.mrf.mxu0
      %v4900 = vadd.f32 0.0, %v4899
      %v4901 = vpop.f32.mrf.mxu0
      %v4902 = vpop.f32.mrf.mxu0
      %v4903 = vadd.f32 0.0, %v4902
      %v4904 = vpop.f32.mrf.mxu0
      %4905 = vmatprep.mubr.bf16.mxu0 0
      %4906 = vmatmul.mubr.bf16.gmra.mxu0 %v4796
      %v4907 = vpop.f32.mrf.mxu0
      %v4908 = vadd.f32 0.0, %v4907
      %v4909 = vpop.f32.mrf.mxu0
      %v4910 = vpop.f32.mrf.mxu0
      %v4911 = vadd.f32 0.0, %v4910
      %v4912 = vpop.f32.mrf.mxu0
      %4913 = vmatprep.mubr.bf16.mxu0 0
      %4914 = vmatmul.mubr.bf16.gmra.mxu0 %v4799
      %v4915 = vpop.f32.mrf.mxu0
      %v4916 = vadd.f32 0.0, %v4915
      %v4917 = vpop.f32.mrf.mxu0
      %v4918 = vpop.f32.mrf.mxu0
      %v4919 = vadd.f32 0.0, %v4918
      %v4920 = vpop.f32.mrf.mxu0
      %4921 = vmatprep.mubr.bf16.mxu0 0
      %4922 = vmatmul.mubr.bf16.gmra.mxu0 %v4802
      %v4923 = vpop.f32.mrf.mxu0
      %v4924 = vadd.f32 0.0, %v4923
      %v4925 = vpop.f32.mrf.mxu0
      %v4926 = vpop.f32.mrf.mxu0
      %v4927 = vadd.f32 0.0, %v4926
      %v4928 = vpop.f32.mrf.mxu0
      %4929 = vmatprep.mubr.bf16.mxu0 0
      %4930 = vmatmul.mubr.bf16.gmra.mxu0 %v4805
      %v4931 = vpop.f32.mrf.mxu0
      %v4932 = vadd.f32 0.0, %v4931
      %v4933 = vpop.f32.mrf.mxu0
      %v4934 = vpop.f32.mrf.mxu0
      %v4935 = vadd.f32 0.0, %v4934
      %v4936 = vpop.f32.mrf.mxu0
      %4937 = vmatprep.mubr.bf16.mxu0 0
      %4938 = vmatmul.mubr.bf16.gmra.mxu0 %v4808
      %v4939 = vpop.f32.mrf.mxu0
      %v4940 = vadd.f32 0.0, %v4939
      %v4941 = vpop.f32.mrf.mxu0
      %v4942 = vpop.f32.mrf.mxu0
      %v4943 = vadd.f32 0.0, %v4942
      %v4944 = vpop.f32.mrf.mxu0
      %4945 = vmatprep.mubr.bf16.mxu0 0
      %4946 = vmatmul.mubr.bf16.gmra.mxu0 %v4811
      %v4947 = vpop.f32.mrf.mxu0
      %v4948 = vadd.f32 0.0, %v4947
      %v4949 = vpop.f32.mrf.mxu0
      %v4950 = vpop.f32.mrf.mxu0
      %v4951 = vadd.f32 0.0, %v4950
      %v4952 = vpop.f32.mrf.mxu0
      %4953 = vmatprep.mubr.bf16.mxu0 0
      %4954 = vmatmul.mubr.bf16.gmra.mxu0 %v4814
      %v4955 = vpop.f32.mrf.mxu0
      %v4956 = vadd.f32 0.0, %v4955
      %v4957 = vpop.f32.mrf.mxu0
      %v4958 = vpop.f32.mrf.mxu0
      %v4959 = vadd.f32 0.0, %v4958
      %v4960 = vpop.f32.mrf.mxu0
      %4961 = vmatprep.mubr.bf16.mxu0 0
      %4962 = vmatmul.mubr.bf16.gmra.mxu0 %v4817
      %v4963 = vpop.f32.mrf.mxu0
      %v4964 = vadd.f32 0.0, %v4963
      %v4965 = vpop.f32.mrf.mxu0
      %v4966 = vpop.f32.mrf.mxu0
      %v4967 = vadd.f32 0.0, %v4966
      %v4968 = vpop.f32.mrf.mxu0
      %4969 = vmatprep.mubr.bf16.mxu0 0
      %4970 = vmatmul.mubr.bf16.gmra.mxu0 %v4820
      %v4971 = vpop.f32.mrf.mxu0
      %v4972 = vadd.f32 0.0, %v4971
      %v4973 = vpop.f32.mrf.mxu0
      %v4974 = vpop.f32.mrf.mxu0
      %v4975 = vadd.f32 0.0, %v4974
      %v4976 = vpop.f32.mrf.mxu0
      %4977 = vmatprep.mubr.bf16.mxu0 0
      %4978 = vmatmul.mubr.bf16.gmra.mxu0 %v4823
      %v4979 = vpop.f32.mrf.mxu0
      %v4980 = vadd.f32 0.0, %v4979
      %v4981 = vpop.f32.mrf.mxu0
      %v4982 = vpop.f32.mrf.mxu0
      %v4983 = vadd.f32 0.0, %v4982
      %v4984 = vpop.f32.mrf.mxu0
      %4985 = vdwg.mxu0
      %v4986 = vadd.f32 %v4586, %v4860
      %v4987 = vadd.f32 %v4589, %v4863
      %v4988 = vadd.f32 %v4594, %v4868
      %v4989 = vadd.f32 %v4597, %v4871
      %v4990 = vadd.f32 %v4602, %v4876
      %v4991 = vadd.f32 %v4605, %v4879
      %v4992 = vadd.f32 %v4610, %v4884
      %v4993 = vadd.f32 %v4613, %v4887
      %v4994 = vadd.f32 %v4618, %v4892
      %v4995 = vadd.f32 %v4621, %v4895
      %v4996 = vadd.f32 %v4626, %v4900
      %v4997 = vadd.f32 %v4629, %v4903
      %v4998 = vadd.f32 %v4634, %v4908
      %v4999 = vadd.f32 %v4637, %v4911
      %v5000 = vadd.f32 %v4642, %v4916
      %v5001 = vadd.f32 %v4645, %v4919
      %v5002 = vadd.f32 %v4650, %v4924
      %v5003 = vadd.f32 %v4653, %v4927
      %v5004 = vadd.f32 %v4658, %v4932
      %v5005 = vadd.f32 %v4661, %v4935
      %v5006 = vadd.f32 %v4666, %v4940
      %v5007 = vadd.f32 %v4669, %v4943
      %v5008 = vadd.f32 %v4674, %v4948
      %v5009 = vadd.f32 %v4677, %v4951
      %v5010 = vadd.f32 %v4682, %v4956
      %v5011 = vadd.f32 %v4685, %v4959
      %v5012 = vadd.f32 %v4690, %v4964
      %v5013 = vadd.f32 %v4693, %v4967
      %v5014 = vadd.f32 %v4698, %v4972
      %v5015 = vadd.f32 %v4701, %v4975
      %v5016 = vadd.f32 %v4706, %v4980
      %v5017 = vadd.f32 %v4709, %v4983
      %v5018 = vld [vmem:[#allocation2 + $0x10] sm:$0xff]
      %v5019 = vld [vmem:[#allocation2 + $0x18] sm:$0xff]
      %v5020 = vld [vmem:[#allocation2 + $0x20] sm:$0xff]
      %v5021 = vld [vmem:[#allocation2 + $0x28] sm:$0xff]
      %v5022 = vld [vmem:[#allocation2 + $0x30] sm:$0xff]
      %v5023 = vld [vmem:[#allocation2 + $0x38] sm:$0xff]
      %v5024 = vld [vmem:[#allocation2 + $0x40] sm:$0xff]
      %v5025 = vld [vmem:[#allocation2 + $0x48] sm:$0xff]
      %v5026 = vld [vmem:[#allocation2 + $0x50] sm:$0xff]
      %v5027 = vld [vmem:[#allocation2 + $0x58] sm:$0xff]
      %v5028 = vld [vmem:[#allocation2 + $0x60] sm:$0xff]
      %v5029 = vld [vmem:[#allocation2 + $0x68] sm:$0xff]
      %v5030 = vld [vmem:[#allocation2 + $0x70] sm:$0xff]
      %v5031 = vld [vmem:[#allocation2 + $0x78] sm:$0xff]
      %v5032 = vld [vmem:[#allocation2 + $0x80] sm:$0xff]
      %v5033 = vld [vmem:[#allocation2 + $0x88] sm:$0xff]
      %v5034 = vld [vmem:[#allocation2 + $0x90] sm:$0xff]
      %v5035 = vld [vmem:[#allocation2 + $0x98] sm:$0xff]
      %v5036 = vld [vmem:[#allocation2 + $0xa0] sm:$0xff]
      %v5037 = vld [vmem:[#allocation2 + $0xa8] sm:$0xff]
      %v5038 = vld [vmem:[#allocation2 + $0xb0] sm:$0xff]
      %v5039 = vld [vmem:[#allocation2 + $0xb8] sm:$0xff]
      %v5040 = vld [vmem:[#allocation2 + $0xc0] sm:$0xff]
      %v5041 = vld [vmem:[#allocation2 + $0xc8] sm:$0xff]
      %v5042 = vld [vmem:[#allocation2 + $0xd0] sm:$0xff]
      %v5043 = vld [vmem:[#allocation2 + $0xd8] sm:$0xff]
      %v5044 = vld [vmem:[#allocation2 + $0xe0] sm:$0xff]
      %v5045 = vld [vmem:[#allocation2 + $0xe8] sm:$0xff]
      %v5046 = vld [vmem:[#allocation2 + $0xf0] sm:$0xff]
      %v5047 = vld [vmem:[#allocation2 + $0xf8] sm:$0xff]
      %v5048 = vld [vmem:[#allocation2 + $0x100] sm:$0xff]
      %v5049 = vld [vmem:[#allocation2 + $0x108] sm:$0x3f]
      %v5050 = vpack.c.bf16 %v5019, %v5018
      %v5051 = vpack.c.bf16 %v5021, %v5020
      %v5052 = vpack.c.bf16 %v5023, %v5022
      %v5053 = vpack.c.bf16 %v5025, %v5024
      %v5054 = vpack.c.bf16 %v5027, %v5026
      %v5055 = vpack.c.bf16 %v5029, %v5028
      %v5056 = vpack.c.bf16 %v5031, %v5030
      %v5057 = vpack.c.bf16 %v5033, %v5032
      %v5058 = vpack.c.bf16 %v5035, %v5034
      %v5059 = vpack.c.bf16 %v5037, %v5036
      %v5060 = vpack.c.bf16 %v5039, %v5038
      %v5061 = vpack.c.bf16 %v5041, %v5040
      %v5062 = vpack.c.bf16 %v5043, %v5042
      %v5063 = vpack.c.bf16 %v5045, %v5044
      %v5064 = vpack.c.bf16 %v5047, %v5046
      %v5065 = vpack.c.bf16 %v5049, %v5048
      %s5066 = scalar_lea.vmem %s3, 48
      %v5067 = vld [vmem:[%s5066] sm:$0xf]
      %v5068 = vld [vmem:[%s5066 + $0x4] sm:$0xf]
      %v5069 = vld [vmem:[%s5066 + $0x8] sm:$0xf]
      %v5070 = vld [vmem:[%s5066 + $0xc] sm:$0xf]
      %v5075 = vunpack.c.l.b16 %v5067
      %v5076 = vunpack.c.l.b16 %v5068
      %v5077 = vunpack.c.l.b16 %v5069
      %v5078 = vunpack.c.l.b16 %v5070
      %v5079 = vpack.c.b16 %v5076, %v5075
      %v5080 = vpack.c.b16 %v5078, %v5077
      %v5084 = vsel %vm4078, %v5050, 0
      %v5087 = vsel %vm4078, %v5051, 0
      %v5090 = vsel %vm4078, %v5052, 0
      %v5093 = vsel %vm4078, %v5053, 0
      %v5096 = vsel %vm4078, %v5054, 0
      %v5099 = vsel %vm4078, %v5055, 0
      %v5102 = vsel %vm4078, %v5056, 0
      %v5105 = vsel %vm4078, %v5057, 0
      %v5108 = vsel %vm4078, %v5058, 0
      %v5111 = vsel %vm4078, %v5059, 0
      %v5114 = vsel %vm4078, %v5060, 0
      %v5117 = vsel %vm4078, %v5061, 0
      %v5120 = vsel %vm4078, %v5062, 0
      %v5123 = vsel %vm4078, %v5063, 0
      %v5126 = vsel %vm4078, %v5064, 0
      %v5129 = vsel %vm4078, %v5065, 0
      %5131 = vmatprep.subr.bf16.mxu0 0
      %5132 = vmatpush1.bf16.msra.mxu0 0
      %5133 = vmatprep.subr.bf16.mxu0 0
      %5134 = vmatpush1.bf16.msra.mxu0 0
      %5135 = vmatprep.subr.bf16.mxu0 0
      %5136 = vmatpush1.bf16.msra.mxu0 0
      %5137 = vmatprep.subr.bf16.mxu0 0
      %5138 = vmatpush1.bf16.msra.mxu0 0
      %5139 = vmatprep.subr.bf16.mxu0 0
      %5140 = vmatpush1.bf16.msra.mxu0 0
      %5141 = vmatprep.subr.bf16.mxu0 0
      %5142 = vmatpush1.bf16.msra.mxu0 0
      %5143 = vmatprep.subr.bf16.mxu0 0
      %5144 = vmatpush1.bf16.msra.mxu0 %v5080
      %5145 = vmatprep.subr.bf16.mxu0 0
      %5146 = vmatpush1.bf16.msra.mxu0 %v5079
      %5147 = vmatprep.subr.bf16.mxu0 0
      %5148 = vmatpush2.bf16.msra.mxu0 0
      %5149 = vmatprep.subr.bf16.mxu0 0
      %5150 = vmatpush2.bf16.msra.mxu0 0
      %5151 = vmatprep.subr.bf16.mxu0 0
      %5152 = vmatpush2.bf16.msra.mxu0 0
      %5153 = vmatprep.subr.bf16.mxu0 0
      %5154 = vmatpush2.bf16.msra.mxu0 0
      %5155 = vmatprep.subr.bf16.mxu0 0
      %5156 = vmatpush2.bf16.msra.mxu0 0
      %5157 = vmatprep.subr.bf16.mxu0 0
      %5158 = vmatpush2.bf16.msra.mxu0 0
      %5159 = vmatprep.subr.bf16.mxu0 0
      %5160 = vmatpush2.bf16.msra.mxu0 0
      %5161 = vmatprep.subr.bf16.mxu0 0
      %5162 = vmatpush2.bf16.msra.mxu0 0
      %5163 = vmatprep.mubr.bf16.mxu0 0
      %5164 = vmatmul.mubr.bf16.gmra.mxu0 %v5084
      %v5165 = vpop.f32.mrf.mxu0
      %v5166 = vadd.f32 0.0, %v5165
      %v5167 = vpop.f32.mrf.mxu0
      %v5168 = vpop.f32.mrf.mxu0
      %v5169 = vadd.f32 0.0, %v5168
      %v5170 = vpop.f32.mrf.mxu0
      %5171 = vmatprep.mubr.bf16.mxu0 0
      %5172 = vmatmul.mubr.bf16.gmra.mxu0 %v5087
      %v5173 = vpop.f32.mrf.mxu0
      %v5174 = vadd.f32 0.0, %v5173
      %v5175 = vpop.f32.mrf.mxu0
      %v5176 = vpop.f32.mrf.mxu0
      %v5177 = vadd.f32 0.0, %v5176
      %v5178 = vpop.f32.mrf.mxu0
      %5179 = vmatprep.mubr.bf16.mxu0 0
      %5180 = vmatmul.mubr.bf16.gmra.mxu0 %v5090
      %v5181 = vpop.f32.mrf.mxu0
      %v5182 = vadd.f32 0.0, %v5181
      %v5183 = vpop.f32.mrf.mxu0
      %v5184 = vpop.f32.mrf.mxu0
      %v5185 = vadd.f32 0.0, %v5184
      %v5186 = vpop.f32.mrf.mxu0
      %5187 = vmatprep.mubr.bf16.mxu0 0
      %5188 = vmatmul.mubr.bf16.gmra.mxu0 %v5093
      %v5189 = vpop.f32.mrf.mxu0
      %v5190 = vadd.f32 0.0, %v5189
      %v5191 = vpop.f32.mrf.mxu0
      %v5192 = vpop.f32.mrf.mxu0
      %v5193 = vadd.f32 0.0, %v5192
      %v5194 = vpop.f32.mrf.mxu0
      %5195 = vmatprep.mubr.bf16.mxu0 0
      %5196 = vmatmul.mubr.bf16.gmra.mxu0 %v5096
      %v5197 = vpop.f32.mrf.mxu0
      %v5198 = vadd.f32 0.0, %v5197
      %v5199 = vpop.f32.mrf.mxu0
      %v5200 = vpop.f32.mrf.mxu0
      %v5201 = vadd.f32 0.0, %v5200
      %v5202 = vpop.f32.mrf.mxu0
      %5203 = vmatprep.mubr.bf16.mxu0 0
      %5204 = vmatmul.mubr.bf16.gmra.mxu0 %v5099
      %v5205 = vpop.f32.mrf.mxu0
      %v5206 = vadd.f32 0.0, %v5205
      %v5207 = vpop.f32.mrf.mxu0
      %v5208 = vpop.f32.mrf.mxu0
      %v5209 = vadd.f32 0.0, %v5208
      %v5210 = vpop.f32.mrf.mxu0
      %5211 = vmatprep.mubr.bf16.mxu0 0
      %5212 = vmatmul.mubr.bf16.gmra.mxu0 %v5102
      %v5213 = vpop.f32.mrf.mxu0
      %v5214 = vadd.f32 0.0, %v5213
      %v5215 = vpop.f32.mrf.mxu0
      %v5216 = vpop.f32.mrf.mxu0
      %v5217 = vadd.f32 0.0, %v5216
      %v5218 = vpop.f32.mrf.mxu0
      %5219 = vmatprep.mubr.bf16.mxu0 0
      %5220 = vmatmul.mubr.bf16.gmra.mxu0 %v5105
      %v5221 = vpop.f32.mrf.mxu0
      %v5222 = vadd.f32 0.0, %v5221
      %v5223 = vpop.f32.mrf.mxu0
      %v5224 = vpop.f32.mrf.mxu0
      %v5225 = vadd.f32 0.0, %v5224
      %v5226 = vpop.f32.mrf.mxu0
      %5227 = vmatprep.mubr.bf16.mxu0 0
      %5228 = vmatmul.mubr.bf16.gmra.mxu0 %v5108
      %v5229 = vpop.f32.mrf.mxu0
      %v5230 = vadd.f32 0.0, %v5229
      %v5231 = vpop.f32.mrf.mxu0
      %v5232 = vpop.f32.mrf.mxu0
      %v5233 = vadd.f32 0.0, %v5232
      %v5234 = vpop.f32.mrf.mxu0
      %5235 = vmatprep.mubr.bf16.mxu0 0
      %5236 = vmatmul.mubr.bf16.gmra.mxu0 %v5111
      %v5237 = vpop.f32.mrf.mxu0
      %v5238 = vadd.f32 0.0, %v5237
      %v5239 = vpop.f32.mrf.mxu0
      %v5240 = vpop.f32.mrf.mxu0
      %v5241 = vadd.f32 0.0, %v5240
      %v5242 = vpop.f32.mrf.mxu0
      %5243 = vmatprep.mubr.bf16.mxu0 0
      %5244 = vmatmul.mubr.bf16.gmra.mxu0 %v5114
      %v5245 = vpop.f32.mrf.mxu0
      %v5246 = vadd.f32 0.0, %v5245
      %v5247 = vpop.f32.mrf.mxu0
      %v5248 = vpop.f32.mrf.mxu0
      %v5249 = vadd.f32 0.0, %v5248
      %v5250 = vpop.f32.mrf.mxu0
      %5251 = vmatprep.mubr.bf16.mxu0 0
      %5252 = vmatmul.mubr.bf16.gmra.mxu0 %v5117
      %v5253 = vpop.f32.mrf.mxu0
      %v5254 = vadd.f32 0.0, %v5253
      %v5255 = vpop.f32.mrf.mxu0
      %v5256 = vpop.f32.mrf.mxu0
      %v5257 = vadd.f32 0.0, %v5256
      %v5258 = vpop.f32.mrf.mxu0
      %5259 = vmatprep.mubr.bf16.mxu0 0
      %5260 = vmatmul.mubr.bf16.gmra.mxu0 %v5120
      %v5261 = vpop.f32.mrf.mxu0
      %v5262 = vadd.f32 0.0, %v5261
      %v5263 = vpop.f32.mrf.mxu0
      %v5264 = vpop.f32.mrf.mxu0
      %v5265 = vadd.f32 0.0, %v5264
      %v5266 = vpop.f32.mrf.mxu0
      %5267 = vmatprep.mubr.bf16.mxu0 0
      %5268 = vmatmul.mubr.bf16.gmra.mxu0 %v5123
      %v5269 = vpop.f32.mrf.mxu0
      %v5270 = vadd.f32 0.0, %v5269
      %v5271 = vpop.f32.mrf.mxu0
      %v5272 = vpop.f32.mrf.mxu0
      %v5273 = vadd.f32 0.0, %v5272
      %v5274 = vpop.f32.mrf.mxu0
      %5275 = vmatprep.mubr.bf16.mxu0 0
      %5276 = vmatmul.mubr.bf16.gmra.mxu0 %v5126
      %v5277 = vpop.f32.mrf.mxu0
      %v5278 = vadd.f32 0.0, %v5277
      %v5279 = vpop.f32.mrf.mxu0
      %v5280 = vpop.f32.mrf.mxu0
      %v5281 = vadd.f32 0.0, %v5280
      %v5282 = vpop.f32.mrf.mxu0
      %5283 = vmatprep.mubr.bf16.mxu0 0
      %5284 = vmatmul.mubr.bf16.gmra.mxu0 %v5129
      %v5285 = vpop.f32.mrf.mxu0
      %v5286 = vadd.f32 0.0, %v5285
      %v5287 = vpop.f32.mrf.mxu0
      %v5288 = vpop.f32.mrf.mxu0
      %v5289 = vadd.f32 0.0, %v5288
      %v5290 = vpop.f32.mrf.mxu0
      %5291 = vdwg.mxu0
      %v5292 = vadd.f32 %v4986, %v5166
      %v5293 = vadd.f32 %v4987, %v5169
      %v5294 = vadd.f32 %v4988, %v5174
      %v5295 = vadd.f32 %v4989, %v5177
      %v5296 = vadd.f32 %v4990, %v5182
      %v5297 = vadd.f32 %v4991, %v5185
      %v5298 = vadd.f32 %v4992, %v5190
      %v5299 = vadd.f32 %v4993, %v5193
      %v5300 = vadd.f32 %v4994, %v5198
      %v5301 = vadd.f32 %v4995, %v5201
      %v5302 = vadd.f32 %v4996, %v5206
      %v5303 = vadd.f32 %v4997, %v5209
      %v5304 = vadd.f32 %v4998, %v5214
      %v5305 = vadd.f32 %v4999, %v5217
      %v5306 = vadd.f32 %v5000, %v5222
      %v5307 = vadd.f32 %v5001, %v5225
      %v5308 = vadd.f32 %v5002, %v5230
      %v5309 = vadd.f32 %v5003, %v5233
      %v5310 = vadd.f32 %v5004, %v5238
      %v5311 = vadd.f32 %v5005, %v5241
      %v5312 = vadd.f32 %v5006, %v5246
      %v5313 = vadd.f32 %v5007, %v5249
      %v5314 = vadd.f32 %v5008, %v5254
      %v5315 = vadd.f32 %v5009, %v5257
      %v5316 = vadd.f32 %v5010, %v5262
      %v5317 = vadd.f32 %v5011, %v5265
      %v5318 = vadd.f32 %v5012, %v5270
      %v5319 = vadd.f32 %v5013, %v5273
      %v5320 = vadd.f32 %v5014, %v5278
      %v5321 = vadd.f32 %v5015, %v5281
      %v5322 = vadd.f32 %v5016, %v5286
      %v5323 = vadd.f32 %v5017, %v5289
      %v5324 = vld [vmem:[%s4] sm:$0x1]
      %v5326 = vlaneseq
      %v5327 = vshrl.u32 %v5326, 7
      %v5328 = vsub.s32 0, %v5327
      %v5329 = vrot.slane %v5324, %v5328
      %v5331 = vadd.f32 %v5292, %v5329
      %v5332 = vadd.f32 %v5293, %v5329
      %v5333 = vadd.f32 %v5294, %v5329
      %v5334 = vadd.f32 %v5295, %v5329
      %v5335 = vadd.f32 %v5296, %v5329
      %v5336 = vadd.f32 %v5297, %v5329
      %v5337 = vadd.f32 %v5298, %v5329
      %v5338 = vadd.f32 %v5299, %v5329
      %v5339 = vadd.f32 %v5300, %v5329
      %v5340 = vadd.f32 %v5301, %v5329
      %v5341 = vadd.f32 %v5302, %v5329
      %v5342 = vadd.f32 %v5303, %v5329
      %v5343 = vadd.f32 %v5304, %v5329
      %v5344 = vadd.f32 %v5305, %v5329
      %v5345 = vadd.f32 %v5306, %v5329
      %v5346 = vadd.f32 %v5307, %v5329
      %v5347 = vadd.f32 %v5308, %v5329
      %v5348 = vadd.f32 %v5309, %v5329
      %v5349 = vadd.f32 %v5310, %v5329
      %v5350 = vadd.f32 %v5311, %v5329
      %v5351 = vadd.f32 %v5312, %v5329
      %v5352 = vadd.f32 %v5313, %v5329
      %v5353 = vadd.f32 %v5314, %v5329
      %v5354 = vadd.f32 %v5315, %v5329
      %v5355 = vadd.f32 %v5316, %v5329
      %v5356 = vadd.f32 %v5317, %v5329
      %v5357 = vadd.f32 %v5318, %v5329
      %v5358 = vadd.f32 %v5319, %v5329
      %v5359 = vadd.f32 %v5320, %v5329
      %v5360 = vadd.f32 %v5321, %v5329
      %v5361 = vadd.f32 %v5322, %v5329
      %v5362 = vadd.f32 %v5323, %v5329
      %v5363 = vmax.f32 %v5331, 0.0
      %v5364 = vmax.f32 %v5332, 0.0
      %v5365 = vmax.f32 %v5333, 0.0
      %v5366 = vmax.f32 %v5334, 0.0
      %v5367 = vmax.f32 %v5335, 0.0
      %v5368 = vmax.f32 %v5336, 0.0
      %v5369 = vmax.f32 %v5337, 0.0
      %v5370 = vmax.f32 %v5338, 0.0
      %v5371 = vmax.f32 %v5339, 0.0
      %v5372 = vmax.f32 %v5340, 0.0
      %v5373 = vmax.f32 %v5341, 0.0
      %v5374 = vmax.f32 %v5342, 0.0
      %v5375 = vmax.f32 %v5343, 0.0
      %v5376 = vmax.f32 %v5344, 0.0
      %v5377 = vmax.f32 %v5345, 0.0
      %v5378 = vmax.f32 %v5346, 0.0
      %v5379 = vmax.f32 %v5347, 0.0
      %v5380 = vmax.f32 %v5348, 0.0
      %v5381 = vmax.f32 %v5349, 0.0
      %v5382 = vmax.f32 %v5350, 0.0
      %v5383 = vmax.f32 %v5351, 0.0
      %v5384 = vmax.f32 %v5352, 0.0
      %v5385 = vmax.f32 %v5353, 0.0
      %v5386 = vmax.f32 %v5354, 0.0
      %v5387 = vmax.f32 %v5355, 0.0
      %v5388 = vmax.f32 %v5356, 0.0
      %v5389 = vmax.f32 %v5357, 0.0
      %v5390 = vmax.f32 %v5358, 0.0
      %v5391 = vmax.f32 %v5359, 0.0
      %v5392 = vmax.f32 %v5360, 0.0
      %v5393 = vmax.f32 %v5361, 0.0
      %v5394 = vmax.f32 %v5362, 0.0
      %vm5395 = vcmask 523264
      %5396 = vst.msk [vmem:[#allocation3] sm:$0xff] %vm5395, 0.0
      %5397 = vst.msk [vmem:[#allocation3 + $0x8] sm:$0xff] %vm5395, 0.0
      %5398 = vst.msk [vmem:[#allocation3 + $0x10] sm:$0xff] %vm5395, 0.0
      %5399 = vst.msk [vmem:[#allocation3 + $0x18] sm:$0xff] %vm5395, 0.0
      %5400 = vst.msk [vmem:[#allocation3 + $0x20] sm:$0xff] %vm5395, 0.0
      %5401 = vst.msk [vmem:[#allocation3 + $0x28] sm:$0xff] %vm5395, 0.0
      %5402 = vst.msk [vmem:[#allocation3 + $0x30] sm:$0xff] %vm5395, 0.0
      %5403 = vst.msk [vmem:[#allocation3 + $0x38] sm:$0xff] %vm5395, 0.0
      %5404 = vst.msk [vmem:[#allocation3 + $0x40] sm:$0xff] %vm5395, 0.0
      %5405 = vst.msk [vmem:[#allocation3 + $0x48] sm:$0xff] %vm5395, 0.0
      %5406 = vst.msk [vmem:[#allocation3 + $0x50] sm:$0xff] %vm5395, 0.0
      %5407 = vst.msk [vmem:[#allocation3 + $0x58] sm:$0xff] %vm5395, 0.0
      %5408 = vst.msk [vmem:[#allocation3 + $0x60] sm:$0xff] %vm5395, 0.0
      %5409 = vst.msk [vmem:[#allocation3 + $0x68] sm:$0xff] %vm5395, 0.0
      %5410 = vst.msk [vmem:[#allocation3 + $0x70] sm:$0xff] %vm5395, 0.0
      %5411 = vst.msk [vmem:[#allocation3 + $0x78] sm:$0xff] %vm5395, 0.0
      %5412 = vst.msk [vmem:[#allocation3 + $0x80] sm:$0xff] %vm5395, 0.0
      %5413 = vst.msk [vmem:[#allocation3 + $0x88] sm:$0xff] %vm5395, 0.0
      %5414 = vst.msk [vmem:[#allocation3 + $0x90] sm:$0xff] %vm5395, 0.0
      %5415 = vst.msk [vmem:[#allocation3 + $0x98] sm:$0xff] %vm5395, 0.0
      %5416 = vst.msk [vmem:[#allocation3 + $0xa0] sm:$0xff] %vm5395, 0.0
      %5417 = vst.msk [vmem:[#allocation3 + $0xa8] sm:$0xff] %vm5395, 0.0
      %5418 = vst.msk [vmem:[#allocation3 + $0xb0] sm:$0xff] %vm5395, 0.0
      %5419 = vst.msk [vmem:[#allocation3 + $0xb8] sm:$0xff] %vm5395, 0.0
      %5420 = vst.msk [vmem:[#allocation3 + $0xc0] sm:$0xff] %vm5395, 0.0
      %5421 = vst.msk [vmem:[#allocation3 + $0xc8] sm:$0xff] %vm5395, 0.0
      %5422 = vst.msk [vmem:[#allocation3 + $0xd0] sm:$0xff] %vm5395, 0.0
      %5423 = vst.msk [vmem:[#allocation3 + $0xd8] sm:$0xff] %vm5395, 0.0
      %5424 = vst.msk [vmem:[#allocation3 + $0xe0] sm:$0xff] %vm5395, 0.0
      %5425 = vst.msk [vmem:[#allocation3 + $0xe8] sm:$0xff] %vm5395, 0.0
      %5426 = vst.msk [vmem:[#allocation3 + $0xf0] sm:$0xff] %vm5395, 0.0
      %5427 = vst.msk [vmem:[#allocation3 + $0xf8] sm:$0xff] %vm5395, 0.0
      %5428 = vst.msk [vmem:[#allocation3 + $0x100] sm:$0xff] %vm5395, 0.0
      %vm5429 = vcmask 517120
      %5430 = vst.msk [vmem:[#allocation3 + $0x108] sm:$0x3] %vm5429, 0.0
      %5431 = vst.msk [vmem:[#allocation3 + $0xe] sm:$0xff] %vm5395, %v5363
      %vm5432 = vcmask 521216
      %5433 = vst.msk [vmem:[#allocation3 + $0x16] sm:$0x3f] %vm5432, %v5364
      %vm5434 = vcmask 523271
      %5435 = vst.msk [vmem:[#allocation3 + $0x15] sm:$0x80] %vm5434, %v5364
      %5436 = vst.msk [vmem:[#allocation3 + $0x1d] sm:$0xff] %vm5395, %v5365
      %vm5437 = vcmask 520192
      %5438 = vst.msk [vmem:[#allocation3 + $0x25] sm:$0x1f] %vm5437, %v5366
      %vm5439 = vcmask 523270
      %5440 = vst.msk [vmem:[#allocation3 + $0x24] sm:$0xc0] %vm5439, %v5366
      %5441 = vst.msk [vmem:[#allocation3 + $0x2c] sm:$0xff] %vm5395, %v5367
      %vm5442 = vcmask 519168
      %5443 = vst.msk [vmem:[#allocation3 + $0x34] sm:$0xf] %vm5442, %v5368
      %vm5444 = vcmask 523269
      %5445 = vst.msk [vmem:[#allocation3 + $0x33] sm:$0xe0] %vm5444, %v5368
      %5446 = vst.msk [vmem:[#allocation3 + $0x3b] sm:$0xff] %vm5395, %v5369
      %vm5447 = vcmask 518144
      %5448 = vst.msk [vmem:[#allocation3 + $0x43] sm:$0x7] %vm5447, %v5370
      %vm5449 = vcmask 523268
      %5450 = vst.msk [vmem:[#allocation3 + $0x42] sm:$0xf0] %vm5449, %v5370
      %5451 = vst.msk [vmem:[#allocation3 + $0x4a] sm:$0xff] %vm5395, %v5371
      %5452 = vst.msk [vmem:[#allocation3 + $0x52] sm:$0x3] %vm5429, %v5372
      %vm5453 = vcmask 523267
      %5454 = vst.msk [vmem:[#allocation3 + $0x51] sm:$0xf8] %vm5453, %v5372
      %5455 = vst.msk [vmem:[#allocation3 + $0x59] sm:$0xff] %vm5395, %v5373
      %vm5456 = vcmask 516096
      %5457 = vst.msk [vmem:[#allocation3 + $0x61] sm:$0x1] %vm5456, %v5374
      %vm5458 = vcmask 523266
      %5459 = vst.msk [vmem:[#allocation3 + $0x60] sm:$0xfc] %vm5458, %v5374
      %5460 = vst.msk [vmem:[#allocation3 + $0x68] sm:$0xff] %vm5395, %v5375
      %vm5461 = vcmask 523265
      %5462 = vst.msk [vmem:[#allocation3 + $0x6f] sm:$0xfe] %vm5461, %v5376
      %vm5463 = vcmask 522240
      %5464 = vst.msk [vmem:[#allocation3 + $0x77] sm:$0x7f] %vm5463, %v5377
      %5465 = vst.msk [vmem:[#allocation3 + $0x7e] sm:$0xff] %vm5395, %v5378
      %5466 = vst.msk [vmem:[#allocation3 + $0x86] sm:$0x3f] %vm5432, %v5379
      %5467 = vst.msk [vmem:[#allocation3 + $0x85] sm:$0x80] %vm5434, %v5379
      %5468 = vst.msk [vmem:[#allocation3 + $0x8d] sm:$0xff] %vm5395, %v5380
      %5469 = vst.msk [vmem:[#allocation3 + $0x95] sm:$0x1f] %vm5437, %v5381
      %5470 = vst.msk [vmem:[#allocation3 + $0x94] sm:$0xc0] %vm5439, %v5381
      %5471 = vst.msk [vmem:[#allocation3 + $0x9c] sm:$0xff] %vm5395, %v5382
      %5472 = vst.msk [vmem:[#allocation3 + $0xa4] sm:$0xf] %vm5442, %v5383
      %5473 = vst.msk [vmem:[#allocation3 + $0xa3] sm:$0xe0] %vm5444, %v5383
      %5474 = vst.msk [vmem:[#allocation3 + $0xab] sm:$0xff] %vm5395, %v5384
      %5475 = vst.msk [vmem:[#allocation3 + $0xb3] sm:$0x7] %vm5447, %v5385
      %5476 = vst.msk [vmem:[#allocation3 + $0xb2] sm:$0xf0] %vm5449, %v5385
      %5477 = vst.msk [vmem:[#allocation3 + $0xba] sm:$0xff] %vm5395, %v5386
      %5478 = vst.msk [vmem:[#allocation3 + $0xc2] sm:$0x3] %vm5429, %v5387
      %5479 = vst.msk [vmem:[#allocation3 + $0xc1] sm:$0xf8] %vm5453, %v5387
      %5480 = vst.msk [vmem:[#allocation3 + $0xc9] sm:$0xff] %vm5395, %v5388
      %5481 = vst.msk [vmem:[#allocation3 + $0xd1] sm:$0x1] %vm5456, %v5389
      %5482 = vst.msk [vmem:[#allocation3 + $0xd0] sm:$0xfc] %vm5458, %v5389
      %5483 = vst.msk [vmem:[#allocation3 + $0xd8] sm:$0xff] %vm5395, %v5390
      %5484 = vst.msk [vmem:[#allocation3 + $0xdf] sm:$0xfe] %vm5461, %v5391
      %5485 = vst.msk [vmem:[#allocation3 + $0xe7] sm:$0x7f] %vm5463, %v5392
      %5486 = vst.msk [vmem:[#allocation3 + $0xee] sm:$0xff] %vm5395, %v5393
      %5487 = vst.msk [vmem:[#allocation3 + $0xf6] sm:$0x3f] %vm5432, %v5394
      %v5488 = vld [vmem:[#allocation3] sm:$0xff]
      %v5489 = vld [vmem:[#allocation3 + $0x8] sm:$0xff]
      %v5490 = vld [vmem:[#allocation3 + $0x10] sm:$0xff]
      %v5491 = vld [vmem:[#allocation3 + $0x18] sm:$0xff]
      %v5492 = vld [vmem:[#allocation3 + $0x20] sm:$0xff]
      %v5493 = vld [vmem:[#allocation3 + $0x28] sm:$0xff]
      %v5494 = vld [vmem:[#allocation3 + $0x30] sm:$0xff]
      %v5495 = vld [vmem:[#allocation3 + $0x38] sm:$0xff]
      %v5496 = vld [vmem:[#allocation3 + $0x40] sm:$0xff]
      %v5497 = vld [vmem:[#allocation3 + $0x48] sm:$0xff]
      %v5498 = vld [vmem:[#allocation3 + $0x50] sm:$0xff]
      %v5499 = vld [vmem:[#allocation3 + $0x58] sm:$0xff]
      %v5500 = vld [vmem:[#allocation3 + $0x60] sm:$0xff]
      %v5501 = vld [vmem:[#allocation3 + $0x68] sm:$0xff]
      %v5502 = vld [vmem:[#allocation3 + $0x70] sm:$0xff]
      %v5503 = vld [vmem:[#allocation3 + $0x78] sm:$0xff]
      %v5504 = vld [vmem:[#allocation3 + $0x80] sm:$0xff]
      %v5505 = vld [vmem:[#allocation3 + $0x88] sm:$0xff]
      %v5506 = vld [vmem:[#allocation3 + $0x90] sm:$0xff]
      %v5507 = vld [vmem:[#allocation3 + $0x98] sm:$0xff]
      %v5508 = vld [vmem:[#allocation3 + $0xa0] sm:$0xff]
      %v5509 = vld [vmem:[#allocation3 + $0xa8] sm:$0xff]
      %v5510 = vld [vmem:[#allocation3 + $0xb0] sm:$0xff]
      %v5511 = vld [vmem:[#allocation3 + $0xb8] sm:$0xff]
      %v5512 = vld [vmem:[#allocation3 + $0xc0] sm:$0xff]
      %v5513 = vld [vmem:[#allocation3 + $0xc8] sm:$0xff]
      %v5514 = vld [vmem:[#allocation3 + $0xd0] sm:$0xff]
      %v5515 = vld [vmem:[#allocation3 + $0xd8] sm:$0xff]
      %v5516 = vld [vmem:[#allocation3 + $0xe0] sm:$0xff]
      %v5517 = vld [vmem:[#allocation3 + $0xe8] sm:$0xff]
      %v5518 = vld [vmem:[#allocation3 + $0xf0] sm:$0xff]
      %v5519 = vld [vmem:[#allocation3 + $0xf8] sm:$0x7]
      %v5520 = vpack.c.bf16 %v5489, %v5488
      %v5521 = vpack.c.bf16 %v5491, %v5490
      %v5522 = vpack.c.bf16 %v5493, %v5492
      %v5523 = vpack.c.bf16 %v5495, %v5494
      %v5524 = vpack.c.bf16 %v5497, %v5496
      %v5525 = vpack.c.bf16 %v5499, %v5498
      %v5526 = vpack.c.bf16 %v5501, %v5500
      %v5527 = vpack.c.bf16 %v5503, %v5502
      %v5528 = vpack.c.bf16 %v5505, %v5504
      %v5529 = vpack.c.bf16 %v5507, %v5506
      %v5530 = vpack.c.bf16 %v5509, %v5508
      %v5531 = vpack.c.bf16 %v5511, %v5510
      %v5532 = vpack.c.bf16 %v5513, %v5512
      %v5533 = vpack.c.bf16 %v5515, %v5514
      %v5534 = vpack.c.bf16 %v5517, %v5516
      %v5535 = vpack.c.bf16 %v5519, %v5518
      %v5536 = vld [vmem:[%s5] sm:$0xf]
      %v5537 = vld [vmem:[%s5 + $0x4] sm:$0xf]
      %v5538 = vld [vmem:[%s5 + $0x8] sm:$0xf]
      %v5539 = vld [vmem:[%s5 + $0xc] sm:$0xf]
      %v5540 = vld [vmem:[%s5 + $0x10] sm:$0xf]
      %v5541 = vld [vmem:[%s5 + $0x14] sm:$0xf]
      %v5542 = vld [vmem:[%s5 + $0x18] sm:$0xf]
      %v5543 = vld [vmem:[%s5 + $0x1c] sm:$0xf]
      %v5544 = vld [vmem:[#allocation3 + $0x1] sm:$0xff]
      %v5545 = vld [vmem:[#allocation3 + $0x9] sm:$0xff]
      %v5546 = vld [vmem:[#allocation3 + $0x11] sm:$0xff]
      %v5547 = vld [vmem:[#allocation3 + $0x19] sm:$0xff]
      %v5548 = vld [vmem:[#allocation3 + $0x21] sm:$0xff]
      %v5549 = vld [vmem:[#allocation3 + $0x29] sm:$0xff]
      %v5550 = vld [vmem:[#allocation3 + $0x31] sm:$0xff]
      %v5551 = vld [vmem:[#allocation3 + $0x39] sm:$0xff]
      %v5552 = vld [vmem:[#allocation3 + $0x41] sm:$0xff]
      %v5553 = vld [vmem:[#allocation3 + $0x49] sm:$0xff]
      %v5554 = vld [vmem:[#allocation3 + $0x51] sm:$0xff]
      %v5555 = vld [vmem:[#allocation3 + $0x59] sm:$0xff]
      %v5556 = vld [vmem:[#allocation3 + $0x61] sm:$0xff]
      %v5557 = vld [vmem:[#allocation3 + $0x69] sm:$0xff]
      %v5558 = vld [vmem:[#allocation3 + $0x71] sm:$0xff]
      %v5559 = vld [vmem:[#allocation3 + $0x79] sm:$0xff]
      %v5560 = vld [vmem:[#allocation3 + $0x81] sm:$0xff]
      %v5561 = vld [vmem:[#allocation3 + $0x89] sm:$0xff]
      %v5562 = vld [vmem:[#allocation3 + $0x91] sm:$0xff]
      %v5563 = vld [vmem:[#allocation3 + $0x99] sm:$0xff]
      %v5564 = vld [vmem:[#allocation3 + $0xa1] sm:$0xff]
      %v5565 = vld [vmem:[#allocation3 + $0xa9] sm:$0xff]
      %v5566 = vld [vmem:[#allocation3 + $0xb1] sm:$0xff]
      %v5567 = vld [vmem:[#allocation3 + $0xb9] sm:$0xff]
      %v5568 = vld [vmem:[#allocation3 + $0xc1] sm:$0xff]
      %v5569 = vld [vmem:[#allocation3 + $0xc9] sm:$0xff]
      %v5570 = vld [vmem:[#allocation3 + $0xd1] sm:$0xff]
      %v5571 = vld [vmem:[#allocation3 + $0xd9] sm:$0xff]
      %v5572 = vld [vmem:[#allocation3 + $0xe1] sm:$0xff]
      %v5573 = vld [vmem:[#allocation3 + $0xe9] sm:$0xff]
      %v5574 = vld [vmem:[#allocation3 + $0xf1] sm:$0xff]
      %v5575 = vld [vmem:[#allocation3 + $0xf9] sm:$0x7]
      %v5576 = vpack.c.bf16 %v5545, %v5544
      %v5577 = vpack.c.bf16 %v5547, %v5546
      %v5578 = vpack.c.bf16 %v5549, %v5548
      %v5579 = vpack.c.bf16 %v5551, %v5550
      %v5580 = vpack.c.bf16 %v5553, %v5552
      %v5581 = vpack.c.bf16 %v5555, %v5554
      %v5582 = vpack.c.bf16 %v5557, %v5556
      %v5583 = vpack.c.bf16 %v5559, %v5558
      %v5584 = vpack.c.bf16 %v5561, %v5560
      %v5585 = vpack.c.bf16 %v5563, %v5562
      %v5586 = vpack.c.bf16 %v5565, %v5564
      %v5587 = vpack.c.bf16 %v5567, %v5566
      %v5588 = vpack.c.bf16 %v5569, %v5568
      %v5589 = vpack.c.bf16 %v5571, %v5570
      %v5590 = vpack.c.bf16 %v5573, %v5572
      %v5591 = vpack.c.bf16 %v5575, %v5574
      %s5592 = scalar_lea.vmem %s5, 32
      %v5593 = vld [vmem:[%s5592] sm:$0xf]
      %v5594 = vld [vmem:[%s5592 + $0x4] sm:$0xf]
      %v5595 = vld [vmem:[%s5592 + $0x8] sm:$0xf]
      %v5596 = vld [vmem:[%s5592 + $0xc] sm:$0xf]
      %v5597 = vld [vmem:[%s5592 + $0x10] sm:$0xf]
      %v5598 = vld [vmem:[%s5592 + $0x14] sm:$0xf]
      %v5599 = vld [vmem:[%s5592 + $0x18] sm:$0xf]
      %v5600 = vld [vmem:[%s5592 + $0x1c] sm:$0xf]
      %v5609 = vunpack.c.l.b16 %v5593
      %v5610 = vunpack.c.l.b16 %v5594
      %v5611 = vunpack.c.l.b16 %v5595
      %v5612 = vunpack.c.l.b16 %v5596
      %v5613 = vunpack.c.l.b16 %v5597
      %v5614 = vunpack.c.l.b16 %v5598
      %v5615 = vunpack.c.l.b16 %v5599
      %v5616 = vunpack.c.l.b16 %v5600
      %v5617 = vpack.c.b16 %v5610, %v5609
      %v5618 = vpack.c.b16 %v5612, %v5611
      %v5619 = vpack.c.b16 %v5614, %v5613
      %v5620 = vpack.c.b16 %v5616, %v5615
      %v5626 = vsel %vm5395, %v5576, 0
      %v5629 = vsel %vm5395, %v5577, 0
      %v5632 = vsel %vm5395, %v5578, 0
      %v5635 = vsel %vm5395, %v5579, 0
      %v5638 = vsel %vm5395, %v5580, 0
      %v5641 = vsel %vm5395, %v5581, 0
      %v5644 = vsel %vm5395, %v5582, 0
      %v5647 = vsel %vm5395, %v5583, 0
      %v5650 = vsel %vm5395, %v5584, 0
      %v5653 = vsel %vm5395, %v5585, 0
      %v5656 = vsel %vm5395, %v5586, 0
      %v5659 = vsel %vm5395, %v5587, 0
      %v5662 = vsel %vm5395, %v5588, 0
      %v5665 = vsel %vm5395, %v5589, 0
      %v5668 = vsel %vm5395, %v5590, 0
      %v5671 = vsel %vm5395, %v5591, 0
      %5673 = vmatprep.subr.bf16.mxu0 0
      %5674 = vmatpush1.bf16.msra.mxu0 0
      %5675 = vmatprep.subr.bf16.mxu0 0
      %5676 = vmatpush1.bf16.msra.mxu0 0
      %5677 = vmatprep.subr.bf16.mxu0 0
      %5678 = vmatpush1.bf16.msra.mxu0 0
      %5679 = vmatprep.subr.bf16.mxu0 0
      %5680 = vmatpush1.bf16.msra.mxu0 0
      %5681 = vmatprep.subr.bf16.mxu0 0
      %5682 = vmatpush1.bf16.msra.mxu0 %v5620
      %5683 = vmatprep.subr.bf16.mxu0 0
      %5684 = vmatpush1.bf16.msra.mxu0 %v5619
      %5685 = vmatprep.subr.bf16.mxu0 0
      %5686 = vmatpush1.bf16.msra.mxu0 %v5618
      %5687 = vmatprep.subr.bf16.mxu0 0
      %5688 = vmatpush1.bf16.msra.mxu0 %v5617
      %5689 = vmatprep.subr.bf16.mxu0 0
      %5690 = vmatpush2.bf16.msra.mxu0 0
      %5691 = vmatprep.subr.bf16.mxu0 0
      %5692 = vmatpush2.bf16.msra.mxu0 0
      %5693 = vmatprep.subr.bf16.mxu0 0
      %5694 = vmatpush2.bf16.msra.mxu0 0
      %5695 = vmatprep.subr.bf16.mxu0 0
      %5696 = vmatpush2.bf16.msra.mxu0 0
      %5697 = vmatprep.subr.bf16.mxu0 0
      %5698 = vmatpush2.bf16.msra.mxu0 0
      %5699 = vmatprep.subr.bf16.mxu0 0
      %5700 = vmatpush2.bf16.msra.mxu0 0
      %5701 = vmatprep.subr.bf16.mxu0 0
      %5702 = vmatpush2.bf16.msra.mxu0 0
      %5703 = vmatprep.subr.bf16.mxu0 0
      %5704 = vmatpush2.bf16.msra.mxu0 0
      %5705 = vmatprep.mubr.bf16.mxu0 0
      %5706 = vmatmul.mubr.bf16.gmra.mxu0 %v5626
      %v5707 = vpop.f32.mrf.mxu0
      %v5708 = vadd.f32 0.0, %v5707
      %v5709 = vpop.f32.mrf.mxu0
      %v5710 = vpop.f32.mrf.mxu0
      %v5711 = vadd.f32 0.0, %v5710
      %v5712 = vpop.f32.mrf.mxu0
      %5713 = vmatprep.mubr.bf16.mxu0 0
      %5714 = vmatmul.mubr.bf16.gmra.mxu0 %v5629
      %v5715 = vpop.f32.mrf.mxu0
      %v5716 = vadd.f32 0.0, %v5715
      %v5717 = vpop.f32.mrf.mxu0
      %v5718 = vpop.f32.mrf.mxu0
      %v5719 = vadd.f32 0.0, %v5718
      %v5720 = vpop.f32.mrf.mxu0
      %5721 = vmatprep.mubr.bf16.mxu0 0
      %5722 = vmatmul.mubr.bf16.gmra.mxu0 %v5632
      %v5723 = vpop.f32.mrf.mxu0
      %v5724 = vadd.f32 0.0, %v5723
      %v5725 = vpop.f32.mrf.mxu0
      %v5726 = vpop.f32.mrf.mxu0
      %v5727 = vadd.f32 0.0, %v5726
      %v5728 = vpop.f32.mrf.mxu0
      %5729 = vmatprep.mubr.bf16.mxu0 0
      %5730 = vmatmul.mubr.bf16.gmra.mxu0 %v5635
      %v5731 = vpop.f32.mrf.mxu0
      %v5732 = vadd.f32 0.0, %v5731
      %v5733 = vpop.f32.mrf.mxu0
      %v5734 = vpop.f32.mrf.mxu0
      %v5735 = vadd.f32 0.0, %v5734
      %v5736 = vpop.f32.mrf.mxu0
      %5737 = vmatprep.mubr.bf16.mxu0 0
      %5738 = vmatmul.mubr.bf16.gmra.mxu0 %v5638
      %v5739 = vpop.f32.mrf.mxu0
      %v5740 = vadd.f32 0.0, %v5739
      %v5741 = vpop.f32.mrf.mxu0
      %v5742 = vpop.f32.mrf.mxu0
      %v5743 = vadd.f32 0.0, %v5742
      %v5744 = vpop.f32.mrf.mxu0
      %5745 = vmatprep.mubr.bf16.mxu0 0
      %5746 = vmatmul.mubr.bf16.gmra.mxu0 %v5641
      %v5747 = vpop.f32.mrf.mxu0
      %v5748 = vadd.f32 0.0, %v5747
      %v5749 = vpop.f32.mrf.mxu0
      %v5750 = vpop.f32.mrf.mxu0
      %v5751 = vadd.f32 0.0, %v5750
      %v5752 = vpop.f32.mrf.mxu0
      %5753 = vmatprep.mubr.bf16.mxu0 0
      %5754 = vmatmul.mubr.bf16.gmra.mxu0 %v5644
      %v5755 = vpop.f32.mrf.mxu0
      %v5756 = vadd.f32 0.0, %v5755
      %v5757 = vpop.f32.mrf.mxu0
      %v5758 = vpop.f32.mrf.mxu0
      %v5759 = vadd.f32 0.0, %v5758
      %v5760 = vpop.f32.mrf.mxu0
      %5761 = vmatprep.mubr.bf16.mxu0 0
      %5762 = vmatmul.mubr.bf16.gmra.mxu0 %v5647
      %v5763 = vpop.f32.mrf.mxu0
      %v5764 = vadd.f32 0.0, %v5763
      %v5765 = vpop.f32.mrf.mxu0
      %v5766 = vpop.f32.mrf.mxu0
      %v5767 = vadd.f32 0.0, %v5766
      %v5768 = vpop.f32.mrf.mxu0
      %5769 = vmatprep.mubr.bf16.mxu0 0
      %5770 = vmatmul.mubr.bf16.gmra.mxu0 %v5650
      %v5771 = vpop.f32.mrf.mxu0
      %v5772 = vadd.f32 0.0, %v5771
      %v5773 = vpop.f32.mrf.mxu0
      %v5774 = vpop.f32.mrf.mxu0
      %v5775 = vadd.f32 0.0, %v5774
      %v5776 = vpop.f32.mrf.mxu0
      %5777 = vmatprep.mubr.bf16.mxu0 0
      %5778 = vmatmul.mubr.bf16.gmra.mxu0 %v5653
      %v5779 = vpop.f32.mrf.mxu0
      %v5780 = vadd.f32 0.0, %v5779
      %v5781 = vpop.f32.mrf.mxu0
      %v5782 = vpop.f32.mrf.mxu0
      %v5783 = vadd.f32 0.0, %v5782
      %v5784 = vpop.f32.mrf.mxu0
      %5785 = vmatprep.mubr.bf16.mxu0 0
      %5786 = vmatmul.mubr.bf16.gmra.mxu0 %v5656
      %v5787 = vpop.f32.mrf.mxu0
      %v5788 = vadd.f32 0.0, %v5787
      %v5789 = vpop.f32.mrf.mxu0
      %v5790 = vpop.f32.mrf.mxu0
      %v5791 = vadd.f32 0.0, %v5790
      %v5792 = vpop.f32.mrf.mxu0
      %5793 = vmatprep.mubr.bf16.mxu0 0
      %5794 = vmatmul.mubr.bf16.gmra.mxu0 %v5659
      %v5795 = vpop.f32.mrf.mxu0
      %v5796 = vadd.f32 0.0, %v5795
      %v5797 = vpop.f32.mrf.mxu0
      %v5798 = vpop.f32.mrf.mxu0
      %v5799 = vadd.f32 0.0, %v5798
      %v5800 = vpop.f32.mrf.mxu0
      %5801 = vmatprep.mubr.bf16.mxu0 0
      %5802 = vmatmul.mubr.bf16.gmra.mxu0 %v5662
      %v5803 = vpop.f32.mrf.mxu0
      %v5804 = vadd.f32 0.0, %v5803
      %v5805 = vpop.f32.mrf.mxu0
      %v5806 = vpop.f32.mrf.mxu0
      %v5807 = vadd.f32 0.0, %v5806
      %v5808 = vpop.f32.mrf.mxu0
      %5809 = vmatprep.mubr.bf16.mxu0 0
      %5810 = vmatmul.mubr.bf16.gmra.mxu0 %v5665
      %v5811 = vpop.f32.mrf.mxu0
      %v5812 = vadd.f32 0.0, %v5811
      %v5813 = vpop.f32.mrf.mxu0
      %v5814 = vpop.f32.mrf.mxu0
      %v5815 = vadd.f32 0.0, %v5814
      %v5816 = vpop.f32.mrf.mxu0
      %5817 = vmatprep.mubr.bf16.mxu0 0
      %5818 = vmatmul.mubr.bf16.gmra.mxu0 %v5668
      %v5819 = vpop.f32.mrf.mxu0
      %v5820 = vadd.f32 0.0, %v5819
      %v5821 = vpop.f32.mrf.mxu0
      %v5822 = vpop.f32.mrf.mxu0
      %v5823 = vadd.f32 0.0, %v5822
      %v5824 = vpop.f32.mrf.mxu0
      %5825 = vmatprep.mubr.bf16.mxu0 0
      %5826 = vmatmul.mubr.bf16.gmra.mxu0 %v5671
      %v5827 = vpop.f32.mrf.mxu0
      %v5828 = vadd.f32 0.0, %v5827
      %v5829 = vpop.f32.mrf.mxu0
      %v5830 = vpop.f32.mrf.mxu0
      %v5831 = vadd.f32 0.0, %v5830
      %v5832 = vpop.f32.mrf.mxu0
      %5833 = vdwg.mxu0
      %v5842 = vunpack.c.l.b16 %v5536
      %v5843 = vunpack.c.l.b16 %v5537
      %v5844 = vunpack.c.l.b16 %v5538
      %v5845 = vunpack.c.l.b16 %v5539
      %v5846 = vunpack.c.l.b16 %v5540
      %v5847 = vunpack.c.l.b16 %v5541
      %v5848 = vunpack.c.l.b16 %v5542
      %v5849 = vunpack.c.l.b16 %v5543
      %v5850 = vpack.c.b16 %v5843, %v5842
      %v5851 = vpack.c.b16 %v5845, %v5844
      %v5852 = vpack.c.b16 %v5847, %v5846
      %v5853 = vpack.c.b16 %v5849, %v5848
      %v5859 = vsel %vm5395, %v5520, 0
      %v5862 = vsel %vm5395, %v5521, 0
      %v5865 = vsel %vm5395, %v5522, 0
      %v5868 = vsel %vm5395, %v5523, 0
      %v5871 = vsel %vm5395, %v5524, 0
      %v5874 = vsel %vm5395, %v5525, 0
      %v5877 = vsel %vm5395, %v5526, 0
      %v5880 = vsel %vm5395, %v5527, 0
      %v5883 = vsel %vm5395, %v5528, 0
      %v5886 = vsel %vm5395, %v5529, 0
      %v5889 = vsel %vm5395, %v5530, 0
      %v5892 = vsel %vm5395, %v5531, 0
      %v5895 = vsel %vm5395, %v5532, 0
      %v5898 = vsel %vm5395, %v5533, 0
      %v5901 = vsel %vm5395, %v5534, 0
      %v5904 = vsel %vm5395, %v5535, 0
      %5906 = vmatprep.subr.bf16.mxu0 0
      %5907 = vmatpush1.bf16.msra.mxu0 0
      %5908 = vmatprep.subr.bf16.mxu0 0
      %5909 = vmatpush1.bf16.msra.mxu0 0
      %5910 = vmatprep.subr.bf16.mxu0 0
      %5911 = vmatpush1.bf16.msra.mxu0 0
      %5912 = vmatprep.subr.bf16.mxu0 0
      %5913 = vmatpush1.bf16.msra.mxu0 0
      %5914 = vmatprep.subr.bf16.mxu0 0
      %5915 = vmatpush1.bf16.msra.mxu0 %v5853
      %5916 = vmatprep.subr.bf16.mxu0 0
      %5917 = vmatpush1.bf16.msra.mxu0 %v5852
      %5918 = vmatprep.subr.bf16.mxu0 0
      %5919 = vmatpush1.bf16.msra.mxu0 %v5851
      %5920 = vmatprep.subr.bf16.mxu0 0
      %5921 = vmatpush1.bf16.msra.mxu0 %v5850
      %5922 = vmatprep.subr.bf16.mxu0 0
      %5923 = vmatpush2.bf16.msra.mxu0 0
      %5924 = vmatprep.subr.bf16.mxu0 0
      %5925 = vmatpush2.bf16.msra.mxu0 0
      %5926 = vmatprep.subr.bf16.mxu0 0
      %5927 = vmatpush2.bf16.msra.mxu0 0
      %5928 = vmatprep.subr.bf16.mxu0 0
      %5929 = vmatpush2.bf16.msra.mxu0 0
      %5930 = vmatprep.subr.bf16.mxu0 0
      %5931 = vmatpush2.bf16.msra.mxu0 0
      %5932 = vmatprep.subr.bf16.mxu0 0
      %5933 = vmatpush2.bf16.msra.mxu0 0
      %5934 = vmatprep.subr.bf16.mxu0 0
      %5935 = vmatpush2.bf16.msra.mxu0 0
      %5936 = vmatprep.subr.bf16.mxu0 0
      %5937 = vmatpush2.bf16.msra.mxu0 0
      %5938 = vmatprep.mubr.bf16.mxu0 0
      %5939 = vmatmul.mubr.bf16.gmra.mxu0 %v5859
      %v5940 = vpop.f32.mrf.mxu0
      %v5941 = vadd.f32 %v5708, %v5940
      %v5942 = vpop.f32.mrf.mxu0
      %v5943 = vpop.f32.mrf.mxu0
      %v5944 = vadd.f32 %v5711, %v5943
      %v5945 = vpop.f32.mrf.mxu0
      %5946 = vmatprep.mubr.bf16.mxu0 0
      %5947 = vmatmul.mubr.bf16.gmra.mxu0 %v5862
      %v5948 = vpop.f32.mrf.mxu0
      %v5949 = vadd.f32 %v5716, %v5948
      %v5950 = vpop.f32.mrf.mxu0
      %v5951 = vpop.f32.mrf.mxu0
      %v5952 = vadd.f32 %v5719, %v5951
      %v5953 = vpop.f32.mrf.mxu0
      %5954 = vmatprep.mubr.bf16.mxu0 0
      %5955 = vmatmul.mubr.bf16.gmra.mxu0 %v5865
      %v5956 = vpop.f32.mrf.mxu0
      %v5957 = vadd.f32 %v5724, %v5956
      %v5958 = vpop.f32.mrf.mxu0
      %v5959 = vpop.f32.mrf.mxu0
      %v5960 = vadd.f32 %v5727, %v5959
      %v5961 = vpop.f32.mrf.mxu0
      %5962 = vmatprep.mubr.bf16.mxu0 0
      %5963 = vmatmul.mubr.bf16.gmra.mxu0 %v5868
      %v5964 = vpop.f32.mrf.mxu0
      %v5965 = vadd.f32 %v5732, %v5964
      %v5966 = vpop.f32.mrf.mxu0
      %v5967 = vpop.f32.mrf.mxu0
      %v5968 = vadd.f32 %v5735, %v5967
      %v5969 = vpop.f32.mrf.mxu0
      %5970 = vmatprep.mubr.bf16.mxu0 0
      %5971 = vmatmul.mubr.bf16.gmra.mxu0 %v5871
      %v5972 = vpop.f32.mrf.mxu0
      %v5973 = vadd.f32 %v5740, %v5972
      %v5974 = vpop.f32.mrf.mxu0
      %v5975 = vpop.f32.mrf.mxu0
      %v5976 = vadd.f32 %v5743, %v5975
      %v5977 = vpop.f32.mrf.mxu0
      %5978 = vmatprep.mubr.bf16.mxu0 0
      %5979 = vmatmul.mubr.bf16.gmra.mxu0 %v5874
      %v5980 = vpop.f32.mrf.mxu0
      %v5981 = vadd.f32 %v5748, %v5980
      %v5982 = vpop.f32.mrf.mxu0
      %v5983 = vpop.f32.mrf.mxu0
      %v5984 = vadd.f32 %v5751, %v5983
      %v5985 = vpop.f32.mrf.mxu0
      %5986 = vmatprep.mubr.bf16.mxu0 0
      %5987 = vmatmul.mubr.bf16.gmra.mxu0 %v5877
      %v5988 = vpop.f32.mrf.mxu0
      %v5989 = vadd.f32 %v5756, %v5988
      %v5990 = vpop.f32.mrf.mxu0
      %v5991 = vpop.f32.mrf.mxu0
      %v5992 = vadd.f32 %v5759, %v5991
      %v5993 = vpop.f32.mrf.mxu0
      %5994 = vmatprep.mubr.bf16.mxu0 0
      %5995 = vmatmul.mubr.bf16.gmra.mxu0 %v5880
      %v5996 = vpop.f32.mrf.mxu0
      %v5997 = vadd.f32 %v5764, %v5996
      %v5998 = vpop.f32.mrf.mxu0
      %v5999 = vpop.f32.mrf.mxu0
      %v6000 = vadd.f32 %v5767, %v5999
      %v6001 = vpop.f32.mrf.mxu0
      %6002 = vmatprep.mubr.bf16.mxu0 0
      %6003 = vmatmul.mubr.bf16.gmra.mxu0 %v5883
      %v6004 = vpop.f32.mrf.mxu0
      %v6005 = vadd.f32 %v5772, %v6004
      %v6006 = vpop.f32.mrf.mxu0
      %v6007 = vpop.f32.mrf.mxu0
      %v6008 = vadd.f32 %v5775, %v6007
      %v6009 = vpop.f32.mrf.mxu0
      %6010 = vmatprep.mubr.bf16.mxu0 0
      %6011 = vmatmul.mubr.bf16.gmra.mxu0 %v5886
      %v6012 = vpop.f32.mrf.mxu0
      %v6013 = vadd.f32 %v5780, %v6012
      %v6014 = vpop.f32.mrf.mxu0
      %v6015 = vpop.f32.mrf.mxu0
      %v6016 = vadd.f32 %v5783, %v6015
      %v6017 = vpop.f32.mrf.mxu0
      %6018 = vmatprep.mubr.bf16.mxu0 0
      %6019 = vmatmul.mubr.bf16.gmra.mxu0 %v5889
      %v6020 = vpop.f32.mrf.mxu0
      %v6021 = vadd.f32 %v5788, %v6020
      %v6022 = vpop.f32.mrf.mxu0
      %v6023 = vpop.f32.mrf.mxu0
      %v6024 = vadd.f32 %v5791, %v6023
      %v6025 = vpop.f32.mrf.mxu0
      %6026 = vmatprep.mubr.bf16.mxu0 0
      %6027 = vmatmul.mubr.bf16.gmra.mxu0 %v5892
      %v6028 = vpop.f32.mrf.mxu0
      %v6029 = vadd.f32 %v5796, %v6028
      %v6030 = vpop.f32.mrf.mxu0
      %v6031 = vpop.f32.mrf.mxu0
      %v6032 = vadd.f32 %v5799, %v6031
      %v6033 = vpop.f32.mrf.mxu0
      %6034 = vmatprep.mubr.bf16.mxu0 0
      %6035 = vmatmul.mubr.bf16.gmra.mxu0 %v5895
      %v6036 = vpop.f32.mrf.mxu0
      %v6037 = vadd.f32 %v5804, %v6036
      %v6038 = vpop.f32.mrf.mxu0
      %v6039 = vpop.f32.mrf.mxu0
      %v6040 = vadd.f32 %v5807, %v6039
      %v6041 = vpop.f32.mrf.mxu0
      %6042 = vmatprep.mubr.bf16.mxu0 0
      %6043 = vmatmul.mubr.bf16.gmra.mxu0 %v5898
      %v6044 = vpop.f32.mrf.mxu0
      %v6045 = vadd.f32 %v5812, %v6044
      %v6046 = vpop.f32.mrf.mxu0
      %v6047 = vpop.f32.mrf.mxu0
      %v6048 = vadd.f32 %v5815, %v6047
      %v6049 = vpop.f32.mrf.mxu0
      %6050 = vmatprep.mubr.bf16.mxu0 0
      %6051 = vmatmul.mubr.bf16.gmra.mxu0 %v5901
      %v6052 = vpop.f32.mrf.mxu0
      %v6053 = vadd.f32 %v5820, %v6052
      %v6054 = vpop.f32.mrf.mxu0
      %v6055 = vpop.f32.mrf.mxu0
      %v6056 = vadd.f32 %v5823, %v6055
      %v6057 = vpop.f32.mrf.mxu0
      %6058 = vmatprep.mubr.bf16.mxu0 0
      %6059 = vmatmul.mubr.bf16.gmra.mxu0 %v5904
      %v6060 = vpop.f32.mrf.mxu0
      %v6061 = vadd.f32 %v5828, %v6060
      %v6062 = vpop.f32.mrf.mxu0
      %v6063 = vpop.f32.mrf.mxu0
      %v6064 = vadd.f32 %v5831, %v6063
      %v6065 = vpop.f32.mrf.mxu0
      %6066 = vdwg.mxu0
      %v6067 = vld [vmem:[#allocation3 + $0xe] sm:$0xff]
      %v6068 = vld [vmem:[#allocation3 + $0x16] sm:$0xff]
      %v6069 = vld [vmem:[#allocation3 + $0x1e] sm:$0xff]
      %v6070 = vld [vmem:[#allocation3 + $0x26] sm:$0xff]
      %v6071 = vld [vmem:[#allocation3 + $0x2e] sm:$0xff]
      %v6072 = vld [vmem:[#allocation3 + $0x36] sm:$0xff]
      %v6073 = vld [vmem:[#allocation3 + $0x3e] sm:$0xff]
      %v6074 = vld [vmem:[#allocation3 + $0x46] sm:$0xff]
      %v6075 = vld [vmem:[#allocation3 + $0x4e] sm:$0xff]
      %v6076 = vld [vmem:[#allocation3 + $0x56] sm:$0xff]
      %v6077 = vld [vmem:[#allocation3 + $0x5e] sm:$0xff]
      %v6078 = vld [vmem:[#allocation3 + $0x66] sm:$0xff]
      %v6079 = vld [vmem:[#allocation3 + $0x6e] sm:$0xff]
      %v6080 = vld [vmem:[#allocation3 + $0x76] sm:$0xff]
      %v6081 = vld [vmem:[#allocation3 + $0x7e] sm:$0xff]
      %v6082 = vld [vmem:[#allocation3 + $0x86] sm:$0xff]
      %v6083 = vld [vmem:[#allocation3 + $0x8e] sm:$0xff]
      %v6084 = vld [vmem:[#allocation3 + $0x96] sm:$0xff]
      %v6085 = vld [vmem:[#allocation3 + $0x9e] sm:$0xff]
      %v6086 = vld [vmem:[#allocation3 + $0xa6] sm:$0xff]
      %v6087 = vld [vmem:[#allocation3 + $0xae] sm:$0xff]
      %v6088 = vld [vmem:[#allocation3 + $0xb6] sm:$0xff]
      %v6089 = vld [vmem:[#allocation3 + $0xbe] sm:$0xff]
      %v6090 = vld [vmem:[#allocation3 + $0xc6] sm:$0xff]
      %v6091 = vld [vmem:[#allocation3 + $0xce] sm:$0xff]
      %v6092 = vld [vmem:[#allocation3 + $0xd6] sm:$0xff]
      %v6093 = vld [vmem:[#allocation3 + $0xde] sm:$0xff]
      %v6094 = vld [vmem:[#allocation3 + $0xe6] sm:$0xff]
      %v6095 = vld [vmem:[#allocation3 + $0xee] sm:$0xff]
      %v6096 = vld [vmem:[#allocation3 + $0xf6] sm:$0xff]
      %v6097 = vld [vmem:[#allocation3 + $0xfe] sm:$0xff]
      %v6098 = vld [vmem:[#allocation3 + $0x106] sm:$0x7]
      %v6099 = vpack.c.bf16 %v6068, %v6067
      %v6100 = vpack.c.bf16 %v6070, %v6069
      %v6101 = vpack.c.bf16 %v6072, %v6071
      %v6102 = vpack.c.bf16 %v6074, %v6073
      %v6103 = vpack.c.bf16 %v6076, %v6075
      %v6104 = vpack.c.bf16 %v6078, %v6077
      %v6105 = vpack.c.bf16 %v6080, %v6079
      %v6106 = vpack.c.bf16 %v6082, %v6081
      %v6107 = vpack.c.bf16 %v6084, %v6083
      %v6108 = vpack.c.bf16 %v6086, %v6085
      %v6109 = vpack.c.bf16 %v6088, %v6087
      %v6110 = vpack.c.bf16 %v6090, %v6089
      %v6111 = vpack.c.bf16 %v6092, %v6091
      %v6112 = vpack.c.bf16 %v6094, %v6093
      %v6113 = vpack.c.bf16 %v6096, %v6095
      %v6114 = vpack.c.bf16 %v6098, %v6097
      %s6115 = scalar_lea.vmem %s5, 64
      %v6116 = vld [vmem:[%s6115] sm:$0xf]
      %v6117 = vld [vmem:[%s6115 + $0x4] sm:$0xf]
      %v6118 = vld [vmem:[%s6115 + $0x8] sm:$0xf]
      %v6119 = vld [vmem:[%s6115 + $0xc] sm:$0xf]
      %v6120 = vld [vmem:[%s6115 + $0x10] sm:$0xf]
      %v6121 = vld [vmem:[%s6115 + $0x14] sm:$0xf]
      %v6122 = vld [vmem:[%s6115 + $0x18] sm:$0xf]
      %v6123 = vld [vmem:[%s6115 + $0x1c] sm:$0xf]
      %v6132 = vunpack.c.l.b16 %v6116
      %v6133 = vunpack.c.l.b16 %v6117
      %v6134 = vunpack.c.l.b16 %v6118
      %v6135 = vunpack.c.l.b16 %v6119
      %v6136 = vunpack.c.l.b16 %v6120
      %v6137 = vunpack.c.l.b16 %v6121
      %v6138 = vunpack.c.l.b16 %v6122
      %v6139 = vunpack.c.l.b16 %v6123
      %v6140 = vpack.c.b16 %v6133, %v6132
      %v6141 = vpack.c.b16 %v6135, %v6134
      %v6142 = vpack.c.b16 %v6137, %v6136
      %v6143 = vpack.c.b16 %v6139, %v6138
      %v6149 = vsel %vm5395, %v6099, 0
      %v6152 = vsel %vm5395, %v6100, 0
      %v6155 = vsel %vm5395, %v6101, 0
      %v6158 = vsel %vm5395, %v6102, 0
      %v6161 = vsel %vm5395, %v6103, 0
      %v6164 = vsel %vm5395, %v6104, 0
      %v6167 = vsel %vm5395, %v6105, 0
      %v6170 = vsel %vm5395, %v6106, 0
      %v6173 = vsel %vm5395, %v6107, 0
      %v6176 = vsel %vm5395, %v6108, 0
      %v6179 = vsel %vm5395, %v6109, 0
      %v6182 = vsel %vm5395, %v6110, 0
      %v6185 = vsel %vm5395, %v6111, 0
      %v6188 = vsel %vm5395, %v6112, 0
      %v6191 = vsel %vm5395, %v6113, 0
      %v6194 = vsel %vm5395, %v6114, 0
      %6196 = vmatprep.subr.bf16.mxu0 0
      %6197 = vmatpush1.bf16.msra.mxu0 0
      %6198 = vmatprep.subr.bf16.mxu0 0
      %6199 = vmatpush1.bf16.msra.mxu0 0
      %6200 = vmatprep.subr.bf16.mxu0 0
      %6201 = vmatpush1.bf16.msra.mxu0 0
      %6202 = vmatprep.subr.bf16.mxu0 0
      %6203 = vmatpush1.bf16.msra.mxu0 0
      %6204 = vmatprep.subr.bf16.mxu0 0
      %6205 = vmatpush1.bf16.msra.mxu0 %v6143
      %6206 = vmatprep.subr.bf16.mxu0 0
      %6207 = vmatpush1.bf16.msra.mxu0 %v6142
      %6208 = vmatprep.subr.bf16.mxu0 0
      %6209 = vmatpush1.bf16.msra.mxu0 %v6141
      %6210 = vmatprep.subr.bf16.mxu0 0
      %6211 = vmatpush1.bf16.msra.mxu0 %v6140
      %6212 = vmatprep.subr.bf16.mxu0 0
      %6213 = vmatpush2.bf16.msra.mxu0 0
      %6214 = vmatprep.subr.bf16.mxu0 0
      %6215 = vmatpush2.bf16.msra.mxu0 0
      %6216 = vmatprep.subr.bf16.mxu0 0
      %6217 = vmatpush2.bf16.msra.mxu0 0
      %6218 = vmatprep.subr.bf16.mxu0 0
      %6219 = vmatpush2.bf16.msra.mxu0 0
      %6220 = vmatprep.subr.bf16.mxu0 0
      %6221 = vmatpush2.bf16.msra.mxu0 0
      %6222 = vmatprep.subr.bf16.mxu0 0
      %6223 = vmatpush2.bf16.msra.mxu0 0
      %6224 = vmatprep.subr.bf16.mxu0 0
      %6225 = vmatpush2.bf16.msra.mxu0 0
      %6226 = vmatprep.subr.bf16.mxu0 0
      %6227 = vmatpush2.bf16.msra.mxu0 0
      %6228 = vmatprep.mubr.bf16.mxu0 0
      %6229 = vmatmul.mubr.bf16.gmra.mxu0 %v6149
      %v6230 = vpop.f32.mrf.mxu0
      %v6231 = vadd.f32 0.0, %v6230
      %v6232 = vpop.f32.mrf.mxu0
      %v6233 = vpop.f32.mrf.mxu0
      %v6234 = vadd.f32 0.0, %v6233
      %v6235 = vpop.f32.mrf.mxu0
      %6236 = vmatprep.mubr.bf16.mxu0 0
      %6237 = vmatmul.mubr.bf16.gmra.mxu0 %v6152
      %v6238 = vpop.f32.mrf.mxu0
      %v6239 = vadd.f32 0.0, %v6238
      %v6240 = vpop.f32.mrf.mxu0
      %v6241 = vpop.f32.mrf.mxu0
      %v6242 = vadd.f32 0.0, %v6241
      %v6243 = vpop.f32.mrf.mxu0
      %6244 = vmatprep.mubr.bf16.mxu0 0
      %6245 = vmatmul.mubr.bf16.gmra.mxu0 %v6155
      %v6246 = vpop.f32.mrf.mxu0
      %v6247 = vadd.f32 0.0, %v6246
      %v6248 = vpop.f32.mrf.mxu0
      %v6249 = vpop.f32.mrf.mxu0
      %v6250 = vadd.f32 0.0, %v6249
      %v6251 = vpop.f32.mrf.mxu0
      %6252 = vmatprep.mubr.bf16.mxu0 0
      %6253 = vmatmul.mubr.bf16.gmra.mxu0 %v6158
      %v6254 = vpop.f32.mrf.mxu0
      %v6255 = vadd.f32 0.0, %v6254
      %v6256 = vpop.f32.mrf.mxu0
      %v6257 = vpop.f32.mrf.mxu0
      %v6258 = vadd.f32 0.0, %v6257
      %v6259 = vpop.f32.mrf.mxu0
      %6260 = vmatprep.mubr.bf16.mxu0 0
      %6261 = vmatmul.mubr.bf16.gmra.mxu0 %v6161
      %v6262 = vpop.f32.mrf.mxu0
      %v6263 = vadd.f32 0.0, %v6262
      %v6264 = vpop.f32.mrf.mxu0
      %v6265 = vpop.f32.mrf.mxu0
      %v6266 = vadd.f32 0.0, %v6265
      %v6267 = vpop.f32.mrf.mxu0
      %6268 = vmatprep.mubr.bf16.mxu0 0
      %6269 = vmatmul.mubr.bf16.gmra.mxu0 %v6164
      %v6270 = vpop.f32.mrf.mxu0
      %v6271 = vadd.f32 0.0, %v6270
      %v6272 = vpop.f32.mrf.mxu0
      %v6273 = vpop.f32.mrf.mxu0
      %v6274 = vadd.f32 0.0, %v6273
      %v6275 = vpop.f32.mrf.mxu0
      %6276 = vmatprep.mubr.bf16.mxu0 0
      %6277 = vmatmul.mubr.bf16.gmra.mxu0 %v6167
      %v6278 = vpop.f32.mrf.mxu0
      %v6279 = vadd.f32 0.0, %v6278
      %v6280 = vpop.f32.mrf.mxu0
      %v6281 = vpop.f32.mrf.mxu0
      %v6282 = vadd.f32 0.0, %v6281
      %v6283 = vpop.f32.mrf.mxu0
      %6284 = vmatprep.mubr.bf16.mxu0 0
      %6285 = vmatmul.mubr.bf16.gmra.mxu0 %v6170
      %v6286 = vpop.f32.mrf.mxu0
      %v6287 = vadd.f32 0.0, %v6286
      %v6288 = vpop.f32.mrf.mxu0
      %v6289 = vpop.f32.mrf.mxu0
      %v6290 = vadd.f32 0.0, %v6289
      %v6291 = vpop.f32.mrf.mxu0
      %6292 = vmatprep.mubr.bf16.mxu0 0
      %6293 = vmatmul.mubr.bf16.gmra.mxu0 %v6173
      %v6294 = vpop.f32.mrf.mxu0
      %v6295 = vadd.f32 0.0, %v6294
      %v6296 = vpop.f32.mrf.mxu0
      %v6297 = vpop.f32.mrf.mxu0
      %v6298 = vadd.f32 0.0, %v6297
      %v6299 = vpop.f32.mrf.mxu0
      %6300 = vmatprep.mubr.bf16.mxu0 0
      %6301 = vmatmul.mubr.bf16.gmra.mxu0 %v6176
      %v6302 = vpop.f32.mrf.mxu0
      %v6303 = vadd.f32 0.0, %v6302
      %v6304 = vpop.f32.mrf.mxu0
      %v6305 = vpop.f32.mrf.mxu0
      %v6306 = vadd.f32 0.0, %v6305
      %v6307 = vpop.f32.mrf.mxu0
      %6308 = vmatprep.mubr.bf16.mxu0 0
      %6309 = vmatmul.mubr.bf16.gmra.mxu0 %v6179
      %v6310 = vpop.f32.mrf.mxu0
      %v6311 = vadd.f32 0.0, %v6310
      %v6312 = vpop.f32.mrf.mxu0
      %v6313 = vpop.f32.mrf.mxu0
      %v6314 = vadd.f32 0.0, %v6313
      %v6315 = vpop.f32.mrf.mxu0
      %6316 = vmatprep.mubr.bf16.mxu0 0
      %6317 = vmatmul.mubr.bf16.gmra.mxu0 %v6182
      %v6318 = vpop.f32.mrf.mxu0
      %v6319 = vadd.f32 0.0, %v6318
      %v6320 = vpop.f32.mrf.mxu0
      %v6321 = vpop.f32.mrf.mxu0
      %v6322 = vadd.f32 0.0, %v6321
      %v6323 = vpop.f32.mrf.mxu0
      %6324 = vmatprep.mubr.bf16.mxu0 0
      %6325 = vmatmul.mubr.bf16.gmra.mxu0 %v6185
      %v6326 = vpop.f32.mrf.mxu0
      %v6327 = vadd.f32 0.0, %v6326
      %v6328 = vpop.f32.mrf.mxu0
      %v6329 = vpop.f32.mrf.mxu0
      %v6330 = vadd.f32 0.0, %v6329
      %v6331 = vpop.f32.mrf.mxu0
      %6332 = vmatprep.mubr.bf16.mxu0 0
      %6333 = vmatmul.mubr.bf16.gmra.mxu0 %v6188
      %v6334 = vpop.f32.mrf.mxu0
      %v6335 = vadd.f32 0.0, %v6334
      %v6336 = vpop.f32.mrf.mxu0
      %v6337 = vpop.f32.mrf.mxu0
      %v6338 = vadd.f32 0.0, %v6337
      %v6339 = vpop.f32.mrf.mxu0
      %6340 = vmatprep.mubr.bf16.mxu0 0
      %6341 = vmatmul.mubr.bf16.gmra.mxu0 %v6191
      %v6342 = vpop.f32.mrf.mxu0
      %v6343 = vadd.f32 0.0, %v6342
      %v6344 = vpop.f32.mrf.mxu0
      %v6345 = vpop.f32.mrf.mxu0
      %v6346 = vadd.f32 0.0, %v6345
      %v6347 = vpop.f32.mrf.mxu0
      %6348 = vmatprep.mubr.bf16.mxu0 0
      %6349 = vmatmul.mubr.bf16.gmra.mxu0 %v6194
      %v6350 = vpop.f32.mrf.mxu0
      %v6351 = vadd.f32 0.0, %v6350
      %v6352 = vpop.f32.mrf.mxu0
      %v6353 = vpop.f32.mrf.mxu0
      %v6354 = vadd.f32 0.0, %v6353
      %v6355 = vpop.f32.mrf.mxu0
      %6356 = vdwg.mxu0
      %v6357 = vadd.f32 %v5941, %v6231
      %v6358 = vadd.f32 %v5944, %v6234
      %v6359 = vadd.f32 %v5949, %v6239
      %v6360 = vadd.f32 %v5952, %v6242
      %v6361 = vadd.f32 %v5957, %v6247
      %v6362 = vadd.f32 %v5960, %v6250
      %v6363 = vadd.f32 %v5965, %v6255
      %v6364 = vadd.f32 %v5968, %v6258
      %v6365 = vadd.f32 %v5973, %v6263
      %v6366 = vadd.f32 %v5976, %v6266
      %v6367 = vadd.f32 %v5981, %v6271
      %v6368 = vadd.f32 %v5984, %v6274
      %v6369 = vadd.f32 %v5989, %v6279
      %v6370 = vadd.f32 %v5992, %v6282
      %v6371 = vadd.f32 %v5997, %v6287
      %v6372 = vadd.f32 %v6000, %v6290
      %v6373 = vadd.f32 %v6005, %v6295
      %v6374 = vadd.f32 %v6008, %v6298
      %v6375 = vadd.f32 %v6013, %v6303
      %v6376 = vadd.f32 %v6016, %v6306
      %v6377 = vadd.f32 %v6021, %v6311
      %v6378 = vadd.f32 %v6024, %v6314
      %v6379 = vadd.f32 %v6029, %v6319
      %v6380 = vadd.f32 %v6032, %v6322
      %v6381 = vadd.f32 %v6037, %v6327
      %v6382 = vadd.f32 %v6040, %v6330
      %v6383 = vadd.f32 %v6045, %v6335
      %v6384 = vadd.f32 %v6048, %v6338
      %v6385 = vadd.f32 %v6053, %v6343
      %v6386 = vadd.f32 %v6056, %v6346
      %v6387 = vadd.f32 %v6061, %v6351
      %v6388 = vadd.f32 %v6064, %v6354
      %v6389 = vld [vmem:[#allocation3 + $0xf] sm:$0xff]
      %v6390 = vld [vmem:[#allocation3 + $0x17] sm:$0xff]
      %v6391 = vld [vmem:[#allocation3 + $0x1f] sm:$0xff]
      %v6392 = vld [vmem:[#allocation3 + $0x27] sm:$0xff]
      %v6393 = vld [vmem:[#allocation3 + $0x2f] sm:$0xff]
      %v6394 = vld [vmem:[#allocation3 + $0x37] sm:$0xff]
      %v6395 = vld [vmem:[#allocation3 + $0x3f] sm:$0xff]
      %v6396 = vld [vmem:[#allocation3 + $0x47] sm:$0xff]
      %v6397 = vld [vmem:[#allocation3 + $0x4f] sm:$0xff]
      %v6398 = vld [vmem:[#allocation3 + $0x57] sm:$0xff]
      %v6399 = vld [vmem:[#allocation3 + $0x5f] sm:$0xff]
      %v6400 = vld [vmem:[#allocation3 + $0x67] sm:$0xff]
      %v6401 = vld [vmem:[#allocation3 + $0x6f] sm:$0xff]
      %v6402 = vld [vmem:[#allocation3 + $0x77] sm:$0xff]
      %v6403 = vld [vmem:[#allocation3 + $0x7f] sm:$0xff]
      %v6404 = vld [vmem:[#allocation3 + $0x87] sm:$0xff]
      %v6405 = vld [vmem:[#allocation3 + $0x8f] sm:$0xff]
      %v6406 = vld [vmem:[#allocation3 + $0x97] sm:$0xff]
      %v6407 = vld [vmem:[#allocation3 + $0x9f] sm:$0xff]
      %v6408 = vld [vmem:[#allocation3 + $0xa7] sm:$0xff]
      %v6409 = vld [vmem:[#allocation3 + $0xaf] sm:$0xff]
      %v6410 = vld [vmem:[#allocation3 + $0xb7] sm:$0xff]
      %v6411 = vld [vmem:[#allocation3 + $0xbf] sm:$0xff]
      %v6412 = vld [vmem:[#allocation3 + $0xc7] sm:$0xff]
      %v6413 = vld [vmem:[#allocation3 + $0xcf] sm:$0xff]
      %v6414 = vld [vmem:[#allocation3 + $0xd7] sm:$0xff]
      %v6415 = vld [vmem:[#allocation3 + $0xdf] sm:$0xff]
      %v6416 = vld [vmem:[#allocation3 + $0xe7] sm:$0xff]
      %v6417 = vld [vmem:[#allocation3 + $0xef] sm:$0xff]
      %v6418 = vld [vmem:[#allocation3 + $0xf7] sm:$0xff]
      %v6419 = vld [vmem:[#allocation3 + $0xff] sm:$0xff]
      %v6420 = vld [vmem:[#allocation3 + $0x107] sm:$0x7]
      %v6421 = vpack.c.bf16 %v6390, %v6389
      %v6422 = vpack.c.bf16 %v6392, %v6391
      %v6423 = vpack.c.bf16 %v6394, %v6393
      %v6424 = vpack.c.bf16 %v6396, %v6395
      %v6425 = vpack.c.bf16 %v6398, %v6397
      %v6426 = vpack.c.bf16 %v6400, %v6399
      %v6427 = vpack.c.bf16 %v6402, %v6401
      %v6428 = vpack.c.bf16 %v6404, %v6403
      %v6429 = vpack.c.bf16 %v6406, %v6405
      %v6430 = vpack.c.bf16 %v6408, %v6407
      %v6431 = vpack.c.bf16 %v6410, %v6409
      %v6432 = vpack.c.bf16 %v6412, %v6411
      %v6433 = vpack.c.bf16 %v6414, %v6413
      %v6434 = vpack.c.bf16 %v6416, %v6415
      %v6435 = vpack.c.bf16 %v6418, %v6417
      %v6436 = vpack.c.bf16 %v6420, %v6419
      %s6437 = scalar_lea.vmem %s5, 96
      %v6438 = vld [vmem:[%s6437] sm:$0xf]
      %v6439 = vld [vmem:[%s6437 + $0x4] sm:$0xf]
      %v6440 = vld [vmem:[%s6437 + $0x8] sm:$0xf]
      %v6441 = vld [vmem:[%s6437 + $0xc] sm:$0xf]
      %v6442 = vld [vmem:[%s6437 + $0x10] sm:$0xf]
      %v6443 = vld [vmem:[%s6437 + $0x14] sm:$0xf]
      %v6444 = vld [vmem:[%s6437 + $0x18] sm:$0xf]
      %v6445 = vld [vmem:[%s6437 + $0x1c] sm:$0xf]
      %v6454 = vunpack.c.l.b16 %v6438
      %v6455 = vunpack.c.l.b16 %v6439
      %v6456 = vunpack.c.l.b16 %v6440
      %v6457 = vunpack.c.l.b16 %v6441
      %v6458 = vunpack.c.l.b16 %v6442
      %v6459 = vunpack.c.l.b16 %v6443
      %v6460 = vunpack.c.l.b16 %v6444
      %v6461 = vunpack.c.l.b16 %v6445
      %v6462 = vpack.c.b16 %v6455, %v6454
      %v6463 = vpack.c.b16 %v6457, %v6456
      %v6464 = vpack.c.b16 %v6459, %v6458
      %v6465 = vpack.c.b16 %v6461, %v6460
      %v6471 = vsel %vm5395, %v6421, 0
      %v6474 = vsel %vm5395, %v6422, 0
      %v6477 = vsel %vm5395, %v6423, 0
      %v6480 = vsel %vm5395, %v6424, 0
      %v6483 = vsel %vm5395, %v6425, 0
      %v6486 = vsel %vm5395, %v6426, 0
      %v6489 = vsel %vm5395, %v6427, 0
      %v6492 = vsel %vm5395, %v6428, 0
      %v6495 = vsel %vm5395, %v6429, 0
      %v6498 = vsel %vm5395, %v6430, 0
      %v6501 = vsel %vm5395, %v6431, 0
      %v6504 = vsel %vm5395, %v6432, 0
      %v6507 = vsel %vm5395, %v6433, 0
      %v6510 = vsel %vm5395, %v6434, 0
      %v6513 = vsel %vm5395, %v6435, 0
      %v6516 = vsel %vm5395, %v6436, 0
      %6518 = vmatprep.subr.bf16.mxu0 0
      %6519 = vmatpush1.bf16.msra.mxu0 0
      %6520 = vmatprep.subr.bf16.mxu0 0
      %6521 = vmatpush1.bf16.msra.mxu0 0
      %6522 = vmatprep.subr.bf16.mxu0 0
      %6523 = vmatpush1.bf16.msra.mxu0 0
      %6524 = vmatprep.subr.bf16.mxu0 0
      %6525 = vmatpush1.bf16.msra.mxu0 0
      %6526 = vmatprep.subr.bf16.mxu0 0
      %6527 = vmatpush1.bf16.msra.mxu0 %v6465
      %6528 = vmatprep.subr.bf16.mxu0 0
      %6529 = vmatpush1.bf16.msra.mxu0 %v6464
      %6530 = vmatprep.subr.bf16.mxu0 0
      %6531 = vmatpush1.bf16.msra.mxu0 %v6463
      %6532 = vmatprep.subr.bf16.mxu0 0
      %6533 = vmatpush1.bf16.msra.mxu0 %v6462
      %6534 = vmatprep.subr.bf16.mxu0 0
      %6535 = vmatpush2.bf16.msra.mxu0 0
      %6536 = vmatprep.subr.bf16.mxu0 0
      %6537 = vmatpush2.bf16.msra.mxu0 0
      %6538 = vmatprep.subr.bf16.mxu0 0
      %6539 = vmatpush2.bf16.msra.mxu0 0
      %6540 = vmatprep.subr.bf16.mxu0 0
      %6541 = vmatpush2.bf16.msra.mxu0 0
      %6542 = vmatprep.subr.bf16.mxu0 0
      %6543 = vmatpush2.bf16.msra.mxu0 0
      %6544 = vmatprep.subr.bf16.mxu0 0
      %6545 = vmatpush2.bf16.msra.mxu0 0
      %6546 = vmatprep.subr.bf16.mxu0 0
      %6547 = vmatpush2.bf16.msra.mxu0 0
      %6548 = vmatprep.subr.bf16.mxu0 0
      %6549 = vmatpush2.bf16.msra.mxu0 0
      %6550 = vmatprep.mubr.bf16.mxu0 0
      %6551 = vmatmul.mubr.bf16.gmra.mxu0 %v6471
      %v6552 = vpop.f32.mrf.mxu0
      %v6553 = vadd.f32 0.0, %v6552
      %v6554 = vpop.f32.mrf.mxu0
      %v6555 = vpop.f32.mrf.mxu0
      %v6556 = vadd.f32 0.0, %v6555
      %v6557 = vpop.f32.mrf.mxu0
      %6558 = vmatprep.mubr.bf16.mxu0 0
      %6559 = vmatmul.mubr.bf16.gmra.mxu0 %v6474
      %v6560 = vpop.f32.mrf.mxu0
      %v6561 = vadd.f32 0.0, %v6560
      %v6562 = vpop.f32.mrf.mxu0
      %v6563 = vpop.f32.mrf.mxu0
      %v6564 = vadd.f32 0.0, %v6563
      %v6565 = vpop.f32.mrf.mxu0
      %6566 = vmatprep.mubr.bf16.mxu0 0
      %6567 = vmatmul.mubr.bf16.gmra.mxu0 %v6477
      %v6568 = vpop.f32.mrf.mxu0
      %v6569 = vadd.f32 0.0, %v6568
      %v6570 = vpop.f32.mrf.mxu0
      %v6571 = vpop.f32.mrf.mxu0
      %v6572 = vadd.f32 0.0, %v6571
      %v6573 = vpop.f32.mrf.mxu0
      %6574 = vmatprep.mubr.bf16.mxu0 0
      %6575 = vmatmul.mubr.bf16.gmra.mxu0 %v6480
      %v6576 = vpop.f32.mrf.mxu0
      %v6577 = vadd.f32 0.0, %v6576
      %v6578 = vpop.f32.mrf.mxu0
      %v6579 = vpop.f32.mrf.mxu0
      %v6580 = vadd.f32 0.0, %v6579
      %v6581 = vpop.f32.mrf.mxu0
      %6582 = vmatprep.mubr.bf16.mxu0 0
      %6583 = vmatmul.mubr.bf16.gmra.mxu0 %v6483
      %v6584 = vpop.f32.mrf.mxu0
      %v6585 = vadd.f32 0.0, %v6584
      %v6586 = vpop.f32.mrf.mxu0
      %v6587 = vpop.f32.mrf.mxu0
      %v6588 = vadd.f32 0.0, %v6587
      %v6589 = vpop.f32.mrf.mxu0
      %6590 = vmatprep.mubr.bf16.mxu0 0
      %6591 = vmatmul.mubr.bf16.gmra.mxu0 %v6486
      %v6592 = vpop.f32.mrf.mxu0
      %v6593 = vadd.f32 0.0, %v6592
      %v6594 = vpop.f32.mrf.mxu0
      %v6595 = vpop.f32.mrf.mxu0
      %v6596 = vadd.f32 0.0, %v6595
      %v6597 = vpop.f32.mrf.mxu0
      %6598 = vmatprep.mubr.bf16.mxu0 0
      %6599 = vmatmul.mubr.bf16.gmra.mxu0 %v6489
      %v6600 = vpop.f32.mrf.mxu0
      %v6601 = vadd.f32 0.0, %v6600
      %v6602 = vpop.f32.mrf.mxu0
      %v6603 = vpop.f32.mrf.mxu0
      %v6604 = vadd.f32 0.0, %v6603
      %v6605 = vpop.f32.mrf.mxu0
      %6606 = vmatprep.mubr.bf16.mxu0 0
      %6607 = vmatmul.mubr.bf16.gmra.mxu0 %v6492
      %v6608 = vpop.f32.mrf.mxu0
      %v6609 = vadd.f32 0.0, %v6608
      %v6610 = vpop.f32.mrf.mxu0
      %v6611 = vpop.f32.mrf.mxu0
      %v6612 = vadd.f32 0.0, %v6611
      %v6613 = vpop.f32.mrf.mxu0
      %6614 = vmatprep.mubr.bf16.mxu0 0
      %6615 = vmatmul.mubr.bf16.gmra.mxu0 %v6495
      %v6616 = vpop.f32.mrf.mxu0
      %v6617 = vadd.f32 0.0, %v6616
      %v6618 = vpop.f32.mrf.mxu0
      %v6619 = vpop.f32.mrf.mxu0
      %v6620 = vadd.f32 0.0, %v6619
      %v6621 = vpop.f32.mrf.mxu0
      %6622 = vmatprep.mubr.bf16.mxu0 0
      %6623 = vmatmul.mubr.bf16.gmra.mxu0 %v6498
      %v6624 = vpop.f32.mrf.mxu0
      %v6625 = vadd.f32 0.0, %v6624
      %v6626 = vpop.f32.mrf.mxu0
      %v6627 = vpop.f32.mrf.mxu0
      %v6628 = vadd.f32 0.0, %v6627
      %v6629 = vpop.f32.mrf.mxu0
      %6630 = vmatprep.mubr.bf16.mxu0 0
      %6631 = vmatmul.mubr.bf16.gmra.mxu0 %v6501
      %v6632 = vpop.f32.mrf.mxu0
      %v6633 = vadd.f32 0.0, %v6632
      %v6634 = vpop.f32.mrf.mxu0
      %v6635 = vpop.f32.mrf.mxu0
      %v6636 = vadd.f32 0.0, %v6635
      %v6637 = vpop.f32.mrf.mxu0
      %6638 = vmatprep.mubr.bf16.mxu0 0
      %6639 = vmatmul.mubr.bf16.gmra.mxu0 %v6504
      %v6640 = vpop.f32.mrf.mxu0
      %v6641 = vadd.f32 0.0, %v6640
      %v6642 = vpop.f32.mrf.mxu0
      %v6643 = vpop.f32.mrf.mxu0
      %v6644 = vadd.f32 0.0, %v6643
      %v6645 = vpop.f32.mrf.mxu0
      %6646 = vmatprep.mubr.bf16.mxu0 0
      %6647 = vmatmul.mubr.bf16.gmra.mxu0 %v6507
      %v6648 = vpop.f32.mrf.mxu0
      %v6649 = vadd.f32 0.0, %v6648
      %v6650 = vpop.f32.mrf.mxu0
      %v6651 = vpop.f32.mrf.mxu0
      %v6652 = vadd.f32 0.0, %v6651
      %v6653 = vpop.f32.mrf.mxu0
      %6654 = vmatprep.mubr.bf16.mxu0 0
      %6655 = vmatmul.mubr.bf16.gmra.mxu0 %v6510
      %v6656 = vpop.f32.mrf.mxu0
      %v6657 = vadd.f32 0.0, %v6656
      %v6658 = vpop.f32.mrf.mxu0
      %v6659 = vpop.f32.mrf.mxu0
      %v6660 = vadd.f32 0.0, %v6659
      %v6661 = vpop.f32.mrf.mxu0
      %6662 = vmatprep.mubr.bf16.mxu0 0
      %6663 = vmatmul.mubr.bf16.gmra.mxu0 %v6513
      %v6664 = vpop.f32.mrf.mxu0
      %v6665 = vadd.f32 0.0, %v6664
      %v6666 = vpop.f32.mrf.mxu0
      %v6667 = vpop.f32.mrf.mxu0
      %v6668 = vadd.f32 0.0, %v6667
      %v6669 = vpop.f32.mrf.mxu0
      %6670 = vmatprep.mubr.bf16.mxu0 0
      %6671 = vmatmul.mubr.bf16.gmra.mxu0 %v6516
      %v6672 = vpop.f32.mrf.mxu0
      %v6673 = vadd.f32 0.0, %v6672
      %v6674 = vpop.f32.mrf.mxu0
      %v6675 = vpop.f32.mrf.mxu0
      %v6676 = vadd.f32 0.0, %v6675
      %v6677 = vpop.f32.mrf.mxu0
      %6678 = vdwg.mxu0
      %v6679 = vadd.f32 %v6357, %v6553
      %v6680 = vadd.f32 %v6358, %v6556
      %v6681 = vadd.f32 %v6359, %v6561
      %v6682 = vadd.f32 %v6360, %v6564
      %v6683 = vadd.f32 %v6361, %v6569
      %v6684 = vadd.f32 %v6362, %v6572
      %v6685 = vadd.f32 %v6363, %v6577
      %v6686 = vadd.f32 %v6364, %v6580
      %v6687 = vadd.f32 %v6365, %v6585
      %v6688 = vadd.f32 %v6366, %v6588
      %v6689 = vadd.f32 %v6367, %v6593
      %v6690 = vadd.f32 %v6368, %v6596
      %v6691 = vadd.f32 %v6369, %v6601
      %v6692 = vadd.f32 %v6370, %v6604
      %v6693 = vadd.f32 %v6371, %v6609
      %v6694 = vadd.f32 %v6372, %v6612
      %v6695 = vadd.f32 %v6373, %v6617
      %v6696 = vadd.f32 %v6374, %v6620
      %v6697 = vadd.f32 %v6375, %v6625
      %v6698 = vadd.f32 %v6376, %v6628
      %v6699 = vadd.f32 %v6377, %v6633
      %v6700 = vadd.f32 %v6378, %v6636
      %v6701 = vadd.f32 %v6379, %v6641
      %v6702 = vadd.f32 %v6380, %v6644
      %v6703 = vadd.f32 %v6381, %v6649
      %v6704 = vadd.f32 %v6382, %v6652
      %v6705 = vadd.f32 %v6383, %v6657
      %v6706 = vadd.f32 %v6384, %v6660
      %v6707 = vadd.f32 %v6385, %v6665
      %v6708 = vadd.f32 %v6386, %v6668
      %v6709 = vadd.f32 %v6387, %v6673
      %v6710 = vadd.f32 %v6388, %v6676
      %v6711 = vld [vmem:[%s6] sm:$0x1]
      %v6713 = vlaneseq
      %v6714 = vshrl.u32 %v6713, 7
      %v6715 = vsub.s32 0, %v6714
      %v6716 = vrot.slane %v6711, %v6715
      %v6718 = vadd.f32 %v6679, %v6716
      %v6719 = vadd.f32 %v6680, %v6716
      %v6720 = vadd.f32 %v6681, %v6716
      %v6721 = vadd.f32 %v6682, %v6716
      %v6722 = vadd.f32 %v6683, %v6716
      %v6723 = vadd.f32 %v6684, %v6716
      %v6724 = vadd.f32 %v6685, %v6716
      %v6725 = vadd.f32 %v6686, %v6716
      %v6726 = vadd.f32 %v6687, %v6716
      %v6727 = vadd.f32 %v6688, %v6716
      %v6728 = vadd.f32 %v6689, %v6716
      %v6729 = vadd.f32 %v6690, %v6716
      %v6730 = vadd.f32 %v6691, %v6716
      %v6731 = vadd.f32 %v6692, %v6716
      %v6732 = vadd.f32 %v6693, %v6716
      %v6733 = vadd.f32 %v6694, %v6716
      %v6734 = vadd.f32 %v6695, %v6716
      %v6735 = vadd.f32 %v6696, %v6716
      %v6736 = vadd.f32 %v6697, %v6716
      %v6737 = vadd.f32 %v6698, %v6716
      %v6738 = vadd.f32 %v6699, %v6716
      %v6739 = vadd.f32 %v6700, %v6716
      %v6740 = vadd.f32 %v6701, %v6716
      %v6741 = vadd.f32 %v6702, %v6716
      %v6742 = vadd.f32 %v6703, %v6716
      %v6743 = vadd.f32 %v6704, %v6716
      %v6744 = vadd.f32 %v6705, %v6716
      %v6745 = vadd.f32 %v6706, %v6716
      %v6746 = vadd.f32 %v6707, %v6716
      %v6747 = vadd.f32 %v6708, %v6716
      %v6748 = vadd.f32 %v6709, %v6716
      %v6749 = vadd.f32 %v6710, %v6716
      %v6750 = vmax.f32 %v6718, 0.0
      %v6751 = vmax.f32 %v6719, 0.0
      %v6752 = vmax.f32 %v6720, 0.0
      %v6753 = vmax.f32 %v6721, 0.0
      %v6754 = vmax.f32 %v6722, 0.0
      %v6755 = vmax.f32 %v6723, 0.0
      %v6756 = vmax.f32 %v6724, 0.0
      %v6757 = vmax.f32 %v6725, 0.0
      %v6758 = vmax.f32 %v6726, 0.0
      %v6759 = vmax.f32 %v6727, 0.0
      %v6760 = vmax.f32 %v6728, 0.0
      %v6761 = vmax.f32 %v6729, 0.0
      %v6762 = vmax.f32 %v6730, 0.0
      %v6763 = vmax.f32 %v6731, 0.0
      %v6764 = vmax.f32 %v6732, 0.0
      %v6765 = vmax.f32 %v6733, 0.0
      %v6766 = vmax.f32 %v6734, 0.0
      %v6767 = vmax.f32 %v6735, 0.0
      %v6768 = vmax.f32 %v6736, 0.0
      %v6769 = vmax.f32 %v6737, 0.0
      %v6770 = vmax.f32 %v6738, 0.0
      %v6771 = vmax.f32 %v6739, 0.0
      %v6772 = vmax.f32 %v6740, 0.0
      %v6773 = vmax.f32 %v6741, 0.0
      %v6774 = vmax.f32 %v6742, 0.0
      %v6775 = vmax.f32 %v6743, 0.0
      %v6776 = vmax.f32 %v6744, 0.0
      %v6777 = vmax.f32 %v6745, 0.0
      %v6778 = vmax.f32 %v6746, 0.0
      %v6779 = vmax.f32 %v6747, 0.0
      %v6780 = vmax.f32 %v6748, 0.0
      %v6781 = vmax.f32 %v6749, 0.0
      %v6782 = vld [vmem:[%s11] sm:$0xff]
      %v6783 = vld [vmem:[%s11 + $0x8] sm:$0xff]
      %v6784 = vld [vmem:[%s11 + $0x10] sm:$0xff]
      %v6785 = vld [vmem:[%s11 + $0x18] sm:$0xff]
      %v6786 = vld [vmem:[%s11 + $0x20] sm:$0xff]
      %v6787 = vld [vmem:[%s11 + $0x28] sm:$0xff]
      %v6788 = vld [vmem:[%s11 + $0x30] sm:$0xff]
      %v6789 = vld [vmem:[%s11 + $0x38] sm:$0xff]
      %v6790 = vld [vmem:[%s11 + $0x40] sm:$0xff]
      %v6791 = vld [vmem:[%s11 + $0x48] sm:$0xff]
      %v6792 = vld [vmem:[%s11 + $0x50] sm:$0xff]
      %v6793 = vld [vmem:[%s11 + $0x58] sm:$0xff]
      %v6794 = vld [vmem:[%s11 + $0x60] sm:$0xff]
      %v6795 = vld [vmem:[%s11 + $0x68] sm:$0xff]
      %v6796 = vld [vmem:[%s11 + $0x70] sm:$0xff]
      %v6797 = vld [vmem:[%s11 + $0x78] sm:$0xff]
      %v6798 = vld [vmem:[%s11 + $0x80] sm:$0xff]
      %v6799 = vld [vmem:[%s11 + $0x88] sm:$0xff]
      %v6800 = vld [vmem:[%s11 + $0x90] sm:$0xff]
      %v6801 = vld [vmem:[%s11 + $0x98] sm:$0xff]
      %v6802 = vld [vmem:[%s11 + $0xa0] sm:$0xff]
      %v6803 = vld [vmem:[%s11 + $0xa8] sm:$0xff]
      %v6804 = vld [vmem:[%s11 + $0xb0] sm:$0xff]
      %v6805 = vld [vmem:[%s11 + $0xb8] sm:$0xff]
      %v6806 = vld [vmem:[%s11 + $0xc0] sm:$0xff]
      %v6807 = vld [vmem:[%s11 + $0xc8] sm:$0xff]
      %v6808 = vld [vmem:[%s11 + $0xd0] sm:$0xff]
      %v6809 = vld [vmem:[%s11 + $0xd8] sm:$0xff]
      %v6810 = vld [vmem:[%s11 + $0xe0] sm:$0xff]
      %v6811 = vld [vmem:[%s11 + $0xe8] sm:$0xff]
      %v6812 = vld [vmem:[%s11 + $0xf0] sm:$0xff]
      %v6813 = vld [vmem:[%s11 + $0xf8] sm:$0x7]
      %6815 = vset.pattern.permute.xlu0 0
      %6816 = vperm.xlu0 %6815, %v6782
      %v6817 = vpop.permute.xlu0 %6816
      %6820 = vset.pattern.permute.xlu0 0
      %6821 = vperm.xlu0 %6820, %v6783
      %v6822 = vpop.permute.xlu0 %6821
      %6825 = vset.pattern.permute.xlu0 0
      %6826 = vperm.xlu0 %6825, %v6784
      %v6827 = vpop.permute.xlu0 %6826
      %6830 = vset.pattern.permute.xlu0 0
      %6831 = vperm.xlu0 %6830, %v6785
      %v6832 = vpop.permute.xlu0 %6831
      %6835 = vset.pattern.permute.xlu0 0
      %6836 = vperm.xlu0 %6835, %v6786
      %v6837 = vpop.permute.xlu0 %6836
      %6840 = vset.pattern.permute.xlu0 0
      %6841 = vperm.xlu0 %6840, %v6787
      %v6842 = vpop.permute.xlu0 %6841
      %6845 = vset.pattern.permute.xlu0 0
      %6846 = vperm.xlu0 %6845, %v6788
      %v6847 = vpop.permute.xlu0 %6846
      %6850 = vset.pattern.permute.xlu0 0
      %6851 = vperm.xlu0 %6850, %v6789
      %v6852 = vpop.permute.xlu0 %6851
      %6855 = vset.pattern.permute.xlu0 0
      %6856 = vperm.xlu0 %6855, %v6790
      %v6857 = vpop.permute.xlu0 %6856
      %6860 = vset.pattern.permute.xlu0 0
      %6861 = vperm.xlu0 %6860, %v6791
      %v6862 = vpop.permute.xlu0 %6861
      %6865 = vset.pattern.permute.xlu0 0
      %6866 = vperm.xlu0 %6865, %v6792
      %v6867 = vpop.permute.xlu0 %6866
      %6870 = vset.pattern.permute.xlu0 0
      %6871 = vperm.xlu0 %6870, %v6793
      %v6872 = vpop.permute.xlu0 %6871
      %6875 = vset.pattern.permute.xlu0 0
      %6876 = vperm.xlu0 %6875, %v6794
      %v6877 = vpop.permute.xlu0 %6876
      %6880 = vset.pattern.permute.xlu0 0
      %6881 = vperm.xlu0 %6880, %v6795
      %v6882 = vpop.permute.xlu0 %6881
      %6885 = vset.pattern.permute.xlu0 0
      %6886 = vperm.xlu0 %6885, %v6796
      %v6887 = vpop.permute.xlu0 %6886
      %6890 = vset.pattern.permute.xlu0 0
      %6891 = vperm.xlu0 %6890, %v6797
      %v6892 = vpop.permute.xlu0 %6891
      %6895 = vset.pattern.permute.xlu0 0
      %6896 = vperm.xlu0 %6895, %v6798
      %v6897 = vpop.permute.xlu0 %6896
      %6900 = vset.pattern.permute.xlu0 0
      %6901 = vperm.xlu0 %6900, %v6799
      %v6902 = vpop.permute.xlu0 %6901
      %6905 = vset.pattern.permute.xlu0 0
      %6906 = vperm.xlu0 %6905, %v6800
      %v6907 = vpop.permute.xlu0 %6906
      %6910 = vset.pattern.permute.xlu0 0
      %6911 = vperm.xlu0 %6910, %v6801
      %v6912 = vpop.permute.xlu0 %6911
      %6915 = vset.pattern.permute.xlu0 0
      %6916 = vperm.xlu0 %6915, %v6802
      %v6917 = vpop.permute.xlu0 %6916
      %6920 = vset.pattern.permute.xlu0 0
      %6921 = vperm.xlu0 %6920, %v6803
      %v6922 = vpop.permute.xlu0 %6921
      %6925 = vset.pattern.permute.xlu0 0
      %6926 = vperm.xlu0 %6925, %v6804
      %v6927 = vpop.permute.xlu0 %6926
      %6930 = vset.pattern.permute.xlu0 0
      %6931 = vperm.xlu0 %6930, %v6805
      %v6932 = vpop.permute.xlu0 %6931
      %6935 = vset.pattern.permute.xlu0 0
      %6936 = vperm.xlu0 %6935, %v6806
      %v6937 = vpop.permute.xlu0 %6936
      %6940 = vset.pattern.permute.xlu0 0
      %6941 = vperm.xlu0 %6940, %v6807
      %v6942 = vpop.permute.xlu0 %6941
      %6945 = vset.pattern.permute.xlu0 0
      %6946 = vperm.xlu0 %6945, %v6808
      %v6947 = vpop.permute.xlu0 %6946
      %6950 = vset.pattern.permute.xlu0 0
      %6951 = vperm.xlu0 %6950, %v6809
      %v6952 = vpop.permute.xlu0 %6951
      %6955 = vset.pattern.permute.xlu0 0
      %6956 = vperm.xlu0 %6955, %v6810
      %v6957 = vpop.permute.xlu0 %6956
      %6960 = vset.pattern.permute.xlu0 0
      %6961 = vperm.xlu0 %6960, %v6811
      %v6962 = vpop.permute.xlu0 %6961
      %6965 = vset.pattern.permute.xlu0 0
      %6966 = vperm.xlu0 %6965, %v6812
      %v6967 = vpop.permute.xlu0 %6966
      %6970 = vset.pattern.permute.xlu0 0
      %6971 = vperm.xlu0 %6970, %v6813
      %v6972 = vpop.permute.xlu0 %6971
      %v6974 = vmul.f32 %v6750, %v6817
      %v6975 = vmul.f32 %v6751, %v6822
      %v6976 = vmul.f32 %v6752, %v6827
      %v6977 = vmul.f32 %v6753, %v6832
      %v6978 = vmul.f32 %v6754, %v6837
      %v6979 = vmul.f32 %v6755, %v6842
      %v6980 = vmul.f32 %v6756, %v6847
      %v6981 = vmul.f32 %v6757, %v6852
      %v6982 = vmul.f32 %v6758, %v6857
      %v6983 = vmul.f32 %v6759, %v6862
      %v6984 = vmul.f32 %v6760, %v6867
      %v6985 = vmul.f32 %v6761, %v6872
      %v6986 = vmul.f32 %v6762, %v6877
      %v6987 = vmul.f32 %v6763, %v6882
      %v6988 = vmul.f32 %v6764, %v6887
      %v6989 = vmul.f32 %v6765, %v6892
      %v6990 = vmul.f32 %v6766, %v6897
      %v6991 = vmul.f32 %v6767, %v6902
      %v6992 = vmul.f32 %v6768, %v6907
      %v6993 = vmul.f32 %v6769, %v6912
      %v6994 = vmul.f32 %v6770, %v6917
      %v6995 = vmul.f32 %v6771, %v6922
      %v6996 = vmul.f32 %v6772, %v6927
      %v6997 = vmul.f32 %v6773, %v6932
      %v6998 = vmul.f32 %v6774, %v6937
      %v6999 = vmul.f32 %v6775, %v6942
      %v7000 = vmul.f32 %v6776, %v6947
      %v7001 = vmul.f32 %v6777, %v6952
      %v7002 = vmul.f32 %v6778, %v6957
      %v7003 = vmul.f32 %v6779, %v6962
      %v7004 = vmul.f32 %v6780, %v6967
      %v7005 = vmul.f32 %v6781, %v6972
      %v7006 = vadd.f32 %v6974, %v6975
      %v7007 = vadd.f32 %v7006, %v6976
      %v7008 = vadd.f32 %v7007, %v6977
      %v7009 = vadd.f32 %v7008, %v6978
      %v7010 = vadd.f32 %v7009, %v6979
      %v7011 = vadd.f32 %v7010, %v6980
      %v7012 = vadd.f32 %v7011, %v6981
      %v7013 = vadd.f32 %v7012, %v6982
      %v7014 = vadd.f32 %v7013, %v6983
      %v7015 = vadd.f32 %v7014, %v6984
      %v7016 = vadd.f32 %v7015, %v6985
      %v7017 = vadd.f32 %v7016, %v6986
      %v7018 = vadd.f32 %v7017, %v6987
      %v7019 = vadd.f32 %v7018, %v6988
      %v7020 = vadd.f32 %v7019, %v6989
      %v7021 = vadd.f32 %v7020, %v6990
      %v7022 = vadd.f32 %v7021, %v6991
      %v7023 = vadd.f32 %v7022, %v6992
      %v7024 = vadd.f32 %v7023, %v6993
      %v7025 = vadd.f32 %v7024, %v6994
      %v7026 = vadd.f32 %v7025, %v6995
      %v7027 = vadd.f32 %v7026, %v6996
      %v7028 = vadd.f32 %v7027, %v6997
      %v7029 = vadd.f32 %v7028, %v6998
      %v7030 = vadd.f32 %v7029, %v6999
      %v7031 = vadd.f32 %v7030, %v7000
      %v7032 = vadd.f32 %v7031, %v7001
      %v7033 = vadd.f32 %v7032, %v7002
      %v7034 = vadd.f32 %v7033, %v7003
      %v7035 = vadd.f32 %v7034, %v7004
      %vm7036 = vcmask 1042432
      %v7037 = vsel %vm7036, %v7005, 0.0
      %v7038 = vadd.f32 %v7035, %v7037
      %v7039 = vrot.slane %v7038, 4
      %v7040 = vadd.f32 %v7038, %v7039
      %v7041 = vrot.slane %v7040, 2
      %v7042 = vadd.f32 %v7040, %v7041
      %v7043 = vrot.slane %v7042, 1
      %v7044 = vadd.f32 %v7042, %v7043
      %v7045 = vmul.f32 %v7044, 0.0042735045
      %v7046 = vld [vmem:[%s7] sm:$0xff]
      %v7047 = vld [vmem:[%s7 + $0x8] sm:$0xff]
      %v7048 = vld [vmem:[%s7 + $0x10] sm:$0xff]
      %v7049 = vld [vmem:[%s7 + $0x18] sm:$0xff]
      %v7050 = vld [vmem:[%s7 + $0x20] sm:$0xff]
      %v7051 = vld [vmem:[%s7 + $0x28] sm:$0xff]
      %v7052 = vld [vmem:[%s7 + $0x30] sm:$0xff]
      %v7053 = vld [vmem:[%s7 + $0x38] sm:$0xff]
      %v7054 = vld [vmem:[%s7 + $0x40] sm:$0xff]
      %v7055 = vld [vmem:[%s7 + $0x48] sm:$0xff]
      %v7056 = vld [vmem:[%s7 + $0x50] sm:$0xff]
      %v7057 = vld [vmem:[%s7 + $0x58] sm:$0xff]
      %v7058 = vld [vmem:[%s7 + $0x60] sm:$0xff]
      %v7059 = vld [vmem:[%s7 + $0x68] sm:$0xff]
      %v7060 = vld [vmem:[%s7 + $0x70] sm:$0xff]
      %v7061 = vld [vmem:[%s7 + $0x78] sm:$0xff]
      %v7062 = vld [vmem:[%s8] sm:$0x1]
      %7063 = vmatprep.subr.mxu0 0.0
      %7064 = vmatpush1.msra.mxu0 %v7061
      %7065 = vmatprep.subr.mxu0 0.0
      %7066 = vmatpush1.msra.mxu0 %v7060
      %7067 = vmatprep.subr.mxu0 0.0
      %7068 = vmatpush1.msra.mxu0 %v7059
      %7069 = vmatprep.subr.mxu0 0.0
      %7070 = vmatpush1.msra.mxu0 %v7058
      %7071 = vmatprep.subr.mxu0 0.0
      %7072 = vmatpush1.msra.mxu0 %v7057
      %7073 = vmatprep.subr.mxu0 0.0
      %7074 = vmatpush1.msra.mxu0 %v7056
      %7075 = vmatprep.subr.mxu0 0.0
      %7076 = vmatpush1.msra.mxu0 %v7055
      %7077 = vmatprep.subr.mxu0 0.0
      %7078 = vmatpush1.msra.mxu0 %v7054
      %7079 = vmatprep.subr.mxu0 0.0
      %7080 = vmatpush1.msra.mxu0 %v7053
      %7081 = vmatprep.subr.mxu0 0.0
      %7082 = vmatpush1.msra.mxu0 %v7052
      %7083 = vmatprep.subr.mxu0 0.0
      %7084 = vmatpush1.msra.mxu0 %v7051
      %7085 = vmatprep.subr.mxu0 0.0
      %7086 = vmatpush1.msra.mxu0 %v7050
      %7087 = vmatprep.subr.mxu0 0.0
      %7088 = vmatpush1.msra.mxu0 %v7049
      %7089 = vmatprep.subr.mxu0 0.0
      %7090 = vmatpush1.msra.mxu0 %v7048
      %7091 = vmatprep.subr.mxu0 0.0
      %7092 = vmatpush1.msra.mxu0 %v7047
      %7093 = vmatprep.subr.mxu0 0.0
      %7094 = vmatpush1.msra.mxu0 %v7046
      %7095 = vmatprep.subr.mxu0 0.0
      %7096 = vmatpush2.msra.mxu0 0.0
      %7097 = vmatprep.subr.mxu0 0.0
      %7098 = vmatpush2.msra.mxu0 0.0
      %7099 = vmatprep.subr.mxu0 0.0
      %7100 = vmatpush2.msra.mxu0 0.0
      %7101 = vmatprep.subr.mxu0 0.0
      %7102 = vmatpush2.msra.mxu0 0.0
      %7103 = vmatprep.subr.mxu0 0.0
      %7104 = vmatpush2.msra.mxu0 0.0
      %7105 = vmatprep.subr.mxu0 0.0
      %7106 = vmatpush2.msra.mxu0 0.0
      %7107 = vmatprep.subr.mxu0 0.0
      %7108 = vmatpush2.msra.mxu0 0.0
      %7109 = vmatprep.subr.mxu0 0.0
      %7110 = vmatpush2.msra.mxu0 0.0
      %7111 = vmatprep.subr.mxu0 0.0
      %7112 = vmatpush2.msra.mxu0 0.0
      %7113 = vmatprep.subr.mxu0 0.0
      %7114 = vmatpush2.msra.mxu0 0.0
      %7115 = vmatprep.subr.mxu0 0.0
      %7116 = vmatpush2.msra.mxu0 0.0
      %7117 = vmatprep.subr.mxu0 0.0
      %7118 = vmatpush2.msra.mxu0 0.0
      %7119 = vmatprep.subr.mxu0 0.0
      %7120 = vmatpush2.msra.mxu0 0.0
      %7121 = vmatprep.subr.mxu0 0.0
      %7122 = vmatpush2.msra.mxu0 0.0
      %7123 = vmatprep.subr.mxu0 0.0
      %7124 = vmatpush2.msra.mxu0 0.0
      %7125 = vmatprep.subr.mxu0 0.0
      %7126 = vmatpush2.msra.mxu0 0.0
      %7127 = vmatprep.mubr.f32.mxu0 0.0
      %7128 = vmatmul.mubr.f32.gmra.mxu0 %v7045
      %v7129 = vpop.f32.mrf.mxu0
      %v7130 = vadd.f32 %v7062, %v7129
      %v7131 = vpop.f32.mrf.mxu0
      %7132 = vdwg.mxu0
      %v7133 = vmax.f32 %v7130, 0.0
      %v7134 = vld [vmem:[%s9] sm:$0xff]
      %v7135 = vld [vmem:[%s9 + $0x8] sm:$0xff]
      %v7136 = vld [vmem:[%s9 + $0x10] sm:$0xff]
      %v7137 = vld [vmem:[%s9 + $0x18] sm:$0xff]
      %v7138 = vld [vmem:[%s9 + $0x20] sm:$0xff]
      %v7139 = vld [vmem:[%s9 + $0x28] sm:$0xff]
      %v7140 = vld [vmem:[%s9 + $0x30] sm:$0xff]
      %v7141 = vld [vmem:[%s9 + $0x38] sm:$0xff]
      %v7142 = vld [vmem:[#allocation4] sm:$0x1]
      %v7144 = vsel %vm5395, %v7133, 0
      %7146 = vmatprep.subr.mxu0 0.0
      %7147 = vmatpush1.msra.mxu0 0.0
      %7148 = vmatprep.subr.mxu0 0.0
      %7149 = vmatpush1.msra.mxu0 0.0
      %7150 = vmatprep.subr.mxu0 0.0
      %7151 = vmatpush1.msra.mxu0 0.0
      %7152 = vmatprep.subr.mxu0 0.0
      %7153 = vmatpush1.msra.mxu0 0.0
      %7154 = vmatprep.subr.mxu0 0.0
      %7155 = vmatpush1.msra.mxu0 0.0
      %7156 = vmatprep.subr.mxu0 0.0
      %7157 = vmatpush1.msra.mxu0 0.0
      %7158 = vmatprep.subr.mxu0 0.0
      %7159 = vmatpush1.msra.mxu0 0.0
      %7160 = vmatprep.subr.mxu0 0.0
      %7161 = vmatpush1.msra.mxu0 0.0
      %7162 = vmatprep.subr.mxu0 0.0
      %7163 = vmatpush1.msra.mxu0 %v7141
      %7164 = vmatprep.subr.mxu0 0.0
      %7165 = vmatpush1.msra.mxu0 %v7140
      %7166 = vmatprep.subr.mxu0 0.0
      %7167 = vmatpush1.msra.mxu0 %v7139
      %7168 = vmatprep.subr.mxu0 0.0
      %7169 = vmatpush1.msra.mxu0 %v7138
      %7170 = vmatprep.subr.mxu0 0.0
      %7171 = vmatpush1.msra.mxu0 %v7137
      %7172 = vmatprep.subr.mxu0 0.0
      %7173 = vmatpush1.msra.mxu0 %v7136
      %7174 = vmatprep.subr.mxu0 0.0
      %7175 = vmatpush1.msra.mxu0 %v7135
      %7176 = vmatprep.subr.mxu0 0.0
      %7177 = vmatpush1.msra.mxu0 %v7134
      %7178 = vmatprep.subr.mxu0 0.0
      %7179 = vmatpush2.msra.mxu0 0.0
      %7180 = vmatprep.subr.mxu0 0.0
      %7181 = vmatpush2.msra.mxu0 0.0
      %7182 = vmatprep.subr.mxu0 0.0
      %7183 = vmatpush2.msra.mxu0 0.0
      %7184 = vmatprep.subr.mxu0 0.0
      %7185 = vmatpush2.msra.mxu0 0.0
      %7186 = vmatprep.subr.mxu0 0.0
      %7187 = vmatpush2.msra.mxu0 0.0
      %7188 = vmatprep.subr.mxu0 0.0
      %7189 = vmatpush2.msra.mxu0 0.0
      %7190 = vmatprep.subr.mxu0 0.0
      %7191 = vmatpush2.msra.mxu0 0.0
      %7192 = vmatprep.subr.mxu0 0.0
      %7193 = vmatpush2.msra.mxu0 0.0
      %7194 = vmatprep.subr.mxu0 0.0
      %7195 = vmatpush2.msra.mxu0 0.0
      %7196 = vmatprep.subr.mxu0 0.0
      %7197 = vmatpush2.msra.mxu0 0.0
      %7198 = vmatprep.subr.mxu0 0.0
      %7199 = vmatpush2.msra.mxu0 0.0
      %7200 = vmatprep.subr.mxu0 0.0
      %7201 = vmatpush2.msra.mxu0 0.0
      %7202 = vmatprep.subr.mxu0 0.0
      %7203 = vmatpush2.msra.mxu0 0.0
      %7204 = vmatprep.subr.mxu0 0.0
      %7205 = vmatpush2.msra.mxu0 0.0
      %7206 = vmatprep.subr.mxu0 0.0
      %7207 = vmatpush2.msra.mxu0 0.0
      %7208 = vmatprep.subr.mxu0 0.0
      %7209 = vmatpush2.msra.mxu0 0.0
      %7210 = vmatprep.mubr.f32.mxu0 0.0
      %7211 = vmatmul.mubr.f32.gmra.mxu0 %v7144
      %v7212 = vpop.f32.mrf.mxu0
      %v7213 = vadd.f32 %v7142, %v7212
      %v7214 = vpop.f32.mrf.mxu0
      %7215 = vdwg.mxu0
      %v7216 = vsub.f32 0.0, %v7213
      %v7217 = vmul.f32 %v7216, 1.442695
      %v7218 = vpow.pop %v7217
      %v7219 = vadd.f32 %v7218, 1.0
      %v7220 = vrcp.pop %v7219
      %v7221 = vmul.f32 1.0, %v7220
      %vm7222 = vcmask 0
      %7223 = vst.msk [vmem:[%s411] sm:$0x1] %vm7222, %v7221
      %p7224 = scmp.lt.s32.totalorder %s25, 1
      %s7225 = scalar_select %p7224, %s25, 1
      %s7226 = scalar_lea.vmem %s12, %s7225
      // Predicated region
      $region69: #{cnn_forward_pallas.1} parent=67 // pred_check
        %p7227 = pneg %p300
      $region70: #{cnn_forward_pallas.1} parent=67 // pred_check_branch
        %7229 = sbr.rel (%p7227) target = $region72
      $region71: #{cnn_forward_pallas.1} parent=67 // pred_region
        _
      $region72: #{cnn_forward_pallas.1} parent=67 // pred_fallthru
        _
    $region68: #{cnn_forward_pallas.1} parent=5 // pred_fallthru
      _
    %p7230 = scmp.le.s32.totalorder 2, %s20
    // Predicated region
    $region73: #{cnn_forward_pallas.1} parent=5 // pred_check
      %p7231 = pneg %p7230
    $region74: #{cnn_forward_pallas.1} parent=5 // pred_check_branch
      %7233 = sbr.rel (%p7231) target = $region76
    $region75: #{cnn_forward_pallas.1} parent=5 // pred_region
      %s7234 = ssub.s32 %s20, 2
      // Predicated region
      $region77: #{cnn_forward_pallas.1} parent=75 // pred_check
        %p7235 = pneg %p306
      $region78: #{cnn_forward_pallas.1} parent=75 // pred_check_branch
        %7237 = sbr.rel (%p7235) target = $region80
      $region79: #{cnn_forward_pallas.1} parent=75 // pred_region
        %p7238 = scmp.lt.s32.totalorder %s26, 1
        %s7239 = scalar_select %p7238, %s26, 1
        %s7240 = scalar_lea.vmem %s12, %s7239
      $region80: #{cnn_forward_pallas.1} parent=75 // pred_fallthru
        _
    $region76: #{cnn_forward_pallas.1} parent=5 // pred_fallthru
      _
  $region6: #{cnn_forward_pallas.1} parent=0 // loop_footer
    %s24 = sadd.s32 1, %s20
  $region7: #{cnn_forward_pallas.1} parent=0 // loop_footer_branch
    %19 = sbr.rel target = $region3
  $region8: #{cnn_forward_pallas.1} parent=0 // loop_exit
    _

</llo_original>
